<compile_context>
chip_gen: v6e
topology: v6e:2x2x1
jax: 0.10.0
libtpu: 0.0.40
codegen_flags: <defaults>
</compile_context>

<pallas_src>
import jax
import jax.numpy as jnp
from jax.experimental import pallas as pl
from jax.experimental.pallas import tpu as pltpu

FEATURE_NUM = 256


# ----------------------------------------------------------------------------- kernel
def make_critic_kernel(G, F):
    """G: number of 256-wide merge groups (static). F = 256."""

    def critic_kernel(xg_ref, wv_ref, bv_ref, wr_ref, bq1_ref, wq2_ref, bq2_ref,
                      q_ref, a_ref):
        # 1) Build the full [TILE_B, G*F] bf16 activation in VMEM scratch.
        #    Per group: fused affine+ReLU (VPU) on one broadcast scalar, stored to a
        #    lane-aligned 256-wide slice of the scratch.  Math runs in wv's dtype
        #    (bf16 on v6e/v7x, f32 on v5e).
        for j in range(G):
            xi = xg_ref[:, j:j + 1].astype(wv_ref.dtype)               # [TB, 1]
            a = jnp.maximum(xi * wv_ref[j:j + 1, :] + bv_ref[j:j + 1, :], 0.0)
            a_ref[:, j * F:(j + 1) * F] = a.astype(a_ref.dtype)
        # 2) Single K = G*F matmul on the MXU (bf16 operands, f32 accumulation),
        #    replacing 26 accumulated dots: no VPU accumulate-adds, no register-
        #    resident accumulator, one result drain per output tile.
        h = jnp.dot(a_ref[...], wr_ref[...], preferred_element_type=jnp.float32)
        h = h + bq1_ref[...]
        # 3) fc_q[1]: bf16 x bf16 -> f32, output padded to 128 lanes (dense stores).
        q = jnp.dot(h.astype(wq2_ref.dtype), wq2_ref[...],
                    preferred_element_type=jnp.float32) + bq2_ref[...]
        q_ref[...] = q.astype(q_ref.dtype)

    return critic_kernel


# ----------------------------------------------------------------------------- packing
def activation_dtype():
    """bf16 affine/ReLU on chips with a packed-bf16 VPU (v6e / v7x); f32 otherwise
    (v5e and older have no bf16 VALU path).  Falls back to f32 if detection fails."""
    try:
        kind = jax.devices()[0].device_kind.lower()
    except Exception:
        return jnp.float32
    if any(tag in kind for tag in ("v2", "v3", "v4", "v5")):
        return jnp.float32
    return jnp.bfloat16


def pack_params(params, S, a1_dim, a2_dim, act_dtype=jnp.float32):
    """One-time parameter preprocessing (NOT in the per-call hot path)."""
    (w1, b1, w2, b2, wc3, bc3, wc4, bc4, wc5, bc5,
     w6, b6, w7, b7, wq1, bq1, wq2, bq2) = params
    F = FEATURE_NUM
    out_dim = a1_dim * a2_dim

    # Per-group branch weight / bias vectors (group order matches the xg gather in
    # the wrapper, conv groups expanded per spatial position).  Stored in the VPU
    # math dtype chosen per chip generation.
    wv = jnp.stack([w1[:, 0], w2[:, 0]]
                   + [wc3[:, 0, 0]] * S + [wc4[:, 0, 0]] * S
                   + [wc5[:, 0, 0]] * a1_dim
                   + [w6[:, 0], w7[:, 0]], axis=0).astype(act_dtype)     # [G, F]
    bv = jnp.stack([b1, b2] + [bc3] * S + [bc4] * S + [bc5] * a1_dim
                   + [b6, b7], axis=0).astype(act_dtype)                 # [G, F]

    # Regroup fc_q[0] weight [F, 6656] into per-group blocks [G, F(in), F(out)],
    # matching the group order above, then flatten to the single-matmul layout
    # [G*F, F].  bf16 weight stream (f32 accumulation in-kernel) halves HBM traffic.
    w1b = wq1[:, 0:F].T[None]
    w2b = wq1[:, F:2 * F].T[None]
    o3 = 2 * F
    w3b = jnp.transpose(wq1[:, o3:o3 + F * S].reshape(F, F, S), (2, 1, 0))   # [s,o,k]
    o4 = o3 + F * S
    w4b = jnp.transpose(wq1[:, o4:o4 + F * S].reshape(F, F, S), (2, 1, 0))
    o5 = o4 + F * S
    w5b = jnp.transpose(wq1[:, o5:o5 + F * a1_dim].reshape(F, F, a1_dim), (2, 1, 0))
    o6 = o5 + F * a1_dim
    w6b = wq1[:, o6:o6 + F].T[None]
    w7b = wq1[:, o6 + F:o6 + 2 * F].T[None]
    wr = jnp.concatenate([w1b, w2b, w3b, w4b, w5b, w6b, w7b], axis=0)    # [G, F, F]
    G = wr.shape[0]
    wr = wr.reshape(G * F, F).astype(jnp.bfloat16)                       # [G*F, F]

    # fc_q[1]: bf16 weight, output width padded to a lane-dense multiple of 128.
    out_pad = max(128, ((out_dim + 127) // 128) * 128)
    wq2p = jnp.zeros((F, out_pad), jnp.bfloat16).at[:, :out_dim].set(
        wq2.T.astype(jnp.bfloat16))
    bq2p = jnp.zeros((1, out_pad), jnp.float32).at[0, :out_dim].set(bq2)

    return (wv, bv, wr, bq1[None, :].astype(jnp.float32), wq2p, bq2p)


# ----------------------------------------------------------------------------- wrapper
def critic_forward(x, packed, a1_dim, a2_dim):
    """x: [B, C, S] float32 (C >= 7, a1_dim <= S). packed: output of pack_params.
    Returns q: [B, a1_dim * a2_dim]."""
    wv, bv, wr, bq1p, wq2p, bq2p = packed
    B, C, S = x.shape
    G, F = wv.shape
    out_pad = wq2p.shape[1]
    out_dim = a1_dim * a2_dim
    assert C >= 7
    assert a1_dim <= S, "conv5 branch reads x[:, 4, :a1_dim]; requires a1_dim <= S"
    assert G == 4 + 2 * S + a1_dim and wr.shape == (G * F, F)

    # Gather the one scalar each group consumes -> lane-dense slab, padded to 128
    # lanes (column order matches the group order used in pack_params).
    last = S - 1
    xg = jnp.concatenate(
        [x[:, 0, last:], x[:, 1, last:], x[:, 2, :], x[:, 3, :],
         x[:, 4, :a1_dim], x[:, 5, last:], x[:, 6, last:]], axis=1)      # [B, G]

    # Batch tiling: multiple of 16 (bf16 sublane packing), up to 256 rows per step.
    TILE_B = min(256, ((B + 15) // 16) * 16)
    Bp = ((B + TILE_B - 1) // TILE_B) * TILE_B
    G_lanes = max(128, ((G + 127) // 128) * 128)
    # NOTE: padded batch rows compute relu(0*w + b) = relu(b) != 0, so their q rows
    # are garbage; they are sliced off below.  Never reduce over the padded output.
    xg_p = jnp.zeros((Bp, G_lanes), jnp.float32).at[:B, :G].set(xg)

    kernel = make_critic_kernel(G, F)

    qp = pl.pallas_call(
        kernel,
        out_shape=jax.ShapeDtypeStruct((Bp, out_pad), jnp.float32),
        grid_spec=pltpu.PrefetchScalarGridSpec(
            num_scalar_prefetch=0,
            grid=(Bp // TILE_B,),
            in_specs=[
                pl.BlockSpec((TILE_B, G_lanes), lambda i: (i, 0)),   # xg (pipelined)
                pl.BlockSpec((G, F), lambda i: (0, 0)),              # branch weights
                pl.BlockSpec((G, F), lambda i: (0, 0)),              # branch biases
                pl.BlockSpec((G * F, F), lambda i: (0, 0)),          # fc_q[0] (resident)
                pl.BlockSpec((1, F), lambda i: (0, 0)),              # fc_q[0] bias
                pl.BlockSpec((F, out_pad), lambda i: (0, 0)),        # fc_q[1] weight
                pl.BlockSpec((1, out_pad), lambda i: (0, 0)),        # fc_q[1] bias
            ],
            out_specs=pl.BlockSpec((TILE_B, out_pad), lambda i: (i, 0)),
            scratch_shapes=[pltpu.VMEM((TILE_B, G * F), jnp.bfloat16)],  # a_full
        ),
        compiler_params=pltpu.CompilerParams(
            dimension_semantics=("parallel",),
            vmem_limit_bytes=32 * 1024 * 1024,
        ),
    )(xg_p, wv, bv, wr, bq1p, wq2p, bq2p)

    return qp[:B, :out_dim]


# ----------------------------------------------------------------------------- params
def init_params(key, S, a1_dim, a2_dim):
    F = FEATURE_NUM
    merge_dim = 4 * F + 2 * F * S + F * a1_dim
    ks = jax.random.split(key, 18)

    def n(k, shape, scale=0.1):
        return scale * jax.random.normal(k, shape, dtype=jnp.float32)

    return (
        n(ks[0], (F, 1)), n(ks[1], (F,)),          # fc1_actor
        n(ks[2], (F, 1)), n(ks[3], (F,)),          # fc2_actor
        n(ks[4], (F, 1, 1)), n(ks[5], (F,)),       # conv3_actor
        n(ks[6], (F, 1, 1)), n(ks[7], (F,)),       # conv4_actor
        n(ks[8], (F, 1, 1)), n(ks[9], (F,)),       # conv5_actor
        n(ks[10], (F, 1)), n(ks[11], (F,)),        # fc6_actor
        n(ks[12], (F, 1)), n(ks[13], (F,)),        # fc7_actor
        n(ks[14], (F, merge_dim), 0.02), n(ks[15], (F,)),                      # fc_q[0]
        n(ks[16], (a1_dim * a2_dim, F), 0.02), n(ks[17], (a1_dim * a2_dim,)),  # fc_q[1]
    )


# ----------------------------------------------------------------------------- reference
def critic_reference(x, params, a1_dim, a2_dim):
    """Pure-JAX f32 transcription of the PyTorch forward, for correctness checking."""
    (w1, b1, w2, b2, wc3, bc3, wc4, bc4, wc5, bc5,
     w6, b6, w7, b7, wq1, bq1, wq2, bq2) = params
    B = x.shape[0]
    relu = lambda v: jnp.maximum(v, 0.0)
    lin = lambda v, w, b: v @ w.T + b                      # v: [B,1], w: [256,1]
    conv = lambda v, w, b: v[:, None, :] * w[:, 0, 0][None, :, None] + b[None, :, None]

    s1 = relu(lin(x[:, 0, -1:], w1, b1))
    s2 = relu(lin(x[:, 1, -1:], w2, b2))
    s3 = relu(conv(x[:, 2, :], wc3, bc3)).reshape(B, -1)
    s4 = relu(conv(x[:, 3, :], wc4, bc4)).reshape(B, -1)
    s5 = relu(conv(x[:, 4, :a1_dim], wc5, bc5)).reshape(B, -1)
    s6 = relu(lin(x[:, 5, -1:], w6, b6))
    s7 = relu(lin(x[:, 6, -1:], w7, b7))
    merge = jnp.concatenate([s1, s2, s3, s4, s5, s6, s7], axis=1)
    h = merge @ wq1.T + bq1
    return h @ wq2.T + bq2


# ----------------------------------------------------------------------------- main
if __name__ == "__main__":
    B, C, S = 2, 7, 8           # state: 7 channels, sequence length 8
    a1_dim, a2_dim = 6, 5       # action_dim = (6, 5) -> merge width 6656, q width 30

    key = jax.random.PRNGKey(0)
    kx, kp = jax.random.split(key)
    x = jax.random.normal(kx, (B, C, S), dtype=jnp.float32)
    params = init_params(kp, S, a1_dim, a2_dim)

    # One-time parameter preprocessing (hoisted out of the per-call path); the
    # affine/ReLU math dtype is chosen per chip generation (bf16 on v6e/v7x,
    # f32 on v5e and older).
    packed = pack_params(params, S, a1_dim, a2_dim, activation_dtype())
    packed = jax.tree_util.tree_map(jax.block_until_ready, packed)

    fwd = jax.jit(critic_forward, static_argnums=(2, 3))
    q = fwd(x, packed, a1_dim, a2_dim)
    q = jax.block_until_ready(q)

    q_ref = critic_reference(x, params, a1_dim, a2_dim)
    assert q.shape == (B, a1_dim * a2_dim)
    # Tolerance covers bf16 storage of the fc_q[0]/fc_q[1] weights AND the bf16
    # activations fed to the MXU (plus bf16 affine math on v6e/v7x); accumulation
    # is f32 throughout.  Observed error ~1e-3 absolute on O(0.1) outputs.
    assert jnp.allclose(q, q_ref, atol=1e-2, rtol=1e-2), "mismatch vs reference"

    print("KERNEL_OK")
</pallas_src>

<mosaic_0001>
module attributes {stable_mosaic.version = 11 : i64} {
  func.func @critic_kernel(%arg0: i32, %arg1: memref<16x128xf32, #tpu.memory_space<vmem>>, %arg2: memref<26x256xbf16, #tpu.memory_space<vmem>>, %arg3: memref<26x256xbf16, #tpu.memory_space<vmem>>, %arg4: memref<6656x256xbf16, #tpu.memory_space<vmem>>, %arg5: memref<1x256xf32, #tpu.memory_space<vmem>>, %arg6: memref<256x128xbf16, #tpu.memory_space<vmem>>, %arg7: memref<1x128xf32, #tpu.memory_space<vmem>>, %arg8: memref<16x128xf32, #tpu.memory_space<vmem>>, %arg9: memref<16x6656xbf16, #tpu.memory_space<vmem>>) attributes {dimension_semantics = [#tpu.dimension_semantics<parallel>], iteration_bounds = array<i64: 1>, scalar_prefetch = 0 : i64, scratch_operands = 1 : i64, tpu.core_type = #tpu.core_type<tc>, window_params = [{transform_indices = @transform_0, window_bounds = array<i64: 16, 128>}, {pipeline_mode = #tpu.pipeline_mode<synchronous>, transform_indices = @transform_1, window_bounds = array<i64: 26, 256>}, {pipeline_mode = #tpu.pipeline_mode<synchronous>, transform_indices = @transform_2, window_bounds = array<i64: 26, 256>}, {pipeline_mode = #tpu.pipeline_mode<synchronous>, transform_indices = @transform_3, window_bounds = array<i64: 6656, 256>}, {pipeline_mode = #tpu.pipeline_mode<synchronous>, transform_indices = @transform_4, window_bounds = array<i64: 1, 256>}, {pipeline_mode = #tpu.pipeline_mode<synchronous>, transform_indices = @transform_5, window_bounds = array<i64: 256, 128>}, {pipeline_mode = #tpu.pipeline_mode<synchronous>, transform_indices = @transform_6, window_bounds = array<i64: 1, 128>}, {transform_indices = @transform_7, window_bounds = array<i64: 16, 128>}]} {
    %c0 = arith.constant 0 : index
    %c0_0 = arith.constant 0 : index
    %0 = vector.load %arg1[%c0, %c0_0] : memref<16x128xf32, #tpu.memory_space<vmem>>, vector<16x1xf32>
    %1 = arith.truncf %0 : vector<16x1xf32> to vector<16x1xbf16>
    %c0_1 = arith.constant 0 : index
    %c0_2 = arith.constant 0 : index
    %2 = vector.load %arg2[%c0_1, %c0_2] : memref<26x256xbf16, #tpu.memory_space<vmem>>, vector<1x256xbf16>
    %3 = vector.broadcast %1 : vector<16x1xbf16> to vector<16x256xbf16>
    %4 = vector.broadcast %2 : vector<1x256xbf16> to vector<16x256xbf16>
    %5 = arith.mulf %3, %4 : vector<16x256xbf16>
    %c0_3 = arith.constant 0 : index
    %c0_4 = arith.constant 0 : index
    %6 = vector.load %arg3[%c0_3, %c0_4] : memref<26x256xbf16, #tpu.memory_space<vmem>>, vector<1x256xbf16>
    %7 = vector.broadcast %6 : vector<1x256xbf16> to vector<16x256xbf16>
    %8 = arith.addf %5, %7 : vector<16x256xbf16>
    %cst = arith.constant 0.000000e+00 : bf16
    %9 = vector.broadcast %cst : bf16 to vector<16x256xbf16>
    %10 = arith.maximumf %8, %9 : vector<16x256xbf16>
    %c0_5 = arith.constant 0 : index
    %c0_6 = arith.constant 0 : index
    %11 = vector.load %arg9[%c0_5, %c0_6] : memref<16x6656xbf16, #tpu.memory_space<vmem>>, vector<16x256xbf16>
    tpu.vector_store %arg9[%c0_5, %c0_6], %10 {strides = array<i32>} : memref<16x6656xbf16, #tpu.memory_space<vmem>>, vector<16x256xbf16>,
    %c0_7 = arith.constant 0 : index
    %c1 = arith.constant 1 : index
    %12 = vector.load %arg1[%c0_7, %c1] : memref<16x128xf32, #tpu.memory_space<vmem>>, vector<16x1xf32>
    %13 = arith.truncf %12 : vector<16x1xf32> to vector<16x1xbf16>
    %c1_8 = arith.constant 1 : index
    %c0_9 = arith.constant 0 : index
    %14 = vector.load %arg2[%c1_8, %c0_9] : memref<26x256xbf16, #tpu.memory_space<vmem>>, vector<1x256xbf16>
    %15 = vector.broadcast %13 : vector<16x1xbf16> to vector<16x256xbf16>
    %16 = vector.broadcast %14 : vector<1x256xbf16> to vector<16x256xbf16>
    %17 = arith.mulf %15, %16 : vector<16x256xbf16>
    %c1_10 = arith.constant 1 : index
    %c0_11 = arith.constant 0 : index
    %18 = vector.load %arg3[%c1_10, %c0_11] : memref<26x256xbf16, #tpu.memory_space<vmem>>, vector<1x256xbf16>
    %19 = vector.broadcast %18 : vector<1x256xbf16> to vector<16x256xbf16>
    %20 = arith.addf %17, %19 : vector<16x256xbf16>
    %cst_12 = arith.constant 0.000000e+00 : bf16
    %21 = vector.broadcast %cst_12 : bf16 to vector<16x256xbf16>
    %22 = arith.maximumf %20, %21 : vector<16x256xbf16>
    %c0_13 = arith.constant 0 : index
    %c256 = arith.constant 256 : index
    %23 = vector.load %arg9[%c0_13, %c256] : memref<16x6656xbf16, #tpu.memory_space<vmem>>, vector<16x256xbf16>
    tpu.vector_store %arg9[%c0_13, %c256], %22 {strides = array<i32>} : memref<16x6656xbf16, #tpu.memory_space<vmem>>, vector<16x256xbf16>,
    %c0_14 = arith.constant 0 : index
    %c2 = arith.constant 2 : index
    %24 = vector.load %arg1[%c0_14, %c2] : memref<16x128xf32, #tpu.memory_space<vmem>>, vector<16x1xf32>
    %25 = arith.truncf %24 : vector<16x1xf32> to vector<16x1xbf16>
    %c2_15 = arith.constant 2 : index
    %c0_16 = arith.constant 0 : index
    %26 = vector.load %arg2[%c2_15, %c0_16] : memref<26x256xbf16, #tpu.memory_space<vmem>>, vector<1x256xbf16>
    %27 = vector.broadcast %25 : vector<16x1xbf16> to vector<16x256xbf16>
    %28 = vector.broadcast %26 : vector<1x256xbf16> to vector<16x256xbf16>
    %29 = arith.mulf %27, %28 : vector<16x256xbf16>
    %c2_17 = arith.constant 2 : index
    %c0_18 = arith.constant 0 : index
    %30 = vector.load %arg3[%c2_17, %c0_18] : memref<26x256xbf16, #tpu.memory_space<vmem>>, vector<1x256xbf16>
    %31 = vector.broadcast %30 : vector<1x256xbf16> to vector<16x256xbf16>
    %32 = arith.addf %29, %31 : vector<16x256xbf16>
    %cst_19 = arith.constant 0.000000e+00 : bf16
    %33 = vector.broadcast %cst_19 : bf16 to vector<16x256xbf16>
    %34 = arith.maximumf %32, %33 : vector<16x256xbf16>
    %c0_20 = arith.constant 0 : index
    %c512 = arith.constant 512 : index
    %35 = vector.load %arg9[%c0_20, %c512] : memref<16x6656xbf16, #tpu.memory_space<vmem>>, vector<16x256xbf16>
    tpu.vector_store %arg9[%c0_20, %c512], %34 {strides = array<i32>} : memref<16x6656xbf16, #tpu.memory_space<vmem>>, vector<16x256xbf16>,
    %c0_21 = arith.constant 0 : index
    %c3 = arith.constant 3 : index
    %36 = vector.load %arg1[%c0_21, %c3] : memref<16x128xf32, #tpu.memory_space<vmem>>, vector<16x1xf32>
    %37 = arith.truncf %36 : vector<16x1xf32> to vector<16x1xbf16>
    %c3_22 = arith.constant 3 : index
    %c0_23 = arith.constant 0 : index
    %38 = vector.load %arg2[%c3_22, %c0_23] : memref<26x256xbf16, #tpu.memory_space<vmem>>, vector<1x256xbf16>
    %39 = vector.broadcast %37 : vector<16x1xbf16> to vector<16x256xbf16>
    %40 = vector.broadcast %38 : vector<1x256xbf16> to vector<16x256xbf16>
    %41 = arith.mulf %39, %40 : vector<16x256xbf16>
    %c3_24 = arith.constant 3 : index
    %c0_25 = arith.constant 0 : index
    %42 = vector.load %arg3[%c3_24, %c0_25] : memref<26x256xbf16, #tpu.memory_space<vmem>>, vector<1x256xbf16>
    %43 = vector.broadcast %42 : vector<1x256xbf16> to vector<16x256xbf16>
    %44 = arith.addf %41, %43 : vector<16x256xbf16>
    %cst_26 = arith.constant 0.000000e+00 : bf16
    %45 = vector.broadcast %cst_26 : bf16 to vector<16x256xbf16>
    %46 = arith.maximumf %44, %45 : vector<16x256xbf16>
    %c0_27 = arith.constant 0 : index
    %c768 = arith.constant 768 : index
    %47 = vector.load %arg9[%c0_27, %c768] : memref<16x6656xbf16, #tpu.memory_space<vmem>>, vector<16x256xbf16>
    tpu.vector_store %arg9[%c0_27, %c768], %46 {strides = array<i32>} : memref<16x6656xbf16, #tpu.memory_space<vmem>>, vector<16x256xbf16>,
    %c0_28 = arith.constant 0 : index
    %c4 = arith.constant 4 : index
    %48 = vector.load %arg1[%c0_28, %c4] : memref<16x128xf32, #tpu.memory_space<vmem>>, vector<16x1xf32>
    %49 = arith.truncf %48 : vector<16x1xf32> to vector<16x1xbf16>
    %c4_29 = arith.constant 4 : index
    %c0_30 = arith.constant 0 : index
    %50 = vector.load %arg2[%c4_29, %c0_30] : memref<26x256xbf16, #tpu.memory_space<vmem>>, vector<1x256xbf16>
    %51 = vector.broadcast %49 : vector<16x1xbf16> to vector<16x256xbf16>
    %52 = vector.broadcast %50 : vector<1x256xbf16> to vector<16x256xbf16>
    %53 = arith.mulf %51, %52 : vector<16x256xbf16>
    %c4_31 = arith.constant 4 : index
    %c0_32 = arith.constant 0 : index
    %54 = vector.load %arg3[%c4_31, %c0_32] : memref<26x256xbf16, #tpu.memory_space<vmem>>, vector<1x256xbf16>
    %55 = vector.broadcast %54 : vector<1x256xbf16> to vector<16x256xbf16>
    %56 = arith.addf %53, %55 : vector<16x256xbf16>
    %cst_33 = arith.constant 0.000000e+00 : bf16
    %57 = vector.broadcast %cst_33 : bf16 to vector<16x256xbf16>
    %58 = arith.maximumf %56, %57 : vector<16x256xbf16>
    %c0_34 = arith.constant 0 : index
    %c1024 = arith.constant 1024 : index
    %59 = vector.load %arg9[%c0_34, %c1024] : memref<16x6656xbf16, #tpu.memory_space<vmem>>, vector<16x256xbf16>
    tpu.vector_store %arg9[%c0_34, %c1024], %58 {strides = array<i32>} : memref<16x6656xbf16, #tpu.memory_space<vmem>>, vector<16x256xbf16>,
    %c0_35 = arith.constant 0 : index
    %c5 = arith.constant 5 : index
    %60 = vector.load %arg1[%c0_35, %c5] : memref<16x128xf32, #tpu.memory_space<vmem>>, vector<16x1xf32>
    %61 = arith.truncf %60 : vector<16x1xf32> to vector<16x1xbf16>
    %c5_36 = arith.constant 5 : index
    %c0_37 = arith.constant 0 : index
    %62 = vector.load %arg2[%c5_36, %c0_37] : memref<26x256xbf16, #tpu.memory_space<vmem>>, vector<1x256xbf16>
    %63 = vector.broadcast %61 : vector<16x1xbf16> to vector<16x256xbf16>
    %64 = vector.broadcast %62 : vector<1x256xbf16> to vector<16x256xbf16>
    %65 = arith.mulf %63, %64 : vector<16x256xbf16>
    %c5_38 = arith.constant 5 : index
    %c0_39 = arith.constant 0 : index
    %66 = vector.load %arg3[%c5_38, %c0_39] : memref<26x256xbf16, #tpu.memory_space<vmem>>, vector<1x256xbf16>
    %67 = vector.broadcast %66 : vector<1x256xbf16> to vector<16x256xbf16>
    %68 = arith.addf %65, %67 : vector<16x256xbf16>
    %cst_40 = arith.constant 0.000000e+00 : bf16
    %69 = vector.broadcast %cst_40 : bf16 to vector<16x256xbf16>
    %70 = arith.maximumf %68, %69 : vector<16x256xbf16>
    %c0_41 = arith.constant 0 : index
    %c1280 = arith.constant 1280 : index
    %71 = vector.load %arg9[%c0_41, %c1280] : memref<16x6656xbf16, #tpu.memory_space<vmem>>, vector<16x256xbf16>
    tpu.vector_store %arg9[%c0_41, %c1280], %70 {strides = array<i32>} : memref<16x6656xbf16, #tpu.memory_space<vmem>>, vector<16x256xbf16>,
    %c0_42 = arith.constant 0 : index
    %c6 = arith.constant 6 : index
    %72 = vector.load %arg1[%c0_42, %c6] : memref<16x128xf32, #tpu.memory_space<vmem>>, vector<16x1xf32>
    %73 = arith.truncf %72 : vector<16x1xf32> to vector<16x1xbf16>
    %c6_43 = arith.constant 6 : index
    %c0_44 = arith.constant 0 : index
    %74 = vector.load %arg2[%c6_43, %c0_44] : memref<26x256xbf16, #tpu.memory_space<vmem>>, vector<1x256xbf16>
    %75 = vector.broadcast %73 : vector<16x1xbf16> to vector<16x256xbf16>
    %76 = vector.broadcast %74 : vector<1x256xbf16> to vector<16x256xbf16>
    %77 = arith.mulf %75, %76 : vector<16x256xbf16>
    %c6_45 = arith.constant 6 : index
    %c0_46 = arith.constant 0 : index
    %78 = vector.load %arg3[%c6_45, %c0_46] : memref<26x256xbf16, #tpu.memory_space<vmem>>, vector<1x256xbf16>
    %79 = vector.broadcast %78 : vector<1x256xbf16> to vector<16x256xbf16>
    %80 = arith.addf %77, %79 : vector<16x256xbf16>
    %cst_47 = arith.constant 0.000000e+00 : bf16
    %81 = vector.broadcast %cst_47 : bf16 to vector<16x256xbf16>
    %82 = arith.maximumf %80, %81 : vector<16x256xbf16>
    %c0_48 = arith.constant 0 : index
    %c1536 = arith.constant 1536 : index
    %83 = vector.load %arg9[%c0_48, %c1536] : memref<16x6656xbf16, #tpu.memory_space<vmem>>, vector<16x256xbf16>
    tpu.vector_store %arg9[%c0_48, %c1536], %82 {strides = array<i32>} : memref<16x6656xbf16, #tpu.memory_space<vmem>>, vector<16x256xbf16>,
    %c0_49 = arith.constant 0 : index
    %c7 = arith.constant 7 : index
    %84 = vector.load %arg1[%c0_49, %c7] : memref<16x128xf32, #tpu.memory_space<vmem>>, vector<16x1xf32>
    %85 = arith.truncf %84 : vector<16x1xf32> to vector<16x1xbf16>
    %c7_50 = arith.constant 7 : index
    %c0_51 = arith.constant 0 : index
    %86 = vector.load %arg2[%c7_50, %c0_51] : memref<26x256xbf16, #tpu.memory_space<vmem>>, vector<1x256xbf16>
    %87 = vector.broadcast %85 : vector<16x1xbf16> to vector<16x256xbf16>
    %88 = vector.broadcast %86 : vector<1x256xbf16> to vector<16x256xbf16>
    %89 = arith.mulf %87, %88 : vector<16x256xbf16>
    %c7_52 = arith.constant 7 : index
    %c0_53 = arith.constant 0 : index
    %90 = vector.load %arg3[%c7_52, %c0_53] : memref<26x256xbf16, #tpu.memory_space<vmem>>, vector<1x256xbf16>
    %91 = vector.broadcast %90 : vector<1x256xbf16> to vector<16x256xbf16>
    %92 = arith.addf %89, %91 : vector<16x256xbf16>
    %cst_54 = arith.constant 0.000000e+00 : bf16
    %93 = vector.broadcast %cst_54 : bf16 to vector<16x256xbf16>
    %94 = arith.maximumf %92, %93 : vector<16x256xbf16>
    %c0_55 = arith.constant 0 : index
    %c1792 = arith.constant 1792 : index
    %95 = vector.load %arg9[%c0_55, %c1792] : memref<16x6656xbf16, #tpu.memory_space<vmem>>, vector<16x256xbf16>
    tpu.vector_store %arg9[%c0_55, %c1792], %94 {strides = array<i32>} : memref<16x6656xbf16, #tpu.memory_space<vmem>>, vector<16x256xbf16>,
    %c0_56 = arith.constant 0 : index
    %c8 = arith.constant 8 : index
    %96 = vector.load %arg1[%c0_56, %c8] : memref<16x128xf32, #tpu.memory_space<vmem>>, vector<16x1xf32>
    %97 = arith.truncf %96 : vector<16x1xf32> to vector<16x1xbf16>
    %c8_57 = arith.constant 8 : index
    %c0_58 = arith.constant 0 : index
    %98 = vector.load %arg2[%c8_57, %c0_58] : memref<26x256xbf16, #tpu.memory_space<vmem>>, vector<1x256xbf16>
    %99 = vector.broadcast %97 : vector<16x1xbf16> to vector<16x256xbf16>
    %100 = vector.broadcast %98 : vector<1x256xbf16> to vector<16x256xbf16>
    %101 = arith.mulf %99, %100 : vector<16x256xbf16>
    %c8_59 = arith.constant 8 : index
    %c0_60 = arith.constant 0 : index
    %102 = vector.load %arg3[%c8_59, %c0_60] : memref<26x256xbf16, #tpu.memory_space<vmem>>, vector<1x256xbf16>
    %103 = vector.broadcast %102 : vector<1x256xbf16> to vector<16x256xbf16>
    %104 = arith.addf %101, %103 : vector<16x256xbf16>
    %cst_61 = arith.constant 0.000000e+00 : bf16
    %105 = vector.broadcast %cst_61 : bf16 to vector<16x256xbf16>
    %106 = arith.maximumf %104, %105 : vector<16x256xbf16>
    %c0_62 = arith.constant 0 : index
    %c2048 = arith.constant 2048 : index
    %107 = vector.load %arg9[%c0_62, %c2048] : memref<16x6656xbf16, #tpu.memory_space<vmem>>, vector<16x256xbf16>
    tpu.vector_store %arg9[%c0_62, %c2048], %106 {strides = array<i32>} : memref<16x6656xbf16, #tpu.memory_space<vmem>>, vector<16x256xbf16>,
    %c0_63 = arith.constant 0 : index
    %c9 = arith.constant 9 : index
    %108 = vector.load %arg1[%c0_63, %c9] : memref<16x128xf32, #tpu.memory_space<vmem>>, vector<16x1xf32>
    %109 = arith.truncf %108 : vector<16x1xf32> to vector<16x1xbf16>
    %c9_64 = arith.constant 9 : index
    %c0_65 = arith.constant 0 : index
    %110 = vector.load %arg2[%c9_64, %c0_65] : memref<26x256xbf16, #tpu.memory_space<vmem>>, vector<1x256xbf16>
    %111 = vector.broadcast %109 : vector<16x1xbf16> to vector<16x256xbf16>
    %112 = vector.broadcast %110 : vector<1x256xbf16> to vector<16x256xbf16>
    %113 = arith.mulf %111, %112 : vector<16x256xbf16>
    %c9_66 = arith.constant 9 : index
    %c0_67 = arith.constant 0 : index
    %114 = vector.load %arg3[%c9_66, %c0_67] : memref<26x256xbf16, #tpu.memory_space<vmem>>, vector<1x256xbf16>
    %115 = vector.broadcast %114 : vector<1x256xbf16> to vector<16x256xbf16>
    %116 = arith.addf %113, %115 : vector<16x256xbf16>
    %cst_68 = arith.constant 0.000000e+00 : bf16
    %117 = vector.broadcast %cst_68 : bf16 to vector<16x256xbf16>
    %118 = arith.maximumf %116, %117 : vector<16x256xbf16>
    %c0_69 = arith.constant 0 : index
    %c2304 = arith.constant 2304 : index
    %119 = vector.load %arg9[%c0_69, %c2304] : memref<16x6656xbf16, #tpu.memory_space<vmem>>, vector<16x256xbf16>
    tpu.vector_store %arg9[%c0_69, %c2304], %118 {strides = array<i32>} : memref<16x6656xbf16, #tpu.memory_space<vmem>>, vector<16x256xbf16>,
    %c0_70 = arith.constant 0 : index
    %c10 = arith.constant 10 : index
    %120 = vector.load %arg1[%c0_70, %c10] : memref<16x128xf32, #tpu.memory_space<vmem>>, vector<16x1xf32>
    %121 = arith.truncf %120 : vector<16x1xf32> to vector<16x1xbf16>
    %c10_71 = arith.constant 10 : index
    %c0_72 = arith.constant 0 : index
    %122 = vector.load %arg2[%c10_71, %c0_72] : memref<26x256xbf16, #tpu.memory_space<vmem>>, vector<1x256xbf16>
    %123 = vector.broadcast %121 : vector<16x1xbf16> to vector<16x256xbf16>
    %124 = vector.broadcast %122 : vector<1x256xbf16> to vector<16x256xbf16>
    %125 = arith.mulf %123, %124 : vector<16x256xbf16>
    %c10_73 = arith.constant 10 : index
    %c0_74 = arith.constant 0 : index
    %126 = vector.load %arg3[%c10_73, %c0_74] : memref<26x256xbf16, #tpu.memory_space<vmem>>, vector<1x256xbf16>
    %127 = vector.broadcast %126 : vector<1x256xbf16> to vector<16x256xbf16>
    %128 = arith.addf %125, %127 : vector<16x256xbf16>
    %cst_75 = arith.constant 0.000000e+00 : bf16
    %129 = vector.broadcast %cst_75 : bf16 to vector<16x256xbf16>
    %130 = arith.maximumf %128, %129 : vector<16x256xbf16>
    %c0_76 = arith.constant 0 : index
    %c2560 = arith.constant 2560 : index
    %131 = vector.load %arg9[%c0_76, %c2560] : memref<16x6656xbf16, #tpu.memory_space<vmem>>, vector<16x256xbf16>
    tpu.vector_store %arg9[%c0_76, %c2560], %130 {strides = array<i32>} : memref<16x6656xbf16, #tpu.memory_space<vmem>>, vector<16x256xbf16>,
    %c0_77 = arith.constant 0 : index
    %c11 = arith.constant 11 : index
    %132 = vector.load %arg1[%c0_77, %c11] : memref<16x128xf32, #tpu.memory_space<vmem>>, vector<16x1xf32>
    %133 = arith.truncf %132 : vector<16x1xf32> to vector<16x1xbf16>
    %c11_78 = arith.constant 11 : index
    %c0_79 = arith.constant 0 : index
    %134 = vector.load %arg2[%c11_78, %c0_79] : memref<26x256xbf16, #tpu.memory_space<vmem>>, vector<1x256xbf16>
    %135 = vector.broadcast %133 : vector<16x1xbf16> to vector<16x256xbf16>
    %136 = vector.broadcast %134 : vector<1x256xbf16> to vector<16x256xbf16>
    %137 = arith.mulf %135, %136 : vector<16x256xbf16>
    %c11_80 = arith.constant 11 : index
    %c0_81 = arith.constant 0 : index
    %138 = vector.load %arg3[%c11_80, %c0_81] : memref<26x256xbf16, #tpu.memory_space<vmem>>, vector<1x256xbf16>
    %139 = vector.broadcast %138 : vector<1x256xbf16> to vector<16x256xbf16>
    %140 = arith.addf %137, %139 : vector<16x256xbf16>
    %cst_82 = arith.constant 0.000000e+00 : bf16
    %141 = vector.broadcast %cst_82 : bf16 to vector<16x256xbf16>
    %142 = arith.maximumf %140, %141 : vector<16x256xbf16>
    %c0_83 = arith.constant 0 : index
    %c2816 = arith.constant 2816 : index
    %143 = vector.load %arg9[%c0_83, %c2816] : memref<16x6656xbf16, #tpu.memory_space<vmem>>, vector<16x256xbf16>
    tpu.vector_store %arg9[%c0_83, %c2816], %142 {strides = array<i32>} : memref<16x6656xbf16, #tpu.memory_space<vmem>>, vector<16x256xbf16>,
    %c0_84 = arith.constant 0 : index
    %c12 = arith.constant 12 : index
    %144 = vector.load %arg1[%c0_84, %c12] : memref<16x128xf32, #tpu.memory_space<vmem>>, vector<16x1xf32>
    %145 = arith.truncf %144 : vector<16x1xf32> to vector<16x1xbf16>
    %c12_85 = arith.constant 12 : index
    %c0_86 = arith.constant 0 : index
    %146 = vector.load %arg2[%c12_85, %c0_86] : memref<26x256xbf16, #tpu.memory_space<vmem>>, vector<1x256xbf16>
    %147 = vector.broadcast %145 : vector<16x1xbf16> to vector<16x256xbf16>
    %148 = vector.broadcast %146 : vector<1x256xbf16> to vector<16x256xbf16>
    %149 = arith.mulf %147, %148 : vector<16x256xbf16>
    %c12_87 = arith.constant 12 : index
    %c0_88 = arith.constant 0 : index
    %150 = vector.load %arg3[%c12_87, %c0_88] : memref<26x256xbf16, #tpu.memory_space<vmem>>, vector<1x256xbf16>
    %151 = vector.broadcast %150 : vector<1x256xbf16> to vector<16x256xbf16>
    %152 = arith.addf %149, %151 : vector<16x256xbf16>
    %cst_89 = arith.constant 0.000000e+00 : bf16
    %153 = vector.broadcast %cst_89 : bf16 to vector<16x256xbf16>
    %154 = arith.maximumf %152, %153 : vector<16x256xbf16>
    %c0_90 = arith.constant 0 : index
    %c3072 = arith.constant 3072 : index
    %155 = vector.load %arg9[%c0_90, %c3072] : memref<16x6656xbf16, #tpu.memory_space<vmem>>, vector<16x256xbf16>
    tpu.vector_store %arg9[%c0_90, %c3072], %154 {strides = array<i32>} : memref<16x6656xbf16, #tpu.memory_space<vmem>>, vector<16x256xbf16>,
    %c0_91 = arith.constant 0 : index
    %c13 = arith.constant 13 : index
    %156 = vector.load %arg1[%c0_91, %c13] : memref<16x128xf32, #tpu.memory_space<vmem>>, vector<16x1xf32>
    %157 = arith.truncf %156 : vector<16x1xf32> to vector<16x1xbf16>
    %c13_92 = arith.constant 13 : index
    %c0_93 = arith.constant 0 : index
    %158 = vector.load %arg2[%c13_92, %c0_93] : memref<26x256xbf16, #tpu.memory_space<vmem>>, vector<1x256xbf16>
    %159 = vector.broadcast %157 : vector<16x1xbf16> to vector<16x256xbf16>
    %160 = vector.broadcast %158 : vector<1x256xbf16> to vector<16x256xbf16>
    %161 = arith.mulf %159, %160 : vector<16x256xbf16>
    %c13_94 = arith.constant 13 : index
    %c0_95 = arith.constant 0 : index
    %162 = vector.load %arg3[%c13_94, %c0_95] : memref<26x256xbf16, #tpu.memory_space<vmem>>, vector<1x256xbf16>
    %163 = vector.broadcast %162 : vector<1x256xbf16> to vector<16x256xbf16>
    %164 = arith.addf %161, %163 : vector<16x256xbf16>
    %cst_96 = arith.constant 0.000000e+00 : bf16
    %165 = vector.broadcast %cst_96 : bf16 to vector<16x256xbf16>
    %166 = arith.maximumf %164, %165 : vector<16x256xbf16>
    %c0_97 = arith.constant 0 : index
    %c3328 = arith.constant 3328 : index
    %167 = vector.load %arg9[%c0_97, %c3328] : memref<16x6656xbf16, #tpu.memory_space<vmem>>, vector<16x256xbf16>
    tpu.vector_store %arg9[%c0_97, %c3328], %166 {strides = array<i32>} : memref<16x6656xbf16, #tpu.memory_space<vmem>>, vector<16x256xbf16>,
    %c0_98 = arith.constant 0 : index
    %c14 = arith.constant 14 : index
    %168 = vector.load %arg1[%c0_98, %c14] : memref<16x128xf32, #tpu.memory_space<vmem>>, vector<16x1xf32>
    %169 = arith.truncf %168 : vector<16x1xf32> to vector<16x1xbf16>
    %c14_99 = arith.constant 14 : index
    %c0_100 = arith.constant 0 : index
    %170 = vector.load %arg2[%c14_99, %c0_100] : memref<26x256xbf16, #tpu.memory_space<vmem>>, vector<1x256xbf16>
    %171 = vector.broadcast %169 : vector<16x1xbf16> to vector<16x256xbf16>
    %172 = vector.broadcast %170 : vector<1x256xbf16> to vector<16x256xbf16>
    %173 = arith.mulf %171, %172 : vector<16x256xbf16>
    %c14_101 = arith.constant 14 : index
    %c0_102 = arith.constant 0 : index
    %174 = vector.load %arg3[%c14_101, %c0_102] : memref<26x256xbf16, #tpu.memory_space<vmem>>, vector<1x256xbf16>
    %175 = vector.broadcast %174 : vector<1x256xbf16> to vector<16x256xbf16>
    %176 = arith.addf %173, %175 : vector<16x256xbf16>
    %cst_103 = arith.constant 0.000000e+00 : bf16
    %177 = vector.broadcast %cst_103 : bf16 to vector<16x256xbf16>
    %178 = arith.maximumf %176, %177 : vector<16x256xbf16>
    %c0_104 = arith.constant 0 : index
    %c3584 = arith.constant 3584 : index
    %179 = vector.load %arg9[%c0_104, %c3584] : memref<16x6656xbf16, #tpu.memory_space<vmem>>, vector<16x256xbf16>
    tpu.vector_store %arg9[%c0_104, %c3584], %178 {strides = array<i32>} : memref<16x6656xbf16, #tpu.memory_space<vmem>>, vector<16x256xbf16>,
    %c0_105 = arith.constant 0 : index
    %c15 = arith.constant 15 : index
    %180 = vector.load %arg1[%c0_105, %c15] : memref<16x128xf32, #tpu.memory_space<vmem>>, vector<16x1xf32>
    %181 = arith.truncf %180 : vector<16x1xf32> to vector<16x1xbf16>
    %c15_106 = arith.constant 15 : index
    %c0_107 = arith.constant 0 : index
    %182 = vector.load %arg2[%c15_106, %c0_107] : memref<26x256xbf16, #tpu.memory_space<vmem>>, vector<1x256xbf16>
    %183 = vector.broadcast %181 : vector<16x1xbf16> to vector<16x256xbf16>
    %184 = vector.broadcast %182 : vector<1x256xbf16> to vector<16x256xbf16>
    %185 = arith.mulf %183, %184 : vector<16x256xbf16>
    %c15_108 = arith.constant 15 : index
    %c0_109 = arith.constant 0 : index
    %186 = vector.load %arg3[%c15_108, %c0_109] : memref<26x256xbf16, #tpu.memory_space<vmem>>, vector<1x256xbf16>
    %187 = vector.broadcast %186 : vector<1x256xbf16> to vector<16x256xbf16>
    %188 = arith.addf %185, %187 : vector<16x256xbf16>
    %cst_110 = arith.constant 0.000000e+00 : bf16
    %189 = vector.broadcast %cst_110 : bf16 to vector<16x256xbf16>
    %190 = arith.maximumf %188, %189 : vector<16x256xbf16>
    %c0_111 = arith.constant 0 : index
    %c3840 = arith.constant 3840 : index
    %191 = vector.load %arg9[%c0_111, %c3840] : memref<16x6656xbf16, #tpu.memory_space<vmem>>, vector<16x256xbf16>
    tpu.vector_store %arg9[%c0_111, %c3840], %190 {strides = array<i32>} : memref<16x6656xbf16, #tpu.memory_space<vmem>>, vector<16x256xbf16>,
    %c0_112 = arith.constant 0 : index
    %c16 = arith.constant 16 : index
    %192 = vector.load %arg1[%c0_112, %c16] : memref<16x128xf32, #tpu.memory_space<vmem>>, vector<16x1xf32>
    %193 = arith.truncf %192 : vector<16x1xf32> to vector<16x1xbf16>
    %c16_113 = arith.constant 16 : index
    %c0_114 = arith.constant 0 : index
    %194 = vector.load %arg2[%c16_113, %c0_114] : memref<26x256xbf16, #tpu.memory_space<vmem>>, vector<1x256xbf16>
    %195 = vector.broadcast %193 : vector<16x1xbf16> to vector<16x256xbf16>
    %196 = vector.broadcast %194 : vector<1x256xbf16> to vector<16x256xbf16>
    %197 = arith.mulf %195, %196 : vector<16x256xbf16>
    %c16_115 = arith.constant 16 : index
    %c0_116 = arith.constant 0 : index
    %198 = vector.load %arg3[%c16_115, %c0_116] : memref<26x256xbf16, #tpu.memory_space<vmem>>, vector<1x256xbf16>
    %199 = vector.broadcast %198 : vector<1x256xbf16> to vector<16x256xbf16>
    %200 = arith.addf %197, %199 : vector<16x256xbf16>
    %cst_117 = arith.constant 0.000000e+00 : bf16
    %201 = vector.broadcast %cst_117 : bf16 to vector<16x256xbf16>
    %202 = arith.maximumf %200, %201 : vector<16x256xbf16>
    %c0_118 = arith.constant 0 : index
    %c4096 = arith.constant 4096 : index
    %203 = vector.load %arg9[%c0_118, %c4096] : memref<16x6656xbf16, #tpu.memory_space<vmem>>, vector<16x256xbf16>
    tpu.vector_store %arg9[%c0_118, %c4096], %202 {strides = array<i32>} : memref<16x6656xbf16, #tpu.memory_space<vmem>>, vector<16x256xbf16>,
    %c0_119 = arith.constant 0 : index
    %c17 = arith.constant 17 : index
    %204 = vector.load %arg1[%c0_119, %c17] : memref<16x128xf32, #tpu.memory_space<vmem>>, vector<16x1xf32>
    %205 = arith.truncf %204 : vector<16x1xf32> to vector<16x1xbf16>
    %c17_120 = arith.constant 17 : index
    %c0_121 = arith.constant 0 : index
    %206 = vector.load %arg2[%c17_120, %c0_121] : memref<26x256xbf16, #tpu.memory_space<vmem>>, vector<1x256xbf16>
    %207 = vector.broadcast %205 : vector<16x1xbf16> to vector<16x256xbf16>
    %208 = vector.broadcast %206 : vector<1x256xbf16> to vector<16x256xbf16>
    %209 = arith.mulf %207, %208 : vector<16x256xbf16>
    %c17_122 = arith.constant 17 : index
    %c0_123 = arith.constant 0 : index
    %210 = vector.load %arg3[%c17_122, %c0_123] : memref<26x256xbf16, #tpu.memory_space<vmem>>, vector<1x256xbf16>
    %211 = vector.broadcast %210 : vector<1x256xbf16> to vector<16x256xbf16>
    %212 = arith.addf %209, %211 : vector<16x256xbf16>
    %cst_124 = arith.constant 0.000000e+00 : bf16
    %213 = vector.broadcast %cst_124 : bf16 to vector<16x256xbf16>
    %214 = arith.maximumf %212, %213 : vector<16x256xbf16>
    %c0_125 = arith.constant 0 : index
    %c4352 = arith.constant 4352 : index
    %215 = vector.load %arg9[%c0_125, %c4352] : memref<16x6656xbf16, #tpu.memory_space<vmem>>, vector<16x256xbf16>
    tpu.vector_store %arg9[%c0_125, %c4352], %214 {strides = array<i32>} : memref<16x6656xbf16, #tpu.memory_space<vmem>>, vector<16x256xbf16>,
    %c0_126 = arith.constant 0 : index
    %c18 = arith.constant 18 : index
    %216 = vector.load %arg1[%c0_126, %c18] : memref<16x128xf32, #tpu.memory_space<vmem>>, vector<16x1xf32>
    %217 = arith.truncf %216 : vector<16x1xf32> to vector<16x1xbf16>
    %c18_127 = arith.constant 18 : index
    %c0_128 = arith.constant 0 : index
    %218 = vector.load %arg2[%c18_127, %c0_128] : memref<26x256xbf16, #tpu.memory_space<vmem>>, vector<1x256xbf16>
    %219 = vector.broadcast %217 : vector<16x1xbf16> to vector<16x256xbf16>
    %220 = vector.broadcast %218 : vector<1x256xbf16> to vector<16x256xbf16>
    %221 = arith.mulf %219, %220 : vector<16x256xbf16>
    %c18_129 = arith.constant 18 : index
    %c0_130 = arith.constant 0 : index
    %222 = vector.load %arg3[%c18_129, %c0_130] : memref<26x256xbf16, #tpu.memory_space<vmem>>, vector<1x256xbf16>
    %223 = vector.broadcast %222 : vector<1x256xbf16> to vector<16x256xbf16>
    %224 = arith.addf %221, %223 : vector<16x256xbf16>
    %cst_131 = arith.constant 0.000000e+00 : bf16
    %225 = vector.broadcast %cst_131 : bf16 to vector<16x256xbf16>
    %226 = arith.maximumf %224, %225 : vector<16x256xbf16>
    %c0_132 = arith.constant 0 : index
    %c4608 = arith.constant 4608 : index
    %227 = vector.load %arg9[%c0_132, %c4608] : memref<16x6656xbf16, #tpu.memory_space<vmem>>, vector<16x256xbf16>
    tpu.vector_store %arg9[%c0_132, %c4608], %226 {strides = array<i32>} : memref<16x6656xbf16, #tpu.memory_space<vmem>>, vector<16x256xbf16>,
    %c0_133 = arith.constant 0 : index
    %c19 = arith.constant 19 : index
    %228 = vector.load %arg1[%c0_133, %c19] : memref<16x128xf32, #tpu.memory_space<vmem>>, vector<16x1xf32>
    %229 = arith.truncf %228 : vector<16x1xf32> to vector<16x1xbf16>
    %c19_134 = arith.constant 19 : index
    %c0_135 = arith.constant 0 : index
    %230 = vector.load %arg2[%c19_134, %c0_135] : memref<26x256xbf16, #tpu.memory_space<vmem>>, vector<1x256xbf16>
    %231 = vector.broadcast %229 : vector<16x1xbf16> to vector<16x256xbf16>
    %232 = vector.broadcast %230 : vector<1x256xbf16> to vector<16x256xbf16>
    %233 = arith.mulf %231, %232 : vector<16x256xbf16>
    %c19_136 = arith.constant 19 : index
    %c0_137 = arith.constant 0 : index
    %234 = vector.load %arg3[%c19_136, %c0_137] : memref<26x256xbf16, #tpu.memory_space<vmem>>, vector<1x256xbf16>
    %235 = vector.broadcast %234 : vector<1x256xbf16> to vector<16x256xbf16>
    %236 = arith.addf %233, %235 : vector<16x256xbf16>
    %cst_138 = arith.constant 0.000000e+00 : bf16
    %237 = vector.broadcast %cst_138 : bf16 to vector<16x256xbf16>
    %238 = arith.maximumf %236, %237 : vector<16x256xbf16>
    %c0_139 = arith.constant 0 : index
    %c4864 = arith.constant 4864 : index
    %239 = vector.load %arg9[%c0_139, %c4864] : memref<16x6656xbf16, #tpu.memory_space<vmem>>, vector<16x256xbf16>
    tpu.vector_store %arg9[%c0_139, %c4864], %238 {strides = array<i32>} : memref<16x6656xbf16, #tpu.memory_space<vmem>>, vector<16x256xbf16>,
    %c0_140 = arith.constant 0 : index
    %c20 = arith.constant 20 : index
    %240 = vector.load %arg1[%c0_140, %c20] : memref<16x128xf32, #tpu.memory_space<vmem>>, vector<16x1xf32>
    %241 = arith.truncf %240 : vector<16x1xf32> to vector<16x1xbf16>
    %c20_141 = arith.constant 20 : index
    %c0_142 = arith.constant 0 : index
    %242 = vector.load %arg2[%c20_141, %c0_142] : memref<26x256xbf16, #tpu.memory_space<vmem>>, vector<1x256xbf16>
    %243 = vector.broadcast %241 : vector<16x1xbf16> to vector<16x256xbf16>
    %244 = vector.broadcast %242 : vector<1x256xbf16> to vector<16x256xbf16>
    %245 = arith.mulf %243, %244 : vector<16x256xbf16>
    %c20_143 = arith.constant 20 : index
    %c0_144 = arith.constant 0 : index
    %246 = vector.load %arg3[%c20_143, %c0_144] : memref<26x256xbf16, #tpu.memory_space<vmem>>, vector<1x256xbf16>
    %247 = vector.broadcast %246 : vector<1x256xbf16> to vector<16x256xbf16>
    %248 = arith.addf %245, %247 : vector<16x256xbf16>
    %cst_145 = arith.constant 0.000000e+00 : bf16
    %249 = vector.broadcast %cst_145 : bf16 to vector<16x256xbf16>
    %250 = arith.maximumf %248, %249 : vector<16x256xbf16>
    %c0_146 = arith.constant 0 : index
    %c5120 = arith.constant 5120 : index
    %251 = vector.load %arg9[%c0_146, %c5120] : memref<16x6656xbf16, #tpu.memory_space<vmem>>, vector<16x256xbf16>
    tpu.vector_store %arg9[%c0_146, %c5120], %250 {strides = array<i32>} : memref<16x6656xbf16, #tpu.memory_space<vmem>>, vector<16x256xbf16>,
    %c0_147 = arith.constant 0 : index
    %c21 = arith.constant 21 : index
    %252 = vector.load %arg1[%c0_147, %c21] : memref<16x128xf32, #tpu.memory_space<vmem>>, vector<16x1xf32>
    %253 = arith.truncf %252 : vector<16x1xf32> to vector<16x1xbf16>
    %c21_148 = arith.constant 21 : index
    %c0_149 = arith.constant 0 : index
    %254 = vector.load %arg2[%c21_148, %c0_149] : memref<26x256xbf16, #tpu.memory_space<vmem>>, vector<1x256xbf16>
    %255 = vector.broadcast %253 : vector<16x1xbf16> to vector<16x256xbf16>
    %256 = vector.broadcast %254 : vector<1x256xbf16> to vector<16x256xbf16>
    %257 = arith.mulf %255, %256 : vector<16x256xbf16>
    %c21_150 = arith.constant 21 : index
    %c0_151 = arith.constant 0 : index
    %258 = vector.load %arg3[%c21_150, %c0_151] : memref<26x256xbf16, #tpu.memory_space<vmem>>, vector<1x256xbf16>
    %259 = vector.broadcast %258 : vector<1x256xbf16> to vector<16x256xbf16>
    %260 = arith.addf %257, %259 : vector<16x256xbf16>
    %cst_152 = arith.constant 0.000000e+00 : bf16
    %261 = vector.broadcast %cst_152 : bf16 to vector<16x256xbf16>
    %262 = arith.maximumf %260, %261 : vector<16x256xbf16>
    %c0_153 = arith.constant 0 : index
    %c5376 = arith.constant 5376 : index
    %263 = vector.load %arg9[%c0_153, %c5376] : memref<16x6656xbf16, #tpu.memory_space<vmem>>, vector<16x256xbf16>
    tpu.vector_store %arg9[%c0_153, %c5376], %262 {strides = array<i32>} : memref<16x6656xbf16, #tpu.memory_space<vmem>>, vector<16x256xbf16>,
    %c0_154 = arith.constant 0 : index
    %c22 = arith.constant 22 : index
    %264 = vector.load %arg1[%c0_154, %c22] : memref<16x128xf32, #tpu.memory_space<vmem>>, vector<16x1xf32>
    %265 = arith.truncf %264 : vector<16x1xf32> to vector<16x1xbf16>
    %c22_155 = arith.constant 22 : index
    %c0_156 = arith.constant 0 : index
    %266 = vector.load %arg2[%c22_155, %c0_156] : memref<26x256xbf16, #tpu.memory_space<vmem>>, vector<1x256xbf16>
    %267 = vector.broadcast %265 : vector<16x1xbf16> to vector<16x256xbf16>
    %268 = vector.broadcast %266 : vector<1x256xbf16> to vector<16x256xbf16>
    %269 = arith.mulf %267, %268 : vector<16x256xbf16>
    %c22_157 = arith.constant 22 : index
    %c0_158 = arith.constant 0 : index
    %270 = vector.load %arg3[%c22_157, %c0_158] : memref<26x256xbf16, #tpu.memory_space<vmem>>, vector<1x256xbf16>
    %271 = vector.broadcast %270 : vector<1x256xbf16> to vector<16x256xbf16>
    %272 = arith.addf %269, %271 : vector<16x256xbf16>
    %cst_159 = arith.constant 0.000000e+00 : bf16
    %273 = vector.broadcast %cst_159 : bf16 to vector<16x256xbf16>
    %274 = arith.maximumf %272, %273 : vector<16x256xbf16>
    %c0_160 = arith.constant 0 : index
    %c5632 = arith.constant 5632 : index
    %275 = vector.load %arg9[%c0_160, %c5632] : memref<16x6656xbf16, #tpu.memory_space<vmem>>, vector<16x256xbf16>
    tpu.vector_store %arg9[%c0_160, %c5632], %274 {strides = array<i32>} : memref<16x6656xbf16, #tpu.memory_space<vmem>>, vector<16x256xbf16>,
    %c0_161 = arith.constant 0 : index
    %c23 = arith.constant 23 : index
    %276 = vector.load %arg1[%c0_161, %c23] : memref<16x128xf32, #tpu.memory_space<vmem>>, vector<16x1xf32>
    %277 = arith.truncf %276 : vector<16x1xf32> to vector<16x1xbf16>
    %c23_162 = arith.constant 23 : index
    %c0_163 = arith.constant 0 : index
    %278 = vector.load %arg2[%c23_162, %c0_163] : memref<26x256xbf16, #tpu.memory_space<vmem>>, vector<1x256xbf16>
    %279 = vector.broadcast %277 : vector<16x1xbf16> to vector<16x256xbf16>
    %280 = vector.broadcast %278 : vector<1x256xbf16> to vector<16x256xbf16>
    %281 = arith.mulf %279, %280 : vector<16x256xbf16>
    %c23_164 = arith.constant 23 : index
    %c0_165 = arith.constant 0 : index
    %282 = vector.load %arg3[%c23_164, %c0_165] : memref<26x256xbf16, #tpu.memory_space<vmem>>, vector<1x256xbf16>
    %283 = vector.broadcast %282 : vector<1x256xbf16> to vector<16x256xbf16>
    %284 = arith.addf %281, %283 : vector<16x256xbf16>
    %cst_166 = arith.constant 0.000000e+00 : bf16
    %285 = vector.broadcast %cst_166 : bf16 to vector<16x256xbf16>
    %286 = arith.maximumf %284, %285 : vector<16x256xbf16>
    %c0_167 = arith.constant 0 : index
    %c5888 = arith.constant 5888 : index
    %287 = vector.load %arg9[%c0_167, %c5888] : memref<16x6656xbf16, #tpu.memory_space<vmem>>, vector<16x256xbf16>
    tpu.vector_store %arg9[%c0_167, %c5888], %286 {strides = array<i32>} : memref<16x6656xbf16, #tpu.memory_space<vmem>>, vector<16x256xbf16>,
    %c0_168 = arith.constant 0 : index
    %c24 = arith.constant 24 : index
    %288 = vector.load %arg1[%c0_168, %c24] : memref<16x128xf32, #tpu.memory_space<vmem>>, vector<16x1xf32>
    %289 = arith.truncf %288 : vector<16x1xf32> to vector<16x1xbf16>
    %c24_169 = arith.constant 24 : index
    %c0_170 = arith.constant 0 : index
    %290 = vector.load %arg2[%c24_169, %c0_170] : memref<26x256xbf16, #tpu.memory_space<vmem>>, vector<1x256xbf16>
    %291 = vector.broadcast %289 : vector<16x1xbf16> to vector<16x256xbf16>
    %292 = vector.broadcast %290 : vector<1x256xbf16> to vector<16x256xbf16>
    %293 = arith.mulf %291, %292 : vector<16x256xbf16>
    %c24_171 = arith.constant 24 : index
    %c0_172 = arith.constant 0 : index
    %294 = vector.load %arg3[%c24_171, %c0_172] : memref<26x256xbf16, #tpu.memory_space<vmem>>, vector<1x256xbf16>
    %295 = vector.broadcast %294 : vector<1x256xbf16> to vector<16x256xbf16>
    %296 = arith.addf %293, %295 : vector<16x256xbf16>
    %cst_173 = arith.constant 0.000000e+00 : bf16
    %297 = vector.broadcast %cst_173 : bf16 to vector<16x256xbf16>
    %298 = arith.maximumf %296, %297 : vector<16x256xbf16>
    %c0_174 = arith.constant 0 : index
    %c6144 = arith.constant 6144 : index
    %299 = vector.load %arg9[%c0_174, %c6144] : memref<16x6656xbf16, #tpu.memory_space<vmem>>, vector<16x256xbf16>
    tpu.vector_store %arg9[%c0_174, %c6144], %298 {strides = array<i32>} : memref<16x6656xbf16, #tpu.memory_space<vmem>>, vector<16x256xbf16>,
    %c0_175 = arith.constant 0 : index
    %c25 = arith.constant 25 : index
    %300 = vector.load %arg1[%c0_175, %c25] : memref<16x128xf32, #tpu.memory_space<vmem>>, vector<16x1xf32>
    %301 = arith.truncf %300 : vector<16x1xf32> to vector<16x1xbf16>
    %c25_176 = arith.constant 25 : index
    %c0_177 = arith.constant 0 : index
    %302 = vector.load %arg2[%c25_176, %c0_177] : memref<26x256xbf16, #tpu.memory_space<vmem>>, vector<1x256xbf16>
    %303 = vector.broadcast %301 : vector<16x1xbf16> to vector<16x256xbf16>
    %304 = vector.broadcast %302 : vector<1x256xbf16> to vector<16x256xbf16>
    %305 = arith.mulf %303, %304 : vector<16x256xbf16>
    %c25_178 = arith.constant 25 : index
    %c0_179 = arith.constant 0 : index
    %306 = vector.load %arg3[%c25_178, %c0_179] : memref<26x256xbf16, #tpu.memory_space<vmem>>, vector<1x256xbf16>
    %307 = vector.broadcast %306 : vector<1x256xbf16> to vector<16x256xbf16>
    %308 = arith.addf %305, %307 : vector<16x256xbf16>
    %cst_180 = arith.constant 0.000000e+00 : bf16
    %309 = vector.broadcast %cst_180 : bf16 to vector<16x256xbf16>
    %310 = arith.maximumf %308, %309 : vector<16x256xbf16>
    %c0_181 = arith.constant 0 : index
    %c6400 = arith.constant 6400 : index
    %311 = vector.load %arg9[%c0_181, %c6400] : memref<16x6656xbf16, #tpu.memory_space<vmem>>, vector<16x256xbf16>
    tpu.vector_store %arg9[%c0_181, %c6400], %310 {strides = array<i32>} : memref<16x6656xbf16, #tpu.memory_space<vmem>>, vector<16x256xbf16>,
    %c0_182 = arith.constant 0 : index
    %c0_183 = arith.constant 0 : index
    %312 = vector.load %arg9[%c0_182, %c0_183] : memref<16x6656xbf16, #tpu.memory_space<vmem>>, vector<16x6656xbf16>
    %c0_184 = arith.constant 0 : index
    %c0_185 = arith.constant 0 : index
    %313 = vector.load %arg4[%c0_184, %c0_185] : memref<6656x256xbf16, #tpu.memory_space<vmem>>, vector<6656x256xbf16>
    %cst_186 = arith.constant dense<0.000000e+00> : vector<16x256xf32>
    %314 = tpu.matmul %312, %313, %cst_186 {dimension_numbers = #tpu.dot_dimension_numbers<[1], [0], [0], [1], [0, 0, 1, 1], [], []>} : vector<16x6656xbf16>, vector<6656x256xbf16>, vector<16x256xf32> -> vector<16x256xf32>
    %c0_187 = arith.constant 0 : index
    %c0_188 = arith.constant 0 : index
    %315 = vector.load %arg5[%c0_187, %c0_188] : memref<1x256xf32, #tpu.memory_space<vmem>>, vector<1x256xf32>
    %316 = vector.broadcast %315 : vector<1x256xf32> to vector<16x256xf32>
    %317 = arith.addf %314, %316 : vector<16x256xf32>
    %318 = arith.truncf %317 : vector<16x256xf32> to vector<16x256xbf16>
    %c0_189 = arith.constant 0 : index
    %c0_190 = arith.constant 0 : index
    %319 = vector.load %arg6[%c0_189, %c0_190] : memref<256x128xbf16, #tpu.memory_space<vmem>>, vector<256x128xbf16>
    %cst_191 = arith.constant dense<0.000000e+00> : vector<16x128xf32>
    %320 = tpu.matmul %318, %319, %cst_191 {dimension_numbers = #tpu.dot_dimension_numbers<[1], [0], [0], [1], [0, 0, 1, 1], [], []>} : vector<16x256xbf16>, vector<256x128xbf16>, vector<16x128xf32> -> vector<16x128xf32>
    %c0_192 = arith.constant 0 : index
    %c0_193 = arith.constant 0 : index
    %321 = vector.load %arg7[%c0_192, %c0_193] : memref<1x128xf32, #tpu.memory_space<vmem>>, vector<1x128xf32>
    %322 = vector.broadcast %321 : vector<1x128xf32> to vector<16x128xf32>
    %323 = arith.addf %320, %322 : vector<16x128xf32>
    %c0_194 = arith.constant 0 : index
    %c0_195 = arith.constant 0 : index
    %324 = vector.load %arg8[%c0_194, %c0_195] : memref<16x128xf32, #tpu.memory_space<vmem>>, vector<16x128xf32>
    tpu.vector_store %arg8[%c0_194, %c0_195], %323 {strides = array<i32>} : memref<16x128xf32, #tpu.memory_space<vmem>>, vector<16x128xf32>,
    return
  }
  func.func @transform_0(%arg0: i32) -> (i32, i32) {
    %c0_i32 = arith.constant 0 : i32
    %c0_i32_0 = arith.constant 0 : i32
    return %arg0, %c0_i32 : i32, i32
  }
  func.func @transform_1(%arg0: i32) -> (i32, i32) {
    %c0_i32 = arith.constant 0 : i32
    %c0_i32_0 = arith.constant 0 : i32
    %c0_i32_1 = arith.constant 0 : i32
    return %c0_i32, %c0_i32_0 : i32, i32
  }
  func.func @transform_2(%arg0: i32) -> (i32, i32) {
    %c0_i32 = arith.constant 0 : i32
    %c0_i32_0 = arith.constant 0 : i32
    %c0_i32_1 = arith.constant 0 : i32
    return %c0_i32, %c0_i32_0 : i32, i32
  }
  func.func @transform_3(%arg0: i32) -> (i32, i32) {
    %c0_i32 = arith.constant 0 : i32
    %c0_i32_0 = arith.constant 0 : i32
    %c0_i32_1 = arith.constant 0 : i32
    return %c0_i32, %c0_i32_0 : i32, i32
  }
  func.func @transform_4(%arg0: i32) -> (i32, i32) {
    %c0_i32 = arith.constant 0 : i32
    %c0_i32_0 = arith.constant 0 : i32
    %c0_i32_1 = arith.constant 0 : i32
    return %c0_i32, %c0_i32_0 : i32, i32
  }
  func.func @transform_5(%arg0: i32) -> (i32, i32) {
    %c0_i32 = arith.constant 0 : i32
    %c0_i32_0 = arith.constant 0 : i32
    %c0_i32_1 = arith.constant 0 : i32
    return %c0_i32, %c0_i32_0 : i32, i32
  }
  func.func @transform_6(%arg0: i32) -> (i32, i32) {
    %c0_i32 = arith.constant 0 : i32
    %c0_i32_0 = arith.constant 0 : i32
    %c0_i32_1 = arith.constant 0 : i32
    return %c0_i32, %c0_i32_0 : i32, i32
  }
  func.func @transform_7(%arg0: i32) -> (i32, i32) {
    %c0_i32 = arith.constant 0 : i32
    %c0_i32_0 = arith.constant 0 : i32
    return %arg0, %c0_i32 : i32, i32
  }
}

</mosaic_0001>

<llo_original>
// kernel: critic_forward.1
$region0: #{critic_forward.1}
  #allocation0 [shape = 'u32[]', space=smem, size = 0x4, offset = 0x4, fixed_abs, tag = 'smem constant byte address 0x4 - core index']
  #allocation1 [shape = 'u32[144,128]{1,0:T(1,128)}', space=vmem, size = 0x12000, scoped, tag = 'internal scratch']
  #allocation2 [shape = 'bf16[16,6656]{1,0:T(8,128)(2,1)}', space=vmem, size = 0x34000, scoped, tag = 'scratch operand']
  %s0 = inlined_call_operand.vmem [shape: f32[16,128], index: 0, kind: input, shape index: {}]
  %s1 = inlined_call_operand.hbm [shape: bf16[26,256], index: 1, kind: input, shape index: {}]
  %s2 = inlined_call_operand.hbm [shape: bf16[26,256], index: 2, kind: input, shape index: {}]
  %s3 = inlined_call_operand.hbm [shape: bf16[6656,256], index: 3, kind: input, shape index: {}]
  %s4 = inlined_call_operand.hbm [shape: f32[1,256], index: 4, kind: input, shape index: {}]
  %s5 = inlined_call_operand.hbm [shape: bf16[256,128], index: 5, kind: input, shape index: {}]
  %s6 = inlined_call_operand.hbm [shape: f32[1,128], index: 6, kind: input, shape index: {}]
  %s7 = inlined_call_operand.vmem [shape: f32[16,128], index: 7, kind: output, shape index: {}]
  %s8 = sld [smem:[#allocation0]]
  $region62: #{critic_forward.1} parent=0
    _
  %s10 = ssub.s32 1, %s8
  %s11 = scalar_select 0, %s10, %s8
  $region1: #{critic_forward.1} parent=0
    #allocation3 [shape = 'u8[16384]{0}', space=vmem, size = 0x4000, scoped, tag = 'input window, operand 1, single buffered']
    #allocation4 [shape = 's32[1]{0}', space=sflag, size = 0x4, scoped, tag = 'scoped memory for critic_forward.1']
    #allocation5 [shape = 'u8[16384]{0}', space=vmem, size = 0x4000, scoped, tag = 'input window, operand 2, single buffered']
    #allocation6 [shape = 's32[1]{0}', space=sflag, size = 0x4, scoped, tag = 'scoped memory for critic_forward.1']
    #allocation7 [shape = 'u8[3407872]{0}', space=vmem, size = 0x340000, scoped, tag = 'input window, operand 3, single buffered']
    #allocation8 [shape = 'u8[1024]{0}', space=vmem, size = 0x400, scoped, tag = 'input window, operand 4, single buffered']
    #allocation9 [shape = 's32[1]{0}', space=sflag, size = 0x4, scoped, tag = 'scoped memory for critic_forward.1']
    #allocation10 [shape = 'u8[65536]{0}', space=vmem, size = 0x10000, scoped, tag = 'input window, operand 5, single buffered']
    #allocation11 [shape = 'u8[512]{0}', space=vmem, size = 0x400, scoped, tag = 'input window, operand 6, single buffered']
    #allocation12 [shape = 's32[1]{0}', space=sflag, size = 0x4, scoped, tag = 'scoped memory for critic_forward.1']
    %12 = vsyncpa [#allocation4], 0
    %13 = vsyncpa [#allocation6], 0
    %14 = vsyncpa [#allocation9], 0
    %15 = vsyncpa [#allocation12], 0
    // Predicated region
    $region2: #{critic_forward.1} parent=1 // pred_check
      _
    $region3: #{critic_forward.1} parent=1 // pred_check_branch
      %17 = sbr.rel (0) target = $region5
    $region4: #{critic_forward.1} parent=1 // pred_region
      _
    $region5: #{critic_forward.1} parent=1 // pred_fallthru
      _
    // Predicated region
    $region6: #{critic_forward.1} parent=1 // pred_check
      _
    $region7: #{critic_forward.1} parent=1 // pred_check_branch
      %19 = sbr.rel (0) target = $region9
    $region8: #{critic_forward.1} parent=1 // pred_region
      %s21 = ssub.s32 512, 512
      %22 = vsyncadd [#allocation4], %s21
      %s23 = sshll.u32 [#allocation3], 4
      %s24 = int_to_ptr.vmem [resolvable:$true] %s23
      %29 = dma.hbm_to_vmem [thread:$0]  %s1, 512, %s24, [#allocation4], 128, 128, 8
    $region9: #{critic_forward.1} parent=1 // pred_fallthru
      _
    // Predicated region
    $region10: #{critic_forward.1} parent=1 // pred_check
      _
    $region11: #{critic_forward.1} parent=1 // pred_check_branch
      %31 = sbr.rel (0) target = $region13
    $region12: #{critic_forward.1} parent=1 // pred_region
      %s33 = ssub.s32 512, 512
      %34 = vsyncadd [#allocation6], %s33
      %s35 = sshll.u32 [#allocation5], 4
      %s36 = int_to_ptr.vmem [resolvable:$true] %s35
      %41 = dma.hbm_to_vmem [thread:$0]  %s2, 512, %s36, [#allocation6], 128, 128, 8
    $region13: #{critic_forward.1} parent=1 // pred_fallthru
      _
    // Predicated region
    $region14: #{critic_forward.1} parent=1 // pred_check
      _
    $region15: #{critic_forward.1} parent=1 // pred_check_branch
      %43 = sbr.rel (0) target = $region17
    $region16: #{critic_forward.1} parent=1 // pred_region
      %s45 = ssub.s32 106496, 106496
      %46 = vsyncadd [#allocation6], %s45
      %s47 = sshll.u32 [#allocation7], 4
      %s48 = int_to_ptr.vmem [resolvable:$true] %s47
      %53 = dma.hbm_to_vmem [thread:$0]  %s3, 106496, %s48, [#allocation6], 128, 128, 8
    $region17: #{critic_forward.1} parent=1 // pred_fallthru
      _
    // Predicated region
    $region18: #{critic_forward.1} parent=1 // pred_check
      _
    $region19: #{critic_forward.1} parent=1 // pred_check_branch
      %55 = sbr.rel (0) target = $region21
    $region20: #{critic_forward.1} parent=1 // pred_region
      %s57 = ssub.s32 32, 32
      %58 = vsyncadd [#allocation9], %s57
      %s60 = sshll.u32 [#allocation8], 4
      %s61 = int_to_ptr.vmem [resolvable:$true] %s60
      %63 = dma.hbm_to_vmem [thread:$0]  %s4, 32, %s61, [#allocation9]
    $region21: #{critic_forward.1} parent=1 // pred_fallthru
      _
    // Predicated region
    $region22: #{critic_forward.1} parent=1 // pred_check
      _
    $region23: #{critic_forward.1} parent=1 // pred_check_branch
      %65 = sbr.rel (0) target = $region25
    $region24: #{critic_forward.1} parent=1 // pred_region
      %s67 = ssub.s32 2048, 2048
      %68 = vsyncadd [#allocation9], %s67
      %s69 = sshll.u32 [#allocation10], 4
      %s70 = int_to_ptr.vmem [resolvable:$true] %s69
      %75 = dma.hbm_to_vmem [thread:$0]  %s5, 2048, %s70, [#allocation9], 64, 64, 4
    $region25: #{critic_forward.1} parent=1 // pred_fallthru
      _
    // Predicated region
    $region26: #{critic_forward.1} parent=1 // pred_check
      _
    $region27: #{critic_forward.1} parent=1 // pred_check_branch
      %77 = sbr.rel (0) target = $region29
    $region28: #{critic_forward.1} parent=1 // pred_region
      %s79 = ssub.s32 16, 16
      %80 = vsyncadd [#allocation12], %s79
      %s82 = sshll.u32 [#allocation11], 4
      %s83 = int_to_ptr.vmem [resolvable:$true] %s82
      %85 = dma.hbm_to_vmem [thread:$0]  %s6, 16, %s83, [#allocation12]
    $region29: #{critic_forward.1} parent=1 // pred_fallthru
      _
    // Predicated region
    $region30: #{critic_forward.1} parent=1 // pred_check
      _
    $region31: #{critic_forward.1} parent=1 // pred_check_branch
      %87 = sbr.rel (0) target = $region33
    $region32: #{critic_forward.1} parent=1 // pred_region
      %88 = dma.done [#allocation4], 512
    $region33: #{critic_forward.1} parent=1 // pred_fallthru
      _
    // Predicated region
    $region34: #{critic_forward.1} parent=1 // pred_check
      _
    $region35: #{critic_forward.1} parent=1 // pred_check_branch
      %90 = sbr.rel (0) target = $region37
    $region36: #{critic_forward.1} parent=1 // pred_region
      %91 = dma.done [#allocation6], 512
    $region37: #{critic_forward.1} parent=1 // pred_fallthru
      _
    // Predicated region
    $region38: #{critic_forward.1} parent=1 // pred_check
      _
    $region39: #{critic_forward.1} parent=1 // pred_check_branch
      %93 = sbr.rel (0) target = $region41
    $region40: #{critic_forward.1} parent=1 // pred_region
      %94 = dma.done [#allocation6], 106496
    $region41: #{critic_forward.1} parent=1 // pred_fallthru
      _
    // Predicated region
    $region42: #{critic_forward.1} parent=1 // pred_check
      _
    $region43: #{critic_forward.1} parent=1 // pred_check_branch
      %96 = sbr.rel (0) target = $region45
    $region44: #{critic_forward.1} parent=1 // pred_region
      %97 = dma.done [#allocation9], 32
    $region45: #{critic_forward.1} parent=1 // pred_fallthru
      _
    // Predicated region
    $region46: #{critic_forward.1} parent=1 // pred_check
      _
    $region47: #{critic_forward.1} parent=1 // pred_check_branch
      %99 = sbr.rel (0) target = $region49
    $region48: #{critic_forward.1} parent=1 // pred_region
      %100 = dma.done [#allocation9], 2048
    $region49: #{critic_forward.1} parent=1 // pred_fallthru
      _
    // Predicated region
    $region50: #{critic_forward.1} parent=1 // pred_check
      _
    $region51: #{critic_forward.1} parent=1 // pred_check_branch
      %102 = sbr.rel (0) target = $region53
    $region52: #{critic_forward.1} parent=1 // pred_region
      %103 = dma.done [#allocation12], 16
    $region53: #{critic_forward.1} parent=1 // pred_fallthru
      _
    %v105 = vld [vmem:[%s0] sm:$0xff]
    %v106 = vld [vmem:[%s0 + $0x8] sm:$0xff]
    %v107 = vpack.c.bf16 %v106, %v105
    %v108 = vld [vmem:[#allocation3] sm:$0x11]
    %110 = vset.pattern.permute.xlu0 0
    %111 = vperm.xlu0 %110, %v107
    %v112 = vpop.permute.xlu0 %111
    %v115 = vunpack.c.l.b16 %v108
    %v116 = vunpack.c.h.b16 %v108
    %v117 = vpack.c.b16 %v115, %v115
    %v118 = vpack.c.b16 %v116, %v116
    %v120 = vpack.i.b16 %v117, %v117
    %v122 = vlaneseq
    %v123 = vshrl.u32 %v122, 7
    %v124 = vsub.s32 0, %v123
    %v125 = vrot.slane %v120, %v124
    %v127 = vpack.i.b16 %v118, %v118
    %v129 = vlaneseq
    %v130 = vshrl.u32 %v129, 7
    %v131 = vsub.s32 0, %v130
    %v132 = vrot.slane %v127, %v131
    %v133 = vmul.bf16 %v112, %v125
    %v134 = vmul.bf16 %v112, %v132
    %v135 = vld [vmem:[#allocation5] sm:$0x11]
    %v137 = vunpack.c.l.b16 %v135
    %v138 = vunpack.c.h.b16 %v135
    %v139 = vpack.c.b16 %v137, %v137
    %v140 = vpack.c.b16 %v138, %v138
    %v142 = vpack.i.b16 %v139, %v139
    %v144 = vlaneseq
    %v145 = vshrl.u32 %v144, 7
    %v146 = vsub.s32 0, %v145
    %v147 = vrot.slane %v142, %v146
    %v149 = vpack.i.b16 %v140, %v140
    %v151 = vlaneseq
    %v152 = vshrl.u32 %v151, 7
    %v153 = vsub.s32 0, %v152
    %v154 = vrot.slane %v149, %v153
    %v155 = vadd.bf16 %v133, %v147
    %v156 = vadd.bf16 %v134, %v154
    %v157 = vmax.bf16 %v155, 0
    %v158 = vmax.bf16 %v156, 0
    %v161 = vunpack.c.l.b16 %v157
    %v162 = vunpack.c.l.b16 %v158
    %v163 = vunpack.c.h.b16 %v157
    %v164 = vunpack.c.h.b16 %v158
    %v165 = vpack.c.b16 %v162, %v161
    %v166 = vpack.c.b16 %v164, %v163
    %169 = vst [vmem:[#allocation2] sm:$0xff] %v165
    %170 = vst [vmem:[#allocation2 + $0xd0] sm:$0xff] %v166
    %v171 = vld [vmem:[%s0] sm:$0xff]
    %v172 = vld [vmem:[%s0 + $0x8] sm:$0xff]
    %v173 = vpack.c.bf16 %v172, %v171
    %v174 = vld [vmem:[#allocation3] sm:$0x11]
    %176 = vset.pattern.permute.xlu0 1
    %177 = vperm.xlu0 %176, %v173
    %v178 = vpop.permute.xlu0 %177
    %v181 = vunpack.c.l.b16 %v174
    %v182 = vunpack.c.h.b16 %v174
    %v183 = vpack.c.b16 %v181, %v181
    %v184 = vpack.c.b16 %v182, %v182
    %v186 = vshrl.u32 %v183, 16
    %v187 = vpack.i.b16 %v186, %v186
    %v189 = vlaneseq
    %v190 = vshrl.u32 %v189, 7
    %v191 = vsub.s32 0, %v190
    %v192 = vrot.slane %v187, %v191
    %v194 = vshrl.u32 %v184, 16
    %v195 = vpack.i.b16 %v194, %v194
    %v197 = vlaneseq
    %v198 = vshrl.u32 %v197, 7
    %v199 = vsub.s32 0, %v198
    %v200 = vrot.slane %v195, %v199
    %v201 = vmul.bf16 %v178, %v192
    %v202 = vmul.bf16 %v178, %v200
    %v203 = vld [vmem:[#allocation5] sm:$0x11]
    %v205 = vunpack.c.l.b16 %v203
    %v206 = vunpack.c.h.b16 %v203
    %v207 = vpack.c.b16 %v205, %v205
    %v208 = vpack.c.b16 %v206, %v206
    %v210 = vshrl.u32 %v207, 16
    %v211 = vpack.i.b16 %v210, %v210
    %v213 = vlaneseq
    %v214 = vshrl.u32 %v213, 7
    %v215 = vsub.s32 0, %v214
    %v216 = vrot.slane %v211, %v215
    %v218 = vshrl.u32 %v208, 16
    %v219 = vpack.i.b16 %v218, %v218
    %v221 = vlaneseq
    %v222 = vshrl.u32 %v221, 7
    %v223 = vsub.s32 0, %v222
    %v224 = vrot.slane %v219, %v223
    %v225 = vadd.bf16 %v201, %v216
    %v226 = vadd.bf16 %v202, %v224
    %v227 = vmax.bf16 %v225, 0
    %v228 = vmax.bf16 %v226, 0
    %v231 = vunpack.c.l.b16 %v227
    %v232 = vunpack.c.l.b16 %v228
    %v233 = vunpack.c.h.b16 %v227
    %v234 = vunpack.c.h.b16 %v228
    %v235 = vpack.c.b16 %v232, %v231
    %v236 = vpack.c.b16 %v234, %v233
    %239 = vst [vmem:[#allocation2 + $0x8] sm:$0xff] %v235
    %240 = vst [vmem:[#allocation2 + $0xd8] sm:$0xff] %v236
    %v241 = vld [vmem:[%s0] sm:$0xff]
    %v242 = vld [vmem:[%s0 + $0x8] sm:$0xff]
    %v243 = vpack.c.bf16 %v242, %v241
    %v244 = vld [vmem:[#allocation3] sm:$0x22]
    %246 = vset.pattern.permute.xlu0 2
    %247 = vperm.xlu0 %246, %v243
    %v248 = vpop.permute.xlu0 %247
    %v251 = vunpack.c.l.b16 %v244
    %v252 = vunpack.c.h.b16 %v244
    %v253 = vpack.c.b16 %v251, %v251
    %v254 = vpack.c.b16 %v252, %v252
    %v256 = vpack.i.b16 %v253, %v253
    %v258 = vlaneseq
    %v259 = vshrl.u32 %v258, 7
    %v260 = vsub.s32 1, %v259
    %v261 = vrot.slane %v256, %v260
    %v263 = vpack.i.b16 %v254, %v254
    %v265 = vlaneseq
    %v266 = vshrl.u32 %v265, 7
    %v267 = vsub.s32 1, %v266
    %v268 = vrot.slane %v263, %v267
    %v269 = vmul.bf16 %v248, %v261
    %v270 = vmul.bf16 %v248, %v268
    %v271 = vld [vmem:[#allocation5] sm:$0x22]
    %v273 = vunpack.c.l.b16 %v271
    %v274 = vunpack.c.h.b16 %v271
    %v275 = vpack.c.b16 %v273, %v273
    %v276 = vpack.c.b16 %v274, %v274
    %v278 = vpack.i.b16 %v275, %v275
    %v280 = vlaneseq
    %v281 = vshrl.u32 %v280, 7
    %v282 = vsub.s32 1, %v281
    %v283 = vrot.slane %v278, %v282
    %v285 = vpack.i.b16 %v276, %v276
    %v287 = vlaneseq
    %v288 = vshrl.u32 %v287, 7
    %v289 = vsub.s32 1, %v288
    %v290 = vrot.slane %v285, %v289
    %v291 = vadd.bf16 %v269, %v283
    %v292 = vadd.bf16 %v270, %v290
    %v293 = vmax.bf16 %v291, 0
    %v294 = vmax.bf16 %v292, 0
    %v297 = vunpack.c.l.b16 %v293
    %v298 = vunpack.c.l.b16 %v294
    %v299 = vunpack.c.h.b16 %v293
    %v300 = vunpack.c.h.b16 %v294
    %v301 = vpack.c.b16 %v298, %v297
    %v302 = vpack.c.b16 %v300, %v299
    %305 = vst [vmem:[#allocation2 + $0x10] sm:$0xff] %v301
    %306 = vst [vmem:[#allocation2 + $0xe0] sm:$0xff] %v302
    %v307 = vld [vmem:[%s0] sm:$0xff]
    %v308 = vld [vmem:[%s0 + $0x8] sm:$0xff]
    %v309 = vpack.c.bf16 %v308, %v307
    %v310 = vld [vmem:[#allocation3] sm:$0x22]
    %312 = vset.pattern.permute.xlu0 3
    %313 = vperm.xlu0 %312, %v309
    %v314 = vpop.permute.xlu0 %313
    %v317 = vunpack.c.l.b16 %v310
    %v318 = vunpack.c.h.b16 %v310
    %v319 = vpack.c.b16 %v317, %v317
    %v320 = vpack.c.b16 %v318, %v318
    %v322 = vshrl.u32 %v319, 16
    %v323 = vpack.i.b16 %v322, %v322
    %v325 = vlaneseq
    %v326 = vshrl.u32 %v325, 7
    %v327 = vsub.s32 1, %v326
    %v328 = vrot.slane %v323, %v327
    %v330 = vshrl.u32 %v320, 16
    %v331 = vpack.i.b16 %v330, %v330
    %v333 = vlaneseq
    %v334 = vshrl.u32 %v333, 7
    %v335 = vsub.s32 1, %v334
    %v336 = vrot.slane %v331, %v335
    %v337 = vmul.bf16 %v314, %v328
    %v338 = vmul.bf16 %v314, %v336
    %v339 = vld [vmem:[#allocation5] sm:$0x22]
    %v341 = vunpack.c.l.b16 %v339
    %v342 = vunpack.c.h.b16 %v339
    %v343 = vpack.c.b16 %v341, %v341
    %v344 = vpack.c.b16 %v342, %v342
    %v346 = vshrl.u32 %v343, 16
    %v347 = vpack.i.b16 %v346, %v346
    %v349 = vlaneseq
    %v350 = vshrl.u32 %v349, 7
    %v351 = vsub.s32 1, %v350
    %v352 = vrot.slane %v347, %v351
    %v354 = vshrl.u32 %v344, 16
    %v355 = vpack.i.b16 %v354, %v354
    %v357 = vlaneseq
    %v358 = vshrl.u32 %v357, 7
    %v359 = vsub.s32 1, %v358
    %v360 = vrot.slane %v355, %v359
    %v361 = vadd.bf16 %v337, %v352
    %v362 = vadd.bf16 %v338, %v360
    %v363 = vmax.bf16 %v361, 0
    %v364 = vmax.bf16 %v362, 0
    %v367 = vunpack.c.l.b16 %v363
    %v368 = vunpack.c.l.b16 %v364
    %v369 = vunpack.c.h.b16 %v363
    %v370 = vunpack.c.h.b16 %v364
    %v371 = vpack.c.b16 %v368, %v367
    %v372 = vpack.c.b16 %v370, %v369
    %375 = vst [vmem:[#allocation2 + $0x18] sm:$0xff] %v371
    %376 = vst [vmem:[#allocation2 + $0xe8] sm:$0xff] %v372
    %v377 = vld [vmem:[%s0] sm:$0xff]
    %v378 = vld [vmem:[%s0 + $0x8] sm:$0xff]
    %v379 = vpack.c.bf16 %v378, %v377
    %v380 = vld [vmem:[#allocation3] sm:$0x44]
    %382 = vset.pattern.permute.xlu0 4
    %383 = vperm.xlu0 %382, %v379
    %v384 = vpop.permute.xlu0 %383
    %v387 = vunpack.c.l.b16 %v380
    %v388 = vunpack.c.h.b16 %v380
    %v389 = vpack.c.b16 %v387, %v387
    %v390 = vpack.c.b16 %v388, %v388
    %v392 = vpack.i.b16 %v389, %v389
    %v394 = vlaneseq
    %v395 = vshrl.u32 %v394, 7
    %v396 = vsub.s32 2, %v395
    %v397 = vrot.slane %v392, %v396
    %v399 = vpack.i.b16 %v390, %v390
    %v401 = vlaneseq
    %v402 = vshrl.u32 %v401, 7
    %v403 = vsub.s32 2, %v402
    %v404 = vrot.slane %v399, %v403
    %v405 = vmul.bf16 %v384, %v397
    %v406 = vmul.bf16 %v384, %v404
    %v407 = vld [vmem:[#allocation5] sm:$0x44]
    %v409 = vunpack.c.l.b16 %v407
    %v410 = vunpack.c.h.b16 %v407
    %v411 = vpack.c.b16 %v409, %v409
    %v412 = vpack.c.b16 %v410, %v410
    %v414 = vpack.i.b16 %v411, %v411
    %v416 = vlaneseq
    %v417 = vshrl.u32 %v416, 7
    %v418 = vsub.s32 2, %v417
    %v419 = vrot.slane %v414, %v418
    %v421 = vpack.i.b16 %v412, %v412
    %v423 = vlaneseq
    %v424 = vshrl.u32 %v423, 7
    %v425 = vsub.s32 2, %v424
    %v426 = vrot.slane %v421, %v425
    %v427 = vadd.bf16 %v405, %v419
    %v428 = vadd.bf16 %v406, %v426
    %v429 = vmax.bf16 %v427, 0
    %v430 = vmax.bf16 %v428, 0
    %v433 = vunpack.c.l.b16 %v429
    %v434 = vunpack.c.l.b16 %v430
    %v435 = vunpack.c.h.b16 %v429
    %v436 = vunpack.c.h.b16 %v430
    %v437 = vpack.c.b16 %v434, %v433
    %v438 = vpack.c.b16 %v436, %v435
    %441 = vst [vmem:[#allocation2 + $0x20] sm:$0xff] %v437
    %442 = vst [vmem:[#allocation2 + $0xf0] sm:$0xff] %v438
    %v443 = vld [vmem:[%s0] sm:$0xff]
    %v444 = vld [vmem:[%s0 + $0x8] sm:$0xff]
    %v445 = vpack.c.bf16 %v444, %v443
    %v446 = vld [vmem:[#allocation3] sm:$0x44]
    %448 = vset.pattern.permute.xlu0 5
    %449 = vperm.xlu0 %448, %v445
    %v450 = vpop.permute.xlu0 %449
    %v453 = vunpack.c.l.b16 %v446
    %v454 = vunpack.c.h.b16 %v446
    %v455 = vpack.c.b16 %v453, %v453
    %v456 = vpack.c.b16 %v454, %v454
    %v458 = vshrl.u32 %v455, 16
    %v459 = vpack.i.b16 %v458, %v458
    %v461 = vlaneseq
    %v462 = vshrl.u32 %v461, 7
    %v463 = vsub.s32 2, %v462
    %v464 = vrot.slane %v459, %v463
    %v466 = vshrl.u32 %v456, 16
    %v467 = vpack.i.b16 %v466, %v466
    %v469 = vlaneseq
    %v470 = vshrl.u32 %v469, 7
    %v471 = vsub.s32 2, %v470
    %v472 = vrot.slane %v467, %v471
    %v473 = vmul.bf16 %v450, %v464
    %v474 = vmul.bf16 %v450, %v472
    %v475 = vld [vmem:[#allocation5] sm:$0x44]
    %v477 = vunpack.c.l.b16 %v475
    %v478 = vunpack.c.h.b16 %v475
    %v479 = vpack.c.b16 %v477, %v477
    %v480 = vpack.c.b16 %v478, %v478
    %v482 = vshrl.u32 %v479, 16
    %v483 = vpack.i.b16 %v482, %v482
    %v485 = vlaneseq
    %v486 = vshrl.u32 %v485, 7
    %v487 = vsub.s32 2, %v486
    %v488 = vrot.slane %v483, %v487
    %v490 = vshrl.u32 %v480, 16
    %v491 = vpack.i.b16 %v490, %v490
    %v493 = vlaneseq
    %v494 = vshrl.u32 %v493, 7
    %v495 = vsub.s32 2, %v494
    %v496 = vrot.slane %v491, %v495
    %v497 = vadd.bf16 %v473, %v488
    %v498 = vadd.bf16 %v474, %v496
    %v499 = vmax.bf16 %v497, 0
    %v500 = vmax.bf16 %v498, 0
    %v503 = vunpack.c.l.b16 %v499
    %v504 = vunpack.c.l.b16 %v500
    %v505 = vunpack.c.h.b16 %v499
    %v506 = vunpack.c.h.b16 %v500
    %v507 = vpack.c.b16 %v504, %v503
    %v508 = vpack.c.b16 %v506, %v505
    %511 = vst [vmem:[#allocation2 + $0x28] sm:$0xff] %v507
    %512 = vst [vmem:[#allocation2 + $0xf8] sm:$0xff] %v508
    %v513 = vld [vmem:[%s0] sm:$0xff]
    %v514 = vld [vmem:[%s0 + $0x8] sm:$0xff]
    %v515 = vpack.c.bf16 %v514, %v513
    %v516 = vld [vmem:[#allocation3] sm:$0x88]
    %518 = vset.pattern.permute.xlu0 6
    %519 = vperm.xlu0 %518, %v515
    %v520 = vpop.permute.xlu0 %519
    %v523 = vunpack.c.l.b16 %v516
    %v524 = vunpack.c.h.b16 %v516
    %v525 = vpack.c.b16 %v523, %v523
    %v526 = vpack.c.b16 %v524, %v524
    %v528 = vpack.i.b16 %v525, %v525
    %v530 = vlaneseq
    %v531 = vshrl.u32 %v530, 7
    %v532 = vsub.s32 3, %v531
    %v533 = vrot.slane %v528, %v532
    %v535 = vpack.i.b16 %v526, %v526
    %v537 = vlaneseq
    %v538 = vshrl.u32 %v537, 7
    %v539 = vsub.s32 3, %v538
    %v540 = vrot.slane %v535, %v539
    %v541 = vmul.bf16 %v520, %v533
    %v542 = vmul.bf16 %v520, %v540
    %v543 = vld [vmem:[#allocation5] sm:$0x88]
    %v545 = vunpack.c.l.b16 %v543
    %v546 = vunpack.c.h.b16 %v543
    %v547 = vpack.c.b16 %v545, %v545
    %v548 = vpack.c.b16 %v546, %v546
    %v550 = vpack.i.b16 %v547, %v547
    %v552 = vlaneseq
    %v553 = vshrl.u32 %v552, 7
    %v554 = vsub.s32 3, %v553
    %v555 = vrot.slane %v550, %v554
    %v557 = vpack.i.b16 %v548, %v548
    %v559 = vlaneseq
    %v560 = vshrl.u32 %v559, 7
    %v561 = vsub.s32 3, %v560
    %v562 = vrot.slane %v557, %v561
    %v563 = vadd.bf16 %v541, %v555
    %v564 = vadd.bf16 %v542, %v562
    %v565 = vmax.bf16 %v563, 0
    %v566 = vmax.bf16 %v564, 0
    %v569 = vunpack.c.l.b16 %v565
    %v570 = vunpack.c.l.b16 %v566
    %v571 = vunpack.c.h.b16 %v565
    %v572 = vunpack.c.h.b16 %v566
    %v573 = vpack.c.b16 %v570, %v569
    %v574 = vpack.c.b16 %v572, %v571
    %577 = vst [vmem:[#allocation2 + $0x30] sm:$0xff] %v573
    %578 = vst [vmem:[#allocation2 + $0x100] sm:$0xff] %v574
    %v579 = vld [vmem:[%s0] sm:$0xff]
    %v580 = vld [vmem:[%s0 + $0x8] sm:$0xff]
    %v581 = vpack.c.bf16 %v580, %v579
    %v582 = vld [vmem:[#allocation3] sm:$0x88]
    %584 = vset.pattern.permute.xlu0 7
    %585 = vperm.xlu0 %584, %v581
    %v586 = vpop.permute.xlu0 %585
    %v589 = vunpack.c.l.b16 %v582
    %v590 = vunpack.c.h.b16 %v582
    %v591 = vpack.c.b16 %v589, %v589
    %v592 = vpack.c.b16 %v590, %v590
    %v594 = vshrl.u32 %v591, 16
    %v595 = vpack.i.b16 %v594, %v594
    %v597 = vlaneseq
    %v598 = vshrl.u32 %v597, 7
    %v599 = vsub.s32 3, %v598
    %v600 = vrot.slane %v595, %v599
    %v602 = vshrl.u32 %v592, 16
    %v603 = vpack.i.b16 %v602, %v602
    %v605 = vlaneseq
    %v606 = vshrl.u32 %v605, 7
    %v607 = vsub.s32 3, %v606
    %v608 = vrot.slane %v603, %v607
    %v609 = vmul.bf16 %v586, %v600
    %v610 = vmul.bf16 %v586, %v608
    %v611 = vld [vmem:[#allocation5] sm:$0x88]
    %v613 = vunpack.c.l.b16 %v611
    %v614 = vunpack.c.h.b16 %v611
    %v615 = vpack.c.b16 %v613, %v613
    %v616 = vpack.c.b16 %v614, %v614
    %v618 = vshrl.u32 %v615, 16
    %v619 = vpack.i.b16 %v618, %v618
    %v621 = vlaneseq
    %v622 = vshrl.u32 %v621, 7
    %v623 = vsub.s32 3, %v622
    %v624 = vrot.slane %v619, %v623
    %v626 = vshrl.u32 %v616, 16
    %v627 = vpack.i.b16 %v626, %v626
    %v629 = vlaneseq
    %v630 = vshrl.u32 %v629, 7
    %v631 = vsub.s32 3, %v630
    %v632 = vrot.slane %v627, %v631
    %v633 = vadd.bf16 %v609, %v624
    %v634 = vadd.bf16 %v610, %v632
    %v635 = vmax.bf16 %v633, 0
    %v636 = vmax.bf16 %v634, 0
    %v639 = vunpack.c.l.b16 %v635
    %v640 = vunpack.c.l.b16 %v636
    %v641 = vunpack.c.h.b16 %v635
    %v642 = vunpack.c.h.b16 %v636
    %v643 = vpack.c.b16 %v640, %v639
    %v644 = vpack.c.b16 %v642, %v641
    %647 = vst [vmem:[#allocation2 + $0x38] sm:$0xff] %v643
    %648 = vst [vmem:[#allocation2 + $0x108] sm:$0xff] %v644
    %v649 = vld [vmem:[%s0] sm:$0xff]
    %v650 = vld [vmem:[%s0 + $0x8] sm:$0xff]
    %v651 = vpack.c.bf16 %v650, %v649
    %v652 = vld [vmem:[#allocation3 + $0x8] sm:$0x11]
    %654 = vset.pattern.permute.xlu0 8
    %655 = vperm.xlu0 %654, %v651
    %v656 = vpop.permute.xlu0 %655
    %v659 = vunpack.c.l.b16 %v652
    %v660 = vunpack.c.h.b16 %v652
    %v661 = vpack.c.b16 %v659, %v659
    %v662 = vpack.c.b16 %v660, %v660
    %v664 = vpack.i.b16 %v661, %v661
    %v666 = vlaneseq
    %v667 = vshrl.u32 %v666, 7
    %v668 = vsub.s32 0, %v667
    %v669 = vrot.slane %v664, %v668
    %v671 = vpack.i.b16 %v662, %v662
    %v673 = vlaneseq
    %v674 = vshrl.u32 %v673, 7
    %v675 = vsub.s32 0, %v674
    %v676 = vrot.slane %v671, %v675
    %v677 = vmul.bf16 %v656, %v669
    %v678 = vmul.bf16 %v656, %v676
    %v679 = vld [vmem:[#allocation5 + $0x8] sm:$0x11]
    %v681 = vunpack.c.l.b16 %v679
    %v682 = vunpack.c.h.b16 %v679
    %v683 = vpack.c.b16 %v681, %v681
    %v684 = vpack.c.b16 %v682, %v682
    %v686 = vpack.i.b16 %v683, %v683
    %v688 = vlaneseq
    %v689 = vshrl.u32 %v688, 7
    %v690 = vsub.s32 0, %v689
    %v691 = vrot.slane %v686, %v690
    %v693 = vpack.i.b16 %v684, %v684
    %v695 = vlaneseq
    %v696 = vshrl.u32 %v695, 7
    %v697 = vsub.s32 0, %v696
    %v698 = vrot.slane %v693, %v697
    %v699 = vadd.bf16 %v677, %v691
    %v700 = vadd.bf16 %v678, %v698
    %v701 = vmax.bf16 %v699, 0
    %v702 = vmax.bf16 %v700, 0
    %v705 = vunpack.c.l.b16 %v701
    %v706 = vunpack.c.l.b16 %v702
    %v707 = vunpack.c.h.b16 %v701
    %v708 = vunpack.c.h.b16 %v702
    %v709 = vpack.c.b16 %v706, %v705
    %v710 = vpack.c.b16 %v708, %v707
    %713 = vst [vmem:[#allocation2 + $0x40] sm:$0xff] %v709
    %714 = vst [vmem:[#allocation2 + $0x110] sm:$0xff] %v710
    %v715 = vld [vmem:[%s0] sm:$0xff]
    %v716 = vld [vmem:[%s0 + $0x8] sm:$0xff]
    %v717 = vpack.c.bf16 %v716, %v715
    %v718 = vld [vmem:[#allocation3 + $0x8] sm:$0x11]
    %720 = vset.pattern.permute.xlu0 9
    %721 = vperm.xlu0 %720, %v717
    %v722 = vpop.permute.xlu0 %721
    %v725 = vunpack.c.l.b16 %v718
    %v726 = vunpack.c.h.b16 %v718
    %v727 = vpack.c.b16 %v725, %v725
    %v728 = vpack.c.b16 %v726, %v726
    %v730 = vshrl.u32 %v727, 16
    %v731 = vpack.i.b16 %v730, %v730
    %v733 = vlaneseq
    %v734 = vshrl.u32 %v733, 7
    %v735 = vsub.s32 0, %v734
    %v736 = vrot.slane %v731, %v735
    %v738 = vshrl.u32 %v728, 16
    %v739 = vpack.i.b16 %v738, %v738
    %v741 = vlaneseq
    %v742 = vshrl.u32 %v741, 7
    %v743 = vsub.s32 0, %v742
    %v744 = vrot.slane %v739, %v743
    %v745 = vmul.bf16 %v722, %v736
    %v746 = vmul.bf16 %v722, %v744
    %v747 = vld [vmem:[#allocation5 + $0x8] sm:$0x11]
    %v749 = vunpack.c.l.b16 %v747
    %v750 = vunpack.c.h.b16 %v747
    %v751 = vpack.c.b16 %v749, %v749
    %v752 = vpack.c.b16 %v750, %v750
    %v754 = vshrl.u32 %v751, 16
    %v755 = vpack.i.b16 %v754, %v754
    %v757 = vlaneseq
    %v758 = vshrl.u32 %v757, 7
    %v759 = vsub.s32 0, %v758
    %v760 = vrot.slane %v755, %v759
    %v762 = vshrl.u32 %v752, 16
    %v763 = vpack.i.b16 %v762, %v762
    %v765 = vlaneseq
    %v766 = vshrl.u32 %v765, 7
    %v767 = vsub.s32 0, %v766
    %v768 = vrot.slane %v763, %v767
    %v769 = vadd.bf16 %v745, %v760
    %v770 = vadd.bf16 %v746, %v768
    %v771 = vmax.bf16 %v769, 0
    %v772 = vmax.bf16 %v770, 0
    %v775 = vunpack.c.l.b16 %v771
    %v776 = vunpack.c.l.b16 %v772
    %v777 = vunpack.c.h.b16 %v771
    %v778 = vunpack.c.h.b16 %v772
    %v779 = vpack.c.b16 %v776, %v775
    %v780 = vpack.c.b16 %v778, %v777
    %783 = vst [vmem:[#allocation2 + $0x48] sm:$0xff] %v779
    %784 = vst [vmem:[#allocation2 + $0x118] sm:$0xff] %v780
    %v785 = vld [vmem:[%s0] sm:$0xff]
    %v786 = vld [vmem:[%s0 + $0x8] sm:$0xff]
    %v787 = vpack.c.bf16 %v786, %v785
    %v788 = vld [vmem:[#allocation3 + $0x8] sm:$0x22]
    %790 = vset.pattern.permute.xlu0 10
    %791 = vperm.xlu0 %790, %v787
    %v792 = vpop.permute.xlu0 %791
    %v795 = vunpack.c.l.b16 %v788
    %v796 = vunpack.c.h.b16 %v788
    %v797 = vpack.c.b16 %v795, %v795
    %v798 = vpack.c.b16 %v796, %v796
    %v800 = vpack.i.b16 %v797, %v797
    %v802 = vlaneseq
    %v803 = vshrl.u32 %v802, 7
    %v804 = vsub.s32 1, %v803
    %v805 = vrot.slane %v800, %v804
    %v807 = vpack.i.b16 %v798, %v798
    %v809 = vlaneseq
    %v810 = vshrl.u32 %v809, 7
    %v811 = vsub.s32 1, %v810
    %v812 = vrot.slane %v807, %v811
    %v813 = vmul.bf16 %v792, %v805
    %v814 = vmul.bf16 %v792, %v812
    %v815 = vld [vmem:[#allocation5 + $0x8] sm:$0x22]
    %v817 = vunpack.c.l.b16 %v815
    %v818 = vunpack.c.h.b16 %v815
    %v819 = vpack.c.b16 %v817, %v817
    %v820 = vpack.c.b16 %v818, %v818
    %v822 = vpack.i.b16 %v819, %v819
    %v824 = vlaneseq
    %v825 = vshrl.u32 %v824, 7
    %v826 = vsub.s32 1, %v825
    %v827 = vrot.slane %v822, %v826
    %v829 = vpack.i.b16 %v820, %v820
    %v831 = vlaneseq
    %v832 = vshrl.u32 %v831, 7
    %v833 = vsub.s32 1, %v832
    %v834 = vrot.slane %v829, %v833
    %v835 = vadd.bf16 %v813, %v827
    %v836 = vadd.bf16 %v814, %v834
    %v837 = vmax.bf16 %v835, 0
    %v838 = vmax.bf16 %v836, 0
    %v841 = vunpack.c.l.b16 %v837
    %v842 = vunpack.c.l.b16 %v838
    %v843 = vunpack.c.h.b16 %v837
    %v844 = vunpack.c.h.b16 %v838
    %v845 = vpack.c.b16 %v842, %v841
    %v846 = vpack.c.b16 %v844, %v843
    %849 = vst [vmem:[#allocation2 + $0x50] sm:$0xff] %v845
    %850 = vst [vmem:[#allocation2 + $0x120] sm:$0xff] %v846
    %v851 = vld [vmem:[%s0] sm:$0xff]
    %v852 = vld [vmem:[%s0 + $0x8] sm:$0xff]
    %v853 = vpack.c.bf16 %v852, %v851
    %v854 = vld [vmem:[#allocation3 + $0x8] sm:$0x22]
    %856 = vset.pattern.permute.xlu0 11
    %857 = vperm.xlu0 %856, %v853
    %v858 = vpop.permute.xlu0 %857
    %v861 = vunpack.c.l.b16 %v854
    %v862 = vunpack.c.h.b16 %v854
    %v863 = vpack.c.b16 %v861, %v861
    %v864 = vpack.c.b16 %v862, %v862
    %v866 = vshrl.u32 %v863, 16
    %v867 = vpack.i.b16 %v866, %v866
    %v869 = vlaneseq
    %v870 = vshrl.u32 %v869, 7
    %v871 = vsub.s32 1, %v870
    %v872 = vrot.slane %v867, %v871
    %v874 = vshrl.u32 %v864, 16
    %v875 = vpack.i.b16 %v874, %v874
    %v877 = vlaneseq
    %v878 = vshrl.u32 %v877, 7
    %v879 = vsub.s32 1, %v878
    %v880 = vrot.slane %v875, %v879
    %v881 = vmul.bf16 %v858, %v872
    %v882 = vmul.bf16 %v858, %v880
    %v883 = vld [vmem:[#allocation5 + $0x8] sm:$0x22]
    %v885 = vunpack.c.l.b16 %v883
    %v886 = vunpack.c.h.b16 %v883
    %v887 = vpack.c.b16 %v885, %v885
    %v888 = vpack.c.b16 %v886, %v886
    %v890 = vshrl.u32 %v887, 16
    %v891 = vpack.i.b16 %v890, %v890
    %v893 = vlaneseq
    %v894 = vshrl.u32 %v893, 7
    %v895 = vsub.s32 1, %v894
    %v896 = vrot.slane %v891, %v895
    %v898 = vshrl.u32 %v888, 16
    %v899 = vpack.i.b16 %v898, %v898
    %v901 = vlaneseq
    %v902 = vshrl.u32 %v901, 7
    %v903 = vsub.s32 1, %v902
    %v904 = vrot.slane %v899, %v903
    %v905 = vadd.bf16 %v881, %v896
    %v906 = vadd.bf16 %v882, %v904
    %v907 = vmax.bf16 %v905, 0
    %v908 = vmax.bf16 %v906, 0
    %v911 = vunpack.c.l.b16 %v907
    %v912 = vunpack.c.l.b16 %v908
    %v913 = vunpack.c.h.b16 %v907
    %v914 = vunpack.c.h.b16 %v908
    %v915 = vpack.c.b16 %v912, %v911
    %v916 = vpack.c.b16 %v914, %v913
    %919 = vst [vmem:[#allocation2 + $0x58] sm:$0xff] %v915
    %920 = vst [vmem:[#allocation2 + $0x128] sm:$0xff] %v916
    %v921 = vld [vmem:[%s0] sm:$0xff]
    %v922 = vld [vmem:[%s0 + $0x8] sm:$0xff]
    %v923 = vpack.c.bf16 %v922, %v921
    %v924 = vld [vmem:[#allocation3 + $0x8] sm:$0x44]
    %926 = vset.pattern.permute.xlu0 12
    %927 = vperm.xlu0 %926, %v923
    %v928 = vpop.permute.xlu0 %927
    %v931 = vunpack.c.l.b16 %v924
    %v932 = vunpack.c.h.b16 %v924
    %v933 = vpack.c.b16 %v931, %v931
    %v934 = vpack.c.b16 %v932, %v932
    %v936 = vpack.i.b16 %v933, %v933
    %v938 = vlaneseq
    %v939 = vshrl.u32 %v938, 7
    %v940 = vsub.s32 2, %v939
    %v941 = vrot.slane %v936, %v940
    %v943 = vpack.i.b16 %v934, %v934
    %v945 = vlaneseq
    %v946 = vshrl.u32 %v945, 7
    %v947 = vsub.s32 2, %v946
    %v948 = vrot.slane %v943, %v947
    %v949 = vmul.bf16 %v928, %v941
    %v950 = vmul.bf16 %v928, %v948
    %v951 = vld [vmem:[#allocation5 + $0x8] sm:$0x44]
    %v953 = vunpack.c.l.b16 %v951
    %v954 = vunpack.c.h.b16 %v951
    %v955 = vpack.c.b16 %v953, %v953
    %v956 = vpack.c.b16 %v954, %v954
    %v958 = vpack.i.b16 %v955, %v955
    %v960 = vlaneseq
    %v961 = vshrl.u32 %v960, 7
    %v962 = vsub.s32 2, %v961
    %v963 = vrot.slane %v958, %v962
    %v965 = vpack.i.b16 %v956, %v956
    %v967 = vlaneseq
    %v968 = vshrl.u32 %v967, 7
    %v969 = vsub.s32 2, %v968
    %v970 = vrot.slane %v965, %v969
    %v971 = vadd.bf16 %v949, %v963
    %v972 = vadd.bf16 %v950, %v970
    %v973 = vmax.bf16 %v971, 0
    %v974 = vmax.bf16 %v972, 0
    %v977 = vunpack.c.l.b16 %v973
    %v978 = vunpack.c.l.b16 %v974
    %v979 = vunpack.c.h.b16 %v973
    %v980 = vunpack.c.h.b16 %v974
    %v981 = vpack.c.b16 %v978, %v977
    %v982 = vpack.c.b16 %v980, %v979
    %985 = vst [vmem:[#allocation2 + $0x60] sm:$0xff] %v981
    %986 = vst [vmem:[#allocation2 + $0x130] sm:$0xff] %v982
    %v987 = vld [vmem:[%s0] sm:$0xff]
    %v988 = vld [vmem:[%s0 + $0x8] sm:$0xff]
    %v989 = vpack.c.bf16 %v988, %v987
    %v990 = vld [vmem:[#allocation3 + $0x8] sm:$0x44]
    %992 = vset.pattern.permute.xlu0 13
    %993 = vperm.xlu0 %992, %v989
    %v994 = vpop.permute.xlu0 %993
    %v997 = vunpack.c.l.b16 %v990
    %v998 = vunpack.c.h.b16 %v990
    %v999 = vpack.c.b16 %v997, %v997
    %v1000 = vpack.c.b16 %v998, %v998
    %v1002 = vshrl.u32 %v999, 16
    %v1003 = vpack.i.b16 %v1002, %v1002
    %v1005 = vlaneseq
    %v1006 = vshrl.u32 %v1005, 7
    %v1007 = vsub.s32 2, %v1006
    %v1008 = vrot.slane %v1003, %v1007
    %v1010 = vshrl.u32 %v1000, 16
    %v1011 = vpack.i.b16 %v1010, %v1010
    %v1013 = vlaneseq
    %v1014 = vshrl.u32 %v1013, 7
    %v1015 = vsub.s32 2, %v1014
    %v1016 = vrot.slane %v1011, %v1015
    %v1017 = vmul.bf16 %v994, %v1008
    %v1018 = vmul.bf16 %v994, %v1016
    %v1019 = vld [vmem:[#allocation5 + $0x8] sm:$0x44]
    %v1021 = vunpack.c.l.b16 %v1019
    %v1022 = vunpack.c.h.b16 %v1019
    %v1023 = vpack.c.b16 %v1021, %v1021
    %v1024 = vpack.c.b16 %v1022, %v1022
    %v1026 = vshrl.u32 %v1023, 16
    %v1027 = vpack.i.b16 %v1026, %v1026
    %v1029 = vlaneseq
    %v1030 = vshrl.u32 %v1029, 7
    %v1031 = vsub.s32 2, %v1030
    %v1032 = vrot.slane %v1027, %v1031
    %v1034 = vshrl.u32 %v1024, 16
    %v1035 = vpack.i.b16 %v1034, %v1034
    %v1037 = vlaneseq
    %v1038 = vshrl.u32 %v1037, 7
    %v1039 = vsub.s32 2, %v1038
    %v1040 = vrot.slane %v1035, %v1039
    %v1041 = vadd.bf16 %v1017, %v1032
    %v1042 = vadd.bf16 %v1018, %v1040
    %v1043 = vmax.bf16 %v1041, 0
    %v1044 = vmax.bf16 %v1042, 0
    %v1047 = vunpack.c.l.b16 %v1043
    %v1048 = vunpack.c.l.b16 %v1044
    %v1049 = vunpack.c.h.b16 %v1043
    %v1050 = vunpack.c.h.b16 %v1044
    %v1051 = vpack.c.b16 %v1048, %v1047
    %v1052 = vpack.c.b16 %v1050, %v1049
    %1055 = vst [vmem:[#allocation2 + $0x68] sm:$0xff] %v1051
    %1056 = vst [vmem:[#allocation2 + $0x138] sm:$0xff] %v1052
    %v1057 = vld [vmem:[%s0] sm:$0xff]
    %v1058 = vld [vmem:[%s0 + $0x8] sm:$0xff]
    %v1059 = vpack.c.bf16 %v1058, %v1057
    %v1060 = vld [vmem:[#allocation3 + $0x8] sm:$0x88]
    %1062 = vset.pattern.permute.xlu0 14
    %1063 = vperm.xlu0 %1062, %v1059
    %v1064 = vpop.permute.xlu0 %1063
    %v1067 = vunpack.c.l.b16 %v1060
    %v1068 = vunpack.c.h.b16 %v1060
    %v1069 = vpack.c.b16 %v1067, %v1067
    %v1070 = vpack.c.b16 %v1068, %v1068
    %v1072 = vpack.i.b16 %v1069, %v1069
    %v1074 = vlaneseq
    %v1075 = vshrl.u32 %v1074, 7
    %v1076 = vsub.s32 3, %v1075
    %v1077 = vrot.slane %v1072, %v1076
    %v1079 = vpack.i.b16 %v1070, %v1070
    %v1081 = vlaneseq
    %v1082 = vshrl.u32 %v1081, 7
    %v1083 = vsub.s32 3, %v1082
    %v1084 = vrot.slane %v1079, %v1083
    %v1085 = vmul.bf16 %v1064, %v1077
    %v1086 = vmul.bf16 %v1064, %v1084
    %v1087 = vld [vmem:[#allocation5 + $0x8] sm:$0x88]
    %v1089 = vunpack.c.l.b16 %v1087
    %v1090 = vunpack.c.h.b16 %v1087
    %v1091 = vpack.c.b16 %v1089, %v1089
    %v1092 = vpack.c.b16 %v1090, %v1090
    %v1094 = vpack.i.b16 %v1091, %v1091
    %v1096 = vlaneseq
    %v1097 = vshrl.u32 %v1096, 7
    %v1098 = vsub.s32 3, %v1097
    %v1099 = vrot.slane %v1094, %v1098
    %v1101 = vpack.i.b16 %v1092, %v1092
    %v1103 = vlaneseq
    %v1104 = vshrl.u32 %v1103, 7
    %v1105 = vsub.s32 3, %v1104
    %v1106 = vrot.slane %v1101, %v1105
    %v1107 = vadd.bf16 %v1085, %v1099
    %v1108 = vadd.bf16 %v1086, %v1106
    %v1109 = vmax.bf16 %v1107, 0
    %v1110 = vmax.bf16 %v1108, 0
    %v1113 = vunpack.c.l.b16 %v1109
    %v1114 = vunpack.c.l.b16 %v1110
    %v1115 = vunpack.c.h.b16 %v1109
    %v1116 = vunpack.c.h.b16 %v1110
    %v1117 = vpack.c.b16 %v1114, %v1113
    %v1118 = vpack.c.b16 %v1116, %v1115
    %1121 = vst [vmem:[#allocation2 + $0x70] sm:$0xff] %v1117
    %1122 = vst [vmem:[#allocation2 + $0x140] sm:$0xff] %v1118
    %v1123 = vld [vmem:[%s0] sm:$0xff]
    %v1124 = vld [vmem:[%s0 + $0x8] sm:$0xff]
    %v1125 = vpack.c.bf16 %v1124, %v1123
    %v1126 = vld [vmem:[#allocation3 + $0x8] sm:$0x88]
    %1128 = vset.pattern.permute.xlu0 15
    %1129 = vperm.xlu0 %1128, %v1125
    %v1130 = vpop.permute.xlu0 %1129
    %v1133 = vunpack.c.l.b16 %v1126
    %v1134 = vunpack.c.h.b16 %v1126
    %v1135 = vpack.c.b16 %v1133, %v1133
    %v1136 = vpack.c.b16 %v1134, %v1134
    %v1138 = vshrl.u32 %v1135, 16
    %v1139 = vpack.i.b16 %v1138, %v1138
    %v1141 = vlaneseq
    %v1142 = vshrl.u32 %v1141, 7
    %v1143 = vsub.s32 3, %v1142
    %v1144 = vrot.slane %v1139, %v1143
    %v1146 = vshrl.u32 %v1136, 16
    %v1147 = vpack.i.b16 %v1146, %v1146
    %v1149 = vlaneseq
    %v1150 = vshrl.u32 %v1149, 7
    %v1151 = vsub.s32 3, %v1150
    %v1152 = vrot.slane %v1147, %v1151
    %v1153 = vmul.bf16 %v1130, %v1144
    %v1154 = vmul.bf16 %v1130, %v1152
    %v1155 = vld [vmem:[#allocation5 + $0x8] sm:$0x88]
    %v1157 = vunpack.c.l.b16 %v1155
    %v1158 = vunpack.c.h.b16 %v1155
    %v1159 = vpack.c.b16 %v1157, %v1157
    %v1160 = vpack.c.b16 %v1158, %v1158
    %v1162 = vshrl.u32 %v1159, 16
    %v1163 = vpack.i.b16 %v1162, %v1162
    %v1165 = vlaneseq
    %v1166 = vshrl.u32 %v1165, 7
    %v1167 = vsub.s32 3, %v1166
    %v1168 = vrot.slane %v1163, %v1167
    %v1170 = vshrl.u32 %v1160, 16
    %v1171 = vpack.i.b16 %v1170, %v1170
    %v1173 = vlaneseq
    %v1174 = vshrl.u32 %v1173, 7
    %v1175 = vsub.s32 3, %v1174
    %v1176 = vrot.slane %v1171, %v1175
    %v1177 = vadd.bf16 %v1153, %v1168
    %v1178 = vadd.bf16 %v1154, %v1176
    %v1179 = vmax.bf16 %v1177, 0
    %v1180 = vmax.bf16 %v1178, 0
    %v1183 = vunpack.c.l.b16 %v1179
    %v1184 = vunpack.c.l.b16 %v1180
    %v1185 = vunpack.c.h.b16 %v1179
    %v1186 = vunpack.c.h.b16 %v1180
    %v1187 = vpack.c.b16 %v1184, %v1183
    %v1188 = vpack.c.b16 %v1186, %v1185
    %1191 = vst [vmem:[#allocation2 + $0x78] sm:$0xff] %v1187
    %1192 = vst [vmem:[#allocation2 + $0x148] sm:$0xff] %v1188
    %v1193 = vld [vmem:[%s0] sm:$0xff]
    %v1194 = vld [vmem:[%s0 + $0x8] sm:$0xff]
    %v1195 = vpack.c.bf16 %v1194, %v1193
    %v1196 = vld [vmem:[#allocation3 + $0x10] sm:$0x11]
    %1198 = vset.pattern.permute.xlu0 16
    %1199 = vperm.xlu0 %1198, %v1195
    %v1200 = vpop.permute.xlu0 %1199
    %v1203 = vunpack.c.l.b16 %v1196
    %v1204 = vunpack.c.h.b16 %v1196
    %v1205 = vpack.c.b16 %v1203, %v1203
    %v1206 = vpack.c.b16 %v1204, %v1204
    %v1208 = vpack.i.b16 %v1205, %v1205
    %v1210 = vlaneseq
    %v1211 = vshrl.u32 %v1210, 7
    %v1212 = vsub.s32 0, %v1211
    %v1213 = vrot.slane %v1208, %v1212
    %v1215 = vpack.i.b16 %v1206, %v1206
    %v1217 = vlaneseq
    %v1218 = vshrl.u32 %v1217, 7
    %v1219 = vsub.s32 0, %v1218
    %v1220 = vrot.slane %v1215, %v1219
    %v1221 = vmul.bf16 %v1200, %v1213
    %v1222 = vmul.bf16 %v1200, %v1220
    %v1223 = vld [vmem:[#allocation5 + $0x10] sm:$0x11]
    %v1225 = vunpack.c.l.b16 %v1223
    %v1226 = vunpack.c.h.b16 %v1223
    %v1227 = vpack.c.b16 %v1225, %v1225
    %v1228 = vpack.c.b16 %v1226, %v1226
    %v1230 = vpack.i.b16 %v1227, %v1227
    %v1232 = vlaneseq
    %v1233 = vshrl.u32 %v1232, 7
    %v1234 = vsub.s32 0, %v1233
    %v1235 = vrot.slane %v1230, %v1234
    %v1237 = vpack.i.b16 %v1228, %v1228
    %v1239 = vlaneseq
    %v1240 = vshrl.u32 %v1239, 7
    %v1241 = vsub.s32 0, %v1240
    %v1242 = vrot.slane %v1237, %v1241
    %v1243 = vadd.bf16 %v1221, %v1235
    %v1244 = vadd.bf16 %v1222, %v1242
    %v1245 = vmax.bf16 %v1243, 0
    %v1246 = vmax.bf16 %v1244, 0
    %v1249 = vunpack.c.l.b16 %v1245
    %v1250 = vunpack.c.l.b16 %v1246
    %v1251 = vunpack.c.h.b16 %v1245
    %v1252 = vunpack.c.h.b16 %v1246
    %v1253 = vpack.c.b16 %v1250, %v1249
    %v1254 = vpack.c.b16 %v1252, %v1251
    %1257 = vst [vmem:[#allocation2 + $0x80] sm:$0xff] %v1253
    %1258 = vst [vmem:[#allocation2 + $0x150] sm:$0xff] %v1254
    %v1259 = vld [vmem:[%s0] sm:$0xff]
    %v1260 = vld [vmem:[%s0 + $0x8] sm:$0xff]
    %v1261 = vpack.c.bf16 %v1260, %v1259
    %v1262 = vld [vmem:[#allocation3 + $0x10] sm:$0x11]
    %1264 = vset.pattern.permute.xlu0 17
    %1265 = vperm.xlu0 %1264, %v1261
    %v1266 = vpop.permute.xlu0 %1265
    %v1269 = vunpack.c.l.b16 %v1262
    %v1270 = vunpack.c.h.b16 %v1262
    %v1271 = vpack.c.b16 %v1269, %v1269
    %v1272 = vpack.c.b16 %v1270, %v1270
    %v1274 = vshrl.u32 %v1271, 16
    %v1275 = vpack.i.b16 %v1274, %v1274
    %v1277 = vlaneseq
    %v1278 = vshrl.u32 %v1277, 7
    %v1279 = vsub.s32 0, %v1278
    %v1280 = vrot.slane %v1275, %v1279
    %v1282 = vshrl.u32 %v1272, 16
    %v1283 = vpack.i.b16 %v1282, %v1282
    %v1285 = vlaneseq
    %v1286 = vshrl.u32 %v1285, 7
    %v1287 = vsub.s32 0, %v1286
    %v1288 = vrot.slane %v1283, %v1287
    %v1289 = vmul.bf16 %v1266, %v1280
    %v1290 = vmul.bf16 %v1266, %v1288
    %v1291 = vld [vmem:[#allocation5 + $0x10] sm:$0x11]
    %v1293 = vunpack.c.l.b16 %v1291
    %v1294 = vunpack.c.h.b16 %v1291
    %v1295 = vpack.c.b16 %v1293, %v1293
    %v1296 = vpack.c.b16 %v1294, %v1294
    %v1298 = vshrl.u32 %v1295, 16
    %v1299 = vpack.i.b16 %v1298, %v1298
    %v1301 = vlaneseq
    %v1302 = vshrl.u32 %v1301, 7
    %v1303 = vsub.s32 0, %v1302
    %v1304 = vrot.slane %v1299, %v1303
    %v1306 = vshrl.u32 %v1296, 16
    %v1307 = vpack.i.b16 %v1306, %v1306
    %v1309 = vlaneseq
    %v1310 = vshrl.u32 %v1309, 7
    %v1311 = vsub.s32 0, %v1310
    %v1312 = vrot.slane %v1307, %v1311
    %v1313 = vadd.bf16 %v1289, %v1304
    %v1314 = vadd.bf16 %v1290, %v1312
    %v1315 = vmax.bf16 %v1313, 0
    %v1316 = vmax.bf16 %v1314, 0
    %v1319 = vunpack.c.l.b16 %v1315
    %v1320 = vunpack.c.l.b16 %v1316
    %v1321 = vunpack.c.h.b16 %v1315
    %v1322 = vunpack.c.h.b16 %v1316
    %v1323 = vpack.c.b16 %v1320, %v1319
    %v1324 = vpack.c.b16 %v1322, %v1321
    %1327 = vst [vmem:[#allocation2 + $0x88] sm:$0xff] %v1323
    %1328 = vst [vmem:[#allocation2 + $0x158] sm:$0xff] %v1324
    %v1329 = vld [vmem:[%s0] sm:$0xff]
    %v1330 = vld [vmem:[%s0 + $0x8] sm:$0xff]
    %v1331 = vpack.c.bf16 %v1330, %v1329
    %v1332 = vld [vmem:[#allocation3 + $0x10] sm:$0x22]
    %1334 = vset.pattern.permute.xlu0 18
    %1335 = vperm.xlu0 %1334, %v1331
    %v1336 = vpop.permute.xlu0 %1335
    %v1339 = vunpack.c.l.b16 %v1332
    %v1340 = vunpack.c.h.b16 %v1332
    %v1341 = vpack.c.b16 %v1339, %v1339
    %v1342 = vpack.c.b16 %v1340, %v1340
    %v1344 = vpack.i.b16 %v1341, %v1341
    %v1346 = vlaneseq
    %v1347 = vshrl.u32 %v1346, 7
    %v1348 = vsub.s32 1, %v1347
    %v1349 = vrot.slane %v1344, %v1348
    %v1351 = vpack.i.b16 %v1342, %v1342
    %v1353 = vlaneseq
    %v1354 = vshrl.u32 %v1353, 7
    %v1355 = vsub.s32 1, %v1354
    %v1356 = vrot.slane %v1351, %v1355
    %v1357 = vmul.bf16 %v1336, %v1349
    %v1358 = vmul.bf16 %v1336, %v1356
    %v1359 = vld [vmem:[#allocation5 + $0x10] sm:$0x22]
    %v1361 = vunpack.c.l.b16 %v1359
    %v1362 = vunpack.c.h.b16 %v1359
    %v1363 = vpack.c.b16 %v1361, %v1361
    %v1364 = vpack.c.b16 %v1362, %v1362
    %v1366 = vpack.i.b16 %v1363, %v1363
    %v1368 = vlaneseq
    %v1369 = vshrl.u32 %v1368, 7
    %v1370 = vsub.s32 1, %v1369
    %v1371 = vrot.slane %v1366, %v1370
    %v1373 = vpack.i.b16 %v1364, %v1364
    %v1375 = vlaneseq
    %v1376 = vshrl.u32 %v1375, 7
    %v1377 = vsub.s32 1, %v1376
    %v1378 = vrot.slane %v1373, %v1377
    %v1379 = vadd.bf16 %v1357, %v1371
    %v1380 = vadd.bf16 %v1358, %v1378
    %v1381 = vmax.bf16 %v1379, 0
    %v1382 = vmax.bf16 %v1380, 0
    %v1385 = vunpack.c.l.b16 %v1381
    %v1386 = vunpack.c.l.b16 %v1382
    %v1387 = vunpack.c.h.b16 %v1381
    %v1388 = vunpack.c.h.b16 %v1382
    %v1389 = vpack.c.b16 %v1386, %v1385
    %v1390 = vpack.c.b16 %v1388, %v1387
    %1393 = vst [vmem:[#allocation2 + $0x90] sm:$0xff] %v1389
    %1394 = vst [vmem:[#allocation2 + $0x160] sm:$0xff] %v1390
    %v1395 = vld [vmem:[%s0] sm:$0xff]
    %v1396 = vld [vmem:[%s0 + $0x8] sm:$0xff]
    %v1397 = vpack.c.bf16 %v1396, %v1395
    %v1398 = vld [vmem:[#allocation3 + $0x10] sm:$0x22]
    %1400 = vset.pattern.permute.xlu0 19
    %1401 = vperm.xlu0 %1400, %v1397
    %v1402 = vpop.permute.xlu0 %1401
    %v1405 = vunpack.c.l.b16 %v1398
    %v1406 = vunpack.c.h.b16 %v1398
    %v1407 = vpack.c.b16 %v1405, %v1405
    %v1408 = vpack.c.b16 %v1406, %v1406
    %v1410 = vshrl.u32 %v1407, 16
    %v1411 = vpack.i.b16 %v1410, %v1410
    %v1413 = vlaneseq
    %v1414 = vshrl.u32 %v1413, 7
    %v1415 = vsub.s32 1, %v1414
    %v1416 = vrot.slane %v1411, %v1415
    %v1418 = vshrl.u32 %v1408, 16
    %v1419 = vpack.i.b16 %v1418, %v1418
    %v1421 = vlaneseq
    %v1422 = vshrl.u32 %v1421, 7
    %v1423 = vsub.s32 1, %v1422
    %v1424 = vrot.slane %v1419, %v1423
    %v1425 = vmul.bf16 %v1402, %v1416
    %v1426 = vmul.bf16 %v1402, %v1424
    %v1427 = vld [vmem:[#allocation5 + $0x10] sm:$0x22]
    %v1429 = vunpack.c.l.b16 %v1427
    %v1430 = vunpack.c.h.b16 %v1427
    %v1431 = vpack.c.b16 %v1429, %v1429
    %v1432 = vpack.c.b16 %v1430, %v1430
    %v1434 = vshrl.u32 %v1431, 16
    %v1435 = vpack.i.b16 %v1434, %v1434
    %v1437 = vlaneseq
    %v1438 = vshrl.u32 %v1437, 7
    %v1439 = vsub.s32 1, %v1438
    %v1440 = vrot.slane %v1435, %v1439
    %v1442 = vshrl.u32 %v1432, 16
    %v1443 = vpack.i.b16 %v1442, %v1442
    %v1445 = vlaneseq
    %v1446 = vshrl.u32 %v1445, 7
    %v1447 = vsub.s32 1, %v1446
    %v1448 = vrot.slane %v1443, %v1447
    %v1449 = vadd.bf16 %v1425, %v1440
    %v1450 = vadd.bf16 %v1426, %v1448
    %v1451 = vmax.bf16 %v1449, 0
    %v1452 = vmax.bf16 %v1450, 0
    %v1455 = vunpack.c.l.b16 %v1451
    %v1456 = vunpack.c.l.b16 %v1452
    %v1457 = vunpack.c.h.b16 %v1451
    %v1458 = vunpack.c.h.b16 %v1452
    %v1459 = vpack.c.b16 %v1456, %v1455
    %v1460 = vpack.c.b16 %v1458, %v1457
    %1463 = vst [vmem:[#allocation2 + $0x98] sm:$0xff] %v1459
    %1464 = vst [vmem:[#allocation2 + $0x168] sm:$0xff] %v1460
    %v1465 = vld [vmem:[%s0] sm:$0xff]
    %v1466 = vld [vmem:[%s0 + $0x8] sm:$0xff]
    %v1467 = vpack.c.bf16 %v1466, %v1465
    %v1468 = vld [vmem:[#allocation3 + $0x10] sm:$0x44]
    %1470 = vset.pattern.permute.xlu0 20
    %1471 = vperm.xlu0 %1470, %v1467
    %v1472 = vpop.permute.xlu0 %1471
    %v1475 = vunpack.c.l.b16 %v1468
    %v1476 = vunpack.c.h.b16 %v1468
    %v1477 = vpack.c.b16 %v1475, %v1475
    %v1478 = vpack.c.b16 %v1476, %v1476
    %v1480 = vpack.i.b16 %v1477, %v1477
    %v1482 = vlaneseq
    %v1483 = vshrl.u32 %v1482, 7
    %v1484 = vsub.s32 2, %v1483
    %v1485 = vrot.slane %v1480, %v1484
    %v1487 = vpack.i.b16 %v1478, %v1478
    %v1489 = vlaneseq
    %v1490 = vshrl.u32 %v1489, 7
    %v1491 = vsub.s32 2, %v1490
    %v1492 = vrot.slane %v1487, %v1491
    %v1493 = vmul.bf16 %v1472, %v1485
    %v1494 = vmul.bf16 %v1472, %v1492
    %v1495 = vld [vmem:[#allocation5 + $0x10] sm:$0x44]
    %v1497 = vunpack.c.l.b16 %v1495
    %v1498 = vunpack.c.h.b16 %v1495
    %v1499 = vpack.c.b16 %v1497, %v1497
    %v1500 = vpack.c.b16 %v1498, %v1498
    %v1502 = vpack.i.b16 %v1499, %v1499
    %v1504 = vlaneseq
    %v1505 = vshrl.u32 %v1504, 7
    %v1506 = vsub.s32 2, %v1505
    %v1507 = vrot.slane %v1502, %v1506
    %v1509 = vpack.i.b16 %v1500, %v1500
    %v1511 = vlaneseq
    %v1512 = vshrl.u32 %v1511, 7
    %v1513 = vsub.s32 2, %v1512
    %v1514 = vrot.slane %v1509, %v1513
    %v1515 = vadd.bf16 %v1493, %v1507
    %v1516 = vadd.bf16 %v1494, %v1514
    %v1517 = vmax.bf16 %v1515, 0
    %v1518 = vmax.bf16 %v1516, 0
    %v1521 = vunpack.c.l.b16 %v1517
    %v1522 = vunpack.c.l.b16 %v1518
    %v1523 = vunpack.c.h.b16 %v1517
    %v1524 = vunpack.c.h.b16 %v1518
    %v1525 = vpack.c.b16 %v1522, %v1521
    %v1526 = vpack.c.b16 %v1524, %v1523
    %1529 = vst [vmem:[#allocation2 + $0xa0] sm:$0xff] %v1525
    %1530 = vst [vmem:[#allocation2 + $0x170] sm:$0xff] %v1526
    %v1531 = vld [vmem:[%s0] sm:$0xff]
    %v1532 = vld [vmem:[%s0 + $0x8] sm:$0xff]
    %v1533 = vpack.c.bf16 %v1532, %v1531
    %v1534 = vld [vmem:[#allocation3 + $0x10] sm:$0x44]
    %1536 = vset.pattern.permute.xlu0 21
    %1537 = vperm.xlu0 %1536, %v1533
    %v1538 = vpop.permute.xlu0 %1537
    %v1541 = vunpack.c.l.b16 %v1534
    %v1542 = vunpack.c.h.b16 %v1534
    %v1543 = vpack.c.b16 %v1541, %v1541
    %v1544 = vpack.c.b16 %v1542, %v1542
    %v1546 = vshrl.u32 %v1543, 16
    %v1547 = vpack.i.b16 %v1546, %v1546
    %v1549 = vlaneseq
    %v1550 = vshrl.u32 %v1549, 7
    %v1551 = vsub.s32 2, %v1550
    %v1552 = vrot.slane %v1547, %v1551
    %v1554 = vshrl.u32 %v1544, 16
    %v1555 = vpack.i.b16 %v1554, %v1554
    %v1557 = vlaneseq
    %v1558 = vshrl.u32 %v1557, 7
    %v1559 = vsub.s32 2, %v1558
    %v1560 = vrot.slane %v1555, %v1559
    %v1561 = vmul.bf16 %v1538, %v1552
    %v1562 = vmul.bf16 %v1538, %v1560
    %v1563 = vld [vmem:[#allocation5 + $0x10] sm:$0x44]
    %v1565 = vunpack.c.l.b16 %v1563
    %v1566 = vunpack.c.h.b16 %v1563
    %v1567 = vpack.c.b16 %v1565, %v1565
    %v1568 = vpack.c.b16 %v1566, %v1566
    %v1570 = vshrl.u32 %v1567, 16
    %v1571 = vpack.i.b16 %v1570, %v1570
    %v1573 = vlaneseq
    %v1574 = vshrl.u32 %v1573, 7
    %v1575 = vsub.s32 2, %v1574
    %v1576 = vrot.slane %v1571, %v1575
    %v1578 = vshrl.u32 %v1568, 16
    %v1579 = vpack.i.b16 %v1578, %v1578
    %v1581 = vlaneseq
    %v1582 = vshrl.u32 %v1581, 7
    %v1583 = vsub.s32 2, %v1582
    %v1584 = vrot.slane %v1579, %v1583
    %v1585 = vadd.bf16 %v1561, %v1576
    %v1586 = vadd.bf16 %v1562, %v1584
    %v1587 = vmax.bf16 %v1585, 0
    %v1588 = vmax.bf16 %v1586, 0
    %v1591 = vunpack.c.l.b16 %v1587
    %v1592 = vunpack.c.l.b16 %v1588
    %v1593 = vunpack.c.h.b16 %v1587
    %v1594 = vunpack.c.h.b16 %v1588
    %v1595 = vpack.c.b16 %v1592, %v1591
    %v1596 = vpack.c.b16 %v1594, %v1593
    %1599 = vst [vmem:[#allocation2 + $0xa8] sm:$0xff] %v1595
    %1600 = vst [vmem:[#allocation2 + $0x178] sm:$0xff] %v1596
    %v1601 = vld [vmem:[%s0] sm:$0xff]
    %v1602 = vld [vmem:[%s0 + $0x8] sm:$0xff]
    %v1603 = vpack.c.bf16 %v1602, %v1601
    %v1604 = vld [vmem:[#allocation3 + $0x10] sm:$0x88]
    %1606 = vset.pattern.permute.xlu0 22
    %1607 = vperm.xlu0 %1606, %v1603
    %v1608 = vpop.permute.xlu0 %1607
    %v1611 = vunpack.c.l.b16 %v1604
    %v1612 = vunpack.c.h.b16 %v1604
    %v1613 = vpack.c.b16 %v1611, %v1611
    %v1614 = vpack.c.b16 %v1612, %v1612
    %v1616 = vpack.i.b16 %v1613, %v1613
    %v1618 = vlaneseq
    %v1619 = vshrl.u32 %v1618, 7
    %v1620 = vsub.s32 3, %v1619
    %v1621 = vrot.slane %v1616, %v1620
    %v1623 = vpack.i.b16 %v1614, %v1614
    %v1625 = vlaneseq
    %v1626 = vshrl.u32 %v1625, 7
    %v1627 = vsub.s32 3, %v1626
    %v1628 = vrot.slane %v1623, %v1627
    %v1629 = vmul.bf16 %v1608, %v1621
    %v1630 = vmul.bf16 %v1608, %v1628
    %v1631 = vld [vmem:[#allocation5 + $0x10] sm:$0x88]
    %v1633 = vunpack.c.l.b16 %v1631
    %v1634 = vunpack.c.h.b16 %v1631
    %v1635 = vpack.c.b16 %v1633, %v1633
    %v1636 = vpack.c.b16 %v1634, %v1634
    %v1638 = vpack.i.b16 %v1635, %v1635
    %v1640 = vlaneseq
    %v1641 = vshrl.u32 %v1640, 7
    %v1642 = vsub.s32 3, %v1641
    %v1643 = vrot.slane %v1638, %v1642
    %v1645 = vpack.i.b16 %v1636, %v1636
    %v1647 = vlaneseq
    %v1648 = vshrl.u32 %v1647, 7
    %v1649 = vsub.s32 3, %v1648
    %v1650 = vrot.slane %v1645, %v1649
    %v1651 = vadd.bf16 %v1629, %v1643
    %v1652 = vadd.bf16 %v1630, %v1650
    %v1653 = vmax.bf16 %v1651, 0
    %v1654 = vmax.bf16 %v1652, 0
    %v1657 = vunpack.c.l.b16 %v1653
    %v1658 = vunpack.c.l.b16 %v1654
    %v1659 = vunpack.c.h.b16 %v1653
    %v1660 = vunpack.c.h.b16 %v1654
    %v1661 = vpack.c.b16 %v1658, %v1657
    %v1662 = vpack.c.b16 %v1660, %v1659
    %1665 = vst [vmem:[#allocation2 + $0xb0] sm:$0xff] %v1661
    %1666 = vst [vmem:[#allocation2 + $0x180] sm:$0xff] %v1662
    %v1667 = vld [vmem:[%s0] sm:$0xff]
    %v1668 = vld [vmem:[%s0 + $0x8] sm:$0xff]
    %v1669 = vpack.c.bf16 %v1668, %v1667
    %v1670 = vld [vmem:[#allocation3 + $0x10] sm:$0x88]
    %1672 = vset.pattern.permute.xlu0 23
    %1673 = vperm.xlu0 %1672, %v1669
    %v1674 = vpop.permute.xlu0 %1673
    %v1677 = vunpack.c.l.b16 %v1670
    %v1678 = vunpack.c.h.b16 %v1670
    %v1679 = vpack.c.b16 %v1677, %v1677
    %v1680 = vpack.c.b16 %v1678, %v1678
    %v1682 = vshrl.u32 %v1679, 16
    %v1683 = vpack.i.b16 %v1682, %v1682
    %v1685 = vlaneseq
    %v1686 = vshrl.u32 %v1685, 7
    %v1687 = vsub.s32 3, %v1686
    %v1688 = vrot.slane %v1683, %v1687
    %v1690 = vshrl.u32 %v1680, 16
    %v1691 = vpack.i.b16 %v1690, %v1690
    %v1693 = vlaneseq
    %v1694 = vshrl.u32 %v1693, 7
    %v1695 = vsub.s32 3, %v1694
    %v1696 = vrot.slane %v1691, %v1695
    %v1697 = vmul.bf16 %v1674, %v1688
    %v1698 = vmul.bf16 %v1674, %v1696
    %v1699 = vld [vmem:[#allocation5 + $0x10] sm:$0x88]
    %v1701 = vunpack.c.l.b16 %v1699
    %v1702 = vunpack.c.h.b16 %v1699
    %v1703 = vpack.c.b16 %v1701, %v1701
    %v1704 = vpack.c.b16 %v1702, %v1702
    %v1706 = vshrl.u32 %v1703, 16
    %v1707 = vpack.i.b16 %v1706, %v1706
    %v1709 = vlaneseq
    %v1710 = vshrl.u32 %v1709, 7
    %v1711 = vsub.s32 3, %v1710
    %v1712 = vrot.slane %v1707, %v1711
    %v1714 = vshrl.u32 %v1704, 16
    %v1715 = vpack.i.b16 %v1714, %v1714
    %v1717 = vlaneseq
    %v1718 = vshrl.u32 %v1717, 7
    %v1719 = vsub.s32 3, %v1718
    %v1720 = vrot.slane %v1715, %v1719
    %v1721 = vadd.bf16 %v1697, %v1712
    %v1722 = vadd.bf16 %v1698, %v1720
    %v1723 = vmax.bf16 %v1721, 0
    %v1724 = vmax.bf16 %v1722, 0
    %v1727 = vunpack.c.l.b16 %v1723
    %v1728 = vunpack.c.l.b16 %v1724
    %v1729 = vunpack.c.h.b16 %v1723
    %v1730 = vunpack.c.h.b16 %v1724
    %v1731 = vpack.c.b16 %v1728, %v1727
    %v1732 = vpack.c.b16 %v1730, %v1729
    %1735 = vst [vmem:[#allocation2 + $0xb8] sm:$0xff] %v1731
    %1736 = vst [vmem:[#allocation2 + $0x188] sm:$0xff] %v1732
    %v1737 = vld [vmem:[%s0] sm:$0xff]
    %v1738 = vld [vmem:[%s0 + $0x8] sm:$0xff]
    %v1739 = vpack.c.bf16 %v1738, %v1737
    %v1740 = vld [vmem:[#allocation3 + $0x18] sm:$0x11]
    %1742 = vset.pattern.permute.xlu0 24
    %1743 = vperm.xlu0 %1742, %v1739
    %v1744 = vpop.permute.xlu0 %1743
    %v1747 = vunpack.c.l.b16 %v1740
    %v1748 = vunpack.c.h.b16 %v1740
    %v1749 = vpack.c.b16 %v1747, %v1747
    %v1750 = vpack.c.b16 %v1748, %v1748
    %v1752 = vpack.i.b16 %v1749, %v1749
    %v1754 = vlaneseq
    %v1755 = vshrl.u32 %v1754, 7
    %v1756 = vsub.s32 0, %v1755
    %v1757 = vrot.slane %v1752, %v1756
    %v1759 = vpack.i.b16 %v1750, %v1750
    %v1761 = vlaneseq
    %v1762 = vshrl.u32 %v1761, 7
    %v1763 = vsub.s32 0, %v1762
    %v1764 = vrot.slane %v1759, %v1763
    %v1765 = vmul.bf16 %v1744, %v1757
    %v1766 = vmul.bf16 %v1744, %v1764
    %v1767 = vld [vmem:[#allocation5 + $0x18] sm:$0x11]
    %v1769 = vunpack.c.l.b16 %v1767
    %v1770 = vunpack.c.h.b16 %v1767
    %v1771 = vpack.c.b16 %v1769, %v1769
    %v1772 = vpack.c.b16 %v1770, %v1770
    %v1774 = vpack.i.b16 %v1771, %v1771
    %v1776 = vlaneseq
    %v1777 = vshrl.u32 %v1776, 7
    %v1778 = vsub.s32 0, %v1777
    %v1779 = vrot.slane %v1774, %v1778
    %v1781 = vpack.i.b16 %v1772, %v1772
    %v1783 = vlaneseq
    %v1784 = vshrl.u32 %v1783, 7
    %v1785 = vsub.s32 0, %v1784
    %v1786 = vrot.slane %v1781, %v1785
    %v1787 = vadd.bf16 %v1765, %v1779
    %v1788 = vadd.bf16 %v1766, %v1786
    %v1789 = vmax.bf16 %v1787, 0
    %v1790 = vmax.bf16 %v1788, 0
    %v1793 = vunpack.c.l.b16 %v1789
    %v1794 = vunpack.c.l.b16 %v1790
    %v1795 = vunpack.c.h.b16 %v1789
    %v1796 = vunpack.c.h.b16 %v1790
    %v1797 = vpack.c.b16 %v1794, %v1793
    %v1798 = vpack.c.b16 %v1796, %v1795
    %1801 = vst [vmem:[#allocation2 + $0xc0] sm:$0xff] %v1797
    %1802 = vst [vmem:[#allocation2 + $0x190] sm:$0xff] %v1798
    %v1803 = vld [vmem:[%s0] sm:$0xff]
    %v1804 = vld [vmem:[%s0 + $0x8] sm:$0xff]
    %v1805 = vpack.c.bf16 %v1804, %v1803
    %v1806 = vld [vmem:[#allocation3 + $0x18] sm:$0x11]
    %1808 = vset.pattern.permute.xlu0 25
    %1809 = vperm.xlu0 %1808, %v1805
    %v1810 = vpop.permute.xlu0 %1809
    %v1813 = vunpack.c.l.b16 %v1806
    %v1814 = vunpack.c.h.b16 %v1806
    %v1815 = vpack.c.b16 %v1813, %v1813
    %v1816 = vpack.c.b16 %v1814, %v1814
    %v1818 = vshrl.u32 %v1815, 16
    %v1819 = vpack.i.b16 %v1818, %v1818
    %v1821 = vlaneseq
    %v1822 = vshrl.u32 %v1821, 7
    %v1823 = vsub.s32 0, %v1822
    %v1824 = vrot.slane %v1819, %v1823
    %v1826 = vshrl.u32 %v1816, 16
    %v1827 = vpack.i.b16 %v1826, %v1826
    %v1829 = vlaneseq
    %v1830 = vshrl.u32 %v1829, 7
    %v1831 = vsub.s32 0, %v1830
    %v1832 = vrot.slane %v1827, %v1831
    %v1833 = vmul.bf16 %v1810, %v1824
    %v1834 = vmul.bf16 %v1810, %v1832
    %v1835 = vld [vmem:[#allocation5 + $0x18] sm:$0x11]
    %v1837 = vunpack.c.l.b16 %v1835
    %v1838 = vunpack.c.h.b16 %v1835
    %v1839 = vpack.c.b16 %v1837, %v1837
    %v1840 = vpack.c.b16 %v1838, %v1838
    %v1842 = vshrl.u32 %v1839, 16
    %v1843 = vpack.i.b16 %v1842, %v1842
    %v1845 = vlaneseq
    %v1846 = vshrl.u32 %v1845, 7
    %v1847 = vsub.s32 0, %v1846
    %v1848 = vrot.slane %v1843, %v1847
    %v1850 = vshrl.u32 %v1840, 16
    %v1851 = vpack.i.b16 %v1850, %v1850
    %v1853 = vlaneseq
    %v1854 = vshrl.u32 %v1853, 7
    %v1855 = vsub.s32 0, %v1854
    %v1856 = vrot.slane %v1851, %v1855
    %v1857 = vadd.bf16 %v1833, %v1848
    %v1858 = vadd.bf16 %v1834, %v1856
    %v1859 = vmax.bf16 %v1857, 0
    %v1860 = vmax.bf16 %v1858, 0
    %v1863 = vunpack.c.l.b16 %v1859
    %v1864 = vunpack.c.l.b16 %v1860
    %v1865 = vunpack.c.h.b16 %v1859
    %v1866 = vunpack.c.h.b16 %v1860
    %v1867 = vpack.c.b16 %v1864, %v1863
    %v1868 = vpack.c.b16 %v1866, %v1865
    %1871 = vst [vmem:[#allocation2 + $0xc8] sm:$0xff] %v1867
    %1872 = vst [vmem:[#allocation2 + $0x198] sm:$0xff] %v1868
    %v1873 = vld [vmem:[#allocation2] sm:$0xff]
    %v1874 = vld [vmem:[#allocation2 + $0x8] sm:$0xff]
    %v1875 = vld [vmem:[#allocation2 + $0x10] sm:$0xff]
    %v1876 = vld [vmem:[#allocation2 + $0x18] sm:$0xff]
    %v1877 = vld [vmem:[#allocation2 + $0x20] sm:$0xff]
    %v1878 = vld [vmem:[#allocation2 + $0x28] sm:$0xff]
    %v1879 = vld [vmem:[#allocation2 + $0x30] sm:$0xff]
    %v1880 = vld [vmem:[#allocation2 + $0x38] sm:$0xff]
    %v1881 = vld [vmem:[#allocation2 + $0x40] sm:$0xff]
    %v1882 = vld [vmem:[#allocation2 + $0x48] sm:$0xff]
    %v1883 = vld [vmem:[#allocation2 + $0x50] sm:$0xff]
    %v1884 = vld [vmem:[#allocation2 + $0x58] sm:$0xff]
    %v1885 = vld [vmem:[#allocation2 + $0x60] sm:$0xff]
    %v1886 = vld [vmem:[#allocation2 + $0x68] sm:$0xff]
    %v1887 = vld [vmem:[#allocation2 + $0x70] sm:$0xff]
    %v1888 = vld [vmem:[#allocation2 + $0x78] sm:$0xff]
    %v1889 = vld [vmem:[#allocation2 + $0x80] sm:$0xff]
    %v1890 = vld [vmem:[#allocation2 + $0x88] sm:$0xff]
    %v1891 = vld [vmem:[#allocation2 + $0x90] sm:$0xff]
    %v1892 = vld [vmem:[#allocation2 + $0x98] sm:$0xff]
    %v1893 = vld [vmem:[#allocation2 + $0xa0] sm:$0xff]
    %v1894 = vld [vmem:[#allocation2 + $0xa8] sm:$0xff]
    %v1895 = vld [vmem:[#allocation2 + $0xb0] sm:$0xff]
    %v1896 = vld [vmem:[#allocation2 + $0xb8] sm:$0xff]
    %v1897 = vld [vmem:[#allocation2 + $0xc0] sm:$0xff]
    %v1898 = vld [vmem:[#allocation2 + $0xc8] sm:$0xff]
    %v1899 = vld [vmem:[#allocation2 + $0xd0] sm:$0xff]
    %v1900 = vld [vmem:[#allocation2 + $0xd8] sm:$0xff]
    %v1901 = vld [vmem:[#allocation2 + $0xe0] sm:$0xff]
    %v1902 = vld [vmem:[#allocation2 + $0xe8] sm:$0xff]
    %v1903 = vld [vmem:[#allocation2 + $0xf0] sm:$0xff]
    %v1904 = vld [vmem:[#allocation2 + $0xf8] sm:$0xff]
    %v1905 = vld [vmem:[#allocation2 + $0x100] sm:$0xff]
    %v1906 = vld [vmem:[#allocation2 + $0x108] sm:$0xff]
    %v1907 = vld [vmem:[#allocation2 + $0x110] sm:$0xff]
    %v1908 = vld [vmem:[#allocation2 + $0x118] sm:$0xff]
    %v1909 = vld [vmem:[#allocation2 + $0x120] sm:$0xff]
    %v1910 = vld [vmem:[#allocation2 + $0x128] sm:$0xff]
    %v1911 = vld [vmem:[#allocation2 + $0x130] sm:$0xff]
    %v1912 = vld [vmem:[#allocation2 + $0x138] sm:$0xff]
    %v1913 = vld [vmem:[#allocation2 + $0x140] sm:$0xff]
    %v1914 = vld [vmem:[#allocation2 + $0x148] sm:$0xff]
    %v1915 = vld [vmem:[#allocation2 + $0x150] sm:$0xff]
    %v1916 = vld [vmem:[#allocation2 + $0x158] sm:$0xff]
    %v1917 = vld [vmem:[#allocation2 + $0x160] sm:$0xff]
    %v1918 = vld [vmem:[#allocation2 + $0x168] sm:$0xff]
    %v1919 = vld [vmem:[#allocation2 + $0x170] sm:$0xff]
    %v1920 = vld [vmem:[#allocation2 + $0x178] sm:$0xff]
    %v1921 = vld [vmem:[#allocation2 + $0x180] sm:$0xff]
    %v1922 = vld [vmem:[#allocation2 + $0x188] sm:$0xff]
    %v1923 = vld [vmem:[#allocation2 + $0x190] sm:$0xff]
    %v1924 = vld [vmem:[#allocation2 + $0x198] sm:$0xff]
    %v1925 = vld [vmem:[#allocation7] sm:$0xff]
    %v1926 = vld [vmem:[#allocation7 + $0x8] sm:$0xff]
    %v1927 = vld [vmem:[#allocation7 + $0x10] sm:$0xff]
    %v1928 = vld [vmem:[#allocation7 + $0x18] sm:$0xff]
    %v1929 = vld [vmem:[#allocation7 + $0x20] sm:$0xff]
    %v1930 = vld [vmem:[#allocation7 + $0x28] sm:$0xff]
    %v1931 = vld [vmem:[#allocation7 + $0x30] sm:$0xff]
    %v1932 = vld [vmem:[#allocation7 + $0x38] sm:$0xff]
    %v1933 = vld [vmem:[#allocation7 + $0x40] sm:$0xff]
    %v1934 = vld [vmem:[#allocation7 + $0x48] sm:$0xff]
    %v1935 = vld [vmem:[#allocation7 + $0x50] sm:$0xff]
    %v1936 = vld [vmem:[#allocation7 + $0x58] sm:$0xff]
    %v1937 = vld [vmem:[#allocation7 + $0x60] sm:$0xff]
    %v1938 = vld [vmem:[#allocation7 + $0x68] sm:$0xff]
    %v1939 = vld [vmem:[#allocation7 + $0x70] sm:$0xff]
    %v1940 = vld [vmem:[#allocation7 + $0x78] sm:$0xff]
    %v1941 = vld [vmem:[#allocation7 + $0x80] sm:$0xff]
    %v1942 = vld [vmem:[#allocation7 + $0x88] sm:$0xff]
    %v1943 = vld [vmem:[#allocation7 + $0x90] sm:$0xff]
    %v1944 = vld [vmem:[#allocation7 + $0x98] sm:$0xff]
    %v1945 = vld [vmem:[#allocation7 + $0xa0] sm:$0xff]
    %v1946 = vld [vmem:[#allocation7 + $0xa8] sm:$0xff]
    %v1947 = vld [vmem:[#allocation7 + $0xb0] sm:$0xff]
    %v1948 = vld [vmem:[#allocation7 + $0xb8] sm:$0xff]
    %v1949 = vld [vmem:[#allocation7 + $0xc0] sm:$0xff]
    %v1950 = vld [vmem:[#allocation7 + $0xc8] sm:$0xff]
    %v1951 = vld [vmem:[#allocation7 + $0xd0] sm:$0xff]
    %v1952 = vld [vmem:[#allocation7 + $0xd8] sm:$0xff]
    %v1953 = vld [vmem:[#allocation7 + $0xe0] sm:$0xff]
    %v1954 = vld [vmem:[#allocation7 + $0xe8] sm:$0xff]
    %v1955 = vld [vmem:[#allocation7 + $0xf0] sm:$0xff]
    %v1956 = vld [vmem:[#allocation7 + $0xf8] sm:$0xff]
    %v1957 = vld [vmem:[#allocation7 + $0x100] sm:$0xff]
    %v1958 = vld [vmem:[#allocation7 + $0x108] sm:$0xff]
    %v1959 = vld [vmem:[#allocation7 + $0x110] sm:$0xff]
    %v1960 = vld [vmem:[#allocation7 + $0x118] sm:$0xff]
    %v1961 = vld [vmem:[#allocation7 + $0x120] sm:$0xff]
    %v1962 = vld [vmem:[#allocation7 + $0x128] sm:$0xff]
    %v1963 = vld [vmem:[#allocation7 + $0x130] sm:$0xff]
    %v1964 = vld [vmem:[#allocation7 + $0x138] sm:$0xff]
    %v1965 = vld [vmem:[#allocation7 + $0x140] sm:$0xff]
    %v1966 = vld [vmem:[#allocation7 + $0x148] sm:$0xff]
    %v1967 = vld [vmem:[#allocation7 + $0x150] sm:$0xff]
    %v1968 = vld [vmem:[#allocation7 + $0x158] sm:$0xff]
    %v1969 = vld [vmem:[#allocation7 + $0x160] sm:$0xff]
    %v1970 = vld [vmem:[#allocation7 + $0x168] sm:$0xff]
    %v1971 = vld [vmem:[#allocation7 + $0x170] sm:$0xff]
    %v1972 = vld [vmem:[#allocation7 + $0x178] sm:$0xff]
    %v1973 = vld [vmem:[#allocation7 + $0x180] sm:$0xff]
    %v1974 = vld [vmem:[#allocation7 + $0x188] sm:$0xff]
    %v1975 = vld [vmem:[#allocation7 + $0x190] sm:$0xff]
    %v1976 = vld [vmem:[#allocation7 + $0x198] sm:$0xff]
    %v1977 = vld [vmem:[#allocation7 + $0x1a0] sm:$0xff]
    %v1978 = vld [vmem:[#allocation7 + $0x1a8] sm:$0xff]
    %v1979 = vld [vmem:[#allocation7 + $0x1b0] sm:$0xff]
    %v1980 = vld [vmem:[#allocation7 + $0x1b8] sm:$0xff]
    %v1981 = vld [vmem:[#allocation7 + $0x1c0] sm:$0xff]
    %v1982 = vld [vmem:[#allocation7 + $0x1c8] sm:$0xff]
    %v1983 = vld [vmem:[#allocation7 + $0x1d0] sm:$0xff]
    %v1984 = vld [vmem:[#allocation7 + $0x1d8] sm:$0xff]
    %v1985 = vld [vmem:[#allocation7 + $0x1e0] sm:$0xff]
    %v1986 = vld [vmem:[#allocation7 + $0x1e8] sm:$0xff]
    %v1987 = vld [vmem:[#allocation7 + $0x1f0] sm:$0xff]
    %v1988 = vld [vmem:[#allocation7 + $0x1f8] sm:$0xff]
    %v1989 = vld [vmem:[#allocation7 + $0x200] sm:$0xff]
    %v1990 = vld [vmem:[#allocation7 + $0x208] sm:$0xff]
    %v1991 = vld [vmem:[#allocation7 + $0x210] sm:$0xff]
    %v1992 = vld [vmem:[#allocation7 + $0x218] sm:$0xff]
    %v1993 = vld [vmem:[#allocation7 + $0x220] sm:$0xff]
    %v1994 = vld [vmem:[#allocation7 + $0x228] sm:$0xff]
    %v1995 = vld [vmem:[#allocation7 + $0x230] sm:$0xff]
    %v1996 = vld [vmem:[#allocation7 + $0x238] sm:$0xff]
    %v1997 = vld [vmem:[#allocation7 + $0x240] sm:$0xff]
    %v1998 = vld [vmem:[#allocation7 + $0x248] sm:$0xff]
    %v1999 = vld [vmem:[#allocation7 + $0x250] sm:$0xff]
    %v2000 = vld [vmem:[#allocation7 + $0x258] sm:$0xff]
    %v2001 = vld [vmem:[#allocation7 + $0x260] sm:$0xff]
    %v2002 = vld [vmem:[#allocation7 + $0x268] sm:$0xff]
    %v2003 = vld [vmem:[#allocation7 + $0x270] sm:$0xff]
    %v2004 = vld [vmem:[#allocation7 + $0x278] sm:$0xff]
    %v2005 = vld [vmem:[#allocation7 + $0x280] sm:$0xff]
    %v2006 = vld [vmem:[#allocation7 + $0x288] sm:$0xff]
    %v2007 = vld [vmem:[#allocation7 + $0x290] sm:$0xff]
    %v2008 = vld [vmem:[#allocation7 + $0x298] sm:$0xff]
    %v2009 = vld [vmem:[#allocation7 + $0x2a0] sm:$0xff]
    %v2010 = vld [vmem:[#allocation7 + $0x2a8] sm:$0xff]
    %v2011 = vld [vmem:[#allocation7 + $0x2b0] sm:$0xff]
    %v2012 = vld [vmem:[#allocation7 + $0x2b8] sm:$0xff]
    %v2013 = vld [vmem:[#allocation7 + $0x2c0] sm:$0xff]
    %v2014 = vld [vmem:[#allocation7 + $0x2c8] sm:$0xff]
    %v2015 = vld [vmem:[#allocation7 + $0x2d0] sm:$0xff]
    %v2016 = vld [vmem:[#allocation7 + $0x2d8] sm:$0xff]
    %v2017 = vld [vmem:[#allocation7 + $0x2e0] sm:$0xff]
    %v2018 = vld [vmem:[#allocation7 + $0x2e8] sm:$0xff]
    %v2019 = vld [vmem:[#allocation7 + $0x2f0] sm:$0xff]
    %v2020 = vld [vmem:[#allocation7 + $0x2f8] sm:$0xff]
    %v2021 = vld [vmem:[#allocation7 + $0x300] sm:$0xff]
    %v2022 = vld [vmem:[#allocation7 + $0x308] sm:$0xff]
    %v2023 = vld [vmem:[#allocation7 + $0x310] sm:$0xff]
    %v2024 = vld [vmem:[#allocation7 + $0x318] sm:$0xff]
    %v2025 = vld [vmem:[#allocation7 + $0x320] sm:$0xff]
    %v2026 = vld [vmem:[#allocation7 + $0x328] sm:$0xff]
    %v2027 = vld [vmem:[#allocation7 + $0x330] sm:$0xff]
    %v2028 = vld [vmem:[#allocation7 + $0x338] sm:$0xff]
    %v2029 = vld [vmem:[#allocation7 + $0x340] sm:$0xff]
    %v2030 = vld [vmem:[#allocation7 + $0x348] sm:$0xff]
    %v2031 = vld [vmem:[#allocation7 + $0x350] sm:$0xff]
    %v2032 = vld [vmem:[#allocation7 + $0x358] sm:$0xff]
    %v2033 = vld [vmem:[#allocation7 + $0x360] sm:$0xff]
    %v2034 = vld [vmem:[#allocation7 + $0x368] sm:$0xff]
    %v2035 = vld [vmem:[#allocation7 + $0x370] sm:$0xff]
    %v2036 = vld [vmem:[#allocation7 + $0x378] sm:$0xff]
    %v2037 = vld [vmem:[#allocation7 + $0x380] sm:$0xff]
    %v2038 = vld [vmem:[#allocation7 + $0x388] sm:$0xff]
    %v2039 = vld [vmem:[#allocation7 + $0x390] sm:$0xff]
    %v2040 = vld [vmem:[#allocation7 + $0x398] sm:$0xff]
    %v2041 = vld [vmem:[#allocation7 + $0x3a0] sm:$0xff]
    %v2042 = vld [vmem:[#allocation7 + $0x3a8] sm:$0xff]
    %v2043 = vld [vmem:[#allocation7 + $0x3b0] sm:$0xff]
    %v2044 = vld [vmem:[#allocation7 + $0x3b8] sm:$0xff]
    %v2045 = vld [vmem:[#allocation7 + $0x3c0] sm:$0xff]
    %v2046 = vld [vmem:[#allocation7 + $0x3c8] sm:$0xff]
    %v2047 = vld [vmem:[#allocation7 + $0x3d0] sm:$0xff]
    %v2048 = vld [vmem:[#allocation7 + $0x3d8] sm:$0xff]
    %v2049 = vld [vmem:[#allocation7 + $0x3e0] sm:$0xff]
    %v2050 = vld [vmem:[#allocation7 + $0x3e8] sm:$0xff]
    %v2051 = vld [vmem:[#allocation7 + $0x3f0] sm:$0xff]
    %v2052 = vld [vmem:[#allocation7 + $0x3f8] sm:$0xff]
    %v2053 = vld [vmem:[#allocation7 + $0x400] sm:$0xff]
    %v2054 = vld [vmem:[#allocation7 + $0x408] sm:$0xff]
    %v2055 = vld [vmem:[#allocation7 + $0x410] sm:$0xff]
    %v2056 = vld [vmem:[#allocation7 + $0x418] sm:$0xff]
    %v2057 = vld [vmem:[#allocation7 + $0x420] sm:$0xff]
    %v2058 = vld [vmem:[#allocation7 + $0x428] sm:$0xff]
    %v2059 = vld [vmem:[#allocation7 + $0x430] sm:$0xff]
    %v2060 = vld [vmem:[#allocation7 + $0x438] sm:$0xff]
    %v2061 = vld [vmem:[#allocation7 + $0x440] sm:$0xff]
    %v2062 = vld [vmem:[#allocation7 + $0x448] sm:$0xff]
    %v2063 = vld [vmem:[#allocation7 + $0x450] sm:$0xff]
    %v2064 = vld [vmem:[#allocation7 + $0x458] sm:$0xff]
    %v2065 = vld [vmem:[#allocation7 + $0x460] sm:$0xff]
    %v2066 = vld [vmem:[#allocation7 + $0x468] sm:$0xff]
    %v2067 = vld [vmem:[#allocation7 + $0x470] sm:$0xff]
    %v2068 = vld [vmem:[#allocation7 + $0x478] sm:$0xff]
    %v2069 = vld [vmem:[#allocation7 + $0x480] sm:$0xff]
    %v2070 = vld [vmem:[#allocation7 + $0x488] sm:$0xff]
    %v2071 = vld [vmem:[#allocation7 + $0x490] sm:$0xff]
    %v2072 = vld [vmem:[#allocation7 + $0x498] sm:$0xff]
    %v2073 = vld [vmem:[#allocation7 + $0x4a0] sm:$0xff]
    %v2074 = vld [vmem:[#allocation7 + $0x4a8] sm:$0xff]
    %v2075 = vld [vmem:[#allocation7 + $0x4b0] sm:$0xff]
    %v2076 = vld [vmem:[#allocation7 + $0x4b8] sm:$0xff]
    %v2077 = vld [vmem:[#allocation7 + $0x4c0] sm:$0xff]
    %v2078 = vld [vmem:[#allocation7 + $0x4c8] sm:$0xff]
    %v2079 = vld [vmem:[#allocation7 + $0x4d0] sm:$0xff]
    %v2080 = vld [vmem:[#allocation7 + $0x4d8] sm:$0xff]
    %v2081 = vld [vmem:[#allocation7 + $0x4e0] sm:$0xff]
    %v2082 = vld [vmem:[#allocation7 + $0x4e8] sm:$0xff]
    %v2083 = vld [vmem:[#allocation7 + $0x4f0] sm:$0xff]
    %v2084 = vld [vmem:[#allocation7 + $0x4f8] sm:$0xff]
    %v2085 = vld [vmem:[#allocation7 + $0x500] sm:$0xff]
    %v2086 = vld [vmem:[#allocation7 + $0x508] sm:$0xff]
    %v2087 = vld [vmem:[#allocation7 + $0x510] sm:$0xff]
    %v2088 = vld [vmem:[#allocation7 + $0x518] sm:$0xff]
    %v2089 = vld [vmem:[#allocation7 + $0x520] sm:$0xff]
    %v2090 = vld [vmem:[#allocation7 + $0x528] sm:$0xff]
    %v2091 = vld [vmem:[#allocation7 + $0x530] sm:$0xff]
    %v2092 = vld [vmem:[#allocation7 + $0x538] sm:$0xff]
    %v2093 = vld [vmem:[#allocation7 + $0x540] sm:$0xff]
    %v2094 = vld [vmem:[#allocation7 + $0x548] sm:$0xff]
    %v2095 = vld [vmem:[#allocation7 + $0x550] sm:$0xff]
    %v2096 = vld [vmem:[#allocation7 + $0x558] sm:$0xff]
    %v2097 = vld [vmem:[#allocation7 + $0x560] sm:$0xff]
    %v2098 = vld [vmem:[#allocation7 + $0x568] sm:$0xff]
    %v2099 = vld [vmem:[#allocation7 + $0x570] sm:$0xff]
    %v2100 = vld [vmem:[#allocation7 + $0x578] sm:$0xff]
    %v2101 = vld [vmem:[#allocation7 + $0x580] sm:$0xff]
    %v2102 = vld [vmem:[#allocation7 + $0x588] sm:$0xff]
    %v2103 = vld [vmem:[#allocation7 + $0x590] sm:$0xff]
    %v2104 = vld [vmem:[#allocation7 + $0x598] sm:$0xff]
    %v2105 = vld [vmem:[#allocation7 + $0x5a0] sm:$0xff]
    %v2106 = vld [vmem:[#allocation7 + $0x5a8] sm:$0xff]
    %v2107 = vld [vmem:[#allocation7 + $0x5b0] sm:$0xff]
    %v2108 = vld [vmem:[#allocation7 + $0x5b8] sm:$0xff]
    %v2109 = vld [vmem:[#allocation7 + $0x5c0] sm:$0xff]
    %v2110 = vld [vmem:[#allocation7 + $0x5c8] sm:$0xff]
    %v2111 = vld [vmem:[#allocation7 + $0x5d0] sm:$0xff]
    %v2112 = vld [vmem:[#allocation7 + $0x5d8] sm:$0xff]
    %v2113 = vld [vmem:[#allocation7 + $0x5e0] sm:$0xff]
    %v2114 = vld [vmem:[#allocation7 + $0x5e8] sm:$0xff]
    %v2115 = vld [vmem:[#allocation7 + $0x5f0] sm:$0xff]
    %v2116 = vld [vmem:[#allocation7 + $0x5f8] sm:$0xff]
    %v2117 = vld [vmem:[#allocation7 + $0x600] sm:$0xff]
    %v2118 = vld [vmem:[#allocation7 + $0x608] sm:$0xff]
    %v2119 = vld [vmem:[#allocation7 + $0x610] sm:$0xff]
    %v2120 = vld [vmem:[#allocation7 + $0x618] sm:$0xff]
    %v2121 = vld [vmem:[#allocation7 + $0x620] sm:$0xff]
    %v2122 = vld [vmem:[#allocation7 + $0x628] sm:$0xff]
    %v2123 = vld [vmem:[#allocation7 + $0x630] sm:$0xff]
    %v2124 = vld [vmem:[#allocation7 + $0x638] sm:$0xff]
    %v2125 = vld [vmem:[#allocation7 + $0x640] sm:$0xff]
    %v2126 = vld [vmem:[#allocation7 + $0x648] sm:$0xff]
    %v2127 = vld [vmem:[#allocation7 + $0x650] sm:$0xff]
    %v2128 = vld [vmem:[#allocation7 + $0x658] sm:$0xff]
    %v2129 = vld [vmem:[#allocation7 + $0x660] sm:$0xff]
    %v2130 = vld [vmem:[#allocation7 + $0x668] sm:$0xff]
    %v2131 = vld [vmem:[#allocation7 + $0x670] sm:$0xff]
    %v2132 = vld [vmem:[#allocation7 + $0x678] sm:$0xff]
    %v2133 = vld [vmem:[#allocation7 + $0x680] sm:$0xff]
    %v2134 = vld [vmem:[#allocation7 + $0x688] sm:$0xff]
    %v2135 = vld [vmem:[#allocation7 + $0x690] sm:$0xff]
    %v2136 = vld [vmem:[#allocation7 + $0x698] sm:$0xff]
    %v2137 = vld [vmem:[#allocation7 + $0x6a0] sm:$0xff]
    %v2138 = vld [vmem:[#allocation7 + $0x6a8] sm:$0xff]
    %v2139 = vld [vmem:[#allocation7 + $0x6b0] sm:$0xff]
    %v2140 = vld [vmem:[#allocation7 + $0x6b8] sm:$0xff]
    %v2141 = vld [vmem:[#allocation7 + $0x6c0] sm:$0xff]
    %v2142 = vld [vmem:[#allocation7 + $0x6c8] sm:$0xff]
    %v2143 = vld [vmem:[#allocation7 + $0x6d0] sm:$0xff]
    %v2144 = vld [vmem:[#allocation7 + $0x6d8] sm:$0xff]
    %v2145 = vld [vmem:[#allocation7 + $0x6e0] sm:$0xff]
    %v2146 = vld [vmem:[#allocation7 + $0x6e8] sm:$0xff]
    %v2147 = vld [vmem:[#allocation7 + $0x6f0] sm:$0xff]
    %v2148 = vld [vmem:[#allocation7 + $0x6f8] sm:$0xff]
    %v2149 = vld [vmem:[#allocation7 + $0x700] sm:$0xff]
    %v2150 = vld [vmem:[#allocation7 + $0x708] sm:$0xff]
    %v2151 = vld [vmem:[#allocation7 + $0x710] sm:$0xff]
    %v2152 = vld [vmem:[#allocation7 + $0x718] sm:$0xff]
    %v2153 = vld [vmem:[#allocation7 + $0x720] sm:$0xff]
    %v2154 = vld [vmem:[#allocation7 + $0x728] sm:$0xff]
    %v2155 = vld [vmem:[#allocation7 + $0x730] sm:$0xff]
    %v2156 = vld [vmem:[#allocation7 + $0x738] sm:$0xff]
    %v2157 = vld [vmem:[#allocation7 + $0x740] sm:$0xff]
    %v2158 = vld [vmem:[#allocation7 + $0x748] sm:$0xff]
    %v2159 = vld [vmem:[#allocation7 + $0x750] sm:$0xff]
    %v2160 = vld [vmem:[#allocation7 + $0x758] sm:$0xff]
    %v2161 = vld [vmem:[#allocation7 + $0x760] sm:$0xff]
    %v2162 = vld [vmem:[#allocation7 + $0x768] sm:$0xff]
    %v2163 = vld [vmem:[#allocation7 + $0x770] sm:$0xff]
    %v2164 = vld [vmem:[#allocation7 + $0x778] sm:$0xff]
    %v2165 = vld [vmem:[#allocation7 + $0x780] sm:$0xff]
    %v2166 = vld [vmem:[#allocation7 + $0x788] sm:$0xff]
    %v2167 = vld [vmem:[#allocation7 + $0x790] sm:$0xff]
    %v2168 = vld [vmem:[#allocation7 + $0x798] sm:$0xff]
    %v2169 = vld [vmem:[#allocation7 + $0x7a0] sm:$0xff]
    %v2170 = vld [vmem:[#allocation7 + $0x7a8] sm:$0xff]
    %v2171 = vld [vmem:[#allocation7 + $0x7b0] sm:$0xff]
    %v2172 = vld [vmem:[#allocation7 + $0x7b8] sm:$0xff]
    %v2173 = vld [vmem:[#allocation7 + $0x7c0] sm:$0xff]
    %v2174 = vld [vmem:[#allocation7 + $0x7c8] sm:$0xff]
    %v2175 = vld [vmem:[#allocation7 + $0x7d0] sm:$0xff]
    %v2176 = vld [vmem:[#allocation7 + $0x7d8] sm:$0xff]
    %v2177 = vld [vmem:[#allocation7 + $0x7e0] sm:$0xff]
    %v2178 = vld [vmem:[#allocation7 + $0x7e8] sm:$0xff]
    %v2179 = vld [vmem:[#allocation7 + $0x7f0] sm:$0xff]
    %v2180 = vld [vmem:[#allocation7 + $0x7f8] sm:$0xff]
    %v2181 = vld [vmem:[#allocation7 + $0x800] sm:$0xff]
    %v2182 = vld [vmem:[#allocation7 + $0x808] sm:$0xff]
    %v2183 = vld [vmem:[#allocation7 + $0x810] sm:$0xff]
    %v2184 = vld [vmem:[#allocation7 + $0x818] sm:$0xff]
    %v2185 = vld [vmem:[#allocation7 + $0x820] sm:$0xff]
    %v2186 = vld [vmem:[#allocation7 + $0x828] sm:$0xff]
    %v2187 = vld [vmem:[#allocation7 + $0x830] sm:$0xff]
    %v2188 = vld [vmem:[#allocation7 + $0x838] sm:$0xff]
    %v2189 = vld [vmem:[#allocation7 + $0x840] sm:$0xff]
    %v2190 = vld [vmem:[#allocation7 + $0x848] sm:$0xff]
    %v2191 = vld [vmem:[#allocation7 + $0x850] sm:$0xff]
    %v2192 = vld [vmem:[#allocation7 + $0x858] sm:$0xff]
    %v2193 = vld [vmem:[#allocation7 + $0x860] sm:$0xff]
    %v2194 = vld [vmem:[#allocation7 + $0x868] sm:$0xff]
    %v2195 = vld [vmem:[#allocation7 + $0x870] sm:$0xff]
    %v2196 = vld [vmem:[#allocation7 + $0x878] sm:$0xff]
    %v2197 = vld [vmem:[#allocation7 + $0x880] sm:$0xff]
    %v2198 = vld [vmem:[#allocation7 + $0x888] sm:$0xff]
    %v2199 = vld [vmem:[#allocation7 + $0x890] sm:$0xff]
    %v2200 = vld [vmem:[#allocation7 + $0x898] sm:$0xff]
    %v2201 = vld [vmem:[#allocation7 + $0x8a0] sm:$0xff]
    %v2202 = vld [vmem:[#allocation7 + $0x8a8] sm:$0xff]
    %v2203 = vld [vmem:[#allocation7 + $0x8b0] sm:$0xff]
    %v2204 = vld [vmem:[#allocation7 + $0x8b8] sm:$0xff]
    %v2205 = vld [vmem:[#allocation7 + $0x8c0] sm:$0xff]
    %v2206 = vld [vmem:[#allocation7 + $0x8c8] sm:$0xff]
    %v2207 = vld [vmem:[#allocation7 + $0x8d0] sm:$0xff]
    %v2208 = vld [vmem:[#allocation7 + $0x8d8] sm:$0xff]
    %v2209 = vld [vmem:[#allocation7 + $0x8e0] sm:$0xff]
    %v2210 = vld [vmem:[#allocation7 + $0x8e8] sm:$0xff]
    %v2211 = vld [vmem:[#allocation7 + $0x8f0] sm:$0xff]
    %v2212 = vld [vmem:[#allocation7 + $0x8f8] sm:$0xff]
    %v2213 = vld [vmem:[#allocation7 + $0x900] sm:$0xff]
    %v2214 = vld [vmem:[#allocation7 + $0x908] sm:$0xff]
    %v2215 = vld [vmem:[#allocation7 + $0x910] sm:$0xff]
    %v2216 = vld [vmem:[#allocation7 + $0x918] sm:$0xff]
    %v2217 = vld [vmem:[#allocation7 + $0x920] sm:$0xff]
    %v2218 = vld [vmem:[#allocation7 + $0x928] sm:$0xff]
    %v2219 = vld [vmem:[#allocation7 + $0x930] sm:$0xff]
    %v2220 = vld [vmem:[#allocation7 + $0x938] sm:$0xff]
    %v2221 = vld [vmem:[#allocation7 + $0x940] sm:$0xff]
    %v2222 = vld [vmem:[#allocation7 + $0x948] sm:$0xff]
    %v2223 = vld [vmem:[#allocation7 + $0x950] sm:$0xff]
    %v2224 = vld [vmem:[#allocation7 + $0x958] sm:$0xff]
    %v2225 = vld [vmem:[#allocation7 + $0x960] sm:$0xff]
    %v2226 = vld [vmem:[#allocation7 + $0x968] sm:$0xff]
    %v2227 = vld [vmem:[#allocation7 + $0x970] sm:$0xff]
    %v2228 = vld [vmem:[#allocation7 + $0x978] sm:$0xff]
    %v2229 = vld [vmem:[#allocation7 + $0x980] sm:$0xff]
    %v2230 = vld [vmem:[#allocation7 + $0x988] sm:$0xff]
    %v2231 = vld [vmem:[#allocation7 + $0x990] sm:$0xff]
    %v2232 = vld [vmem:[#allocation7 + $0x998] sm:$0xff]
    %v2233 = vld [vmem:[#allocation7 + $0x9a0] sm:$0xff]
    %v2234 = vld [vmem:[#allocation7 + $0x9a8] sm:$0xff]
    %v2235 = vld [vmem:[#allocation7 + $0x9b0] sm:$0xff]
    %v2236 = vld [vmem:[#allocation7 + $0x9b8] sm:$0xff]
    %v2237 = vld [vmem:[#allocation7 + $0x9c0] sm:$0xff]
    %v2238 = vld [vmem:[#allocation7 + $0x9c8] sm:$0xff]
    %v2239 = vld [vmem:[#allocation7 + $0x9d0] sm:$0xff]
    %v2240 = vld [vmem:[#allocation7 + $0x9d8] sm:$0xff]
    %v2241 = vld [vmem:[#allocation7 + $0x9e0] sm:$0xff]
    %v2242 = vld [vmem:[#allocation7 + $0x9e8] sm:$0xff]
    %v2243 = vld [vmem:[#allocation7 + $0x9f0] sm:$0xff]
    %v2244 = vld [vmem:[#allocation7 + $0x9f8] sm:$0xff]
    %v2245 = vld [vmem:[#allocation7 + $0xa00] sm:$0xff]
    %v2246 = vld [vmem:[#allocation7 + $0xa08] sm:$0xff]
    %v2247 = vld [vmem:[#allocation7 + $0xa10] sm:$0xff]
    %v2248 = vld [vmem:[#allocation7 + $0xa18] sm:$0xff]
    %v2249 = vld [vmem:[#allocation7 + $0xa20] sm:$0xff]
    %v2250 = vld [vmem:[#allocation7 + $0xa28] sm:$0xff]
    %v2251 = vld [vmem:[#allocation7 + $0xa30] sm:$0xff]
    %v2252 = vld [vmem:[#allocation7 + $0xa38] sm:$0xff]
    %v2253 = vld [vmem:[#allocation7 + $0xa40] sm:$0xff]
    %v2254 = vld [vmem:[#allocation7 + $0xa48] sm:$0xff]
    %v2255 = vld [vmem:[#allocation7 + $0xa50] sm:$0xff]
    %v2256 = vld [vmem:[#allocation7 + $0xa58] sm:$0xff]
    %v2257 = vld [vmem:[#allocation7 + $0xa60] sm:$0xff]
    %v2258 = vld [vmem:[#allocation7 + $0xa68] sm:$0xff]
    %v2259 = vld [vmem:[#allocation7 + $0xa70] sm:$0xff]
    %v2260 = vld [vmem:[#allocation7 + $0xa78] sm:$0xff]
    %v2261 = vld [vmem:[#allocation7 + $0xa80] sm:$0xff]
    %v2262 = vld [vmem:[#allocation7 + $0xa88] sm:$0xff]
    %v2263 = vld [vmem:[#allocation7 + $0xa90] sm:$0xff]
    %v2264 = vld [vmem:[#allocation7 + $0xa98] sm:$0xff]
    %v2265 = vld [vmem:[#allocation7 + $0xaa0] sm:$0xff]
    %v2266 = vld [vmem:[#allocation7 + $0xaa8] sm:$0xff]
    %v2267 = vld [vmem:[#allocation7 + $0xab0] sm:$0xff]
    %v2268 = vld [vmem:[#allocation7 + $0xab8] sm:$0xff]
    %v2269 = vld [vmem:[#allocation7 + $0xac0] sm:$0xff]
    %v2270 = vld [vmem:[#allocation7 + $0xac8] sm:$0xff]
    %v2271 = vld [vmem:[#allocation7 + $0xad0] sm:$0xff]
    %v2272 = vld [vmem:[#allocation7 + $0xad8] sm:$0xff]
    %v2273 = vld [vmem:[#allocation7 + $0xae0] sm:$0xff]
    %v2274 = vld [vmem:[#allocation7 + $0xae8] sm:$0xff]
    %v2275 = vld [vmem:[#allocation7 + $0xaf0] sm:$0xff]
    %v2276 = vld [vmem:[#allocation7 + $0xaf8] sm:$0xff]
    %v2277 = vld [vmem:[#allocation7 + $0xb00] sm:$0xff]
    %v2278 = vld [vmem:[#allocation7 + $0xb08] sm:$0xff]
    %v2279 = vld [vmem:[#allocation7 + $0xb10] sm:$0xff]
    %v2280 = vld [vmem:[#allocation7 + $0xb18] sm:$0xff]
    %v2281 = vld [vmem:[#allocation7 + $0xb20] sm:$0xff]
    %v2282 = vld [vmem:[#allocation7 + $0xb28] sm:$0xff]
    %v2283 = vld [vmem:[#allocation7 + $0xb30] sm:$0xff]
    %v2284 = vld [vmem:[#allocation7 + $0xb38] sm:$0xff]
    %v2285 = vld [vmem:[#allocation7 + $0xb40] sm:$0xff]
    %v2286 = vld [vmem:[#allocation7 + $0xb48] sm:$0xff]
    %v2287 = vld [vmem:[#allocation7 + $0xb50] sm:$0xff]
    %v2288 = vld [vmem:[#allocation7 + $0xb58] sm:$0xff]
    %v2289 = vld [vmem:[#allocation7 + $0xb60] sm:$0xff]
    %v2290 = vld [vmem:[#allocation7 + $0xb68] sm:$0xff]
    %v2291 = vld [vmem:[#allocation7 + $0xb70] sm:$0xff]
    %v2292 = vld [vmem:[#allocation7 + $0xb78] sm:$0xff]
    %v2293 = vld [vmem:[#allocation7 + $0xb80] sm:$0xff]
    %v2294 = vld [vmem:[#allocation7 + $0xb88] sm:$0xff]
    %v2295 = vld [vmem:[#allocation7 + $0xb90] sm:$0xff]
    %v2296 = vld [vmem:[#allocation7 + $0xb98] sm:$0xff]
    %v2297 = vld [vmem:[#allocation7 + $0xba0] sm:$0xff]
    %v2298 = vld [vmem:[#allocation7 + $0xba8] sm:$0xff]
    %v2299 = vld [vmem:[#allocation7 + $0xbb0] sm:$0xff]
    %v2300 = vld [vmem:[#allocation7 + $0xbb8] sm:$0xff]
    %v2301 = vld [vmem:[#allocation7 + $0xbc0] sm:$0xff]
    %v2302 = vld [vmem:[#allocation7 + $0xbc8] sm:$0xff]
    %v2303 = vld [vmem:[#allocation7 + $0xbd0] sm:$0xff]
    %v2304 = vld [vmem:[#allocation7 + $0xbd8] sm:$0xff]
    %v2305 = vld [vmem:[#allocation7 + $0xbe0] sm:$0xff]
    %v2306 = vld [vmem:[#allocation7 + $0xbe8] sm:$0xff]
    %v2307 = vld [vmem:[#allocation7 + $0xbf0] sm:$0xff]
    %v2308 = vld [vmem:[#allocation7 + $0xbf8] sm:$0xff]
    %v2309 = vld [vmem:[#allocation7 + $0xc00] sm:$0xff]
    %v2310 = vld [vmem:[#allocation7 + $0xc08] sm:$0xff]
    %v2311 = vld [vmem:[#allocation7 + $0xc10] sm:$0xff]
    %v2312 = vld [vmem:[#allocation7 + $0xc18] sm:$0xff]
    %v2313 = vld [vmem:[#allocation7 + $0xc20] sm:$0xff]
    %v2314 = vld [vmem:[#allocation7 + $0xc28] sm:$0xff]
    %v2315 = vld [vmem:[#allocation7 + $0xc30] sm:$0xff]
    %v2316 = vld [vmem:[#allocation7 + $0xc38] sm:$0xff]
    %v2317 = vld [vmem:[#allocation7 + $0xc40] sm:$0xff]
    %v2318 = vld [vmem:[#allocation7 + $0xc48] sm:$0xff]
    %v2319 = vld [vmem:[#allocation7 + $0xc50] sm:$0xff]
    %v2320 = vld [vmem:[#allocation7 + $0xc58] sm:$0xff]
    %v2321 = vld [vmem:[#allocation7 + $0xc60] sm:$0xff]
    %v2322 = vld [vmem:[#allocation7 + $0xc68] sm:$0xff]
    %v2323 = vld [vmem:[#allocation7 + $0xc70] sm:$0xff]
    %v2324 = vld [vmem:[#allocation7 + $0xc78] sm:$0xff]
    %v2325 = vld [vmem:[#allocation7 + $0xc80] sm:$0xff]
    %v2326 = vld [vmem:[#allocation7 + $0xc88] sm:$0xff]
    %v2327 = vld [vmem:[#allocation7 + $0xc90] sm:$0xff]
    %v2328 = vld [vmem:[#allocation7 + $0xc98] sm:$0xff]
    %v2329 = vld [vmem:[#allocation7 + $0xca0] sm:$0xff]
    %v2330 = vld [vmem:[#allocation7 + $0xca8] sm:$0xff]
    %v2331 = vld [vmem:[#allocation7 + $0xcb0] sm:$0xff]
    %v2332 = vld [vmem:[#allocation7 + $0xcb8] sm:$0xff]
    %v2333 = vld [vmem:[#allocation7 + $0xcc0] sm:$0xff]
    %v2334 = vld [vmem:[#allocation7 + $0xcc8] sm:$0xff]
    %v2335 = vld [vmem:[#allocation7 + $0xcd0] sm:$0xff]
    %v2336 = vld [vmem:[#allocation7 + $0xcd8] sm:$0xff]
    %v2337 = vld [vmem:[#allocation7 + $0xce0] sm:$0xff]
    %v2338 = vld [vmem:[#allocation7 + $0xce8] sm:$0xff]
    %v2339 = vld [vmem:[#allocation7 + $0xcf0] sm:$0xff]
    %v2340 = vld [vmem:[#allocation7 + $0xcf8] sm:$0xff]
    %v2341 = vld [vmem:[#allocation7 + $0xd00] sm:$0xff]
    %v2342 = vld [vmem:[#allocation7 + $0xd08] sm:$0xff]
    %v2343 = vld [vmem:[#allocation7 + $0xd10] sm:$0xff]
    %v2344 = vld [vmem:[#allocation7 + $0xd18] sm:$0xff]
    %v2345 = vld [vmem:[#allocation7 + $0xd20] sm:$0xff]
    %v2346 = vld [vmem:[#allocation7 + $0xd28] sm:$0xff]
    %v2347 = vld [vmem:[#allocation7 + $0xd30] sm:$0xff]
    %v2348 = vld [vmem:[#allocation7 + $0xd38] sm:$0xff]
    %v2349 = vld [vmem:[#allocation7 + $0xd40] sm:$0xff]
    %v2350 = vld [vmem:[#allocation7 + $0xd48] sm:$0xff]
    %v2351 = vld [vmem:[#allocation7 + $0xd50] sm:$0xff]
    %v2352 = vld [vmem:[#allocation7 + $0xd58] sm:$0xff]
    %v2353 = vld [vmem:[#allocation7 + $0xd60] sm:$0xff]
    %v2354 = vld [vmem:[#allocation7 + $0xd68] sm:$0xff]
    %v2355 = vld [vmem:[#allocation7 + $0xd70] sm:$0xff]
    %v2356 = vld [vmem:[#allocation7 + $0xd78] sm:$0xff]
    %v2357 = vld [vmem:[#allocation7 + $0xd80] sm:$0xff]
    %v2358 = vld [vmem:[#allocation7 + $0xd88] sm:$0xff]
    %v2359 = vld [vmem:[#allocation7 + $0xd90] sm:$0xff]
    %v2360 = vld [vmem:[#allocation7 + $0xd98] sm:$0xff]
    %v2361 = vld [vmem:[#allocation7 + $0xda0] sm:$0xff]
    %v2362 = vld [vmem:[#allocation7 + $0xda8] sm:$0xff]
    %v2363 = vld [vmem:[#allocation7 + $0xdb0] sm:$0xff]
    %v2364 = vld [vmem:[#allocation7 + $0xdb8] sm:$0xff]
    %v2365 = vld [vmem:[#allocation7 + $0xdc0] sm:$0xff]
    %v2366 = vld [vmem:[#allocation7 + $0xdc8] sm:$0xff]
    %v2367 = vld [vmem:[#allocation7 + $0xdd0] sm:$0xff]
    %v2368 = vld [vmem:[#allocation7 + $0xdd8] sm:$0xff]
    %v2369 = vld [vmem:[#allocation7 + $0xde0] sm:$0xff]
    %v2370 = vld [vmem:[#allocation7 + $0xde8] sm:$0xff]
    %v2371 = vld [vmem:[#allocation7 + $0xdf0] sm:$0xff]
    %v2372 = vld [vmem:[#allocation7 + $0xdf8] sm:$0xff]
    %v2373 = vld [vmem:[#allocation7 + $0xe00] sm:$0xff]
    %v2374 = vld [vmem:[#allocation7 + $0xe08] sm:$0xff]
    %v2375 = vld [vmem:[#allocation7 + $0xe10] sm:$0xff]
    %v2376 = vld [vmem:[#allocation7 + $0xe18] sm:$0xff]
    %v2377 = vld [vmem:[#allocation7 + $0xe20] sm:$0xff]
    %v2378 = vld [vmem:[#allocation7 + $0xe28] sm:$0xff]
    %v2379 = vld [vmem:[#allocation7 + $0xe30] sm:$0xff]
    %v2380 = vld [vmem:[#allocation7 + $0xe38] sm:$0xff]
    %v2381 = vld [vmem:[#allocation7 + $0xe40] sm:$0xff]
    %v2382 = vld [vmem:[#allocation7 + $0xe48] sm:$0xff]
    %v2383 = vld [vmem:[#allocation7 + $0xe50] sm:$0xff]
    %v2384 = vld [vmem:[#allocation7 + $0xe58] sm:$0xff]
    %v2385 = vld [vmem:[#allocation7 + $0xe60] sm:$0xff]
    %v2386 = vld [vmem:[#allocation7 + $0xe68] sm:$0xff]
    %v2387 = vld [vmem:[#allocation7 + $0xe70] sm:$0xff]
    %v2388 = vld [vmem:[#allocation7 + $0xe78] sm:$0xff]
    %v2389 = vld [vmem:[#allocation7 + $0xe80] sm:$0xff]
    %v2390 = vld [vmem:[#allocation7 + $0xe88] sm:$0xff]
    %v2391 = vld [vmem:[#allocation7 + $0xe90] sm:$0xff]
    %v2392 = vld [vmem:[#allocation7 + $0xe98] sm:$0xff]
    %v2393 = vld [vmem:[#allocation7 + $0xea0] sm:$0xff]
    %v2394 = vld [vmem:[#allocation7 + $0xea8] sm:$0xff]
    %v2395 = vld [vmem:[#allocation7 + $0xeb0] sm:$0xff]
    %v2396 = vld [vmem:[#allocation7 + $0xeb8] sm:$0xff]
    %v2397 = vld [vmem:[#allocation7 + $0xec0] sm:$0xff]
    %v2398 = vld [vmem:[#allocation7 + $0xec8] sm:$0xff]
    %v2399 = vld [vmem:[#allocation7 + $0xed0] sm:$0xff]
    %v2400 = vld [vmem:[#allocation7 + $0xed8] sm:$0xff]
    %v2401 = vld [vmem:[#allocation7 + $0xee0] sm:$0xff]
    %v2402 = vld [vmem:[#allocation7 + $0xee8] sm:$0xff]
    %v2403 = vld [vmem:[#allocation7 + $0xef0] sm:$0xff]
    %v2404 = vld [vmem:[#allocation7 + $0xef8] sm:$0xff]
    %v2405 = vld [vmem:[#allocation7 + $0xf00] sm:$0xff]
    %v2406 = vld [vmem:[#allocation7 + $0xf08] sm:$0xff]
    %v2407 = vld [vmem:[#allocation7 + $0xf10] sm:$0xff]
    %v2408 = vld [vmem:[#allocation7 + $0xf18] sm:$0xff]
    %v2409 = vld [vmem:[#allocation7 + $0xf20] sm:$0xff]
    %v2410 = vld [vmem:[#allocation7 + $0xf28] sm:$0xff]
    %v2411 = vld [vmem:[#allocation7 + $0xf30] sm:$0xff]
    %v2412 = vld [vmem:[#allocation7 + $0xf38] sm:$0xff]
    %v2413 = vld [vmem:[#allocation7 + $0xf40] sm:$0xff]
    %v2414 = vld [vmem:[#allocation7 + $0xf48] sm:$0xff]
    %v2415 = vld [vmem:[#allocation7 + $0xf50] sm:$0xff]
    %v2416 = vld [vmem:[#allocation7 + $0xf58] sm:$0xff]
    %v2417 = vld [vmem:[#allocation7 + $0xf60] sm:$0xff]
    %v2418 = vld [vmem:[#allocation7 + $0xf68] sm:$0xff]
    %v2419 = vld [vmem:[#allocation7 + $0xf70] sm:$0xff]
    %v2420 = vld [vmem:[#allocation7 + $0xf78] sm:$0xff]
    %v2421 = vld [vmem:[#allocation7 + $0xf80] sm:$0xff]
    %v2422 = vld [vmem:[#allocation7 + $0xf88] sm:$0xff]
    %v2423 = vld [vmem:[#allocation7 + $0xf90] sm:$0xff]
    %v2424 = vld [vmem:[#allocation7 + $0xf98] sm:$0xff]
    %v2425 = vld [vmem:[#allocation7 + $0xfa0] sm:$0xff]
    %v2426 = vld [vmem:[#allocation7 + $0xfa8] sm:$0xff]
    %v2427 = vld [vmem:[#allocation7 + $0xfb0] sm:$0xff]
    %v2428 = vld [vmem:[#allocation7 + $0xfb8] sm:$0xff]
    %v2429 = vld [vmem:[#allocation7 + $0xfc0] sm:$0xff]
    %v2430 = vld [vmem:[#allocation7 + $0xfc8] sm:$0xff]
    %v2431 = vld [vmem:[#allocation7 + $0xfd0] sm:$0xff]
    %v2432 = vld [vmem:[#allocation7 + $0xfd8] sm:$0xff]
    %v2433 = vld [vmem:[#allocation7 + $0xfe0] sm:$0xff]
    %v2434 = vld [vmem:[#allocation7 + $0xfe8] sm:$0xff]
    %v2435 = vld [vmem:[#allocation7 + $0xff0] sm:$0xff]
    %v2436 = vld [vmem:[#allocation7 + $0xff8] sm:$0xff]
    %v2437 = vld [vmem:[#allocation7 + $0x1000] sm:$0xff]
    %v2438 = vld [vmem:[#allocation7 + $0x1008] sm:$0xff]
    %v2439 = vld [vmem:[#allocation7 + $0x1010] sm:$0xff]
    %v2440 = vld [vmem:[#allocation7 + $0x1018] sm:$0xff]
    %v2441 = vld [vmem:[#allocation7 + $0x1020] sm:$0xff]
    %v2442 = vld [vmem:[#allocation7 + $0x1028] sm:$0xff]
    %v2443 = vld [vmem:[#allocation7 + $0x1030] sm:$0xff]
    %v2444 = vld [vmem:[#allocation7 + $0x1038] sm:$0xff]
    %v2445 = vld [vmem:[#allocation7 + $0x1040] sm:$0xff]
    %v2446 = vld [vmem:[#allocation7 + $0x1048] sm:$0xff]
    %v2447 = vld [vmem:[#allocation7 + $0x1050] sm:$0xff]
    %v2448 = vld [vmem:[#allocation7 + $0x1058] sm:$0xff]
    %v2449 = vld [vmem:[#allocation7 + $0x1060] sm:$0xff]
    %v2450 = vld [vmem:[#allocation7 + $0x1068] sm:$0xff]
    %v2451 = vld [vmem:[#allocation7 + $0x1070] sm:$0xff]
    %v2452 = vld [vmem:[#allocation7 + $0x1078] sm:$0xff]
    %v2453 = vld [vmem:[#allocation7 + $0x1080] sm:$0xff]
    %v2454 = vld [vmem:[#allocation7 + $0x1088] sm:$0xff]
    %v2455 = vld [vmem:[#allocation7 + $0x1090] sm:$0xff]
    %v2456 = vld [vmem:[#allocation7 + $0x1098] sm:$0xff]
    %v2457 = vld [vmem:[#allocation7 + $0x10a0] sm:$0xff]
    %v2458 = vld [vmem:[#allocation7 + $0x10a8] sm:$0xff]
    %v2459 = vld [vmem:[#allocation7 + $0x10b0] sm:$0xff]
    %v2460 = vld [vmem:[#allocation7 + $0x10b8] sm:$0xff]
    %v2461 = vld [vmem:[#allocation7 + $0x10c0] sm:$0xff]
    %v2462 = vld [vmem:[#allocation7 + $0x10c8] sm:$0xff]
    %v2463 = vld [vmem:[#allocation7 + $0x10d0] sm:$0xff]
    %v2464 = vld [vmem:[#allocation7 + $0x10d8] sm:$0xff]
    %v2465 = vld [vmem:[#allocation7 + $0x10e0] sm:$0xff]
    %v2466 = vld [vmem:[#allocation7 + $0x10e8] sm:$0xff]
    %v2467 = vld [vmem:[#allocation7 + $0x10f0] sm:$0xff]
    %v2468 = vld [vmem:[#allocation7 + $0x10f8] sm:$0xff]
    %v2469 = vld [vmem:[#allocation7 + $0x1100] sm:$0xff]
    %v2470 = vld [vmem:[#allocation7 + $0x1108] sm:$0xff]
    %v2471 = vld [vmem:[#allocation7 + $0x1110] sm:$0xff]
    %v2472 = vld [vmem:[#allocation7 + $0x1118] sm:$0xff]
    %v2473 = vld [vmem:[#allocation7 + $0x1120] sm:$0xff]
    %v2474 = vld [vmem:[#allocation7 + $0x1128] sm:$0xff]
    %v2475 = vld [vmem:[#allocation7 + $0x1130] sm:$0xff]
    %v2476 = vld [vmem:[#allocation7 + $0x1138] sm:$0xff]
    %v2477 = vld [vmem:[#allocation7 + $0x1140] sm:$0xff]
    %v2478 = vld [vmem:[#allocation7 + $0x1148] sm:$0xff]
    %v2479 = vld [vmem:[#allocation7 + $0x1150] sm:$0xff]
    %v2480 = vld [vmem:[#allocation7 + $0x1158] sm:$0xff]
    %v2481 = vld [vmem:[#allocation7 + $0x1160] sm:$0xff]
    %v2482 = vld [vmem:[#allocation7 + $0x1168] sm:$0xff]
    %v2483 = vld [vmem:[#allocation7 + $0x1170] sm:$0xff]
    %v2484 = vld [vmem:[#allocation7 + $0x1178] sm:$0xff]
    %v2485 = vld [vmem:[#allocation7 + $0x1180] sm:$0xff]
    %v2486 = vld [vmem:[#allocation7 + $0x1188] sm:$0xff]
    %v2487 = vld [vmem:[#allocation7 + $0x1190] sm:$0xff]
    %v2488 = vld [vmem:[#allocation7 + $0x1198] sm:$0xff]
    %v2489 = vld [vmem:[#allocation7 + $0x11a0] sm:$0xff]
    %v2490 = vld [vmem:[#allocation7 + $0x11a8] sm:$0xff]
    %v2491 = vld [vmem:[#allocation7 + $0x11b0] sm:$0xff]
    %v2492 = vld [vmem:[#allocation7 + $0x11b8] sm:$0xff]
    %v2493 = vld [vmem:[#allocation7 + $0x11c0] sm:$0xff]
    %v2494 = vld [vmem:[#allocation7 + $0x11c8] sm:$0xff]
    %v2495 = vld [vmem:[#allocation7 + $0x11d0] sm:$0xff]
    %v2496 = vld [vmem:[#allocation7 + $0x11d8] sm:$0xff]
    %v2497 = vld [vmem:[#allocation7 + $0x11e0] sm:$0xff]
    %v2498 = vld [vmem:[#allocation7 + $0x11e8] sm:$0xff]
    %v2499 = vld [vmem:[#allocation7 + $0x11f0] sm:$0xff]
    %v2500 = vld [vmem:[#allocation7 + $0x11f8] sm:$0xff]
    %v2501 = vld [vmem:[#allocation7 + $0x1200] sm:$0xff]
    %v2502 = vld [vmem:[#allocation7 + $0x1208] sm:$0xff]
    %v2503 = vld [vmem:[#allocation7 + $0x1210] sm:$0xff]
    %v2504 = vld [vmem:[#allocation7 + $0x1218] sm:$0xff]
    %v2505 = vld [vmem:[#allocation7 + $0x1220] sm:$0xff]
    %v2506 = vld [vmem:[#allocation7 + $0x1228] sm:$0xff]
    %v2507 = vld [vmem:[#allocation7 + $0x1230] sm:$0xff]
    %v2508 = vld [vmem:[#allocation7 + $0x1238] sm:$0xff]
    %v2509 = vld [vmem:[#allocation7 + $0x1240] sm:$0xff]
    %v2510 = vld [vmem:[#allocation7 + $0x1248] sm:$0xff]
    %v2511 = vld [vmem:[#allocation7 + $0x1250] sm:$0xff]
    %v2512 = vld [vmem:[#allocation7 + $0x1258] sm:$0xff]
    %v2513 = vld [vmem:[#allocation7 + $0x1260] sm:$0xff]
    %v2514 = vld [vmem:[#allocation7 + $0x1268] sm:$0xff]
    %v2515 = vld [vmem:[#allocation7 + $0x1270] sm:$0xff]
    %v2516 = vld [vmem:[#allocation7 + $0x1278] sm:$0xff]
    %v2517 = vld [vmem:[#allocation7 + $0x1280] sm:$0xff]
    %v2518 = vld [vmem:[#allocation7 + $0x1288] sm:$0xff]
    %v2519 = vld [vmem:[#allocation7 + $0x1290] sm:$0xff]
    %v2520 = vld [vmem:[#allocation7 + $0x1298] sm:$0xff]
    %v2521 = vld [vmem:[#allocation7 + $0x12a0] sm:$0xff]
    %v2522 = vld [vmem:[#allocation7 + $0x12a8] sm:$0xff]
    %v2523 = vld [vmem:[#allocation7 + $0x12b0] sm:$0xff]
    %v2524 = vld [vmem:[#allocation7 + $0x12b8] sm:$0xff]
    %v2525 = vld [vmem:[#allocation7 + $0x12c0] sm:$0xff]
    %v2526 = vld [vmem:[#allocation7 + $0x12c8] sm:$0xff]
    %v2527 = vld [vmem:[#allocation7 + $0x12d0] sm:$0xff]
    %v2528 = vld [vmem:[#allocation7 + $0x12d8] sm:$0xff]
    %v2529 = vld [vmem:[#allocation7 + $0x12e0] sm:$0xff]
    %v2530 = vld [vmem:[#allocation7 + $0x12e8] sm:$0xff]
    %v2531 = vld [vmem:[#allocation7 + $0x12f0] sm:$0xff]
    %v2532 = vld [vmem:[#allocation7 + $0x12f8] sm:$0xff]
    %v2533 = vld [vmem:[#allocation7 + $0x1300] sm:$0xff]
    %v2534 = vld [vmem:[#allocation7 + $0x1308] sm:$0xff]
    %v2535 = vld [vmem:[#allocation7 + $0x1310] sm:$0xff]
    %v2536 = vld [vmem:[#allocation7 + $0x1318] sm:$0xff]
    %v2537 = vld [vmem:[#allocation7 + $0x1320] sm:$0xff]
    %v2538 = vld [vmem:[#allocation7 + $0x1328] sm:$0xff]
    %v2539 = vld [vmem:[#allocation7 + $0x1330] sm:$0xff]
    %v2540 = vld [vmem:[#allocation7 + $0x1338] sm:$0xff]
    %v2541 = vld [vmem:[#allocation7 + $0x1340] sm:$0xff]
    %v2542 = vld [vmem:[#allocation7 + $0x1348] sm:$0xff]
    %v2543 = vld [vmem:[#allocation7 + $0x1350] sm:$0xff]
    %v2544 = vld [vmem:[#allocation7 + $0x1358] sm:$0xff]
    %v2545 = vld [vmem:[#allocation7 + $0x1360] sm:$0xff]
    %v2546 = vld [vmem:[#allocation7 + $0x1368] sm:$0xff]
    %v2547 = vld [vmem:[#allocation7 + $0x1370] sm:$0xff]
    %v2548 = vld [vmem:[#allocation7 + $0x1378] sm:$0xff]
    %v2549 = vld [vmem:[#allocation7 + $0x1380] sm:$0xff]
    %v2550 = vld [vmem:[#allocation7 + $0x1388] sm:$0xff]
    %v2551 = vld [vmem:[#allocation7 + $0x1390] sm:$0xff]
    %v2552 = vld [vmem:[#allocation7 + $0x1398] sm:$0xff]
    %v2553 = vld [vmem:[#allocation7 + $0x13a0] sm:$0xff]
    %v2554 = vld [vmem:[#allocation7 + $0x13a8] sm:$0xff]
    %v2555 = vld [vmem:[#allocation7 + $0x13b0] sm:$0xff]
    %v2556 = vld [vmem:[#allocation7 + $0x13b8] sm:$0xff]
    %v2557 = vld [vmem:[#allocation7 + $0x13c0] sm:$0xff]
    %v2558 = vld [vmem:[#allocation7 + $0x13c8] sm:$0xff]
    %v2559 = vld [vmem:[#allocation7 + $0x13d0] sm:$0xff]
    %v2560 = vld [vmem:[#allocation7 + $0x13d8] sm:$0xff]
    %v2561 = vld [vmem:[#allocation7 + $0x13e0] sm:$0xff]
    %v2562 = vld [vmem:[#allocation7 + $0x13e8] sm:$0xff]
    %v2563 = vld [vmem:[#allocation7 + $0x13f0] sm:$0xff]
    %v2564 = vld [vmem:[#allocation7 + $0x13f8] sm:$0xff]
    %v2565 = vld [vmem:[#allocation7 + $0x1400] sm:$0xff]
    %v2566 = vld [vmem:[#allocation7 + $0x1408] sm:$0xff]
    %v2567 = vld [vmem:[#allocation7 + $0x1410] sm:$0xff]
    %v2568 = vld [vmem:[#allocation7 + $0x1418] sm:$0xff]
    %v2569 = vld [vmem:[#allocation7 + $0x1420] sm:$0xff]
    %v2570 = vld [vmem:[#allocation7 + $0x1428] sm:$0xff]
    %v2571 = vld [vmem:[#allocation7 + $0x1430] sm:$0xff]
    %v2572 = vld [vmem:[#allocation7 + $0x1438] sm:$0xff]
    %v2573 = vld [vmem:[#allocation7 + $0x1440] sm:$0xff]
    %v2574 = vld [vmem:[#allocation7 + $0x1448] sm:$0xff]
    %v2575 = vld [vmem:[#allocation7 + $0x1450] sm:$0xff]
    %v2576 = vld [vmem:[#allocation7 + $0x1458] sm:$0xff]
    %v2577 = vld [vmem:[#allocation7 + $0x1460] sm:$0xff]
    %v2578 = vld [vmem:[#allocation7 + $0x1468] sm:$0xff]
    %v2579 = vld [vmem:[#allocation7 + $0x1470] sm:$0xff]
    %v2580 = vld [vmem:[#allocation7 + $0x1478] sm:$0xff]
    %v2581 = vld [vmem:[#allocation7 + $0x1480] sm:$0xff]
    %v2582 = vld [vmem:[#allocation7 + $0x1488] sm:$0xff]
    %v2583 = vld [vmem:[#allocation7 + $0x1490] sm:$0xff]
    %v2584 = vld [vmem:[#allocation7 + $0x1498] sm:$0xff]
    %v2585 = vld [vmem:[#allocation7 + $0x14a0] sm:$0xff]
    %v2586 = vld [vmem:[#allocation7 + $0x14a8] sm:$0xff]
    %v2587 = vld [vmem:[#allocation7 + $0x14b0] sm:$0xff]
    %v2588 = vld [vmem:[#allocation7 + $0x14b8] sm:$0xff]
    %v2589 = vld [vmem:[#allocation7 + $0x14c0] sm:$0xff]
    %v2590 = vld [vmem:[#allocation7 + $0x14c8] sm:$0xff]
    %v2591 = vld [vmem:[#allocation7 + $0x14d0] sm:$0xff]
    %v2592 = vld [vmem:[#allocation7 + $0x14d8] sm:$0xff]
    %v2593 = vld [vmem:[#allocation7 + $0x14e0] sm:$0xff]
    %v2594 = vld [vmem:[#allocation7 + $0x14e8] sm:$0xff]
    %v2595 = vld [vmem:[#allocation7 + $0x14f0] sm:$0xff]
    %v2596 = vld [vmem:[#allocation7 + $0x14f8] sm:$0xff]
    %v2597 = vld [vmem:[#allocation7 + $0x1500] sm:$0xff]
    %v2598 = vld [vmem:[#allocation7 + $0x1508] sm:$0xff]
    %v2599 = vld [vmem:[#allocation7 + $0x1510] sm:$0xff]
    %v2600 = vld [vmem:[#allocation7 + $0x1518] sm:$0xff]
    %v2601 = vld [vmem:[#allocation7 + $0x1520] sm:$0xff]
    %v2602 = vld [vmem:[#allocation7 + $0x1528] sm:$0xff]
    %v2603 = vld [vmem:[#allocation7 + $0x1530] sm:$0xff]
    %v2604 = vld [vmem:[#allocation7 + $0x1538] sm:$0xff]
    %v2605 = vld [vmem:[#allocation7 + $0x1540] sm:$0xff]
    %v2606 = vld [vmem:[#allocation7 + $0x1548] sm:$0xff]
    %v2607 = vld [vmem:[#allocation7 + $0x1550] sm:$0xff]
    %v2608 = vld [vmem:[#allocation7 + $0x1558] sm:$0xff]
    %v2609 = vld [vmem:[#allocation7 + $0x1560] sm:$0xff]
    %v2610 = vld [vmem:[#allocation7 + $0x1568] sm:$0xff]
    %v2611 = vld [vmem:[#allocation7 + $0x1570] sm:$0xff]
    %v2612 = vld [vmem:[#allocation7 + $0x1578] sm:$0xff]
    %v2613 = vld [vmem:[#allocation7 + $0x1580] sm:$0xff]
    %v2614 = vld [vmem:[#allocation7 + $0x1588] sm:$0xff]
    %v2615 = vld [vmem:[#allocation7 + $0x1590] sm:$0xff]
    %v2616 = vld [vmem:[#allocation7 + $0x1598] sm:$0xff]
    %v2617 = vld [vmem:[#allocation7 + $0x15a0] sm:$0xff]
    %v2618 = vld [vmem:[#allocation7 + $0x15a8] sm:$0xff]
    %v2619 = vld [vmem:[#allocation7 + $0x15b0] sm:$0xff]
    %v2620 = vld [vmem:[#allocation7 + $0x15b8] sm:$0xff]
    %v2621 = vld [vmem:[#allocation7 + $0x15c0] sm:$0xff]
    %v2622 = vld [vmem:[#allocation7 + $0x15c8] sm:$0xff]
    %v2623 = vld [vmem:[#allocation7 + $0x15d0] sm:$0xff]
    %v2624 = vld [vmem:[#allocation7 + $0x15d8] sm:$0xff]
    %v2625 = vld [vmem:[#allocation7 + $0x15e0] sm:$0xff]
    %v2626 = vld [vmem:[#allocation7 + $0x15e8] sm:$0xff]
    %v2627 = vld [vmem:[#allocation7 + $0x15f0] sm:$0xff]
    %v2628 = vld [vmem:[#allocation7 + $0x15f8] sm:$0xff]
    %v2629 = vld [vmem:[#allocation7 + $0x1600] sm:$0xff]
    %v2630 = vld [vmem:[#allocation7 + $0x1608] sm:$0xff]
    %v2631 = vld [vmem:[#allocation7 + $0x1610] sm:$0xff]
    %v2632 = vld [vmem:[#allocation7 + $0x1618] sm:$0xff]
    %v2633 = vld [vmem:[#allocation7 + $0x1620] sm:$0xff]
    %v2634 = vld [vmem:[#allocation7 + $0x1628] sm:$0xff]
    %v2635 = vld [vmem:[#allocation7 + $0x1630] sm:$0xff]
    %v2636 = vld [vmem:[#allocation7 + $0x1638] sm:$0xff]
    %v2637 = vld [vmem:[#allocation7 + $0x1640] sm:$0xff]
    %v2638 = vld [vmem:[#allocation7 + $0x1648] sm:$0xff]
    %v2639 = vld [vmem:[#allocation7 + $0x1650] sm:$0xff]
    %v2640 = vld [vmem:[#allocation7 + $0x1658] sm:$0xff]
    %v2641 = vld [vmem:[#allocation7 + $0x1660] sm:$0xff]
    %v2642 = vld [vmem:[#allocation7 + $0x1668] sm:$0xff]
    %v2643 = vld [vmem:[#allocation7 + $0x1670] sm:$0xff]
    %v2644 = vld [vmem:[#allocation7 + $0x1678] sm:$0xff]
    %v2645 = vld [vmem:[#allocation7 + $0x1680] sm:$0xff]
    %v2646 = vld [vmem:[#allocation7 + $0x1688] sm:$0xff]
    %v2647 = vld [vmem:[#allocation7 + $0x1690] sm:$0xff]
    %v2648 = vld [vmem:[#allocation7 + $0x1698] sm:$0xff]
    %v2649 = vld [vmem:[#allocation7 + $0x16a0] sm:$0xff]
    %v2650 = vld [vmem:[#allocation7 + $0x16a8] sm:$0xff]
    %v2651 = vld [vmem:[#allocation7 + $0x16b0] sm:$0xff]
    %v2652 = vld [vmem:[#allocation7 + $0x16b8] sm:$0xff]
    %v2653 = vld [vmem:[#allocation7 + $0x16c0] sm:$0xff]
    %v2654 = vld [vmem:[#allocation7 + $0x16c8] sm:$0xff]
    %v2655 = vld [vmem:[#allocation7 + $0x16d0] sm:$0xff]
    %v2656 = vld [vmem:[#allocation7 + $0x16d8] sm:$0xff]
    %v2657 = vld [vmem:[#allocation7 + $0x16e0] sm:$0xff]
    %v2658 = vld [vmem:[#allocation7 + $0x16e8] sm:$0xff]
    %v2659 = vld [vmem:[#allocation7 + $0x16f0] sm:$0xff]
    %v2660 = vld [vmem:[#allocation7 + $0x16f8] sm:$0xff]
    %v2661 = vld [vmem:[#allocation7 + $0x1700] sm:$0xff]
    %v2662 = vld [vmem:[#allocation7 + $0x1708] sm:$0xff]
    %v2663 = vld [vmem:[#allocation7 + $0x1710] sm:$0xff]
    %v2664 = vld [vmem:[#allocation7 + $0x1718] sm:$0xff]
    %v2665 = vld [vmem:[#allocation7 + $0x1720] sm:$0xff]
    %v2666 = vld [vmem:[#allocation7 + $0x1728] sm:$0xff]
    %v2667 = vld [vmem:[#allocation7 + $0x1730] sm:$0xff]
    %v2668 = vld [vmem:[#allocation7 + $0x1738] sm:$0xff]
    %v2669 = vld [vmem:[#allocation7 + $0x1740] sm:$0xff]
    %v2670 = vld [vmem:[#allocation7 + $0x1748] sm:$0xff]
    %v2671 = vld [vmem:[#allocation7 + $0x1750] sm:$0xff]
    %v2672 = vld [vmem:[#allocation7 + $0x1758] sm:$0xff]
    %v2673 = vld [vmem:[#allocation7 + $0x1760] sm:$0xff]
    %v2674 = vld [vmem:[#allocation7 + $0x1768] sm:$0xff]
    %v2675 = vld [vmem:[#allocation7 + $0x1770] sm:$0xff]
    %v2676 = vld [vmem:[#allocation7 + $0x1778] sm:$0xff]
    %v2677 = vld [vmem:[#allocation7 + $0x1780] sm:$0xff]
    %v2678 = vld [vmem:[#allocation7 + $0x1788] sm:$0xff]
    %v2679 = vld [vmem:[#allocation7 + $0x1790] sm:$0xff]
    %v2680 = vld [vmem:[#allocation7 + $0x1798] sm:$0xff]
    %v2681 = vld [vmem:[#allocation7 + $0x17a0] sm:$0xff]
    %v2682 = vld [vmem:[#allocation7 + $0x17a8] sm:$0xff]
    %v2683 = vld [vmem:[#allocation7 + $0x17b0] sm:$0xff]
    %v2684 = vld [vmem:[#allocation7 + $0x17b8] sm:$0xff]
    %v2685 = vld [vmem:[#allocation7 + $0x17c0] sm:$0xff]
    %v2686 = vld [vmem:[#allocation7 + $0x17c8] sm:$0xff]
    %v2687 = vld [vmem:[#allocation7 + $0x17d0] sm:$0xff]
    %v2688 = vld [vmem:[#allocation7 + $0x17d8] sm:$0xff]
    %v2689 = vld [vmem:[#allocation7 + $0x17e0] sm:$0xff]
    %v2690 = vld [vmem:[#allocation7 + $0x17e8] sm:$0xff]
    %v2691 = vld [vmem:[#allocation7 + $0x17f0] sm:$0xff]
    %v2692 = vld [vmem:[#allocation7 + $0x17f8] sm:$0xff]
    %v2693 = vld [vmem:[#allocation7 + $0x1800] sm:$0xff]
    %v2694 = vld [vmem:[#allocation7 + $0x1808] sm:$0xff]
    %v2695 = vld [vmem:[#allocation7 + $0x1810] sm:$0xff]
    %v2696 = vld [vmem:[#allocation7 + $0x1818] sm:$0xff]
    %v2697 = vld [vmem:[#allocation7 + $0x1820] sm:$0xff]
    %v2698 = vld [vmem:[#allocation7 + $0x1828] sm:$0xff]
    %v2699 = vld [vmem:[#allocation7 + $0x1830] sm:$0xff]
    %v2700 = vld [vmem:[#allocation7 + $0x1838] sm:$0xff]
    %v2701 = vld [vmem:[#allocation7 + $0x1840] sm:$0xff]
    %v2702 = vld [vmem:[#allocation7 + $0x1848] sm:$0xff]
    %v2703 = vld [vmem:[#allocation7 + $0x1850] sm:$0xff]
    %v2704 = vld [vmem:[#allocation7 + $0x1858] sm:$0xff]
    %v2705 = vld [vmem:[#allocation7 + $0x1860] sm:$0xff]
    %v2706 = vld [vmem:[#allocation7 + $0x1868] sm:$0xff]
    %v2707 = vld [vmem:[#allocation7 + $0x1870] sm:$0xff]
    %v2708 = vld [vmem:[#allocation7 + $0x1878] sm:$0xff]
    %v2709 = vld [vmem:[#allocation7 + $0x1880] sm:$0xff]
    %v2710 = vld [vmem:[#allocation7 + $0x1888] sm:$0xff]
    %v2711 = vld [vmem:[#allocation7 + $0x1890] sm:$0xff]
    %v2712 = vld [vmem:[#allocation7 + $0x1898] sm:$0xff]
    %v2713 = vld [vmem:[#allocation7 + $0x18a0] sm:$0xff]
    %v2714 = vld [vmem:[#allocation7 + $0x18a8] sm:$0xff]
    %v2715 = vld [vmem:[#allocation7 + $0x18b0] sm:$0xff]
    %v2716 = vld [vmem:[#allocation7 + $0x18b8] sm:$0xff]
    %v2717 = vld [vmem:[#allocation7 + $0x18c0] sm:$0xff]
    %v2718 = vld [vmem:[#allocation7 + $0x18c8] sm:$0xff]
    %v2719 = vld [vmem:[#allocation7 + $0x18d0] sm:$0xff]
    %v2720 = vld [vmem:[#allocation7 + $0x18d8] sm:$0xff]
    %v2721 = vld [vmem:[#allocation7 + $0x18e0] sm:$0xff]
    %v2722 = vld [vmem:[#allocation7 + $0x18e8] sm:$0xff]
    %v2723 = vld [vmem:[#allocation7 + $0x18f0] sm:$0xff]
    %v2724 = vld [vmem:[#allocation7 + $0x18f8] sm:$0xff]
    %v2725 = vld [vmem:[#allocation7 + $0x1900] sm:$0xff]
    %v2726 = vld [vmem:[#allocation7 + $0x1908] sm:$0xff]
    %v2727 = vld [vmem:[#allocation7 + $0x1910] sm:$0xff]
    %v2728 = vld [vmem:[#allocation7 + $0x1918] sm:$0xff]
    %v2729 = vld [vmem:[#allocation7 + $0x1920] sm:$0xff]
    %v2730 = vld [vmem:[#allocation7 + $0x1928] sm:$0xff]
    %v2731 = vld [vmem:[#allocation7 + $0x1930] sm:$0xff]
    %v2732 = vld [vmem:[#allocation7 + $0x1938] sm:$0xff]
    %v2733 = vld [vmem:[#allocation7 + $0x1940] sm:$0xff]
    %v2734 = vld [vmem:[#allocation7 + $0x1948] sm:$0xff]
    %v2735 = vld [vmem:[#allocation7 + $0x1950] sm:$0xff]
    %v2736 = vld [vmem:[#allocation7 + $0x1958] sm:$0xff]
    %v2737 = vld [vmem:[#allocation7 + $0x1960] sm:$0xff]
    %v2738 = vld [vmem:[#allocation7 + $0x1968] sm:$0xff]
    %v2739 = vld [vmem:[#allocation7 + $0x1970] sm:$0xff]
    %v2740 = vld [vmem:[#allocation7 + $0x1978] sm:$0xff]
    %v2741 = vld [vmem:[#allocation7 + $0x1980] sm:$0xff]
    %v2742 = vld [vmem:[#allocation7 + $0x1988] sm:$0xff]
    %v2743 = vld [vmem:[#allocation7 + $0x1990] sm:$0xff]
    %v2744 = vld [vmem:[#allocation7 + $0x1998] sm:$0xff]
    %v2745 = vld [vmem:[#allocation7 + $0x19a0] sm:$0xff]
    %v2746 = vld [vmem:[#allocation7 + $0x19a8] sm:$0xff]
    %v2747 = vld [vmem:[#allocation7 + $0x19b0] sm:$0xff]
    %v2748 = vld [vmem:[#allocation7 + $0x19b8] sm:$0xff]
    %v2749 = vld [vmem:[#allocation7 + $0x19c0] sm:$0xff]
    %v2750 = vld [vmem:[#allocation7 + $0x19c8] sm:$0xff]
    %v2751 = vld [vmem:[#allocation7 + $0x19d0] sm:$0xff]
    %v2752 = vld [vmem:[#allocation7 + $0x19d8] sm:$0xff]
    %v2753 = vld [vmem:[#allocation7 + $0x19e0] sm:$0xff]
    %v2754 = vld [vmem:[#allocation7 + $0x19e8] sm:$0xff]
    %v2755 = vld [vmem:[#allocation7 + $0x19f0] sm:$0xff]
    %v2756 = vld [vmem:[#allocation7 + $0x19f8] sm:$0xff]
    %v2757 = vld [vmem:[#allocation8] sm:$0x3]
    %v2759 = vlaneseq
    %v2760 = vshrl.u32 %v2759, 7
    %v2761 = vsub.s32 0, %v2760
    %v2762 = vrot.slane %v2757, %v2761
    %v2763 = vlaneseq
    %v2764 = vshrl.u32 %v2763, 7
    %v2765 = vsub.s32 1, %v2764
    %v2766 = vrot.slane %v2757, %v2765
    %v2821 = vunpack.c.l.b16 %v1873
    %v2822 = vunpack.c.h.b16 %v1873
    %v2823 = vunpack.c.l.b16 %v1874
    %v2824 = vunpack.c.h.b16 %v1874
    %v2825 = vunpack.c.l.b16 %v1875
    %v2826 = vunpack.c.h.b16 %v1875
    %v2827 = vunpack.c.l.b16 %v1876
    %v2828 = vunpack.c.h.b16 %v1876
    %v2829 = vunpack.c.l.b16 %v1877
    %v2830 = vunpack.c.h.b16 %v1877
    %v2831 = vunpack.c.l.b16 %v1878
    %v2832 = vunpack.c.h.b16 %v1878
    %v2833 = vunpack.c.l.b16 %v1879
    %v2834 = vunpack.c.h.b16 %v1879
    %v2835 = vunpack.c.l.b16 %v1880
    %v2836 = vunpack.c.h.b16 %v1880
    %v2837 = vunpack.c.l.b16 %v1881
    %v2838 = vunpack.c.h.b16 %v1881
    %v2839 = vunpack.c.l.b16 %v1882
    %v2840 = vunpack.c.h.b16 %v1882
    %v2841 = vunpack.c.l.b16 %v1883
    %v2842 = vunpack.c.h.b16 %v1883
    %v2843 = vunpack.c.l.b16 %v1884
    %v2844 = vunpack.c.h.b16 %v1884
    %v2845 = vunpack.c.l.b16 %v1885
    %v2846 = vunpack.c.h.b16 %v1885
    %v2847 = vunpack.c.l.b16 %v1886
    %v2848 = vunpack.c.h.b16 %v1886
    %v2849 = vunpack.c.l.b16 %v1887
    %v2850 = vunpack.c.h.b16 %v1887
    %v2851 = vunpack.c.l.b16 %v1888
    %v2852 = vunpack.c.h.b16 %v1888
    %v2853 = vunpack.c.l.b16 %v1889
    %v2854 = vunpack.c.h.b16 %v1889
    %v2855 = vunpack.c.l.b16 %v1890
    %v2856 = vunpack.c.h.b16 %v1890
    %v2857 = vunpack.c.l.b16 %v1891
    %v2858 = vunpack.c.h.b16 %v1891
    %v2859 = vunpack.c.l.b16 %v1892
    %v2860 = vunpack.c.h.b16 %v1892
    %v2861 = vunpack.c.l.b16 %v1893
    %v2862 = vunpack.c.h.b16 %v1893
    %v2863 = vunpack.c.l.b16 %v1894
    %v2864 = vunpack.c.h.b16 %v1894
    %v2865 = vunpack.c.l.b16 %v1895
    %v2866 = vunpack.c.h.b16 %v1895
    %v2867 = vunpack.c.l.b16 %v1896
    %v2868 = vunpack.c.h.b16 %v1896
    %v2869 = vunpack.c.l.b16 %v1897
    %v2870 = vunpack.c.h.b16 %v1897
    %v2871 = vunpack.c.l.b16 %v1898
    %v2872 = vunpack.c.h.b16 %v1898
    %v2873 = vunpack.c.l.b16 %v1899
    %v2874 = vunpack.c.h.b16 %v1899
    %v2875 = vunpack.c.l.b16 %v1900
    %v2876 = vunpack.c.h.b16 %v1900
    %v2877 = vunpack.c.l.b16 %v1901
    %v2878 = vunpack.c.h.b16 %v1901
    %v2879 = vunpack.c.l.b16 %v1902
    %v2880 = vunpack.c.h.b16 %v1902
    %v2881 = vunpack.c.l.b16 %v1903
    %v2882 = vunpack.c.h.b16 %v1903
    %v2883 = vunpack.c.l.b16 %v1904
    %v2884 = vunpack.c.h.b16 %v1904
    %v2885 = vunpack.c.l.b16 %v1905
    %v2886 = vunpack.c.h.b16 %v1905
    %v2887 = vunpack.c.l.b16 %v1906
    %v2888 = vunpack.c.h.b16 %v1906
    %v2889 = vunpack.c.l.b16 %v1907
    %v2890 = vunpack.c.h.b16 %v1907
    %v2891 = vunpack.c.l.b16 %v1908
    %v2892 = vunpack.c.h.b16 %v1908
    %v2893 = vunpack.c.l.b16 %v1909
    %v2894 = vunpack.c.h.b16 %v1909
    %v2895 = vunpack.c.l.b16 %v1910
    %v2896 = vunpack.c.h.b16 %v1910
    %v2897 = vunpack.c.l.b16 %v1911
    %v2898 = vunpack.c.h.b16 %v1911
    %v2899 = vunpack.c.l.b16 %v1912
    %v2900 = vunpack.c.h.b16 %v1912
    %v2901 = vunpack.c.l.b16 %v1913
    %v2902 = vunpack.c.h.b16 %v1913
    %v2903 = vunpack.c.l.b16 %v1914
    %v2904 = vunpack.c.h.b16 %v1914
    %v2905 = vunpack.c.l.b16 %v1915
    %v2906 = vunpack.c.h.b16 %v1915
    %v2907 = vunpack.c.l.b16 %v1916
    %v2908 = vunpack.c.h.b16 %v1916
    %v2909 = vunpack.c.l.b16 %v1917
    %v2910 = vunpack.c.h.b16 %v1917
    %v2911 = vunpack.c.l.b16 %v1918
    %v2912 = vunpack.c.h.b16 %v1918
    %v2913 = vunpack.c.l.b16 %v1919
    %v2914 = vunpack.c.h.b16 %v1919
    %v2915 = vunpack.c.l.b16 %v1920
    %v2916 = vunpack.c.h.b16 %v1920
    %v2917 = vunpack.c.l.b16 %v1921
    %v2918 = vunpack.c.h.b16 %v1921
    %v2919 = vunpack.c.l.b16 %v1922
    %v2920 = vunpack.c.h.b16 %v1922
    %v2921 = vunpack.c.l.b16 %v1923
    %v2922 = vunpack.c.h.b16 %v1923
    %v2923 = vunpack.c.l.b16 %v1924
    %v2924 = vunpack.c.h.b16 %v1924
    %v2925 = vpack.c.b16 %v2873, %v2821
    %v2926 = vpack.c.b16 %v2874, %v2822
    %v2927 = vpack.c.b16 %v2875, %v2823
    %v2928 = vpack.c.b16 %v2876, %v2824
    %v2929 = vpack.c.b16 %v2877, %v2825
    %v2930 = vpack.c.b16 %v2878, %v2826
    %v2931 = vpack.c.b16 %v2879, %v2827
    %v2932 = vpack.c.b16 %v2880, %v2828
    %v2933 = vpack.c.b16 %v2881, %v2829
    %v2934 = vpack.c.b16 %v2882, %v2830
    %v2935 = vpack.c.b16 %v2883, %v2831
    %v2936 = vpack.c.b16 %v2884, %v2832
    %v2937 = vpack.c.b16 %v2885, %v2833
    %v2938 = vpack.c.b16 %v2886, %v2834
    %v2939 = vpack.c.b16 %v2887, %v2835
    %v2940 = vpack.c.b16 %v2888, %v2836
    %v2941 = vpack.c.b16 %v2889, %v2837
    %v2942 = vpack.c.b16 %v2890, %v2838
    %v2943 = vpack.c.b16 %v2891, %v2839
    %v2944 = vpack.c.b16 %v2892, %v2840
    %v2945 = vpack.c.b16 %v2893, %v2841
    %v2946 = vpack.c.b16 %v2894, %v2842
    %v2947 = vpack.c.b16 %v2895, %v2843
    %v2948 = vpack.c.b16 %v2896, %v2844
    %v2949 = vpack.c.b16 %v2897, %v2845
    %v2950 = vpack.c.b16 %v2898, %v2846
    %v2951 = vpack.c.b16 %v2899, %v2847
    %v2952 = vpack.c.b16 %v2900, %v2848
    %v2953 = vpack.c.b16 %v2901, %v2849
    %v2954 = vpack.c.b16 %v2902, %v2850
    %v2955 = vpack.c.b16 %v2903, %v2851
    %v2956 = vpack.c.b16 %v2904, %v2852
    %v2957 = vpack.c.b16 %v2905, %v2853
    %v2958 = vpack.c.b16 %v2906, %v2854
    %v2959 = vpack.c.b16 %v2907, %v2855
    %v2960 = vpack.c.b16 %v2908, %v2856
    %v2961 = vpack.c.b16 %v2909, %v2857
    %v2962 = vpack.c.b16 %v2910, %v2858
    %v2963 = vpack.c.b16 %v2911, %v2859
    %v2964 = vpack.c.b16 %v2912, %v2860
    %v2965 = vpack.c.b16 %v2913, %v2861
    %v2966 = vpack.c.b16 %v2914, %v2862
    %v2967 = vpack.c.b16 %v2915, %v2863
    %v2968 = vpack.c.b16 %v2916, %v2864
    %v2969 = vpack.c.b16 %v2917, %v2865
    %v2970 = vpack.c.b16 %v2918, %v2866
    %v2971 = vpack.c.b16 %v2919, %v2867
    %v2972 = vpack.c.b16 %v2920, %v2868
    %v2973 = vpack.c.b16 %v2921, %v2869
    %v2974 = vpack.c.b16 %v2922, %v2870
    %v2975 = vpack.c.b16 %v2923, %v2871
    %v2976 = vpack.c.b16 %v2924, %v2872
    %v3861 = vunpack.c.l.b16 %v1925
    %v3862 = vunpack.c.h.b16 %v1925
    %v3863 = vunpack.c.l.b16 %v1926
    %v3864 = vunpack.c.h.b16 %v1926
    %v3865 = vunpack.c.l.b16 %v1927
    %v3866 = vunpack.c.h.b16 %v1927
    %v3867 = vunpack.c.l.b16 %v1928
    %v3868 = vunpack.c.h.b16 %v1928
    %v3869 = vunpack.c.l.b16 %v1929
    %v3870 = vunpack.c.h.b16 %v1929
    %v3871 = vunpack.c.l.b16 %v1930
    %v3872 = vunpack.c.h.b16 %v1930
    %v3873 = vunpack.c.l.b16 %v1931
    %v3874 = vunpack.c.h.b16 %v1931
    %v3875 = vunpack.c.l.b16 %v1932
    %v3876 = vunpack.c.h.b16 %v1932
    %v3877 = vunpack.c.l.b16 %v1933
    %v3878 = vunpack.c.h.b16 %v1933
    %v3879 = vunpack.c.l.b16 %v1934
    %v3880 = vunpack.c.h.b16 %v1934
    %v3881 = vunpack.c.l.b16 %v1935
    %v3882 = vunpack.c.h.b16 %v1935
    %v3883 = vunpack.c.l.b16 %v1936
    %v3884 = vunpack.c.h.b16 %v1936
    %v3885 = vunpack.c.l.b16 %v1937
    %v3886 = vunpack.c.h.b16 %v1937
    %v3887 = vunpack.c.l.b16 %v1938
    %v3888 = vunpack.c.h.b16 %v1938
    %v3889 = vunpack.c.l.b16 %v1939
    %v3890 = vunpack.c.h.b16 %v1939
    %v3891 = vunpack.c.l.b16 %v1940
    %v3892 = vunpack.c.h.b16 %v1940
    %v3893 = vunpack.c.l.b16 %v1941
    %v3894 = vunpack.c.h.b16 %v1941
    %v3895 = vunpack.c.l.b16 %v1942
    %v3896 = vunpack.c.h.b16 %v1942
    %v3897 = vunpack.c.l.b16 %v1943
    %v3898 = vunpack.c.h.b16 %v1943
    %v3899 = vunpack.c.l.b16 %v1944
    %v3900 = vunpack.c.h.b16 %v1944
    %v3901 = vunpack.c.l.b16 %v1945
    %v3902 = vunpack.c.h.b16 %v1945
    %v3903 = vunpack.c.l.b16 %v1946
    %v3904 = vunpack.c.h.b16 %v1946
    %v3905 = vunpack.c.l.b16 %v1947
    %v3906 = vunpack.c.h.b16 %v1947
    %v3907 = vunpack.c.l.b16 %v1948
    %v3908 = vunpack.c.h.b16 %v1948
    %v3909 = vunpack.c.l.b16 %v1949
    %v3910 = vunpack.c.h.b16 %v1949
    %v3911 = vunpack.c.l.b16 %v1950
    %v3912 = vunpack.c.h.b16 %v1950
    %v3913 = vunpack.c.l.b16 %v1951
    %v3914 = vunpack.c.h.b16 %v1951
    %v3915 = vunpack.c.l.b16 %v1952
    %v3916 = vunpack.c.h.b16 %v1952
    %v3917 = vunpack.c.l.b16 %v1953
    %v3918 = vunpack.c.h.b16 %v1953
    %v3919 = vunpack.c.l.b16 %v1954
    %v3920 = vunpack.c.h.b16 %v1954
    %v3921 = vunpack.c.l.b16 %v1955
    %v3922 = vunpack.c.h.b16 %v1955
    %v3923 = vunpack.c.l.b16 %v1956
    %v3924 = vunpack.c.h.b16 %v1956
    %v3925 = vunpack.c.l.b16 %v1957
    %v3926 = vunpack.c.h.b16 %v1957
    %v3927 = vunpack.c.l.b16 %v1958
    %v3928 = vunpack.c.h.b16 %v1958
    %v3929 = vunpack.c.l.b16 %v1959
    %v3930 = vunpack.c.h.b16 %v1959
    %v3931 = vunpack.c.l.b16 %v1960
    %v3932 = vunpack.c.h.b16 %v1960
    %v3933 = vunpack.c.l.b16 %v1961
    %v3934 = vunpack.c.h.b16 %v1961
    %v3935 = vunpack.c.l.b16 %v1962
    %v3936 = vunpack.c.h.b16 %v1962
    %v3937 = vunpack.c.l.b16 %v1963
    %v3938 = vunpack.c.h.b16 %v1963
    %v3939 = vunpack.c.l.b16 %v1964
    %v3940 = vunpack.c.h.b16 %v1964
    %v3941 = vunpack.c.l.b16 %v1965
    %v3942 = vunpack.c.h.b16 %v1965
    %v3943 = vunpack.c.l.b16 %v1966
    %v3944 = vunpack.c.h.b16 %v1966
    %v3945 = vunpack.c.l.b16 %v1967
    %v3946 = vunpack.c.h.b16 %v1967
    %v3947 = vunpack.c.l.b16 %v1968
    %v3948 = vunpack.c.h.b16 %v1968
    %v3949 = vunpack.c.l.b16 %v1969
    %v3950 = vunpack.c.h.b16 %v1969
    %v3951 = vunpack.c.l.b16 %v1970
    %v3952 = vunpack.c.h.b16 %v1970
    %v3953 = vunpack.c.l.b16 %v1971
    %v3954 = vunpack.c.h.b16 %v1971
    %v3955 = vunpack.c.l.b16 %v1972
    %v3956 = vunpack.c.h.b16 %v1972
    %v3957 = vunpack.c.l.b16 %v1973
    %v3958 = vunpack.c.h.b16 %v1973
    %v3959 = vunpack.c.l.b16 %v1974
    %v3960 = vunpack.c.h.b16 %v1974
    %v3961 = vunpack.c.l.b16 %v1975
    %v3962 = vunpack.c.h.b16 %v1975
    %v3963 = vunpack.c.l.b16 %v1976
    %v3964 = vunpack.c.h.b16 %v1976
    %v3965 = vunpack.c.l.b16 %v1977
    %v3966 = vunpack.c.h.b16 %v1977
    %v3967 = vunpack.c.l.b16 %v1978
    %v3968 = vunpack.c.h.b16 %v1978
    %v3969 = vunpack.c.l.b16 %v1979
    %v3970 = vunpack.c.h.b16 %v1979
    %v3971 = vunpack.c.l.b16 %v1980
    %v3972 = vunpack.c.h.b16 %v1980
    %v3973 = vunpack.c.l.b16 %v1981
    %v3974 = vunpack.c.h.b16 %v1981
    %v3975 = vunpack.c.l.b16 %v1982
    %v3976 = vunpack.c.h.b16 %v1982
    %v3977 = vunpack.c.l.b16 %v1983
    %v3978 = vunpack.c.h.b16 %v1983
    %v3979 = vunpack.c.l.b16 %v1984
    %v3980 = vunpack.c.h.b16 %v1984
    %v3981 = vunpack.c.l.b16 %v1985
    %v3982 = vunpack.c.h.b16 %v1985
    %v3983 = vunpack.c.l.b16 %v1986
    %v3984 = vunpack.c.h.b16 %v1986
    %v3985 = vunpack.c.l.b16 %v1987
    %v3986 = vunpack.c.h.b16 %v1987
    %v3987 = vunpack.c.l.b16 %v1988
    %v3988 = vunpack.c.h.b16 %v1988
    %v3989 = vunpack.c.l.b16 %v1989
    %v3990 = vunpack.c.h.b16 %v1989
    %v3991 = vunpack.c.l.b16 %v1990
    %v3992 = vunpack.c.h.b16 %v1990
    %v3993 = vunpack.c.l.b16 %v1991
    %v3994 = vunpack.c.h.b16 %v1991
    %v3995 = vunpack.c.l.b16 %v1992
    %v3996 = vunpack.c.h.b16 %v1992
    %v3997 = vunpack.c.l.b16 %v1993
    %v3998 = vunpack.c.h.b16 %v1993
    %v3999 = vunpack.c.l.b16 %v1994
    %v4000 = vunpack.c.h.b16 %v1994
    %v4001 = vunpack.c.l.b16 %v1995
    %v4002 = vunpack.c.h.b16 %v1995
    %v4003 = vunpack.c.l.b16 %v1996
    %v4004 = vunpack.c.h.b16 %v1996
    %v4005 = vunpack.c.l.b16 %v1997
    %v4006 = vunpack.c.h.b16 %v1997
    %v4007 = vunpack.c.l.b16 %v1998
    %v4008 = vunpack.c.h.b16 %v1998
    %v4009 = vunpack.c.l.b16 %v1999
    %v4010 = vunpack.c.h.b16 %v1999
    %v4011 = vunpack.c.l.b16 %v2000
    %v4012 = vunpack.c.h.b16 %v2000
    %v4013 = vunpack.c.l.b16 %v2001
    %v4014 = vunpack.c.h.b16 %v2001
    %v4015 = vunpack.c.l.b16 %v2002
    %v4016 = vunpack.c.h.b16 %v2002
    %v4017 = vunpack.c.l.b16 %v2003
    %v4018 = vunpack.c.h.b16 %v2003
    %v4019 = vunpack.c.l.b16 %v2004
    %v4020 = vunpack.c.h.b16 %v2004
    %v4021 = vunpack.c.l.b16 %v2005
    %v4022 = vunpack.c.h.b16 %v2005
    %v4023 = vunpack.c.l.b16 %v2006
    %v4024 = vunpack.c.h.b16 %v2006
    %v4025 = vunpack.c.l.b16 %v2007
    %v4026 = vunpack.c.h.b16 %v2007
    %v4027 = vunpack.c.l.b16 %v2008
    %v4028 = vunpack.c.h.b16 %v2008
    %v4029 = vunpack.c.l.b16 %v2009
    %v4030 = vunpack.c.h.b16 %v2009
    %v4031 = vunpack.c.l.b16 %v2010
    %v4032 = vunpack.c.h.b16 %v2010
    %v4033 = vunpack.c.l.b16 %v2011
    %v4034 = vunpack.c.h.b16 %v2011
    %v4035 = vunpack.c.l.b16 %v2012
    %v4036 = vunpack.c.h.b16 %v2012
    %v4037 = vunpack.c.l.b16 %v2013
    %v4038 = vunpack.c.h.b16 %v2013
    %v4039 = vunpack.c.l.b16 %v2014
    %v4040 = vunpack.c.h.b16 %v2014
    %v4041 = vunpack.c.l.b16 %v2015
    %v4042 = vunpack.c.h.b16 %v2015
    %v4043 = vunpack.c.l.b16 %v2016
    %v4044 = vunpack.c.h.b16 %v2016
    %v4045 = vunpack.c.l.b16 %v2017
    %v4046 = vunpack.c.h.b16 %v2017
    %v4047 = vunpack.c.l.b16 %v2018
    %v4048 = vunpack.c.h.b16 %v2018
    %v4049 = vunpack.c.l.b16 %v2019
    %v4050 = vunpack.c.h.b16 %v2019
    %v4051 = vunpack.c.l.b16 %v2020
    %v4052 = vunpack.c.h.b16 %v2020
    %v4053 = vunpack.c.l.b16 %v2021
    %v4054 = vunpack.c.h.b16 %v2021
    %v4055 = vunpack.c.l.b16 %v2022
    %v4056 = vunpack.c.h.b16 %v2022
    %v4057 = vunpack.c.l.b16 %v2023
    %v4058 = vunpack.c.h.b16 %v2023
    %v4059 = vunpack.c.l.b16 %v2024
    %v4060 = vunpack.c.h.b16 %v2024
    %v4061 = vunpack.c.l.b16 %v2025
    %v4062 = vunpack.c.h.b16 %v2025
    %v4063 = vunpack.c.l.b16 %v2026
    %v4064 = vunpack.c.h.b16 %v2026
    %v4065 = vunpack.c.l.b16 %v2027
    %v4066 = vunpack.c.h.b16 %v2027
    %v4067 = vunpack.c.l.b16 %v2028
    %v4068 = vunpack.c.h.b16 %v2028
    %v4069 = vunpack.c.l.b16 %v2029
    %v4070 = vunpack.c.h.b16 %v2029
    %v4071 = vunpack.c.l.b16 %v2030
    %v4072 = vunpack.c.h.b16 %v2030
    %v4073 = vunpack.c.l.b16 %v2031
    %v4074 = vunpack.c.h.b16 %v2031
    %v4075 = vunpack.c.l.b16 %v2032
    %v4076 = vunpack.c.h.b16 %v2032
    %v4077 = vunpack.c.l.b16 %v2033
    %v4078 = vunpack.c.h.b16 %v2033
    %v4079 = vunpack.c.l.b16 %v2034
    %v4080 = vunpack.c.h.b16 %v2034
    %v4081 = vunpack.c.l.b16 %v2035
    %v4082 = vunpack.c.h.b16 %v2035
    %v4083 = vunpack.c.l.b16 %v2036
    %v4084 = vunpack.c.h.b16 %v2036
    %v4085 = vunpack.c.l.b16 %v2037
    %v4086 = vunpack.c.h.b16 %v2037
    %v4087 = vunpack.c.l.b16 %v2038
    %v4088 = vunpack.c.h.b16 %v2038
    %v4089 = vunpack.c.l.b16 %v2039
    %v4090 = vunpack.c.h.b16 %v2039
    %v4091 = vunpack.c.l.b16 %v2040
    %v4092 = vunpack.c.h.b16 %v2040
    %v4093 = vunpack.c.l.b16 %v2041
    %v4094 = vunpack.c.h.b16 %v2041
    %v4095 = vunpack.c.l.b16 %v2042
    %v4096 = vunpack.c.h.b16 %v2042
    %v4097 = vunpack.c.l.b16 %v2043
    %v4098 = vunpack.c.h.b16 %v2043
    %v4099 = vunpack.c.l.b16 %v2044
    %v4100 = vunpack.c.h.b16 %v2044
    %v4101 = vunpack.c.l.b16 %v2045
    %v4102 = vunpack.c.h.b16 %v2045
    %v4103 = vunpack.c.l.b16 %v2046
    %v4104 = vunpack.c.h.b16 %v2046
    %v4105 = vunpack.c.l.b16 %v2047
    %v4106 = vunpack.c.h.b16 %v2047
    %v4107 = vunpack.c.l.b16 %v2048
    %v4108 = vunpack.c.h.b16 %v2048
    %v4109 = vunpack.c.l.b16 %v2049
    %v4110 = vunpack.c.h.b16 %v2049
    %v4111 = vunpack.c.l.b16 %v2050
    %v4112 = vunpack.c.h.b16 %v2050
    %v4113 = vunpack.c.l.b16 %v2051
    %v4114 = vunpack.c.h.b16 %v2051
    %v4115 = vunpack.c.l.b16 %v2052
    %v4116 = vunpack.c.h.b16 %v2052
    %v4117 = vunpack.c.l.b16 %v2053
    %v4118 = vunpack.c.h.b16 %v2053
    %v4119 = vunpack.c.l.b16 %v2054
    %v4120 = vunpack.c.h.b16 %v2054
    %v4121 = vunpack.c.l.b16 %v2055
    %v4122 = vunpack.c.h.b16 %v2055
    %v4123 = vunpack.c.l.b16 %v2056
    %v4124 = vunpack.c.h.b16 %v2056
    %v4125 = vunpack.c.l.b16 %v2057
    %v4126 = vunpack.c.h.b16 %v2057
    %v4127 = vunpack.c.l.b16 %v2058
    %v4128 = vunpack.c.h.b16 %v2058
    %v4129 = vunpack.c.l.b16 %v2059
    %v4130 = vunpack.c.h.b16 %v2059
    %v4131 = vunpack.c.l.b16 %v2060
    %v4132 = vunpack.c.h.b16 %v2060
    %v4133 = vunpack.c.l.b16 %v2061
    %v4134 = vunpack.c.h.b16 %v2061
    %v4135 = vunpack.c.l.b16 %v2062
    %v4136 = vunpack.c.h.b16 %v2062
    %v4137 = vunpack.c.l.b16 %v2063
    %v4138 = vunpack.c.h.b16 %v2063
    %v4139 = vunpack.c.l.b16 %v2064
    %v4140 = vunpack.c.h.b16 %v2064
    %v4141 = vunpack.c.l.b16 %v2065
    %v4142 = vunpack.c.h.b16 %v2065
    %v4143 = vunpack.c.l.b16 %v2066
    %v4144 = vunpack.c.h.b16 %v2066
    %v4145 = vunpack.c.l.b16 %v2067
    %v4146 = vunpack.c.h.b16 %v2067
    %v4147 = vunpack.c.l.b16 %v2068
    %v4148 = vunpack.c.h.b16 %v2068
    %v4149 = vunpack.c.l.b16 %v2069
    %v4150 = vunpack.c.h.b16 %v2069
    %v4151 = vunpack.c.l.b16 %v2070
    %v4152 = vunpack.c.h.b16 %v2070
    %v4153 = vunpack.c.l.b16 %v2071
    %v4154 = vunpack.c.h.b16 %v2071
    %v4155 = vunpack.c.l.b16 %v2072
    %v4156 = vunpack.c.h.b16 %v2072
    %v4157 = vunpack.c.l.b16 %v2073
    %v4158 = vunpack.c.h.b16 %v2073
    %v4159 = vunpack.c.l.b16 %v2074
    %v4160 = vunpack.c.h.b16 %v2074
    %v4161 = vunpack.c.l.b16 %v2075
    %v4162 = vunpack.c.h.b16 %v2075
    %v4163 = vunpack.c.l.b16 %v2076
    %v4164 = vunpack.c.h.b16 %v2076
    %v4165 = vunpack.c.l.b16 %v2077
    %v4166 = vunpack.c.h.b16 %v2077
    %v4167 = vunpack.c.l.b16 %v2078
    %v4168 = vunpack.c.h.b16 %v2078
    %v4169 = vunpack.c.l.b16 %v2079
    %v4170 = vunpack.c.h.b16 %v2079
    %v4171 = vunpack.c.l.b16 %v2080
    %v4172 = vunpack.c.h.b16 %v2080
    %v4173 = vunpack.c.l.b16 %v2081
    %v4174 = vunpack.c.h.b16 %v2081
    %v4175 = vunpack.c.l.b16 %v2082
    %v4176 = vunpack.c.h.b16 %v2082
    %v4177 = vunpack.c.l.b16 %v2083
    %v4178 = vunpack.c.h.b16 %v2083
    %v4179 = vunpack.c.l.b16 %v2084
    %v4180 = vunpack.c.h.b16 %v2084
    %v4181 = vunpack.c.l.b16 %v2085
    %v4182 = vunpack.c.h.b16 %v2085
    %v4183 = vunpack.c.l.b16 %v2086
    %v4184 = vunpack.c.h.b16 %v2086
    %v4185 = vunpack.c.l.b16 %v2087
    %v4186 = vunpack.c.h.b16 %v2087
    %v4187 = vunpack.c.l.b16 %v2088
    %v4188 = vunpack.c.h.b16 %v2088
    %v4189 = vunpack.c.l.b16 %v2089
    %v4190 = vunpack.c.h.b16 %v2089
    %v4191 = vunpack.c.l.b16 %v2090
    %v4192 = vunpack.c.h.b16 %v2090
    %v4193 = vunpack.c.l.b16 %v2091
    %v4194 = vunpack.c.h.b16 %v2091
    %v4195 = vunpack.c.l.b16 %v2092
    %v4196 = vunpack.c.h.b16 %v2092
    %v4197 = vunpack.c.l.b16 %v2093
    %v4198 = vunpack.c.h.b16 %v2093
    %v4199 = vunpack.c.l.b16 %v2094
    %v4200 = vunpack.c.h.b16 %v2094
    %v4201 = vunpack.c.l.b16 %v2095
    %v4202 = vunpack.c.h.b16 %v2095
    %v4203 = vunpack.c.l.b16 %v2096
    %v4204 = vunpack.c.h.b16 %v2096
    %v4205 = vunpack.c.l.b16 %v2097
    %v4206 = vunpack.c.h.b16 %v2097
    %v4207 = vunpack.c.l.b16 %v2098
    %v4208 = vunpack.c.h.b16 %v2098
    %v4209 = vunpack.c.l.b16 %v2099
    %v4210 = vunpack.c.h.b16 %v2099
    %v4211 = vunpack.c.l.b16 %v2100
    %v4212 = vunpack.c.h.b16 %v2100
    %v4213 = vunpack.c.l.b16 %v2101
    %v4214 = vunpack.c.h.b16 %v2101
    %v4215 = vunpack.c.l.b16 %v2102
    %v4216 = vunpack.c.h.b16 %v2102
    %v4217 = vunpack.c.l.b16 %v2103
    %v4218 = vunpack.c.h.b16 %v2103
    %v4219 = vunpack.c.l.b16 %v2104
    %v4220 = vunpack.c.h.b16 %v2104
    %v4221 = vunpack.c.l.b16 %v2105
    %v4222 = vunpack.c.h.b16 %v2105
    %v4223 = vunpack.c.l.b16 %v2106
    %v4224 = vunpack.c.h.b16 %v2106
    %v4225 = vunpack.c.l.b16 %v2107
    %v4226 = vunpack.c.h.b16 %v2107
    %v4227 = vunpack.c.l.b16 %v2108
    %v4228 = vunpack.c.h.b16 %v2108
    %v4229 = vunpack.c.l.b16 %v2109
    %v4230 = vunpack.c.h.b16 %v2109
    %v4231 = vunpack.c.l.b16 %v2110
    %v4232 = vunpack.c.h.b16 %v2110
    %v4233 = vunpack.c.l.b16 %v2111
    %v4234 = vunpack.c.h.b16 %v2111
    %v4235 = vunpack.c.l.b16 %v2112
    %v4236 = vunpack.c.h.b16 %v2112
    %v4237 = vunpack.c.l.b16 %v2113
    %v4238 = vunpack.c.h.b16 %v2113
    %v4239 = vunpack.c.l.b16 %v2114
    %v4240 = vunpack.c.h.b16 %v2114
    %v4241 = vunpack.c.l.b16 %v2115
    %v4242 = vunpack.c.h.b16 %v2115
    %v4243 = vunpack.c.l.b16 %v2116
    %v4244 = vunpack.c.h.b16 %v2116
    %v4245 = vunpack.c.l.b16 %v2117
    %v4246 = vunpack.c.h.b16 %v2117
    %v4247 = vunpack.c.l.b16 %v2118
    %v4248 = vunpack.c.h.b16 %v2118
    %v4249 = vunpack.c.l.b16 %v2119
    %v4250 = vunpack.c.h.b16 %v2119
    %v4251 = vunpack.c.l.b16 %v2120
    %v4252 = vunpack.c.h.b16 %v2120
    %v4253 = vunpack.c.l.b16 %v2121
    %v4254 = vunpack.c.h.b16 %v2121
    %v4255 = vunpack.c.l.b16 %v2122
    %v4256 = vunpack.c.h.b16 %v2122
    %v4257 = vunpack.c.l.b16 %v2123
    %v4258 = vunpack.c.h.b16 %v2123
    %v4259 = vunpack.c.l.b16 %v2124
    %v4260 = vunpack.c.h.b16 %v2124
    %v4261 = vunpack.c.l.b16 %v2125
    %v4262 = vunpack.c.h.b16 %v2125
    %v4263 = vunpack.c.l.b16 %v2126
    %v4264 = vunpack.c.h.b16 %v2126
    %v4265 = vunpack.c.l.b16 %v2127
    %v4266 = vunpack.c.h.b16 %v2127
    %v4267 = vunpack.c.l.b16 %v2128
    %v4268 = vunpack.c.h.b16 %v2128
    %v4269 = vunpack.c.l.b16 %v2129
    %v4270 = vunpack.c.h.b16 %v2129
    %v4271 = vunpack.c.l.b16 %v2130
    %v4272 = vunpack.c.h.b16 %v2130
    %v4273 = vunpack.c.l.b16 %v2131
    %v4274 = vunpack.c.h.b16 %v2131
    %v4275 = vunpack.c.l.b16 %v2132
    %v4276 = vunpack.c.h.b16 %v2132
    %v4277 = vunpack.c.l.b16 %v2133
    %v4278 = vunpack.c.h.b16 %v2133
    %v4279 = vunpack.c.l.b16 %v2134
    %v4280 = vunpack.c.h.b16 %v2134
    %v4281 = vunpack.c.l.b16 %v2135
    %v4282 = vunpack.c.h.b16 %v2135
    %v4283 = vunpack.c.l.b16 %v2136
    %v4284 = vunpack.c.h.b16 %v2136
    %v4285 = vunpack.c.l.b16 %v2137
    %v4286 = vunpack.c.h.b16 %v2137
    %v4287 = vunpack.c.l.b16 %v2138
    %v4288 = vunpack.c.h.b16 %v2138
    %v4289 = vunpack.c.l.b16 %v2139
    %v4290 = vunpack.c.h.b16 %v2139
    %v4291 = vunpack.c.l.b16 %v2140
    %v4292 = vunpack.c.h.b16 %v2140
    %v4293 = vunpack.c.l.b16 %v2141
    %v4294 = vunpack.c.h.b16 %v2141
    %v4295 = vunpack.c.l.b16 %v2142
    %v4296 = vunpack.c.h.b16 %v2142
    %v4297 = vunpack.c.l.b16 %v2143
    %v4298 = vunpack.c.h.b16 %v2143
    %v4299 = vunpack.c.l.b16 %v2144
    %v4300 = vunpack.c.h.b16 %v2144
    %v4301 = vunpack.c.l.b16 %v2145
    %v4302 = vunpack.c.h.b16 %v2145
    %v4303 = vunpack.c.l.b16 %v2146
    %v4304 = vunpack.c.h.b16 %v2146
    %v4305 = vunpack.c.l.b16 %v2147
    %v4306 = vunpack.c.h.b16 %v2147
    %v4307 = vunpack.c.l.b16 %v2148
    %v4308 = vunpack.c.h.b16 %v2148
    %v4309 = vunpack.c.l.b16 %v2149
    %v4310 = vunpack.c.h.b16 %v2149
    %v4311 = vunpack.c.l.b16 %v2150
    %v4312 = vunpack.c.h.b16 %v2150
    %v4313 = vunpack.c.l.b16 %v2151
    %v4314 = vunpack.c.h.b16 %v2151
    %v4315 = vunpack.c.l.b16 %v2152
    %v4316 = vunpack.c.h.b16 %v2152
    %v4317 = vunpack.c.l.b16 %v2153
    %v4318 = vunpack.c.h.b16 %v2153
    %v4319 = vunpack.c.l.b16 %v2154
    %v4320 = vunpack.c.h.b16 %v2154
    %v4321 = vunpack.c.l.b16 %v2155
    %v4322 = vunpack.c.h.b16 %v2155
    %v4323 = vunpack.c.l.b16 %v2156
    %v4324 = vunpack.c.h.b16 %v2156
    %v4325 = vunpack.c.l.b16 %v2157
    %v4326 = vunpack.c.h.b16 %v2157
    %v4327 = vunpack.c.l.b16 %v2158
    %v4328 = vunpack.c.h.b16 %v2158
    %v4329 = vunpack.c.l.b16 %v2159
    %v4330 = vunpack.c.h.b16 %v2159
    %v4331 = vunpack.c.l.b16 %v2160
    %v4332 = vunpack.c.h.b16 %v2160
    %v4333 = vunpack.c.l.b16 %v2161
    %v4334 = vunpack.c.h.b16 %v2161
    %v4335 = vunpack.c.l.b16 %v2162
    %v4336 = vunpack.c.h.b16 %v2162
    %v4337 = vunpack.c.l.b16 %v2163
    %v4338 = vunpack.c.h.b16 %v2163
    %v4339 = vunpack.c.l.b16 %v2164
    %v4340 = vunpack.c.h.b16 %v2164
    %v4341 = vunpack.c.l.b16 %v2165
    %v4342 = vunpack.c.h.b16 %v2165
    %v4343 = vunpack.c.l.b16 %v2166
    %v4344 = vunpack.c.h.b16 %v2166
    %v4345 = vunpack.c.l.b16 %v2167
    %v4346 = vunpack.c.h.b16 %v2167
    %v4347 = vunpack.c.l.b16 %v2168
    %v4348 = vunpack.c.h.b16 %v2168
    %v4349 = vunpack.c.l.b16 %v2169
    %v4350 = vunpack.c.h.b16 %v2169
    %v4351 = vunpack.c.l.b16 %v2170
    %v4352 = vunpack.c.h.b16 %v2170
    %v4353 = vunpack.c.l.b16 %v2171
    %v4354 = vunpack.c.h.b16 %v2171
    %v4355 = vunpack.c.l.b16 %v2172
    %v4356 = vunpack.c.h.b16 %v2172
    %v4357 = vunpack.c.l.b16 %v2173
    %v4358 = vunpack.c.h.b16 %v2173
    %v4359 = vunpack.c.l.b16 %v2174
    %v4360 = vunpack.c.h.b16 %v2174
    %v4361 = vunpack.c.l.b16 %v2175
    %v4362 = vunpack.c.h.b16 %v2175
    %v4363 = vunpack.c.l.b16 %v2176
    %v4364 = vunpack.c.h.b16 %v2176
    %v4365 = vunpack.c.l.b16 %v2177
    %v4366 = vunpack.c.h.b16 %v2177
    %v4367 = vunpack.c.l.b16 %v2178
    %v4368 = vunpack.c.h.b16 %v2178
    %v4369 = vunpack.c.l.b16 %v2179
    %v4370 = vunpack.c.h.b16 %v2179
    %v4371 = vunpack.c.l.b16 %v2180
    %v4372 = vunpack.c.h.b16 %v2180
    %v4373 = vunpack.c.l.b16 %v2181
    %v4374 = vunpack.c.h.b16 %v2181
    %v4375 = vunpack.c.l.b16 %v2182
    %v4376 = vunpack.c.h.b16 %v2182
    %v4377 = vunpack.c.l.b16 %v2183
    %v4378 = vunpack.c.h.b16 %v2183
    %v4379 = vunpack.c.l.b16 %v2184
    %v4380 = vunpack.c.h.b16 %v2184
    %v4381 = vunpack.c.l.b16 %v2185
    %v4382 = vunpack.c.h.b16 %v2185
    %v4383 = vunpack.c.l.b16 %v2186
    %v4384 = vunpack.c.h.b16 %v2186
    %v4385 = vunpack.c.l.b16 %v2187
    %v4386 = vunpack.c.h.b16 %v2187
    %v4387 = vunpack.c.l.b16 %v2188
    %v4388 = vunpack.c.h.b16 %v2188
    %v4389 = vunpack.c.l.b16 %v2189
    %v4390 = vunpack.c.h.b16 %v2189
    %v4391 = vunpack.c.l.b16 %v2190
    %v4392 = vunpack.c.h.b16 %v2190
    %v4393 = vunpack.c.l.b16 %v2191
    %v4394 = vunpack.c.h.b16 %v2191
    %v4395 = vunpack.c.l.b16 %v2192
    %v4396 = vunpack.c.h.b16 %v2192
    %v4397 = vunpack.c.l.b16 %v2193
    %v4398 = vunpack.c.h.b16 %v2193
    %v4399 = vunpack.c.l.b16 %v2194
    %v4400 = vunpack.c.h.b16 %v2194
    %v4401 = vunpack.c.l.b16 %v2195
    %v4402 = vunpack.c.h.b16 %v2195
    %v4403 = vunpack.c.l.b16 %v2196
    %v4404 = vunpack.c.h.b16 %v2196
    %v4405 = vunpack.c.l.b16 %v2197
    %v4406 = vunpack.c.h.b16 %v2197
    %v4407 = vunpack.c.l.b16 %v2198
    %v4408 = vunpack.c.h.b16 %v2198
    %v4409 = vunpack.c.l.b16 %v2199
    %v4410 = vunpack.c.h.b16 %v2199
    %v4411 = vunpack.c.l.b16 %v2200
    %v4412 = vunpack.c.h.b16 %v2200
    %v4413 = vunpack.c.l.b16 %v2201
    %v4414 = vunpack.c.h.b16 %v2201
    %v4415 = vunpack.c.l.b16 %v2202
    %v4416 = vunpack.c.h.b16 %v2202
    %v4417 = vunpack.c.l.b16 %v2203
    %v4418 = vunpack.c.h.b16 %v2203
    %v4419 = vunpack.c.l.b16 %v2204
    %v4420 = vunpack.c.h.b16 %v2204
    %v4421 = vunpack.c.l.b16 %v2205
    %v4422 = vunpack.c.h.b16 %v2205
    %v4423 = vunpack.c.l.b16 %v2206
    %v4424 = vunpack.c.h.b16 %v2206
    %v4425 = vunpack.c.l.b16 %v2207
    %v4426 = vunpack.c.h.b16 %v2207
    %v4427 = vunpack.c.l.b16 %v2208
    %v4428 = vunpack.c.h.b16 %v2208
    %v4429 = vunpack.c.l.b16 %v2209
    %v4430 = vunpack.c.h.b16 %v2209
    %v4431 = vunpack.c.l.b16 %v2210
    %v4432 = vunpack.c.h.b16 %v2210
    %v4433 = vunpack.c.l.b16 %v2211
    %v4434 = vunpack.c.h.b16 %v2211
    %v4435 = vunpack.c.l.b16 %v2212
    %v4436 = vunpack.c.h.b16 %v2212
    %v4437 = vunpack.c.l.b16 %v2213
    %v4438 = vunpack.c.h.b16 %v2213
    %v4439 = vunpack.c.l.b16 %v2214
    %v4440 = vunpack.c.h.b16 %v2214
    %v4441 = vunpack.c.l.b16 %v2215
    %v4442 = vunpack.c.h.b16 %v2215
    %v4443 = vunpack.c.l.b16 %v2216
    %v4444 = vunpack.c.h.b16 %v2216
    %v4445 = vunpack.c.l.b16 %v2217
    %v4446 = vunpack.c.h.b16 %v2217
    %v4447 = vunpack.c.l.b16 %v2218
    %v4448 = vunpack.c.h.b16 %v2218
    %v4449 = vunpack.c.l.b16 %v2219
    %v4450 = vunpack.c.h.b16 %v2219
    %v4451 = vunpack.c.l.b16 %v2220
    %v4452 = vunpack.c.h.b16 %v2220
    %v4453 = vunpack.c.l.b16 %v2221
    %v4454 = vunpack.c.h.b16 %v2221
    %v4455 = vunpack.c.l.b16 %v2222
    %v4456 = vunpack.c.h.b16 %v2222
    %v4457 = vunpack.c.l.b16 %v2223
    %v4458 = vunpack.c.h.b16 %v2223
    %v4459 = vunpack.c.l.b16 %v2224
    %v4460 = vunpack.c.h.b16 %v2224
    %v4461 = vunpack.c.l.b16 %v2225
    %v4462 = vunpack.c.h.b16 %v2225
    %v4463 = vunpack.c.l.b16 %v2226
    %v4464 = vunpack.c.h.b16 %v2226
    %v4465 = vunpack.c.l.b16 %v2227
    %v4466 = vunpack.c.h.b16 %v2227
    %v4467 = vunpack.c.l.b16 %v2228
    %v4468 = vunpack.c.h.b16 %v2228
    %v4469 = vunpack.c.l.b16 %v2229
    %v4470 = vunpack.c.h.b16 %v2229
    %v4471 = vunpack.c.l.b16 %v2230
    %v4472 = vunpack.c.h.b16 %v2230
    %v4473 = vunpack.c.l.b16 %v2231
    %v4474 = vunpack.c.h.b16 %v2231
    %v4475 = vunpack.c.l.b16 %v2232
    %v4476 = vunpack.c.h.b16 %v2232
    %v4477 = vunpack.c.l.b16 %v2233
    %v4478 = vunpack.c.h.b16 %v2233
    %v4479 = vunpack.c.l.b16 %v2234
    %v4480 = vunpack.c.h.b16 %v2234
    %v4481 = vunpack.c.l.b16 %v2235
    %v4482 = vunpack.c.h.b16 %v2235
    %v4483 = vunpack.c.l.b16 %v2236
    %v4484 = vunpack.c.h.b16 %v2236
    %v4485 = vunpack.c.l.b16 %v2237
    %v4486 = vunpack.c.h.b16 %v2237
    %v4487 = vunpack.c.l.b16 %v2238
    %v4488 = vunpack.c.h.b16 %v2238
    %v4489 = vunpack.c.l.b16 %v2239
    %v4490 = vunpack.c.h.b16 %v2239
    %v4491 = vunpack.c.l.b16 %v2240
    %v4492 = vunpack.c.h.b16 %v2240
    %v4493 = vunpack.c.l.b16 %v2241
    %v4494 = vunpack.c.h.b16 %v2241
    %v4495 = vunpack.c.l.b16 %v2242
    %v4496 = vunpack.c.h.b16 %v2242
    %v4497 = vunpack.c.l.b16 %v2243
    %v4498 = vunpack.c.h.b16 %v2243
    %v4499 = vunpack.c.l.b16 %v2244
    %v4500 = vunpack.c.h.b16 %v2244
    %v4501 = vunpack.c.l.b16 %v2245
    %v4502 = vunpack.c.h.b16 %v2245
    %v4503 = vunpack.c.l.b16 %v2246
    %v4504 = vunpack.c.h.b16 %v2246
    %v4505 = vunpack.c.l.b16 %v2247
    %v4506 = vunpack.c.h.b16 %v2247
    %v4507 = vunpack.c.l.b16 %v2248
    %v4508 = vunpack.c.h.b16 %v2248
    %v4509 = vunpack.c.l.b16 %v2249
    %v4510 = vunpack.c.h.b16 %v2249
    %v4511 = vunpack.c.l.b16 %v2250
    %v4512 = vunpack.c.h.b16 %v2250
    %v4513 = vunpack.c.l.b16 %v2251
    %v4514 = vunpack.c.h.b16 %v2251
    %v4515 = vunpack.c.l.b16 %v2252
    %v4516 = vunpack.c.h.b16 %v2252
    %v4517 = vunpack.c.l.b16 %v2253
    %v4518 = vunpack.c.h.b16 %v2253
    %v4519 = vunpack.c.l.b16 %v2254
    %v4520 = vunpack.c.h.b16 %v2254
    %v4521 = vunpack.c.l.b16 %v2255
    %v4522 = vunpack.c.h.b16 %v2255
    %v4523 = vunpack.c.l.b16 %v2256
    %v4524 = vunpack.c.h.b16 %v2256
    %v4525 = vunpack.c.l.b16 %v2257
    %v4526 = vunpack.c.h.b16 %v2257
    %v4527 = vunpack.c.l.b16 %v2258
    %v4528 = vunpack.c.h.b16 %v2258
    %v4529 = vunpack.c.l.b16 %v2259
    %v4530 = vunpack.c.h.b16 %v2259
    %v4531 = vunpack.c.l.b16 %v2260
    %v4532 = vunpack.c.h.b16 %v2260
    %v4533 = vunpack.c.l.b16 %v2261
    %v4534 = vunpack.c.h.b16 %v2261
    %v4535 = vunpack.c.l.b16 %v2262
    %v4536 = vunpack.c.h.b16 %v2262
    %v4537 = vunpack.c.l.b16 %v2263
    %v4538 = vunpack.c.h.b16 %v2263
    %v4539 = vunpack.c.l.b16 %v2264
    %v4540 = vunpack.c.h.b16 %v2264
    %v4541 = vunpack.c.l.b16 %v2265
    %v4542 = vunpack.c.h.b16 %v2265
    %v4543 = vunpack.c.l.b16 %v2266
    %v4544 = vunpack.c.h.b16 %v2266
    %v4545 = vunpack.c.l.b16 %v2267
    %v4546 = vunpack.c.h.b16 %v2267
    %v4547 = vunpack.c.l.b16 %v2268
    %v4548 = vunpack.c.h.b16 %v2268
    %v4549 = vunpack.c.l.b16 %v2269
    %v4550 = vunpack.c.h.b16 %v2269
    %v4551 = vunpack.c.l.b16 %v2270
    %v4552 = vunpack.c.h.b16 %v2270
    %v4553 = vunpack.c.l.b16 %v2271
    %v4554 = vunpack.c.h.b16 %v2271
    %v4555 = vunpack.c.l.b16 %v2272
    %v4556 = vunpack.c.h.b16 %v2272
    %v4557 = vunpack.c.l.b16 %v2273
    %v4558 = vunpack.c.h.b16 %v2273
    %v4559 = vunpack.c.l.b16 %v2274
    %v4560 = vunpack.c.h.b16 %v2274
    %v4561 = vunpack.c.l.b16 %v2275
    %v4562 = vunpack.c.h.b16 %v2275
    %v4563 = vunpack.c.l.b16 %v2276
    %v4564 = vunpack.c.h.b16 %v2276
    %v4565 = vunpack.c.l.b16 %v2277
    %v4566 = vunpack.c.h.b16 %v2277
    %v4567 = vunpack.c.l.b16 %v2278
    %v4568 = vunpack.c.h.b16 %v2278
    %v4569 = vunpack.c.l.b16 %v2279
    %v4570 = vunpack.c.h.b16 %v2279
    %v4571 = vunpack.c.l.b16 %v2280
    %v4572 = vunpack.c.h.b16 %v2280
    %v4573 = vunpack.c.l.b16 %v2281
    %v4574 = vunpack.c.h.b16 %v2281
    %v4575 = vunpack.c.l.b16 %v2282
    %v4576 = vunpack.c.h.b16 %v2282
    %v4577 = vunpack.c.l.b16 %v2283
    %v4578 = vunpack.c.h.b16 %v2283
    %v4579 = vunpack.c.l.b16 %v2284
    %v4580 = vunpack.c.h.b16 %v2284
    %v4581 = vunpack.c.l.b16 %v2285
    %v4582 = vunpack.c.h.b16 %v2285
    %v4583 = vunpack.c.l.b16 %v2286
    %v4584 = vunpack.c.h.b16 %v2286
    %v4585 = vunpack.c.l.b16 %v2287
    %v4586 = vunpack.c.h.b16 %v2287
    %v4587 = vunpack.c.l.b16 %v2288
    %v4588 = vunpack.c.h.b16 %v2288
    %v4589 = vunpack.c.l.b16 %v2289
    %v4590 = vunpack.c.h.b16 %v2289
    %v4591 = vunpack.c.l.b16 %v2290
    %v4592 = vunpack.c.h.b16 %v2290
    %v4593 = vunpack.c.l.b16 %v2291
    %v4594 = vunpack.c.h.b16 %v2291
    %v4595 = vunpack.c.l.b16 %v2292
    %v4596 = vunpack.c.h.b16 %v2292
    %v4597 = vunpack.c.l.b16 %v2293
    %v4598 = vunpack.c.h.b16 %v2293
    %v4599 = vunpack.c.l.b16 %v2294
    %v4600 = vunpack.c.h.b16 %v2294
    %v4601 = vunpack.c.l.b16 %v2295
    %v4602 = vunpack.c.h.b16 %v2295
    %v4603 = vunpack.c.l.b16 %v2296
    %v4604 = vunpack.c.h.b16 %v2296
    %v4605 = vunpack.c.l.b16 %v2297
    %v4606 = vunpack.c.h.b16 %v2297
    %v4607 = vunpack.c.l.b16 %v2298
    %v4608 = vunpack.c.h.b16 %v2298
    %v4609 = vunpack.c.l.b16 %v2299
    %v4610 = vunpack.c.h.b16 %v2299
    %v4611 = vunpack.c.l.b16 %v2300
    %v4612 = vunpack.c.h.b16 %v2300
    %v4613 = vunpack.c.l.b16 %v2301
    %v4614 = vunpack.c.h.b16 %v2301
    %v4615 = vunpack.c.l.b16 %v2302
    %v4616 = vunpack.c.h.b16 %v2302
    %v4617 = vunpack.c.l.b16 %v2303
    %v4618 = vunpack.c.h.b16 %v2303
    %v4619 = vunpack.c.l.b16 %v2304
    %v4620 = vunpack.c.h.b16 %v2304
    %v4621 = vunpack.c.l.b16 %v2305
    %v4622 = vunpack.c.h.b16 %v2305
    %v4623 = vunpack.c.l.b16 %v2306
    %v4624 = vunpack.c.h.b16 %v2306
    %v4625 = vunpack.c.l.b16 %v2307
    %v4626 = vunpack.c.h.b16 %v2307
    %v4627 = vunpack.c.l.b16 %v2308
    %v4628 = vunpack.c.h.b16 %v2308
    %v4629 = vunpack.c.l.b16 %v2309
    %v4630 = vunpack.c.h.b16 %v2309
    %v4631 = vunpack.c.l.b16 %v2310
    %v4632 = vunpack.c.h.b16 %v2310
    %v4633 = vunpack.c.l.b16 %v2311
    %v4634 = vunpack.c.h.b16 %v2311
    %v4635 = vunpack.c.l.b16 %v2312
    %v4636 = vunpack.c.h.b16 %v2312
    %v4637 = vunpack.c.l.b16 %v2313
    %v4638 = vunpack.c.h.b16 %v2313
    %v4639 = vunpack.c.l.b16 %v2314
    %v4640 = vunpack.c.h.b16 %v2314
    %v4641 = vunpack.c.l.b16 %v2315
    %v4642 = vunpack.c.h.b16 %v2315
    %v4643 = vunpack.c.l.b16 %v2316
    %v4644 = vunpack.c.h.b16 %v2316
    %v4645 = vunpack.c.l.b16 %v2317
    %v4646 = vunpack.c.h.b16 %v2317
    %v4647 = vunpack.c.l.b16 %v2318
    %v4648 = vunpack.c.h.b16 %v2318
    %v4649 = vunpack.c.l.b16 %v2319
    %v4650 = vunpack.c.h.b16 %v2319
    %v4651 = vunpack.c.l.b16 %v2320
    %v4652 = vunpack.c.h.b16 %v2320
    %v4653 = vunpack.c.l.b16 %v2321
    %v4654 = vunpack.c.h.b16 %v2321
    %v4655 = vunpack.c.l.b16 %v2322
    %v4656 = vunpack.c.h.b16 %v2322
    %v4657 = vunpack.c.l.b16 %v2323
    %v4658 = vunpack.c.h.b16 %v2323
    %v4659 = vunpack.c.l.b16 %v2324
    %v4660 = vunpack.c.h.b16 %v2324
    %v4661 = vunpack.c.l.b16 %v2325
    %v4662 = vunpack.c.h.b16 %v2325
    %v4663 = vunpack.c.l.b16 %v2326
    %v4664 = vunpack.c.h.b16 %v2326
    %v4665 = vunpack.c.l.b16 %v2327
    %v4666 = vunpack.c.h.b16 %v2327
    %v4667 = vunpack.c.l.b16 %v2328
    %v4668 = vunpack.c.h.b16 %v2328
    %v4669 = vunpack.c.l.b16 %v2329
    %v4670 = vunpack.c.h.b16 %v2329
    %v4671 = vunpack.c.l.b16 %v2330
    %v4672 = vunpack.c.h.b16 %v2330
    %v4673 = vunpack.c.l.b16 %v2331
    %v4674 = vunpack.c.h.b16 %v2331
    %v4675 = vunpack.c.l.b16 %v2332
    %v4676 = vunpack.c.h.b16 %v2332
    %v4677 = vunpack.c.l.b16 %v2333
    %v4678 = vunpack.c.h.b16 %v2333
    %v4679 = vunpack.c.l.b16 %v2334
    %v4680 = vunpack.c.h.b16 %v2334
    %v4681 = vunpack.c.l.b16 %v2335
    %v4682 = vunpack.c.h.b16 %v2335
    %v4683 = vunpack.c.l.b16 %v2336
    %v4684 = vunpack.c.h.b16 %v2336
    %v4685 = vunpack.c.l.b16 %v2337
    %v4686 = vunpack.c.h.b16 %v2337
    %v4687 = vunpack.c.l.b16 %v2338
    %v4688 = vunpack.c.h.b16 %v2338
    %v4689 = vunpack.c.l.b16 %v2339
    %v4690 = vunpack.c.h.b16 %v2339
    %v4691 = vunpack.c.l.b16 %v2340
    %v4692 = vunpack.c.h.b16 %v2340
    %v4693 = vunpack.c.l.b16 %v2341
    %v4694 = vunpack.c.h.b16 %v2341
    %v4695 = vunpack.c.l.b16 %v2342
    %v4696 = vunpack.c.h.b16 %v2342
    %v4697 = vunpack.c.l.b16 %v2343
    %v4698 = vunpack.c.h.b16 %v2343
    %v4699 = vunpack.c.l.b16 %v2344
    %v4700 = vunpack.c.h.b16 %v2344
    %v4701 = vunpack.c.l.b16 %v2345
    %v4702 = vunpack.c.h.b16 %v2345
    %v4703 = vunpack.c.l.b16 %v2346
    %v4704 = vunpack.c.h.b16 %v2346
    %v4705 = vunpack.c.l.b16 %v2347
    %v4706 = vunpack.c.h.b16 %v2347
    %v4707 = vunpack.c.l.b16 %v2348
    %v4708 = vunpack.c.h.b16 %v2348
    %v4709 = vunpack.c.l.b16 %v2349
    %v4710 = vunpack.c.h.b16 %v2349
    %v4711 = vunpack.c.l.b16 %v2350
    %v4712 = vunpack.c.h.b16 %v2350
    %v4713 = vunpack.c.l.b16 %v2351
    %v4714 = vunpack.c.h.b16 %v2351
    %v4715 = vunpack.c.l.b16 %v2352
    %v4716 = vunpack.c.h.b16 %v2352
    %v4717 = vunpack.c.l.b16 %v2353
    %v4718 = vunpack.c.h.b16 %v2353
    %v4719 = vunpack.c.l.b16 %v2354
    %v4720 = vunpack.c.h.b16 %v2354
    %v4721 = vunpack.c.l.b16 %v2355
    %v4722 = vunpack.c.h.b16 %v2355
    %v4723 = vunpack.c.l.b16 %v2356
    %v4724 = vunpack.c.h.b16 %v2356
    %v4725 = vunpack.c.l.b16 %v2357
    %v4726 = vunpack.c.h.b16 %v2357
    %v4727 = vunpack.c.l.b16 %v2358
    %v4728 = vunpack.c.h.b16 %v2358
    %v4729 = vunpack.c.l.b16 %v2359
    %v4730 = vunpack.c.h.b16 %v2359
    %v4731 = vunpack.c.l.b16 %v2360
    %v4732 = vunpack.c.h.b16 %v2360
    %v4733 = vunpack.c.l.b16 %v2361
    %v4734 = vunpack.c.h.b16 %v2361
    %v4735 = vunpack.c.l.b16 %v2362
    %v4736 = vunpack.c.h.b16 %v2362
    %v4737 = vunpack.c.l.b16 %v2363
    %v4738 = vunpack.c.h.b16 %v2363
    %v4739 = vunpack.c.l.b16 %v2364
    %v4740 = vunpack.c.h.b16 %v2364
    %v4741 = vunpack.c.l.b16 %v2365
    %v4742 = vunpack.c.h.b16 %v2365
    %v4743 = vunpack.c.l.b16 %v2366
    %v4744 = vunpack.c.h.b16 %v2366
    %v4745 = vunpack.c.l.b16 %v2367
    %v4746 = vunpack.c.h.b16 %v2367
    %v4747 = vunpack.c.l.b16 %v2368
    %v4748 = vunpack.c.h.b16 %v2368
    %v4749 = vunpack.c.l.b16 %v2369
    %v4750 = vunpack.c.h.b16 %v2369
    %v4751 = vunpack.c.l.b16 %v2370
    %v4752 = vunpack.c.h.b16 %v2370
    %v4753 = vunpack.c.l.b16 %v2371
    %v4754 = vunpack.c.h.b16 %v2371
    %v4755 = vunpack.c.l.b16 %v2372
    %v4756 = vunpack.c.h.b16 %v2372
    %v4757 = vunpack.c.l.b16 %v2373
    %v4758 = vunpack.c.h.b16 %v2373
    %v4759 = vunpack.c.l.b16 %v2374
    %v4760 = vunpack.c.h.b16 %v2374
    %v4761 = vunpack.c.l.b16 %v2375
    %v4762 = vunpack.c.h.b16 %v2375
    %v4763 = vunpack.c.l.b16 %v2376
    %v4764 = vunpack.c.h.b16 %v2376
    %v4765 = vunpack.c.l.b16 %v2377
    %v4766 = vunpack.c.h.b16 %v2377
    %v4767 = vunpack.c.l.b16 %v2378
    %v4768 = vunpack.c.h.b16 %v2378
    %v4769 = vunpack.c.l.b16 %v2379
    %v4770 = vunpack.c.h.b16 %v2379
    %v4771 = vunpack.c.l.b16 %v2380
    %v4772 = vunpack.c.h.b16 %v2380
    %v4773 = vunpack.c.l.b16 %v2381
    %v4774 = vunpack.c.h.b16 %v2381
    %v4775 = vunpack.c.l.b16 %v2382
    %v4776 = vunpack.c.h.b16 %v2382
    %v4777 = vunpack.c.l.b16 %v2383
    %v4778 = vunpack.c.h.b16 %v2383
    %v4779 = vunpack.c.l.b16 %v2384
    %v4780 = vunpack.c.h.b16 %v2384
    %v4781 = vunpack.c.l.b16 %v2385
    %v4782 = vunpack.c.h.b16 %v2385
    %v4783 = vunpack.c.l.b16 %v2386
    %v4784 = vunpack.c.h.b16 %v2386
    %v4785 = vunpack.c.l.b16 %v2387
    %v4786 = vunpack.c.h.b16 %v2387
    %v4787 = vunpack.c.l.b16 %v2388
    %v4788 = vunpack.c.h.b16 %v2388
    %v4789 = vunpack.c.l.b16 %v2389
    %v4790 = vunpack.c.h.b16 %v2389
    %v4791 = vunpack.c.l.b16 %v2390
    %v4792 = vunpack.c.h.b16 %v2390
    %v4793 = vunpack.c.l.b16 %v2391
    %v4794 = vunpack.c.h.b16 %v2391
    %v4795 = vunpack.c.l.b16 %v2392
    %v4796 = vunpack.c.h.b16 %v2392
    %v4797 = vunpack.c.l.b16 %v2393
    %v4798 = vunpack.c.h.b16 %v2393
    %v4799 = vunpack.c.l.b16 %v2394
    %v4800 = vunpack.c.h.b16 %v2394
    %v4801 = vunpack.c.l.b16 %v2395
    %v4802 = vunpack.c.h.b16 %v2395
    %v4803 = vunpack.c.l.b16 %v2396
    %v4804 = vunpack.c.h.b16 %v2396
    %v4805 = vunpack.c.l.b16 %v2397
    %v4806 = vunpack.c.h.b16 %v2397
    %v4807 = vunpack.c.l.b16 %v2398
    %v4808 = vunpack.c.h.b16 %v2398
    %v4809 = vunpack.c.l.b16 %v2399
    %v4810 = vunpack.c.h.b16 %v2399
    %v4811 = vunpack.c.l.b16 %v2400
    %v4812 = vunpack.c.h.b16 %v2400
    %v4813 = vunpack.c.l.b16 %v2401
    %v4814 = vunpack.c.h.b16 %v2401
    %v4815 = vunpack.c.l.b16 %v2402
    %v4816 = vunpack.c.h.b16 %v2402
    %v4817 = vunpack.c.l.b16 %v2403
    %v4818 = vunpack.c.h.b16 %v2403
    %v4819 = vunpack.c.l.b16 %v2404
    %v4820 = vunpack.c.h.b16 %v2404
    %v4821 = vunpack.c.l.b16 %v2405
    %v4822 = vunpack.c.h.b16 %v2405
    %v4823 = vunpack.c.l.b16 %v2406
    %v4824 = vunpack.c.h.b16 %v2406
    %v4825 = vunpack.c.l.b16 %v2407
    %v4826 = vunpack.c.h.b16 %v2407
    %v4827 = vunpack.c.l.b16 %v2408
    %v4828 = vunpack.c.h.b16 %v2408
    %v4829 = vunpack.c.l.b16 %v2409
    %v4830 = vunpack.c.h.b16 %v2409
    %v4831 = vunpack.c.l.b16 %v2410
    %v4832 = vunpack.c.h.b16 %v2410
    %v4833 = vunpack.c.l.b16 %v2411
    %v4834 = vunpack.c.h.b16 %v2411
    %v4835 = vunpack.c.l.b16 %v2412
    %v4836 = vunpack.c.h.b16 %v2412
    %v4837 = vunpack.c.l.b16 %v2413
    %v4838 = vunpack.c.h.b16 %v2413
    %v4839 = vunpack.c.l.b16 %v2414
    %v4840 = vunpack.c.h.b16 %v2414
    %v4841 = vunpack.c.l.b16 %v2415
    %v4842 = vunpack.c.h.b16 %v2415
    %v4843 = vunpack.c.l.b16 %v2416
    %v4844 = vunpack.c.h.b16 %v2416
    %v4845 = vunpack.c.l.b16 %v2417
    %v4846 = vunpack.c.h.b16 %v2417
    %v4847 = vunpack.c.l.b16 %v2418
    %v4848 = vunpack.c.h.b16 %v2418
    %v4849 = vunpack.c.l.b16 %v2419
    %v4850 = vunpack.c.h.b16 %v2419
    %v4851 = vunpack.c.l.b16 %v2420
    %v4852 = vunpack.c.h.b16 %v2420
    %v4853 = vunpack.c.l.b16 %v2421
    %v4854 = vunpack.c.h.b16 %v2421
    %v4855 = vunpack.c.l.b16 %v2422
    %v4856 = vunpack.c.h.b16 %v2422
    %v4857 = vunpack.c.l.b16 %v2423
    %v4858 = vunpack.c.h.b16 %v2423
    %v4859 = vunpack.c.l.b16 %v2424
    %v4860 = vunpack.c.h.b16 %v2424
    %v4861 = vunpack.c.l.b16 %v2425
    %v4862 = vunpack.c.h.b16 %v2425
    %v4863 = vunpack.c.l.b16 %v2426
    %v4864 = vunpack.c.h.b16 %v2426
    %v4865 = vunpack.c.l.b16 %v2427
    %v4866 = vunpack.c.h.b16 %v2427
    %v4867 = vunpack.c.l.b16 %v2428
    %v4868 = vunpack.c.h.b16 %v2428
    %v4869 = vunpack.c.l.b16 %v2429
    %v4870 = vunpack.c.h.b16 %v2429
    %v4871 = vunpack.c.l.b16 %v2430
    %v4872 = vunpack.c.h.b16 %v2430
    %v4873 = vunpack.c.l.b16 %v2431
    %v4874 = vunpack.c.h.b16 %v2431
    %v4875 = vunpack.c.l.b16 %v2432
    %v4876 = vunpack.c.h.b16 %v2432
    %v4877 = vunpack.c.l.b16 %v2433
    %v4878 = vunpack.c.h.b16 %v2433
    %v4879 = vunpack.c.l.b16 %v2434
    %v4880 = vunpack.c.h.b16 %v2434
    %v4881 = vunpack.c.l.b16 %v2435
    %v4882 = vunpack.c.h.b16 %v2435
    %v4883 = vunpack.c.l.b16 %v2436
    %v4884 = vunpack.c.h.b16 %v2436
    %v4885 = vunpack.c.l.b16 %v2437
    %v4886 = vunpack.c.h.b16 %v2437
    %v4887 = vunpack.c.l.b16 %v2438
    %v4888 = vunpack.c.h.b16 %v2438
    %v4889 = vunpack.c.l.b16 %v2439
    %v4890 = vunpack.c.h.b16 %v2439
    %v4891 = vunpack.c.l.b16 %v2440
    %v4892 = vunpack.c.h.b16 %v2440
    %v4893 = vunpack.c.l.b16 %v2441
    %v4894 = vunpack.c.h.b16 %v2441
    %v4895 = vunpack.c.l.b16 %v2442
    %v4896 = vunpack.c.h.b16 %v2442
    %v4897 = vunpack.c.l.b16 %v2443
    %v4898 = vunpack.c.h.b16 %v2443
    %v4899 = vunpack.c.l.b16 %v2444
    %v4900 = vunpack.c.h.b16 %v2444
    %v4901 = vunpack.c.l.b16 %v2445
    %v4902 = vunpack.c.h.b16 %v2445
    %v4903 = vunpack.c.l.b16 %v2446
    %v4904 = vunpack.c.h.b16 %v2446
    %v4905 = vunpack.c.l.b16 %v2447
    %v4906 = vunpack.c.h.b16 %v2447
    %v4907 = vunpack.c.l.b16 %v2448
    %v4908 = vunpack.c.h.b16 %v2448
    %v4909 = vunpack.c.l.b16 %v2449
    %v4910 = vunpack.c.h.b16 %v2449
    %v4911 = vunpack.c.l.b16 %v2450
    %v4912 = vunpack.c.h.b16 %v2450
    %v4913 = vunpack.c.l.b16 %v2451
    %v4914 = vunpack.c.h.b16 %v2451
    %v4915 = vunpack.c.l.b16 %v2452
    %v4916 = vunpack.c.h.b16 %v2452
    %v4917 = vunpack.c.l.b16 %v2453
    %v4918 = vunpack.c.h.b16 %v2453
    %v4919 = vunpack.c.l.b16 %v2454
    %v4920 = vunpack.c.h.b16 %v2454
    %v4921 = vunpack.c.l.b16 %v2455
    %v4922 = vunpack.c.h.b16 %v2455
    %v4923 = vunpack.c.l.b16 %v2456
    %v4924 = vunpack.c.h.b16 %v2456
    %v4925 = vunpack.c.l.b16 %v2457
    %v4926 = vunpack.c.h.b16 %v2457
    %v4927 = vunpack.c.l.b16 %v2458
    %v4928 = vunpack.c.h.b16 %v2458
    %v4929 = vunpack.c.l.b16 %v2459
    %v4930 = vunpack.c.h.b16 %v2459
    %v4931 = vunpack.c.l.b16 %v2460
    %v4932 = vunpack.c.h.b16 %v2460
    %v4933 = vunpack.c.l.b16 %v2461
    %v4934 = vunpack.c.h.b16 %v2461
    %v4935 = vunpack.c.l.b16 %v2462
    %v4936 = vunpack.c.h.b16 %v2462
    %v4937 = vunpack.c.l.b16 %v2463
    %v4938 = vunpack.c.h.b16 %v2463
    %v4939 = vunpack.c.l.b16 %v2464
    %v4940 = vunpack.c.h.b16 %v2464
    %v4941 = vunpack.c.l.b16 %v2465
    %v4942 = vunpack.c.h.b16 %v2465
    %v4943 = vunpack.c.l.b16 %v2466
    %v4944 = vunpack.c.h.b16 %v2466
    %v4945 = vunpack.c.l.b16 %v2467
    %v4946 = vunpack.c.h.b16 %v2467
    %v4947 = vunpack.c.l.b16 %v2468
    %v4948 = vunpack.c.h.b16 %v2468
    %v4949 = vunpack.c.l.b16 %v2469
    %v4950 = vunpack.c.h.b16 %v2469
    %v4951 = vunpack.c.l.b16 %v2470
    %v4952 = vunpack.c.h.b16 %v2470
    %v4953 = vunpack.c.l.b16 %v2471
    %v4954 = vunpack.c.h.b16 %v2471
    %v4955 = vunpack.c.l.b16 %v2472
    %v4956 = vunpack.c.h.b16 %v2472
    %v4957 = vunpack.c.l.b16 %v2473
    %v4958 = vunpack.c.h.b16 %v2473
    %v4959 = vunpack.c.l.b16 %v2474
    %v4960 = vunpack.c.h.b16 %v2474
    %v4961 = vunpack.c.l.b16 %v2475
    %v4962 = vunpack.c.h.b16 %v2475
    %v4963 = vunpack.c.l.b16 %v2476
    %v4964 = vunpack.c.h.b16 %v2476
    %v4965 = vunpack.c.l.b16 %v2477
    %v4966 = vunpack.c.h.b16 %v2477
    %v4967 = vunpack.c.l.b16 %v2478
    %v4968 = vunpack.c.h.b16 %v2478
    %v4969 = vunpack.c.l.b16 %v2479
    %v4970 = vunpack.c.h.b16 %v2479
    %v4971 = vunpack.c.l.b16 %v2480
    %v4972 = vunpack.c.h.b16 %v2480
    %v4973 = vunpack.c.l.b16 %v2481
    %v4974 = vunpack.c.h.b16 %v2481
    %v4975 = vunpack.c.l.b16 %v2482
    %v4976 = vunpack.c.h.b16 %v2482
    %v4977 = vunpack.c.l.b16 %v2483
    %v4978 = vunpack.c.h.b16 %v2483
    %v4979 = vunpack.c.l.b16 %v2484
    %v4980 = vunpack.c.h.b16 %v2484
    %v4981 = vunpack.c.l.b16 %v2485
    %v4982 = vunpack.c.h.b16 %v2485
    %v4983 = vunpack.c.l.b16 %v2486
    %v4984 = vunpack.c.h.b16 %v2486
    %v4985 = vunpack.c.l.b16 %v2487
    %v4986 = vunpack.c.h.b16 %v2487
    %v4987 = vunpack.c.l.b16 %v2488
    %v4988 = vunpack.c.h.b16 %v2488
    %v4989 = vunpack.c.l.b16 %v2489
    %v4990 = vunpack.c.h.b16 %v2489
    %v4991 = vunpack.c.l.b16 %v2490
    %v4992 = vunpack.c.h.b16 %v2490
    %v4993 = vunpack.c.l.b16 %v2491
    %v4994 = vunpack.c.h.b16 %v2491
    %v4995 = vunpack.c.l.b16 %v2492
    %v4996 = vunpack.c.h.b16 %v2492
    %v4997 = vunpack.c.l.b16 %v2493
    %v4998 = vunpack.c.h.b16 %v2493
    %v4999 = vunpack.c.l.b16 %v2494
    %v5000 = vunpack.c.h.b16 %v2494
    %v5001 = vunpack.c.l.b16 %v2495
    %v5002 = vunpack.c.h.b16 %v2495
    %v5003 = vunpack.c.l.b16 %v2496
    %v5004 = vunpack.c.h.b16 %v2496
    %v5005 = vunpack.c.l.b16 %v2497
    %v5006 = vunpack.c.h.b16 %v2497
    %v5007 = vunpack.c.l.b16 %v2498
    %v5008 = vunpack.c.h.b16 %v2498
    %v5009 = vunpack.c.l.b16 %v2499
    %v5010 = vunpack.c.h.b16 %v2499
    %v5011 = vunpack.c.l.b16 %v2500
    %v5012 = vunpack.c.h.b16 %v2500
    %v5013 = vunpack.c.l.b16 %v2501
    %v5014 = vunpack.c.h.b16 %v2501
    %v5015 = vunpack.c.l.b16 %v2502
    %v5016 = vunpack.c.h.b16 %v2502
    %v5017 = vunpack.c.l.b16 %v2503
    %v5018 = vunpack.c.h.b16 %v2503
    %v5019 = vunpack.c.l.b16 %v2504
    %v5020 = vunpack.c.h.b16 %v2504
    %v5021 = vunpack.c.l.b16 %v2505
    %v5022 = vunpack.c.h.b16 %v2505
    %v5023 = vunpack.c.l.b16 %v2506
    %v5024 = vunpack.c.h.b16 %v2506
    %v5025 = vunpack.c.l.b16 %v2507
    %v5026 = vunpack.c.h.b16 %v2507
    %v5027 = vunpack.c.l.b16 %v2508
    %v5028 = vunpack.c.h.b16 %v2508
    %v5029 = vunpack.c.l.b16 %v2509
    %v5030 = vunpack.c.h.b16 %v2509
    %v5031 = vunpack.c.l.b16 %v2510
    %v5032 = vunpack.c.h.b16 %v2510
    %v5033 = vunpack.c.l.b16 %v2511
    %v5034 = vunpack.c.h.b16 %v2511
    %v5035 = vunpack.c.l.b16 %v2512
    %v5036 = vunpack.c.h.b16 %v2512
    %v5037 = vunpack.c.l.b16 %v2513
    %v5038 = vunpack.c.h.b16 %v2513
    %v5039 = vunpack.c.l.b16 %v2514
    %v5040 = vunpack.c.h.b16 %v2514
    %v5041 = vunpack.c.l.b16 %v2515
    %v5042 = vunpack.c.h.b16 %v2515
    %v5043 = vunpack.c.l.b16 %v2516
    %v5044 = vunpack.c.h.b16 %v2516
    %v5045 = vunpack.c.l.b16 %v2517
    %v5046 = vunpack.c.h.b16 %v2517
    %v5047 = vunpack.c.l.b16 %v2518
    %v5048 = vunpack.c.h.b16 %v2518
    %v5049 = vunpack.c.l.b16 %v2519
    %v5050 = vunpack.c.h.b16 %v2519
    %v5051 = vunpack.c.l.b16 %v2520
    %v5052 = vunpack.c.h.b16 %v2520
    %v5053 = vunpack.c.l.b16 %v2521
    %v5054 = vunpack.c.h.b16 %v2521
    %v5055 = vunpack.c.l.b16 %v2522
    %v5056 = vunpack.c.h.b16 %v2522
    %v5057 = vunpack.c.l.b16 %v2523
    %v5058 = vunpack.c.h.b16 %v2523
    %v5059 = vunpack.c.l.b16 %v2524
    %v5060 = vunpack.c.h.b16 %v2524
    %v5061 = vunpack.c.l.b16 %v2525
    %v5062 = vunpack.c.h.b16 %v2525
    %v5063 = vunpack.c.l.b16 %v2526
    %v5064 = vunpack.c.h.b16 %v2526
    %v5065 = vunpack.c.l.b16 %v2527
    %v5066 = vunpack.c.h.b16 %v2527
    %v5067 = vunpack.c.l.b16 %v2528
    %v5068 = vunpack.c.h.b16 %v2528
    %v5069 = vunpack.c.l.b16 %v2529
    %v5070 = vunpack.c.h.b16 %v2529
    %v5071 = vunpack.c.l.b16 %v2530
    %v5072 = vunpack.c.h.b16 %v2530
    %v5073 = vunpack.c.l.b16 %v2531
    %v5074 = vunpack.c.h.b16 %v2531
    %v5075 = vunpack.c.l.b16 %v2532
    %v5076 = vunpack.c.h.b16 %v2532
    %v5077 = vunpack.c.l.b16 %v2533
    %v5078 = vunpack.c.h.b16 %v2533
    %v5079 = vunpack.c.l.b16 %v2534
    %v5080 = vunpack.c.h.b16 %v2534
    %v5081 = vunpack.c.l.b16 %v2535
    %v5082 = vunpack.c.h.b16 %v2535
    %v5083 = vunpack.c.l.b16 %v2536
    %v5084 = vunpack.c.h.b16 %v2536
    %v5085 = vunpack.c.l.b16 %v2537
    %v5086 = vunpack.c.h.b16 %v2537
    %v5087 = vunpack.c.l.b16 %v2538
    %v5088 = vunpack.c.h.b16 %v2538
    %v5089 = vunpack.c.l.b16 %v2539
    %v5090 = vunpack.c.h.b16 %v2539
    %v5091 = vunpack.c.l.b16 %v2540
    %v5092 = vunpack.c.h.b16 %v2540
    %v5093 = vunpack.c.l.b16 %v2541
    %v5094 = vunpack.c.h.b16 %v2541
    %v5095 = vunpack.c.l.b16 %v2542
    %v5096 = vunpack.c.h.b16 %v2542
    %v5097 = vunpack.c.l.b16 %v2543
    %v5098 = vunpack.c.h.b16 %v2543
    %v5099 = vunpack.c.l.b16 %v2544
    %v5100 = vunpack.c.h.b16 %v2544
    %v5101 = vunpack.c.l.b16 %v2545
    %v5102 = vunpack.c.h.b16 %v2545
    %v5103 = vunpack.c.l.b16 %v2546
    %v5104 = vunpack.c.h.b16 %v2546
    %v5105 = vunpack.c.l.b16 %v2547
    %v5106 = vunpack.c.h.b16 %v2547
    %v5107 = vunpack.c.l.b16 %v2548
    %v5108 = vunpack.c.h.b16 %v2548
    %v5109 = vunpack.c.l.b16 %v2549
    %v5110 = vunpack.c.h.b16 %v2549
    %v5111 = vunpack.c.l.b16 %v2550
    %v5112 = vunpack.c.h.b16 %v2550
    %v5113 = vunpack.c.l.b16 %v2551
    %v5114 = vunpack.c.h.b16 %v2551
    %v5115 = vunpack.c.l.b16 %v2552
    %v5116 = vunpack.c.h.b16 %v2552
    %v5117 = vunpack.c.l.b16 %v2553
    %v5118 = vunpack.c.h.b16 %v2553
    %v5119 = vunpack.c.l.b16 %v2554
    %v5120 = vunpack.c.h.b16 %v2554
    %v5121 = vunpack.c.l.b16 %v2555
    %v5122 = vunpack.c.h.b16 %v2555
    %v5123 = vunpack.c.l.b16 %v2556
    %v5124 = vunpack.c.h.b16 %v2556
    %v5125 = vunpack.c.l.b16 %v2557
    %v5126 = vunpack.c.h.b16 %v2557
    %v5127 = vunpack.c.l.b16 %v2558
    %v5128 = vunpack.c.h.b16 %v2558
    %v5129 = vunpack.c.l.b16 %v2559
    %v5130 = vunpack.c.h.b16 %v2559
    %v5131 = vunpack.c.l.b16 %v2560
    %v5132 = vunpack.c.h.b16 %v2560
    %v5133 = vunpack.c.l.b16 %v2561
    %v5134 = vunpack.c.h.b16 %v2561
    %v5135 = vunpack.c.l.b16 %v2562
    %v5136 = vunpack.c.h.b16 %v2562
    %v5137 = vunpack.c.l.b16 %v2563
    %v5138 = vunpack.c.h.b16 %v2563
    %v5139 = vunpack.c.l.b16 %v2564
    %v5140 = vunpack.c.h.b16 %v2564
    %v5141 = vunpack.c.l.b16 %v2565
    %v5142 = vunpack.c.h.b16 %v2565
    %v5143 = vunpack.c.l.b16 %v2566
    %v5144 = vunpack.c.h.b16 %v2566
    %v5145 = vunpack.c.l.b16 %v2567
    %v5146 = vunpack.c.h.b16 %v2567
    %v5147 = vunpack.c.l.b16 %v2568
    %v5148 = vunpack.c.h.b16 %v2568
    %v5149 = vunpack.c.l.b16 %v2569
    %v5150 = vunpack.c.h.b16 %v2569
    %v5151 = vunpack.c.l.b16 %v2570
    %v5152 = vunpack.c.h.b16 %v2570
    %v5153 = vunpack.c.l.b16 %v2571
    %v5154 = vunpack.c.h.b16 %v2571
    %v5155 = vunpack.c.l.b16 %v2572
    %v5156 = vunpack.c.h.b16 %v2572
    %v5157 = vunpack.c.l.b16 %v2573
    %v5158 = vunpack.c.h.b16 %v2573
    %v5159 = vunpack.c.l.b16 %v2574
    %v5160 = vunpack.c.h.b16 %v2574
    %v5161 = vunpack.c.l.b16 %v2575
    %v5162 = vunpack.c.h.b16 %v2575
    %v5163 = vunpack.c.l.b16 %v2576
    %v5164 = vunpack.c.h.b16 %v2576
    %v5165 = vunpack.c.l.b16 %v2577
    %v5166 = vunpack.c.h.b16 %v2577
    %v5167 = vunpack.c.l.b16 %v2578
    %v5168 = vunpack.c.h.b16 %v2578
    %v5169 = vunpack.c.l.b16 %v2579
    %v5170 = vunpack.c.h.b16 %v2579
    %v5171 = vunpack.c.l.b16 %v2580
    %v5172 = vunpack.c.h.b16 %v2580
    %v5173 = vunpack.c.l.b16 %v2581
    %v5174 = vunpack.c.h.b16 %v2581
    %v5175 = vunpack.c.l.b16 %v2582
    %v5176 = vunpack.c.h.b16 %v2582
    %v5177 = vunpack.c.l.b16 %v2583
    %v5178 = vunpack.c.h.b16 %v2583
    %v5179 = vunpack.c.l.b16 %v2584
    %v5180 = vunpack.c.h.b16 %v2584
    %v5181 = vunpack.c.l.b16 %v2585
    %v5182 = vunpack.c.h.b16 %v2585
    %v5183 = vunpack.c.l.b16 %v2586
    %v5184 = vunpack.c.h.b16 %v2586
    %v5185 = vunpack.c.l.b16 %v2587
    %v5186 = vunpack.c.h.b16 %v2587
    %v5187 = vunpack.c.l.b16 %v2588
    %v5188 = vunpack.c.h.b16 %v2588
    %v5189 = vunpack.c.l.b16 %v2589
    %v5190 = vunpack.c.h.b16 %v2589
    %v5191 = vunpack.c.l.b16 %v2590
    %v5192 = vunpack.c.h.b16 %v2590
    %v5193 = vunpack.c.l.b16 %v2591
    %v5194 = vunpack.c.h.b16 %v2591
    %v5195 = vunpack.c.l.b16 %v2592
    %v5196 = vunpack.c.h.b16 %v2592
    %v5197 = vunpack.c.l.b16 %v2593
    %v5198 = vunpack.c.h.b16 %v2593
    %v5199 = vunpack.c.l.b16 %v2594
    %v5200 = vunpack.c.h.b16 %v2594
    %v5201 = vunpack.c.l.b16 %v2595
    %v5202 = vunpack.c.h.b16 %v2595
    %v5203 = vunpack.c.l.b16 %v2596
    %v5204 = vunpack.c.h.b16 %v2596
    %v5205 = vunpack.c.l.b16 %v2597
    %v5206 = vunpack.c.h.b16 %v2597
    %v5207 = vunpack.c.l.b16 %v2598
    %v5208 = vunpack.c.h.b16 %v2598
    %v5209 = vunpack.c.l.b16 %v2599
    %v5210 = vunpack.c.h.b16 %v2599
    %v5211 = vunpack.c.l.b16 %v2600
    %v5212 = vunpack.c.h.b16 %v2600
    %v5213 = vunpack.c.l.b16 %v2601
    %v5214 = vunpack.c.h.b16 %v2601
    %v5215 = vunpack.c.l.b16 %v2602
    %v5216 = vunpack.c.h.b16 %v2602
    %v5217 = vunpack.c.l.b16 %v2603
    %v5218 = vunpack.c.h.b16 %v2603
    %v5219 = vunpack.c.l.b16 %v2604
    %v5220 = vunpack.c.h.b16 %v2604
    %v5221 = vunpack.c.l.b16 %v2605
    %v5222 = vunpack.c.h.b16 %v2605
    %v5223 = vunpack.c.l.b16 %v2606
    %v5224 = vunpack.c.h.b16 %v2606
    %v5225 = vunpack.c.l.b16 %v2607
    %v5226 = vunpack.c.h.b16 %v2607
    %v5227 = vunpack.c.l.b16 %v2608
    %v5228 = vunpack.c.h.b16 %v2608
    %v5229 = vunpack.c.l.b16 %v2609
    %v5230 = vunpack.c.h.b16 %v2609
    %v5231 = vunpack.c.l.b16 %v2610
    %v5232 = vunpack.c.h.b16 %v2610
    %v5233 = vunpack.c.l.b16 %v2611
    %v5234 = vunpack.c.h.b16 %v2611
    %v5235 = vunpack.c.l.b16 %v2612
    %v5236 = vunpack.c.h.b16 %v2612
    %v5237 = vunpack.c.l.b16 %v2613
    %v5238 = vunpack.c.h.b16 %v2613
    %v5239 = vunpack.c.l.b16 %v2614
    %v5240 = vunpack.c.h.b16 %v2614
    %v5241 = vunpack.c.l.b16 %v2615
    %v5242 = vunpack.c.h.b16 %v2615
    %v5243 = vunpack.c.l.b16 %v2616
    %v5244 = vunpack.c.h.b16 %v2616
    %v5245 = vunpack.c.l.b16 %v2617
    %v5246 = vunpack.c.h.b16 %v2617
    %v5247 = vunpack.c.l.b16 %v2618
    %v5248 = vunpack.c.h.b16 %v2618
    %v5249 = vunpack.c.l.b16 %v2619
    %v5250 = vunpack.c.h.b16 %v2619
    %v5251 = vunpack.c.l.b16 %v2620
    %v5252 = vunpack.c.h.b16 %v2620
    %v5253 = vunpack.c.l.b16 %v2621
    %v5254 = vunpack.c.h.b16 %v2621
    %v5255 = vunpack.c.l.b16 %v2622
    %v5256 = vunpack.c.h.b16 %v2622
    %v5257 = vunpack.c.l.b16 %v2623
    %v5258 = vunpack.c.h.b16 %v2623
    %v5259 = vunpack.c.l.b16 %v2624
    %v5260 = vunpack.c.h.b16 %v2624
    %v5261 = vunpack.c.l.b16 %v2625
    %v5262 = vunpack.c.h.b16 %v2625
    %v5263 = vunpack.c.l.b16 %v2626
    %v5264 = vunpack.c.h.b16 %v2626
    %v5265 = vunpack.c.l.b16 %v2627
    %v5266 = vunpack.c.h.b16 %v2627
    %v5267 = vunpack.c.l.b16 %v2628
    %v5268 = vunpack.c.h.b16 %v2628
    %v5269 = vunpack.c.l.b16 %v2629
    %v5270 = vunpack.c.h.b16 %v2629
    %v5271 = vunpack.c.l.b16 %v2630
    %v5272 = vunpack.c.h.b16 %v2630
    %v5273 = vunpack.c.l.b16 %v2631
    %v5274 = vunpack.c.h.b16 %v2631
    %v5275 = vunpack.c.l.b16 %v2632
    %v5276 = vunpack.c.h.b16 %v2632
    %v5277 = vunpack.c.l.b16 %v2633
    %v5278 = vunpack.c.h.b16 %v2633
    %v5279 = vunpack.c.l.b16 %v2634
    %v5280 = vunpack.c.h.b16 %v2634
    %v5281 = vunpack.c.l.b16 %v2635
    %v5282 = vunpack.c.h.b16 %v2635
    %v5283 = vunpack.c.l.b16 %v2636
    %v5284 = vunpack.c.h.b16 %v2636
    %v5285 = vunpack.c.l.b16 %v2637
    %v5286 = vunpack.c.h.b16 %v2637
    %v5287 = vunpack.c.l.b16 %v2638
    %v5288 = vunpack.c.h.b16 %v2638
    %v5289 = vunpack.c.l.b16 %v2639
    %v5290 = vunpack.c.h.b16 %v2639
    %v5291 = vunpack.c.l.b16 %v2640
    %v5292 = vunpack.c.h.b16 %v2640
    %v5293 = vunpack.c.l.b16 %v2641
    %v5294 = vunpack.c.h.b16 %v2641
    %v5295 = vunpack.c.l.b16 %v2642
    %v5296 = vunpack.c.h.b16 %v2642
    %v5297 = vunpack.c.l.b16 %v2643
    %v5298 = vunpack.c.h.b16 %v2643
    %v5299 = vunpack.c.l.b16 %v2644
    %v5300 = vunpack.c.h.b16 %v2644
    %v5301 = vunpack.c.l.b16 %v2645
    %v5302 = vunpack.c.h.b16 %v2645
    %v5303 = vunpack.c.l.b16 %v2646
    %v5304 = vunpack.c.h.b16 %v2646
    %v5305 = vunpack.c.l.b16 %v2647
    %v5306 = vunpack.c.h.b16 %v2647
    %v5307 = vunpack.c.l.b16 %v2648
    %v5308 = vunpack.c.h.b16 %v2648
    %v5309 = vunpack.c.l.b16 %v2649
    %v5310 = vunpack.c.h.b16 %v2649
    %v5311 = vunpack.c.l.b16 %v2650
    %v5312 = vunpack.c.h.b16 %v2650
    %v5313 = vunpack.c.l.b16 %v2651
    %v5314 = vunpack.c.h.b16 %v2651
    %v5315 = vunpack.c.l.b16 %v2652
    %v5316 = vunpack.c.h.b16 %v2652
    %v5317 = vunpack.c.l.b16 %v2653
    %v5318 = vunpack.c.h.b16 %v2653
    %v5319 = vunpack.c.l.b16 %v2654
    %v5320 = vunpack.c.h.b16 %v2654
    %v5321 = vunpack.c.l.b16 %v2655
    %v5322 = vunpack.c.h.b16 %v2655
    %v5323 = vunpack.c.l.b16 %v2656
    %v5324 = vunpack.c.h.b16 %v2656
    %v5325 = vunpack.c.l.b16 %v2657
    %v5326 = vunpack.c.h.b16 %v2657
    %v5327 = vunpack.c.l.b16 %v2658
    %v5328 = vunpack.c.h.b16 %v2658
    %v5329 = vunpack.c.l.b16 %v2659
    %v5330 = vunpack.c.h.b16 %v2659
    %v5331 = vunpack.c.l.b16 %v2660
    %v5332 = vunpack.c.h.b16 %v2660
    %v5333 = vunpack.c.l.b16 %v2661
    %v5334 = vunpack.c.h.b16 %v2661
    %v5335 = vunpack.c.l.b16 %v2662
    %v5336 = vunpack.c.h.b16 %v2662
    %v5337 = vunpack.c.l.b16 %v2663
    %v5338 = vunpack.c.h.b16 %v2663
    %v5339 = vunpack.c.l.b16 %v2664
    %v5340 = vunpack.c.h.b16 %v2664
    %v5341 = vunpack.c.l.b16 %v2665
    %v5342 = vunpack.c.h.b16 %v2665
    %v5343 = vunpack.c.l.b16 %v2666
    %v5344 = vunpack.c.h.b16 %v2666
    %v5345 = vunpack.c.l.b16 %v2667
    %v5346 = vunpack.c.h.b16 %v2667
    %v5347 = vunpack.c.l.b16 %v2668
    %v5348 = vunpack.c.h.b16 %v2668
    %v5349 = vunpack.c.l.b16 %v2669
    %v5350 = vunpack.c.h.b16 %v2669
    %v5351 = vunpack.c.l.b16 %v2670
    %v5352 = vunpack.c.h.b16 %v2670
    %v5353 = vunpack.c.l.b16 %v2671
    %v5354 = vunpack.c.h.b16 %v2671
    %v5355 = vunpack.c.l.b16 %v2672
    %v5356 = vunpack.c.h.b16 %v2672
    %v5357 = vunpack.c.l.b16 %v2673
    %v5358 = vunpack.c.h.b16 %v2673
    %v5359 = vunpack.c.l.b16 %v2674
    %v5360 = vunpack.c.h.b16 %v2674
    %v5361 = vunpack.c.l.b16 %v2675
    %v5362 = vunpack.c.h.b16 %v2675
    %v5363 = vunpack.c.l.b16 %v2676
    %v5364 = vunpack.c.h.b16 %v2676
    %v5365 = vunpack.c.l.b16 %v2677
    %v5366 = vunpack.c.h.b16 %v2677
    %v5367 = vunpack.c.l.b16 %v2678
    %v5368 = vunpack.c.h.b16 %v2678
    %v5369 = vunpack.c.l.b16 %v2679
    %v5370 = vunpack.c.h.b16 %v2679
    %v5371 = vunpack.c.l.b16 %v2680
    %v5372 = vunpack.c.h.b16 %v2680
    %v5373 = vunpack.c.l.b16 %v2681
    %v5374 = vunpack.c.h.b16 %v2681
    %v5375 = vunpack.c.l.b16 %v2682
    %v5376 = vunpack.c.h.b16 %v2682
    %v5377 = vunpack.c.l.b16 %v2683
    %v5378 = vunpack.c.h.b16 %v2683
    %v5379 = vunpack.c.l.b16 %v2684
    %v5380 = vunpack.c.h.b16 %v2684
    %v5381 = vunpack.c.l.b16 %v2685
    %v5382 = vunpack.c.h.b16 %v2685
    %v5383 = vunpack.c.l.b16 %v2686
    %v5384 = vunpack.c.h.b16 %v2686
    %v5385 = vunpack.c.l.b16 %v2687
    %v5386 = vunpack.c.h.b16 %v2687
    %v5387 = vunpack.c.l.b16 %v2688
    %v5388 = vunpack.c.h.b16 %v2688
    %v5389 = vunpack.c.l.b16 %v2689
    %v5390 = vunpack.c.h.b16 %v2689
    %v5391 = vunpack.c.l.b16 %v2690
    %v5392 = vunpack.c.h.b16 %v2690
    %v5393 = vunpack.c.l.b16 %v2691
    %v5394 = vunpack.c.h.b16 %v2691
    %v5395 = vunpack.c.l.b16 %v2692
    %v5396 = vunpack.c.h.b16 %v2692
    %v5397 = vunpack.c.l.b16 %v2693
    %v5398 = vunpack.c.h.b16 %v2693
    %v5399 = vunpack.c.l.b16 %v2694
    %v5400 = vunpack.c.h.b16 %v2694
    %v5401 = vunpack.c.l.b16 %v2695
    %v5402 = vunpack.c.h.b16 %v2695
    %v5403 = vunpack.c.l.b16 %v2696
    %v5404 = vunpack.c.h.b16 %v2696
    %v5405 = vunpack.c.l.b16 %v2697
    %v5406 = vunpack.c.h.b16 %v2697
    %v5407 = vunpack.c.l.b16 %v2698
    %v5408 = vunpack.c.h.b16 %v2698
    %v5409 = vunpack.c.l.b16 %v2699
    %v5410 = vunpack.c.h.b16 %v2699
    %v5411 = vunpack.c.l.b16 %v2700
    %v5412 = vunpack.c.h.b16 %v2700
    %v5413 = vunpack.c.l.b16 %v2701
    %v5414 = vunpack.c.h.b16 %v2701
    %v5415 = vunpack.c.l.b16 %v2702
    %v5416 = vunpack.c.h.b16 %v2702
    %v5417 = vunpack.c.l.b16 %v2703
    %v5418 = vunpack.c.h.b16 %v2703
    %v5419 = vunpack.c.l.b16 %v2704
    %v5420 = vunpack.c.h.b16 %v2704
    %v5421 = vunpack.c.l.b16 %v2705
    %v5422 = vunpack.c.h.b16 %v2705
    %v5423 = vunpack.c.l.b16 %v2706
    %v5424 = vunpack.c.h.b16 %v2706
    %v5425 = vunpack.c.l.b16 %v2707
    %v5426 = vunpack.c.h.b16 %v2707
    %v5427 = vunpack.c.l.b16 %v2708
    %v5428 = vunpack.c.h.b16 %v2708
    %v5429 = vunpack.c.l.b16 %v2709
    %v5430 = vunpack.c.h.b16 %v2709
    %v5431 = vunpack.c.l.b16 %v2710
    %v5432 = vunpack.c.h.b16 %v2710
    %v5433 = vunpack.c.l.b16 %v2711
    %v5434 = vunpack.c.h.b16 %v2711
    %v5435 = vunpack.c.l.b16 %v2712
    %v5436 = vunpack.c.h.b16 %v2712
    %v5437 = vunpack.c.l.b16 %v2713
    %v5438 = vunpack.c.h.b16 %v2713
    %v5439 = vunpack.c.l.b16 %v2714
    %v5440 = vunpack.c.h.b16 %v2714
    %v5441 = vunpack.c.l.b16 %v2715
    %v5442 = vunpack.c.h.b16 %v2715
    %v5443 = vunpack.c.l.b16 %v2716
    %v5444 = vunpack.c.h.b16 %v2716
    %v5445 = vunpack.c.l.b16 %v2717
    %v5446 = vunpack.c.h.b16 %v2717
    %v5447 = vunpack.c.l.b16 %v2718
    %v5448 = vunpack.c.h.b16 %v2718
    %v5449 = vunpack.c.l.b16 %v2719
    %v5450 = vunpack.c.h.b16 %v2719
    %v5451 = vunpack.c.l.b16 %v2720
    %v5452 = vunpack.c.h.b16 %v2720
    %v5453 = vunpack.c.l.b16 %v2721
    %v5454 = vunpack.c.h.b16 %v2721
    %v5455 = vunpack.c.l.b16 %v2722
    %v5456 = vunpack.c.h.b16 %v2722
    %v5457 = vunpack.c.l.b16 %v2723
    %v5458 = vunpack.c.h.b16 %v2723
    %v5459 = vunpack.c.l.b16 %v2724
    %v5460 = vunpack.c.h.b16 %v2724
    %v5461 = vunpack.c.l.b16 %v2725
    %v5462 = vunpack.c.h.b16 %v2725
    %v5463 = vunpack.c.l.b16 %v2726
    %v5464 = vunpack.c.h.b16 %v2726
    %v5465 = vunpack.c.l.b16 %v2727
    %v5466 = vunpack.c.h.b16 %v2727
    %v5467 = vunpack.c.l.b16 %v2728
    %v5468 = vunpack.c.h.b16 %v2728
    %v5469 = vunpack.c.l.b16 %v2729
    %v5470 = vunpack.c.h.b16 %v2729
    %v5471 = vunpack.c.l.b16 %v2730
    %v5472 = vunpack.c.h.b16 %v2730
    %v5473 = vunpack.c.l.b16 %v2731
    %v5474 = vunpack.c.h.b16 %v2731
    %v5475 = vunpack.c.l.b16 %v2732
    %v5476 = vunpack.c.h.b16 %v2732
    %v5477 = vunpack.c.l.b16 %v2733
    %v5478 = vunpack.c.h.b16 %v2733
    %v5479 = vunpack.c.l.b16 %v2734
    %v5480 = vunpack.c.h.b16 %v2734
    %v5481 = vunpack.c.l.b16 %v2735
    %v5482 = vunpack.c.h.b16 %v2735
    %v5483 = vunpack.c.l.b16 %v2736
    %v5484 = vunpack.c.h.b16 %v2736
    %v5485 = vunpack.c.l.b16 %v2737
    %v5486 = vunpack.c.h.b16 %v2737
    %v5487 = vunpack.c.l.b16 %v2738
    %v5488 = vunpack.c.h.b16 %v2738
    %v5489 = vunpack.c.l.b16 %v2739
    %v5490 = vunpack.c.h.b16 %v2739
    %v5491 = vunpack.c.l.b16 %v2740
    %v5492 = vunpack.c.h.b16 %v2740
    %v5493 = vunpack.c.l.b16 %v2741
    %v5494 = vunpack.c.h.b16 %v2741
    %v5495 = vunpack.c.l.b16 %v2742
    %v5496 = vunpack.c.h.b16 %v2742
    %v5497 = vunpack.c.l.b16 %v2743
    %v5498 = vunpack.c.h.b16 %v2743
    %v5499 = vunpack.c.l.b16 %v2744
    %v5500 = vunpack.c.h.b16 %v2744
    %v5501 = vunpack.c.l.b16 %v2745
    %v5502 = vunpack.c.h.b16 %v2745
    %v5503 = vunpack.c.l.b16 %v2746
    %v5504 = vunpack.c.h.b16 %v2746
    %v5505 = vunpack.c.l.b16 %v2747
    %v5506 = vunpack.c.h.b16 %v2747
    %v5507 = vunpack.c.l.b16 %v2748
    %v5508 = vunpack.c.h.b16 %v2748
    %v5509 = vunpack.c.l.b16 %v2749
    %v5510 = vunpack.c.h.b16 %v2749
    %v5511 = vunpack.c.l.b16 %v2750
    %v5512 = vunpack.c.h.b16 %v2750
    %v5513 = vunpack.c.l.b16 %v2751
    %v5514 = vunpack.c.h.b16 %v2751
    %v5515 = vunpack.c.l.b16 %v2752
    %v5516 = vunpack.c.h.b16 %v2752
    %v5517 = vunpack.c.l.b16 %v2753
    %v5518 = vunpack.c.h.b16 %v2753
    %v5519 = vunpack.c.l.b16 %v2754
    %v5520 = vunpack.c.h.b16 %v2754
    %v5521 = vunpack.c.l.b16 %v2755
    %v5522 = vunpack.c.h.b16 %v2755
    %v5523 = vunpack.c.l.b16 %v2756
    %v5524 = vunpack.c.h.b16 %v2756
    %v5525 = vpack.c.b16 %v3863, %v3861
    %v5526 = vpack.c.b16 %v3864, %v3862
    %v5527 = vpack.c.b16 %v3867, %v3865
    %v5528 = vpack.c.b16 %v3868, %v3866
    %v5529 = vpack.c.b16 %v3871, %v3869
    %v5530 = vpack.c.b16 %v3872, %v3870
    %v5531 = vpack.c.b16 %v3875, %v3873
    %v5532 = vpack.c.b16 %v3876, %v3874
    %v5533 = vpack.c.b16 %v3879, %v3877
    %v5534 = vpack.c.b16 %v3880, %v3878
    %v5535 = vpack.c.b16 %v3883, %v3881
    %v5536 = vpack.c.b16 %v3884, %v3882
    %v5537 = vpack.c.b16 %v3887, %v3885
    %v5538 = vpack.c.b16 %v3888, %v3886
    %v5539 = vpack.c.b16 %v3891, %v3889
    %v5540 = vpack.c.b16 %v3892, %v3890
    %v5541 = vpack.c.b16 %v3895, %v3893
    %v5542 = vpack.c.b16 %v3896, %v3894
    %v5543 = vpack.c.b16 %v3899, %v3897
    %v5544 = vpack.c.b16 %v3900, %v3898
    %v5545 = vpack.c.b16 %v3903, %v3901
    %v5546 = vpack.c.b16 %v3904, %v3902
    %v5547 = vpack.c.b16 %v3907, %v3905
    %v5548 = vpack.c.b16 %v3908, %v3906
    %v5549 = vpack.c.b16 %v3911, %v3909
    %v5550 = vpack.c.b16 %v3912, %v3910
    %v5551 = vpack.c.b16 %v3915, %v3913
    %v5552 = vpack.c.b16 %v3916, %v3914
    %v5553 = vpack.c.b16 %v3919, %v3917
    %v5554 = vpack.c.b16 %v3920, %v3918
    %v5555 = vpack.c.b16 %v3923, %v3921
    %v5556 = vpack.c.b16 %v3924, %v3922
    %v5557 = vpack.c.b16 %v3927, %v3925
    %v5558 = vpack.c.b16 %v3928, %v3926
    %v5559 = vpack.c.b16 %v3931, %v3929
    %v5560 = vpack.c.b16 %v3932, %v3930
    %v5561 = vpack.c.b16 %v3935, %v3933
    %v5562 = vpack.c.b16 %v3936, %v3934
    %v5563 = vpack.c.b16 %v3939, %v3937
    %v5564 = vpack.c.b16 %v3940, %v3938
    %v5565 = vpack.c.b16 %v3943, %v3941
    %v5566 = vpack.c.b16 %v3944, %v3942
    %v5567 = vpack.c.b16 %v3947, %v3945
    %v5568 = vpack.c.b16 %v3948, %v3946
    %v5569 = vpack.c.b16 %v3951, %v3949
    %v5570 = vpack.c.b16 %v3952, %v3950
    %v5571 = vpack.c.b16 %v3955, %v3953
    %v5572 = vpack.c.b16 %v3956, %v3954
    %v5573 = vpack.c.b16 %v3959, %v3957
    %v5574 = vpack.c.b16 %v3960, %v3958
    %v5575 = vpack.c.b16 %v3963, %v3961
    %v5576 = vpack.c.b16 %v3964, %v3962
    %v5577 = vpack.c.b16 %v3967, %v3965
    %v5578 = vpack.c.b16 %v3968, %v3966
    %v5579 = vpack.c.b16 %v3971, %v3969
    %v5580 = vpack.c.b16 %v3972, %v3970
    %v5581 = vpack.c.b16 %v3975, %v3973
    %v5582 = vpack.c.b16 %v3976, %v3974
    %v5583 = vpack.c.b16 %v3979, %v3977
    %v5584 = vpack.c.b16 %v3980, %v3978
    %v5585 = vpack.c.b16 %v3983, %v3981
    %v5586 = vpack.c.b16 %v3984, %v3982
    %v5587 = vpack.c.b16 %v3987, %v3985
    %v5588 = vpack.c.b16 %v3988, %v3986
    %v5589 = vpack.c.b16 %v3991, %v3989
    %v5590 = vpack.c.b16 %v3992, %v3990
    %v5591 = vpack.c.b16 %v3995, %v3993
    %v5592 = vpack.c.b16 %v3996, %v3994
    %v5593 = vpack.c.b16 %v3999, %v3997
    %v5594 = vpack.c.b16 %v4000, %v3998
    %v5595 = vpack.c.b16 %v4003, %v4001
    %v5596 = vpack.c.b16 %v4004, %v4002
    %v5597 = vpack.c.b16 %v4007, %v4005
    %v5598 = vpack.c.b16 %v4008, %v4006
    %v5599 = vpack.c.b16 %v4011, %v4009
    %v5600 = vpack.c.b16 %v4012, %v4010
    %v5601 = vpack.c.b16 %v4015, %v4013
    %v5602 = vpack.c.b16 %v4016, %v4014
    %v5603 = vpack.c.b16 %v4019, %v4017
    %v5604 = vpack.c.b16 %v4020, %v4018
    %v5605 = vpack.c.b16 %v4023, %v4021
    %v5606 = vpack.c.b16 %v4024, %v4022
    %v5607 = vpack.c.b16 %v4027, %v4025
    %v5608 = vpack.c.b16 %v4028, %v4026
    %v5609 = vpack.c.b16 %v4031, %v4029
    %v5610 = vpack.c.b16 %v4032, %v4030
    %v5611 = vpack.c.b16 %v4035, %v4033
    %v5612 = vpack.c.b16 %v4036, %v4034
    %v5613 = vpack.c.b16 %v4039, %v4037
    %v5614 = vpack.c.b16 %v4040, %v4038
    %v5615 = vpack.c.b16 %v4043, %v4041
    %v5616 = vpack.c.b16 %v4044, %v4042
    %v5617 = vpack.c.b16 %v4047, %v4045
    %v5618 = vpack.c.b16 %v4048, %v4046
    %v5619 = vpack.c.b16 %v4051, %v4049
    %v5620 = vpack.c.b16 %v4052, %v4050
    %v5621 = vpack.c.b16 %v4055, %v4053
    %v5622 = vpack.c.b16 %v4056, %v4054
    %v5623 = vpack.c.b16 %v4059, %v4057
    %v5624 = vpack.c.b16 %v4060, %v4058
    %v5625 = vpack.c.b16 %v4063, %v4061
    %v5626 = vpack.c.b16 %v4064, %v4062
    %v5627 = vpack.c.b16 %v4067, %v4065
    %v5628 = vpack.c.b16 %v4068, %v4066
    %v5629 = vpack.c.b16 %v4071, %v4069
    %v5630 = vpack.c.b16 %v4072, %v4070
    %v5631 = vpack.c.b16 %v4075, %v4073
    %v5632 = vpack.c.b16 %v4076, %v4074
    %v5633 = vpack.c.b16 %v4079, %v4077
    %v5634 = vpack.c.b16 %v4080, %v4078
    %v5635 = vpack.c.b16 %v4083, %v4081
    %v5636 = vpack.c.b16 %v4084, %v4082
    %v5637 = vpack.c.b16 %v4087, %v4085
    %v5638 = vpack.c.b16 %v4088, %v4086
    %v5639 = vpack.c.b16 %v4091, %v4089
    %v5640 = vpack.c.b16 %v4092, %v4090
    %v5641 = vpack.c.b16 %v4095, %v4093
    %v5642 = vpack.c.b16 %v4096, %v4094
    %v5643 = vpack.c.b16 %v4099, %v4097
    %v5644 = vpack.c.b16 %v4100, %v4098
    %v5645 = vpack.c.b16 %v4103, %v4101
    %v5646 = vpack.c.b16 %v4104, %v4102
    %v5647 = vpack.c.b16 %v4107, %v4105
    %v5648 = vpack.c.b16 %v4108, %v4106
    %v5649 = vpack.c.b16 %v4111, %v4109
    %v5650 = vpack.c.b16 %v4112, %v4110
    %v5651 = vpack.c.b16 %v4115, %v4113
    %v5652 = vpack.c.b16 %v4116, %v4114
    %v5653 = vpack.c.b16 %v4119, %v4117
    %v5654 = vpack.c.b16 %v4120, %v4118
    %v5655 = vpack.c.b16 %v4123, %v4121
    %v5656 = vpack.c.b16 %v4124, %v4122
    %v5657 = vpack.c.b16 %v4127, %v4125
    %v5658 = vpack.c.b16 %v4128, %v4126
    %v5659 = vpack.c.b16 %v4131, %v4129
    %v5660 = vpack.c.b16 %v4132, %v4130
    %v5661 = vpack.c.b16 %v4135, %v4133
    %v5662 = vpack.c.b16 %v4136, %v4134
    %v5663 = vpack.c.b16 %v4139, %v4137
    %v5664 = vpack.c.b16 %v4140, %v4138
    %v5665 = vpack.c.b16 %v4143, %v4141
    %v5666 = vpack.c.b16 %v4144, %v4142
    %v5667 = vpack.c.b16 %v4147, %v4145
    %v5668 = vpack.c.b16 %v4148, %v4146
    %v5669 = vpack.c.b16 %v4151, %v4149
    %v5670 = vpack.c.b16 %v4152, %v4150
    %v5671 = vpack.c.b16 %v4155, %v4153
    %v5672 = vpack.c.b16 %v4156, %v4154
    %v5673 = vpack.c.b16 %v4159, %v4157
    %v5674 = vpack.c.b16 %v4160, %v4158
    %v5675 = vpack.c.b16 %v4163, %v4161
    %v5676 = vpack.c.b16 %v4164, %v4162
    %v5677 = vpack.c.b16 %v4167, %v4165
    %v5678 = vpack.c.b16 %v4168, %v4166
    %v5679 = vpack.c.b16 %v4171, %v4169
    %v5680 = vpack.c.b16 %v4172, %v4170
    %v5681 = vpack.c.b16 %v4175, %v4173
    %v5682 = vpack.c.b16 %v4176, %v4174
    %v5683 = vpack.c.b16 %v4179, %v4177
    %v5684 = vpack.c.b16 %v4180, %v4178
    %v5685 = vpack.c.b16 %v4183, %v4181
    %v5686 = vpack.c.b16 %v4184, %v4182
    %v5687 = vpack.c.b16 %v4187, %v4185
    %v5688 = vpack.c.b16 %v4188, %v4186
    %v5689 = vpack.c.b16 %v4191, %v4189
    %v5690 = vpack.c.b16 %v4192, %v4190
    %v5691 = vpack.c.b16 %v4195, %v4193
    %v5692 = vpack.c.b16 %v4196, %v4194
    %v5693 = vpack.c.b16 %v4199, %v4197
    %v5694 = vpack.c.b16 %v4200, %v4198
    %v5695 = vpack.c.b16 %v4203, %v4201
    %v5696 = vpack.c.b16 %v4204, %v4202
    %v5697 = vpack.c.b16 %v4207, %v4205
    %v5698 = vpack.c.b16 %v4208, %v4206
    %v5699 = vpack.c.b16 %v4211, %v4209
    %v5700 = vpack.c.b16 %v4212, %v4210
    %v5701 = vpack.c.b16 %v4215, %v4213
    %v5702 = vpack.c.b16 %v4216, %v4214
    %v5703 = vpack.c.b16 %v4219, %v4217
    %v5704 = vpack.c.b16 %v4220, %v4218
    %v5705 = vpack.c.b16 %v4223, %v4221
    %v5706 = vpack.c.b16 %v4224, %v4222
    %v5707 = vpack.c.b16 %v4227, %v4225
    %v5708 = vpack.c.b16 %v4228, %v4226
    %v5709 = vpack.c.b16 %v4231, %v4229
    %v5710 = vpack.c.b16 %v4232, %v4230
    %v5711 = vpack.c.b16 %v4235, %v4233
    %v5712 = vpack.c.b16 %v4236, %v4234
    %v5713 = vpack.c.b16 %v4239, %v4237
    %v5714 = vpack.c.b16 %v4240, %v4238
    %v5715 = vpack.c.b16 %v4243, %v4241
    %v5716 = vpack.c.b16 %v4244, %v4242
    %v5717 = vpack.c.b16 %v4247, %v4245
    %v5718 = vpack.c.b16 %v4248, %v4246
    %v5719 = vpack.c.b16 %v4251, %v4249
    %v5720 = vpack.c.b16 %v4252, %v4250
    %v5721 = vpack.c.b16 %v4255, %v4253
    %v5722 = vpack.c.b16 %v4256, %v4254
    %v5723 = vpack.c.b16 %v4259, %v4257
    %v5724 = vpack.c.b16 %v4260, %v4258
    %v5725 = vpack.c.b16 %v4263, %v4261
    %v5726 = vpack.c.b16 %v4264, %v4262
    %v5727 = vpack.c.b16 %v4267, %v4265
    %v5728 = vpack.c.b16 %v4268, %v4266
    %v5729 = vpack.c.b16 %v4271, %v4269
    %v5730 = vpack.c.b16 %v4272, %v4270
    %v5731 = vpack.c.b16 %v4275, %v4273
    %v5732 = vpack.c.b16 %v4276, %v4274
    %v5733 = vpack.c.b16 %v4279, %v4277
    %v5734 = vpack.c.b16 %v4280, %v4278
    %v5735 = vpack.c.b16 %v4283, %v4281
    %v5736 = vpack.c.b16 %v4284, %v4282
    %v5737 = vpack.c.b16 %v4287, %v4285
    %v5738 = vpack.c.b16 %v4288, %v4286
    %v5739 = vpack.c.b16 %v4291, %v4289
    %v5740 = vpack.c.b16 %v4292, %v4290
    %v5741 = vpack.c.b16 %v4295, %v4293
    %v5742 = vpack.c.b16 %v4296, %v4294
    %v5743 = vpack.c.b16 %v4299, %v4297
    %v5744 = vpack.c.b16 %v4300, %v4298
    %v5745 = vpack.c.b16 %v4303, %v4301
    %v5746 = vpack.c.b16 %v4304, %v4302
    %v5747 = vpack.c.b16 %v4307, %v4305
    %v5748 = vpack.c.b16 %v4308, %v4306
    %v5749 = vpack.c.b16 %v4311, %v4309
    %v5750 = vpack.c.b16 %v4312, %v4310
    %v5751 = vpack.c.b16 %v4315, %v4313
    %v5752 = vpack.c.b16 %v4316, %v4314
    %v5753 = vpack.c.b16 %v4319, %v4317
    %v5754 = vpack.c.b16 %v4320, %v4318
    %v5755 = vpack.c.b16 %v4323, %v4321
    %v5756 = vpack.c.b16 %v4324, %v4322
    %v5757 = vpack.c.b16 %v4327, %v4325
    %v5758 = vpack.c.b16 %v4328, %v4326
    %v5759 = vpack.c.b16 %v4331, %v4329
    %v5760 = vpack.c.b16 %v4332, %v4330
    %v5761 = vpack.c.b16 %v4335, %v4333
    %v5762 = vpack.c.b16 %v4336, %v4334
    %v5763 = vpack.c.b16 %v4339, %v4337
    %v5764 = vpack.c.b16 %v4340, %v4338
    %v5765 = vpack.c.b16 %v4343, %v4341
    %v5766 = vpack.c.b16 %v4344, %v4342
    %v5767 = vpack.c.b16 %v4347, %v4345
    %v5768 = vpack.c.b16 %v4348, %v4346
    %v5769 = vpack.c.b16 %v4351, %v4349
    %v5770 = vpack.c.b16 %v4352, %v4350
    %v5771 = vpack.c.b16 %v4355, %v4353
    %v5772 = vpack.c.b16 %v4356, %v4354
    %v5773 = vpack.c.b16 %v4359, %v4357
    %v5774 = vpack.c.b16 %v4360, %v4358
    %v5775 = vpack.c.b16 %v4363, %v4361
    %v5776 = vpack.c.b16 %v4364, %v4362
    %v5777 = vpack.c.b16 %v4367, %v4365
    %v5778 = vpack.c.b16 %v4368, %v4366
    %v5779 = vpack.c.b16 %v4371, %v4369
    %v5780 = vpack.c.b16 %v4372, %v4370
    %v5781 = vpack.c.b16 %v4375, %v4373
    %v5782 = vpack.c.b16 %v4376, %v4374
    %v5783 = vpack.c.b16 %v4379, %v4377
    %v5784 = vpack.c.b16 %v4380, %v4378
    %v5785 = vpack.c.b16 %v4383, %v4381
    %v5786 = vpack.c.b16 %v4384, %v4382
    %v5787 = vpack.c.b16 %v4387, %v4385
    %v5788 = vpack.c.b16 %v4388, %v4386
    %v5789 = vpack.c.b16 %v4391, %v4389
    %v5790 = vpack.c.b16 %v4392, %v4390
    %v5791 = vpack.c.b16 %v4395, %v4393
    %v5792 = vpack.c.b16 %v4396, %v4394
    %v5793 = vpack.c.b16 %v4399, %v4397
    %v5794 = vpack.c.b16 %v4400, %v4398
    %v5795 = vpack.c.b16 %v4403, %v4401
    %v5796 = vpack.c.b16 %v4404, %v4402
    %v5797 = vpack.c.b16 %v4407, %v4405
    %v5798 = vpack.c.b16 %v4408, %v4406
    %v5799 = vpack.c.b16 %v4411, %v4409
    %v5800 = vpack.c.b16 %v4412, %v4410
    %v5801 = vpack.c.b16 %v4415, %v4413
    %v5802 = vpack.c.b16 %v4416, %v4414
    %v5803 = vpack.c.b16 %v4419, %v4417
    %v5804 = vpack.c.b16 %v4420, %v4418
    %v5805 = vpack.c.b16 %v4423, %v4421
    %v5806 = vpack.c.b16 %v4424, %v4422
    %v5807 = vpack.c.b16 %v4427, %v4425
    %v5808 = vpack.c.b16 %v4428, %v4426
    %v5809 = vpack.c.b16 %v4431, %v4429
    %v5810 = vpack.c.b16 %v4432, %v4430
    %v5811 = vpack.c.b16 %v4435, %v4433
    %v5812 = vpack.c.b16 %v4436, %v4434
    %v5813 = vpack.c.b16 %v4439, %v4437
    %v5814 = vpack.c.b16 %v4440, %v4438
    %v5815 = vpack.c.b16 %v4443, %v4441
    %v5816 = vpack.c.b16 %v4444, %v4442
    %v5817 = vpack.c.b16 %v4447, %v4445
    %v5818 = vpack.c.b16 %v4448, %v4446
    %v5819 = vpack.c.b16 %v4451, %v4449
    %v5820 = vpack.c.b16 %v4452, %v4450
    %v5821 = vpack.c.b16 %v4455, %v4453
    %v5822 = vpack.c.b16 %v4456, %v4454
    %v5823 = vpack.c.b16 %v4459, %v4457
    %v5824 = vpack.c.b16 %v4460, %v4458
    %v5825 = vpack.c.b16 %v4463, %v4461
    %v5826 = vpack.c.b16 %v4464, %v4462
    %v5827 = vpack.c.b16 %v4467, %v4465
    %v5828 = vpack.c.b16 %v4468, %v4466
    %v5829 = vpack.c.b16 %v4471, %v4469
    %v5830 = vpack.c.b16 %v4472, %v4470
    %v5831 = vpack.c.b16 %v4475, %v4473
    %v5832 = vpack.c.b16 %v4476, %v4474
    %v5833 = vpack.c.b16 %v4479, %v4477
    %v5834 = vpack.c.b16 %v4480, %v4478
    %v5835 = vpack.c.b16 %v4483, %v4481
    %v5836 = vpack.c.b16 %v4484, %v4482
    %v5837 = vpack.c.b16 %v4487, %v4485
    %v5838 = vpack.c.b16 %v4488, %v4486
    %v5839 = vpack.c.b16 %v4491, %v4489
    %v5840 = vpack.c.b16 %v4492, %v4490
    %v5841 = vpack.c.b16 %v4495, %v4493
    %v5842 = vpack.c.b16 %v4496, %v4494
    %v5843 = vpack.c.b16 %v4499, %v4497
    %v5844 = vpack.c.b16 %v4500, %v4498
    %v5845 = vpack.c.b16 %v4503, %v4501
    %v5846 = vpack.c.b16 %v4504, %v4502
    %v5847 = vpack.c.b16 %v4507, %v4505
    %v5848 = vpack.c.b16 %v4508, %v4506
    %v5849 = vpack.c.b16 %v4511, %v4509
    %v5850 = vpack.c.b16 %v4512, %v4510
    %v5851 = vpack.c.b16 %v4515, %v4513
    %v5852 = vpack.c.b16 %v4516, %v4514
    %v5853 = vpack.c.b16 %v4519, %v4517
    %v5854 = vpack.c.b16 %v4520, %v4518
    %v5855 = vpack.c.b16 %v4523, %v4521
    %v5856 = vpack.c.b16 %v4524, %v4522
    %v5857 = vpack.c.b16 %v4527, %v4525
    %v5858 = vpack.c.b16 %v4528, %v4526
    %v5859 = vpack.c.b16 %v4531, %v4529
    %v5860 = vpack.c.b16 %v4532, %v4530
    %v5861 = vpack.c.b16 %v4535, %v4533
    %v5862 = vpack.c.b16 %v4536, %v4534
    %v5863 = vpack.c.b16 %v4539, %v4537
    %v5864 = vpack.c.b16 %v4540, %v4538
    %v5865 = vpack.c.b16 %v4543, %v4541
    %v5866 = vpack.c.b16 %v4544, %v4542
    %v5867 = vpack.c.b16 %v4547, %v4545
    %v5868 = vpack.c.b16 %v4548, %v4546
    %v5869 = vpack.c.b16 %v4551, %v4549
    %v5870 = vpack.c.b16 %v4552, %v4550
    %v5871 = vpack.c.b16 %v4555, %v4553
    %v5872 = vpack.c.b16 %v4556, %v4554
    %v5873 = vpack.c.b16 %v4559, %v4557
    %v5874 = vpack.c.b16 %v4560, %v4558
    %v5875 = vpack.c.b16 %v4563, %v4561
    %v5876 = vpack.c.b16 %v4564, %v4562
    %v5877 = vpack.c.b16 %v4567, %v4565
    %v5878 = vpack.c.b16 %v4568, %v4566
    %v5879 = vpack.c.b16 %v4571, %v4569
    %v5880 = vpack.c.b16 %v4572, %v4570
    %v5881 = vpack.c.b16 %v4575, %v4573
    %v5882 = vpack.c.b16 %v4576, %v4574
    %v5883 = vpack.c.b16 %v4579, %v4577
    %v5884 = vpack.c.b16 %v4580, %v4578
    %v5885 = vpack.c.b16 %v4583, %v4581
    %v5886 = vpack.c.b16 %v4584, %v4582
    %v5887 = vpack.c.b16 %v4587, %v4585
    %v5888 = vpack.c.b16 %v4588, %v4586
    %v5889 = vpack.c.b16 %v4591, %v4589
    %v5890 = vpack.c.b16 %v4592, %v4590
    %v5891 = vpack.c.b16 %v4595, %v4593
    %v5892 = vpack.c.b16 %v4596, %v4594
    %v5893 = vpack.c.b16 %v4599, %v4597
    %v5894 = vpack.c.b16 %v4600, %v4598
    %v5895 = vpack.c.b16 %v4603, %v4601
    %v5896 = vpack.c.b16 %v4604, %v4602
    %v5897 = vpack.c.b16 %v4607, %v4605
    %v5898 = vpack.c.b16 %v4608, %v4606
    %v5899 = vpack.c.b16 %v4611, %v4609
    %v5900 = vpack.c.b16 %v4612, %v4610
    %v5901 = vpack.c.b16 %v4615, %v4613
    %v5902 = vpack.c.b16 %v4616, %v4614
    %v5903 = vpack.c.b16 %v4619, %v4617
    %v5904 = vpack.c.b16 %v4620, %v4618
    %v5905 = vpack.c.b16 %v4623, %v4621
    %v5906 = vpack.c.b16 %v4624, %v4622
    %v5907 = vpack.c.b16 %v4627, %v4625
    %v5908 = vpack.c.b16 %v4628, %v4626
    %v5909 = vpack.c.b16 %v4631, %v4629
    %v5910 = vpack.c.b16 %v4632, %v4630
    %v5911 = vpack.c.b16 %v4635, %v4633
    %v5912 = vpack.c.b16 %v4636, %v4634
    %v5913 = vpack.c.b16 %v4639, %v4637
    %v5914 = vpack.c.b16 %v4640, %v4638
    %v5915 = vpack.c.b16 %v4643, %v4641
    %v5916 = vpack.c.b16 %v4644, %v4642
    %v5917 = vpack.c.b16 %v4647, %v4645
    %v5918 = vpack.c.b16 %v4648, %v4646
    %v5919 = vpack.c.b16 %v4651, %v4649
    %v5920 = vpack.c.b16 %v4652, %v4650
    %v5921 = vpack.c.b16 %v4655, %v4653
    %v5922 = vpack.c.b16 %v4656, %v4654
    %v5923 = vpack.c.b16 %v4659, %v4657
    %v5924 = vpack.c.b16 %v4660, %v4658
    %v5925 = vpack.c.b16 %v4663, %v4661
    %v5926 = vpack.c.b16 %v4664, %v4662
    %v5927 = vpack.c.b16 %v4667, %v4665
    %v5928 = vpack.c.b16 %v4668, %v4666
    %v5929 = vpack.c.b16 %v4671, %v4669
    %v5930 = vpack.c.b16 %v4672, %v4670
    %v5931 = vpack.c.b16 %v4675, %v4673
    %v5932 = vpack.c.b16 %v4676, %v4674
    %v5933 = vpack.c.b16 %v4679, %v4677
    %v5934 = vpack.c.b16 %v4680, %v4678
    %v5935 = vpack.c.b16 %v4683, %v4681
    %v5936 = vpack.c.b16 %v4684, %v4682
    %v5937 = vpack.c.b16 %v4687, %v4685
    %v5938 = vpack.c.b16 %v4688, %v4686
    %v5939 = vpack.c.b16 %v4691, %v4689
    %v5940 = vpack.c.b16 %v4692, %v4690
    %v5941 = vpack.c.b16 %v4695, %v4693
    %v5942 = vpack.c.b16 %v4696, %v4694
    %v5943 = vpack.c.b16 %v4699, %v4697
    %v5944 = vpack.c.b16 %v4700, %v4698
    %v5945 = vpack.c.b16 %v4703, %v4701
    %v5946 = vpack.c.b16 %v4704, %v4702
    %v5947 = vpack.c.b16 %v4707, %v4705
    %v5948 = vpack.c.b16 %v4708, %v4706
    %v5949 = vpack.c.b16 %v4711, %v4709
    %v5950 = vpack.c.b16 %v4712, %v4710
    %v5951 = vpack.c.b16 %v4715, %v4713
    %v5952 = vpack.c.b16 %v4716, %v4714
    %v5953 = vpack.c.b16 %v4719, %v4717
    %v5954 = vpack.c.b16 %v4720, %v4718
    %v5955 = vpack.c.b16 %v4723, %v4721
    %v5956 = vpack.c.b16 %v4724, %v4722
    %v5957 = vpack.c.b16 %v4727, %v4725
    %v5958 = vpack.c.b16 %v4728, %v4726
    %v5959 = vpack.c.b16 %v4731, %v4729
    %v5960 = vpack.c.b16 %v4732, %v4730
    %v5961 = vpack.c.b16 %v4735, %v4733
    %v5962 = vpack.c.b16 %v4736, %v4734
    %v5963 = vpack.c.b16 %v4739, %v4737
    %v5964 = vpack.c.b16 %v4740, %v4738
    %v5965 = vpack.c.b16 %v4743, %v4741
    %v5966 = vpack.c.b16 %v4744, %v4742
    %v5967 = vpack.c.b16 %v4747, %v4745
    %v5968 = vpack.c.b16 %v4748, %v4746
    %v5969 = vpack.c.b16 %v4751, %v4749
    %v5970 = vpack.c.b16 %v4752, %v4750
    %v5971 = vpack.c.b16 %v4755, %v4753
    %v5972 = vpack.c.b16 %v4756, %v4754
    %v5973 = vpack.c.b16 %v4759, %v4757
    %v5974 = vpack.c.b16 %v4760, %v4758
    %v5975 = vpack.c.b16 %v4763, %v4761
    %v5976 = vpack.c.b16 %v4764, %v4762
    %v5977 = vpack.c.b16 %v4767, %v4765
    %v5978 = vpack.c.b16 %v4768, %v4766
    %v5979 = vpack.c.b16 %v4771, %v4769
    %v5980 = vpack.c.b16 %v4772, %v4770
    %v5981 = vpack.c.b16 %v4775, %v4773
    %v5982 = vpack.c.b16 %v4776, %v4774
    %v5983 = vpack.c.b16 %v4779, %v4777
    %v5984 = vpack.c.b16 %v4780, %v4778
    %v5985 = vpack.c.b16 %v4783, %v4781
    %v5986 = vpack.c.b16 %v4784, %v4782
    %v5987 = vpack.c.b16 %v4787, %v4785
    %v5988 = vpack.c.b16 %v4788, %v4786
    %v5989 = vpack.c.b16 %v4791, %v4789
    %v5990 = vpack.c.b16 %v4792, %v4790
    %v5991 = vpack.c.b16 %v4795, %v4793
    %v5992 = vpack.c.b16 %v4796, %v4794
    %v5993 = vpack.c.b16 %v4799, %v4797
    %v5994 = vpack.c.b16 %v4800, %v4798
    %v5995 = vpack.c.b16 %v4803, %v4801
    %v5996 = vpack.c.b16 %v4804, %v4802
    %v5997 = vpack.c.b16 %v4807, %v4805
    %v5998 = vpack.c.b16 %v4808, %v4806
    %v5999 = vpack.c.b16 %v4811, %v4809
    %v6000 = vpack.c.b16 %v4812, %v4810
    %v6001 = vpack.c.b16 %v4815, %v4813
    %v6002 = vpack.c.b16 %v4816, %v4814
    %v6003 = vpack.c.b16 %v4819, %v4817
    %v6004 = vpack.c.b16 %v4820, %v4818
    %v6005 = vpack.c.b16 %v4823, %v4821
    %v6006 = vpack.c.b16 %v4824, %v4822
    %v6007 = vpack.c.b16 %v4827, %v4825
    %v6008 = vpack.c.b16 %v4828, %v4826
    %v6009 = vpack.c.b16 %v4831, %v4829
    %v6010 = vpack.c.b16 %v4832, %v4830
    %v6011 = vpack.c.b16 %v4835, %v4833
    %v6012 = vpack.c.b16 %v4836, %v4834
    %v6013 = vpack.c.b16 %v4839, %v4837
    %v6014 = vpack.c.b16 %v4840, %v4838
    %v6015 = vpack.c.b16 %v4843, %v4841
    %v6016 = vpack.c.b16 %v4844, %v4842
    %v6017 = vpack.c.b16 %v4847, %v4845
    %v6018 = vpack.c.b16 %v4848, %v4846
    %v6019 = vpack.c.b16 %v4851, %v4849
    %v6020 = vpack.c.b16 %v4852, %v4850
    %v6021 = vpack.c.b16 %v4855, %v4853
    %v6022 = vpack.c.b16 %v4856, %v4854
    %v6023 = vpack.c.b16 %v4859, %v4857
    %v6024 = vpack.c.b16 %v4860, %v4858
    %v6025 = vpack.c.b16 %v4863, %v4861
    %v6026 = vpack.c.b16 %v4864, %v4862
    %v6027 = vpack.c.b16 %v4867, %v4865
    %v6028 = vpack.c.b16 %v4868, %v4866
    %v6029 = vpack.c.b16 %v4871, %v4869
    %v6030 = vpack.c.b16 %v4872, %v4870
    %v6031 = vpack.c.b16 %v4875, %v4873
    %v6032 = vpack.c.b16 %v4876, %v4874
    %v6033 = vpack.c.b16 %v4879, %v4877
    %v6034 = vpack.c.b16 %v4880, %v4878
    %v6035 = vpack.c.b16 %v4883, %v4881
    %v6036 = vpack.c.b16 %v4884, %v4882
    %v6037 = vpack.c.b16 %v4887, %v4885
    %v6038 = vpack.c.b16 %v4888, %v4886
    %v6039 = vpack.c.b16 %v4891, %v4889
    %v6040 = vpack.c.b16 %v4892, %v4890
    %v6041 = vpack.c.b16 %v4895, %v4893
    %v6042 = vpack.c.b16 %v4896, %v4894
    %v6043 = vpack.c.b16 %v4899, %v4897
    %v6044 = vpack.c.b16 %v4900, %v4898
    %v6045 = vpack.c.b16 %v4903, %v4901
    %v6046 = vpack.c.b16 %v4904, %v4902
    %v6047 = vpack.c.b16 %v4907, %v4905
    %v6048 = vpack.c.b16 %v4908, %v4906
    %v6049 = vpack.c.b16 %v4911, %v4909
    %v6050 = vpack.c.b16 %v4912, %v4910
    %v6051 = vpack.c.b16 %v4915, %v4913
    %v6052 = vpack.c.b16 %v4916, %v4914
    %v6053 = vpack.c.b16 %v4919, %v4917
    %v6054 = vpack.c.b16 %v4920, %v4918
    %v6055 = vpack.c.b16 %v4923, %v4921
    %v6056 = vpack.c.b16 %v4924, %v4922
    %v6057 = vpack.c.b16 %v4927, %v4925
    %v6058 = vpack.c.b16 %v4928, %v4926
    %v6059 = vpack.c.b16 %v4931, %v4929
    %v6060 = vpack.c.b16 %v4932, %v4930
    %v6061 = vpack.c.b16 %v4935, %v4933
    %v6062 = vpack.c.b16 %v4936, %v4934
    %v6063 = vpack.c.b16 %v4939, %v4937
    %v6064 = vpack.c.b16 %v4940, %v4938
    %v6065 = vpack.c.b16 %v4943, %v4941
    %v6066 = vpack.c.b16 %v4944, %v4942
    %v6067 = vpack.c.b16 %v4947, %v4945
    %v6068 = vpack.c.b16 %v4948, %v4946
    %v6069 = vpack.c.b16 %v4951, %v4949
    %v6070 = vpack.c.b16 %v4952, %v4950
    %v6071 = vpack.c.b16 %v4955, %v4953
    %v6072 = vpack.c.b16 %v4956, %v4954
    %v6073 = vpack.c.b16 %v4959, %v4957
    %v6074 = vpack.c.b16 %v4960, %v4958
    %v6075 = vpack.c.b16 %v4963, %v4961
    %v6076 = vpack.c.b16 %v4964, %v4962
    %v6077 = vpack.c.b16 %v4967, %v4965
    %v6078 = vpack.c.b16 %v4968, %v4966
    %v6079 = vpack.c.b16 %v4971, %v4969
    %v6080 = vpack.c.b16 %v4972, %v4970
    %v6081 = vpack.c.b16 %v4975, %v4973
    %v6082 = vpack.c.b16 %v4976, %v4974
    %v6083 = vpack.c.b16 %v4979, %v4977
    %v6084 = vpack.c.b16 %v4980, %v4978
    %v6085 = vpack.c.b16 %v4983, %v4981
    %v6086 = vpack.c.b16 %v4984, %v4982
    %v6087 = vpack.c.b16 %v4987, %v4985
    %v6088 = vpack.c.b16 %v4988, %v4986
    %v6089 = vpack.c.b16 %v4991, %v4989
    %v6090 = vpack.c.b16 %v4992, %v4990
    %v6091 = vpack.c.b16 %v4995, %v4993
    %v6092 = vpack.c.b16 %v4996, %v4994
    %v6093 = vpack.c.b16 %v4999, %v4997
    %v6094 = vpack.c.b16 %v5000, %v4998
    %v6095 = vpack.c.b16 %v5003, %v5001
    %v6096 = vpack.c.b16 %v5004, %v5002
    %v6097 = vpack.c.b16 %v5007, %v5005
    %v6098 = vpack.c.b16 %v5008, %v5006
    %v6099 = vpack.c.b16 %v5011, %v5009
    %v6100 = vpack.c.b16 %v5012, %v5010
    %v6101 = vpack.c.b16 %v5015, %v5013
    %v6102 = vpack.c.b16 %v5016, %v5014
    %v6103 = vpack.c.b16 %v5019, %v5017
    %v6104 = vpack.c.b16 %v5020, %v5018
    %v6105 = vpack.c.b16 %v5023, %v5021
    %v6106 = vpack.c.b16 %v5024, %v5022
    %v6107 = vpack.c.b16 %v5027, %v5025
    %v6108 = vpack.c.b16 %v5028, %v5026
    %v6109 = vpack.c.b16 %v5031, %v5029
    %v6110 = vpack.c.b16 %v5032, %v5030
    %v6111 = vpack.c.b16 %v5035, %v5033
    %v6112 = vpack.c.b16 %v5036, %v5034
    %v6113 = vpack.c.b16 %v5039, %v5037
    %v6114 = vpack.c.b16 %v5040, %v5038
    %v6115 = vpack.c.b16 %v5043, %v5041
    %v6116 = vpack.c.b16 %v5044, %v5042
    %v6117 = vpack.c.b16 %v5047, %v5045
    %v6118 = vpack.c.b16 %v5048, %v5046
    %v6119 = vpack.c.b16 %v5051, %v5049
    %v6120 = vpack.c.b16 %v5052, %v5050
    %v6121 = vpack.c.b16 %v5055, %v5053
    %v6122 = vpack.c.b16 %v5056, %v5054
    %v6123 = vpack.c.b16 %v5059, %v5057
    %v6124 = vpack.c.b16 %v5060, %v5058
    %v6125 = vpack.c.b16 %v5063, %v5061
    %v6126 = vpack.c.b16 %v5064, %v5062
    %v6127 = vpack.c.b16 %v5067, %v5065
    %v6128 = vpack.c.b16 %v5068, %v5066
    %v6129 = vpack.c.b16 %v5071, %v5069
    %v6130 = vpack.c.b16 %v5072, %v5070
    %v6131 = vpack.c.b16 %v5075, %v5073
    %v6132 = vpack.c.b16 %v5076, %v5074
    %v6133 = vpack.c.b16 %v5079, %v5077
    %v6134 = vpack.c.b16 %v5080, %v5078
    %v6135 = vpack.c.b16 %v5083, %v5081
    %v6136 = vpack.c.b16 %v5084, %v5082
    %v6137 = vpack.c.b16 %v5087, %v5085
    %v6138 = vpack.c.b16 %v5088, %v5086
    %v6139 = vpack.c.b16 %v5091, %v5089
    %v6140 = vpack.c.b16 %v5092, %v5090
    %v6141 = vpack.c.b16 %v5095, %v5093
    %v6142 = vpack.c.b16 %v5096, %v5094
    %v6143 = vpack.c.b16 %v5099, %v5097
    %v6144 = vpack.c.b16 %v5100, %v5098
    %v6145 = vpack.c.b16 %v5103, %v5101
    %v6146 = vpack.c.b16 %v5104, %v5102
    %v6147 = vpack.c.b16 %v5107, %v5105
    %v6148 = vpack.c.b16 %v5108, %v5106
    %v6149 = vpack.c.b16 %v5111, %v5109
    %v6150 = vpack.c.b16 %v5112, %v5110
    %v6151 = vpack.c.b16 %v5115, %v5113
    %v6152 = vpack.c.b16 %v5116, %v5114
    %v6153 = vpack.c.b16 %v5119, %v5117
    %v6154 = vpack.c.b16 %v5120, %v5118
    %v6155 = vpack.c.b16 %v5123, %v5121
    %v6156 = vpack.c.b16 %v5124, %v5122
    %v6157 = vpack.c.b16 %v5127, %v5125
    %v6158 = vpack.c.b16 %v5128, %v5126
    %v6159 = vpack.c.b16 %v5131, %v5129
    %v6160 = vpack.c.b16 %v5132, %v5130
    %v6161 = vpack.c.b16 %v5135, %v5133
    %v6162 = vpack.c.b16 %v5136, %v5134
    %v6163 = vpack.c.b16 %v5139, %v5137
    %v6164 = vpack.c.b16 %v5140, %v5138
    %v6165 = vpack.c.b16 %v5143, %v5141
    %v6166 = vpack.c.b16 %v5144, %v5142
    %v6167 = vpack.c.b16 %v5147, %v5145
    %v6168 = vpack.c.b16 %v5148, %v5146
    %v6169 = vpack.c.b16 %v5151, %v5149
    %v6170 = vpack.c.b16 %v5152, %v5150
    %v6171 = vpack.c.b16 %v5155, %v5153
    %v6172 = vpack.c.b16 %v5156, %v5154
    %v6173 = vpack.c.b16 %v5159, %v5157
    %v6174 = vpack.c.b16 %v5160, %v5158
    %v6175 = vpack.c.b16 %v5163, %v5161
    %v6176 = vpack.c.b16 %v5164, %v5162
    %v6177 = vpack.c.b16 %v5167, %v5165
    %v6178 = vpack.c.b16 %v5168, %v5166
    %v6179 = vpack.c.b16 %v5171, %v5169
    %v6180 = vpack.c.b16 %v5172, %v5170
    %v6181 = vpack.c.b16 %v5175, %v5173
    %v6182 = vpack.c.b16 %v5176, %v5174
    %v6183 = vpack.c.b16 %v5179, %v5177
    %v6184 = vpack.c.b16 %v5180, %v5178
    %v6185 = vpack.c.b16 %v5183, %v5181
    %v6186 = vpack.c.b16 %v5184, %v5182
    %v6187 = vpack.c.b16 %v5187, %v5185
    %v6188 = vpack.c.b16 %v5188, %v5186
    %v6189 = vpack.c.b16 %v5191, %v5189
    %v6190 = vpack.c.b16 %v5192, %v5190
    %v6191 = vpack.c.b16 %v5195, %v5193
    %v6192 = vpack.c.b16 %v5196, %v5194
    %v6193 = vpack.c.b16 %v5199, %v5197
    %v6194 = vpack.c.b16 %v5200, %v5198
    %v6195 = vpack.c.b16 %v5203, %v5201
    %v6196 = vpack.c.b16 %v5204, %v5202
    %v6197 = vpack.c.b16 %v5207, %v5205
    %v6198 = vpack.c.b16 %v5208, %v5206
    %v6199 = vpack.c.b16 %v5211, %v5209
    %v6200 = vpack.c.b16 %v5212, %v5210
    %v6201 = vpack.c.b16 %v5215, %v5213
    %v6202 = vpack.c.b16 %v5216, %v5214
    %v6203 = vpack.c.b16 %v5219, %v5217
    %v6204 = vpack.c.b16 %v5220, %v5218
    %v6205 = vpack.c.b16 %v5223, %v5221
    %v6206 = vpack.c.b16 %v5224, %v5222
    %v6207 = vpack.c.b16 %v5227, %v5225
    %v6208 = vpack.c.b16 %v5228, %v5226
    %v6209 = vpack.c.b16 %v5231, %v5229
    %v6210 = vpack.c.b16 %v5232, %v5230
    %v6211 = vpack.c.b16 %v5235, %v5233
    %v6212 = vpack.c.b16 %v5236, %v5234
    %v6213 = vpack.c.b16 %v5239, %v5237
    %v6214 = vpack.c.b16 %v5240, %v5238
    %v6215 = vpack.c.b16 %v5243, %v5241
    %v6216 = vpack.c.b16 %v5244, %v5242
    %v6217 = vpack.c.b16 %v5247, %v5245
    %v6218 = vpack.c.b16 %v5248, %v5246
    %v6219 = vpack.c.b16 %v5251, %v5249
    %v6220 = vpack.c.b16 %v5252, %v5250
    %v6221 = vpack.c.b16 %v5255, %v5253
    %v6222 = vpack.c.b16 %v5256, %v5254
    %v6223 = vpack.c.b16 %v5259, %v5257
    %v6224 = vpack.c.b16 %v5260, %v5258
    %v6225 = vpack.c.b16 %v5263, %v5261
    %v6226 = vpack.c.b16 %v5264, %v5262
    %v6227 = vpack.c.b16 %v5267, %v5265
    %v6228 = vpack.c.b16 %v5268, %v5266
    %v6229 = vpack.c.b16 %v5271, %v5269
    %v6230 = vpack.c.b16 %v5272, %v5270
    %v6231 = vpack.c.b16 %v5275, %v5273
    %v6232 = vpack.c.b16 %v5276, %v5274
    %v6233 = vpack.c.b16 %v5279, %v5277
    %v6234 = vpack.c.b16 %v5280, %v5278
    %v6235 = vpack.c.b16 %v5283, %v5281
    %v6236 = vpack.c.b16 %v5284, %v5282
    %v6237 = vpack.c.b16 %v5287, %v5285
    %v6238 = vpack.c.b16 %v5288, %v5286
    %v6239 = vpack.c.b16 %v5291, %v5289
    %v6240 = vpack.c.b16 %v5292, %v5290
    %v6241 = vpack.c.b16 %v5295, %v5293
    %v6242 = vpack.c.b16 %v5296, %v5294
    %v6243 = vpack.c.b16 %v5299, %v5297
    %v6244 = vpack.c.b16 %v5300, %v5298
    %v6245 = vpack.c.b16 %v5303, %v5301
    %v6246 = vpack.c.b16 %v5304, %v5302
    %v6247 = vpack.c.b16 %v5307, %v5305
    %v6248 = vpack.c.b16 %v5308, %v5306
    %v6249 = vpack.c.b16 %v5311, %v5309
    %v6250 = vpack.c.b16 %v5312, %v5310
    %v6251 = vpack.c.b16 %v5315, %v5313
    %v6252 = vpack.c.b16 %v5316, %v5314
    %v6253 = vpack.c.b16 %v5319, %v5317
    %v6254 = vpack.c.b16 %v5320, %v5318
    %v6255 = vpack.c.b16 %v5323, %v5321
    %v6256 = vpack.c.b16 %v5324, %v5322
    %v6257 = vpack.c.b16 %v5327, %v5325
    %v6258 = vpack.c.b16 %v5328, %v5326
    %v6259 = vpack.c.b16 %v5331, %v5329
    %v6260 = vpack.c.b16 %v5332, %v5330
    %v6261 = vpack.c.b16 %v5335, %v5333
    %v6262 = vpack.c.b16 %v5336, %v5334
    %v6263 = vpack.c.b16 %v5339, %v5337
    %v6264 = vpack.c.b16 %v5340, %v5338
    %v6265 = vpack.c.b16 %v5343, %v5341
    %v6266 = vpack.c.b16 %v5344, %v5342
    %v6267 = vpack.c.b16 %v5347, %v5345
    %v6268 = vpack.c.b16 %v5348, %v5346
    %v6269 = vpack.c.b16 %v5351, %v5349
    %v6270 = vpack.c.b16 %v5352, %v5350
    %v6271 = vpack.c.b16 %v5355, %v5353
    %v6272 = vpack.c.b16 %v5356, %v5354
    %v6273 = vpack.c.b16 %v5359, %v5357
    %v6274 = vpack.c.b16 %v5360, %v5358
    %v6275 = vpack.c.b16 %v5363, %v5361
    %v6276 = vpack.c.b16 %v5364, %v5362
    %v6277 = vpack.c.b16 %v5367, %v5365
    %v6278 = vpack.c.b16 %v5368, %v5366
    %v6279 = vpack.c.b16 %v5371, %v5369
    %v6280 = vpack.c.b16 %v5372, %v5370
    %v6281 = vpack.c.b16 %v5375, %v5373
    %v6282 = vpack.c.b16 %v5376, %v5374
    %v6283 = vpack.c.b16 %v5379, %v5377
    %v6284 = vpack.c.b16 %v5380, %v5378
    %v6285 = vpack.c.b16 %v5383, %v5381
    %v6286 = vpack.c.b16 %v5384, %v5382
    %v6287 = vpack.c.b16 %v5387, %v5385
    %v6288 = vpack.c.b16 %v5388, %v5386
    %v6289 = vpack.c.b16 %v5391, %v5389
    %v6290 = vpack.c.b16 %v5392, %v5390
    %v6291 = vpack.c.b16 %v5395, %v5393
    %v6292 = vpack.c.b16 %v5396, %v5394
    %v6293 = vpack.c.b16 %v5399, %v5397
    %v6294 = vpack.c.b16 %v5400, %v5398
    %v6295 = vpack.c.b16 %v5403, %v5401
    %v6296 = vpack.c.b16 %v5404, %v5402
    %v6297 = vpack.c.b16 %v5407, %v5405
    %v6298 = vpack.c.b16 %v5408, %v5406
    %v6299 = vpack.c.b16 %v5411, %v5409
    %v6300 = vpack.c.b16 %v5412, %v5410
    %v6301 = vpack.c.b16 %v5415, %v5413
    %v6302 = vpack.c.b16 %v5416, %v5414
    %v6303 = vpack.c.b16 %v5419, %v5417
    %v6304 = vpack.c.b16 %v5420, %v5418
    %v6305 = vpack.c.b16 %v5423, %v5421
    %v6306 = vpack.c.b16 %v5424, %v5422
    %v6307 = vpack.c.b16 %v5427, %v5425
    %v6308 = vpack.c.b16 %v5428, %v5426
    %v6309 = vpack.c.b16 %v5431, %v5429
    %v6310 = vpack.c.b16 %v5432, %v5430
    %v6311 = vpack.c.b16 %v5435, %v5433
    %v6312 = vpack.c.b16 %v5436, %v5434
    %v6313 = vpack.c.b16 %v5439, %v5437
    %v6314 = vpack.c.b16 %v5440, %v5438
    %v6315 = vpack.c.b16 %v5443, %v5441
    %v6316 = vpack.c.b16 %v5444, %v5442
    %v6317 = vpack.c.b16 %v5447, %v5445
    %v6318 = vpack.c.b16 %v5448, %v5446
    %v6319 = vpack.c.b16 %v5451, %v5449
    %v6320 = vpack.c.b16 %v5452, %v5450
    %v6321 = vpack.c.b16 %v5455, %v5453
    %v6322 = vpack.c.b16 %v5456, %v5454
    %v6323 = vpack.c.b16 %v5459, %v5457
    %v6324 = vpack.c.b16 %v5460, %v5458
    %v6325 = vpack.c.b16 %v5463, %v5461
    %v6326 = vpack.c.b16 %v5464, %v5462
    %v6327 = vpack.c.b16 %v5467, %v5465
    %v6328 = vpack.c.b16 %v5468, %v5466
    %v6329 = vpack.c.b16 %v5471, %v5469
    %v6330 = vpack.c.b16 %v5472, %v5470
    %v6331 = vpack.c.b16 %v5475, %v5473
    %v6332 = vpack.c.b16 %v5476, %v5474
    %v6333 = vpack.c.b16 %v5479, %v5477
    %v6334 = vpack.c.b16 %v5480, %v5478
    %v6335 = vpack.c.b16 %v5483, %v5481
    %v6336 = vpack.c.b16 %v5484, %v5482
    %v6337 = vpack.c.b16 %v5487, %v5485
    %v6338 = vpack.c.b16 %v5488, %v5486
    %v6339 = vpack.c.b16 %v5491, %v5489
    %v6340 = vpack.c.b16 %v5492, %v5490
    %v6341 = vpack.c.b16 %v5495, %v5493
    %v6342 = vpack.c.b16 %v5496, %v5494
    %v6343 = vpack.c.b16 %v5499, %v5497
    %v6344 = vpack.c.b16 %v5500, %v5498
    %v6345 = vpack.c.b16 %v5503, %v5501
    %v6346 = vpack.c.b16 %v5504, %v5502
    %v6347 = vpack.c.b16 %v5507, %v5505
    %v6348 = vpack.c.b16 %v5508, %v5506
    %v6349 = vpack.c.b16 %v5511, %v5509
    %v6350 = vpack.c.b16 %v5512, %v5510
    %v6351 = vpack.c.b16 %v5515, %v5513
    %v6352 = vpack.c.b16 %v5516, %v5514
    %v6353 = vpack.c.b16 %v5519, %v5517
    %v6354 = vpack.c.b16 %v5520, %v5518
    %v6355 = vpack.c.b16 %v5523, %v5521
    %v6356 = vpack.c.b16 %v5524, %v5522
    %7189 = vmatprep.subr.bf16.mxu0 %v5540
    %7190 = vmatpush1.bf16.msra.mxu0 %v5539
    %7191 = vmatprep.subr.bf16.mxu0 %v5538
    %7192 = vmatpush1.bf16.msra.mxu0 %v5537
    %7193 = vmatprep.subr.bf16.mxu0 %v5536
    %7194 = vmatpush1.bf16.msra.mxu0 %v5535
    %7195 = vmatprep.subr.bf16.mxu0 %v5534
    %7196 = vmatpush1.bf16.msra.mxu0 %v5533
    %7197 = vmatprep.subr.bf16.mxu0 %v5532
    %7198 = vmatpush1.bf16.msra.mxu0 %v5531
    %7199 = vmatprep.subr.bf16.mxu0 %v5530
    %7200 = vmatpush1.bf16.msra.mxu0 %v5529
    %7201 = vmatprep.subr.bf16.mxu0 %v5528
    %7202 = vmatpush1.bf16.msra.mxu0 %v5527
    %7203 = vmatprep.subr.bf16.mxu0 %v5526
    %7204 = vmatpush1.bf16.msra.mxu0 %v5525
    %7205 = vmatprep.subr.bf16.mxu0 %v5556
    %7206 = vmatpush2.bf16.msra.mxu0 %v5555
    %7207 = vmatprep.subr.bf16.mxu0 %v5554
    %7208 = vmatpush2.bf16.msra.mxu0 %v5553
    %7209 = vmatprep.subr.bf16.mxu0 %v5552
    %7210 = vmatpush2.bf16.msra.mxu0 %v5551
    %7211 = vmatprep.subr.bf16.mxu0 %v5550
    %7212 = vmatpush2.bf16.msra.mxu0 %v5549
    %7213 = vmatprep.subr.bf16.mxu0 %v5548
    %7214 = vmatpush2.bf16.msra.mxu0 %v5547
    %7215 = vmatprep.subr.bf16.mxu0 %v5546
    %7216 = vmatpush2.bf16.msra.mxu0 %v5545
    %7217 = vmatprep.subr.bf16.mxu0 %v5544
    %7218 = vmatpush2.bf16.msra.mxu0 %v5543
    %7219 = vmatprep.subr.bf16.mxu0 %v5542
    %7220 = vmatpush2.bf16.msra.mxu0 %v5541
    %7221 = vmatprep.mubr.bf16.mxu0 %v2926
    %7222 = vmatmul.mubr.bf16.gmra.mxu0 %v2925
    %v7223 = vpop.f32.mrf.mxu0
    %v7224 = vadd.f32 %v2762, %v7223
    %v7225 = vpop.f32.mrf.mxu0
    %v7226 = vadd.f32 %v2766, %v7225
    %v7227 = vpop.f32.mrf.mxu0
    %v7228 = vadd.f32 %v2762, %v7227
    %v7229 = vpop.f32.mrf.mxu0
    %v7230 = vadd.f32 %v2766, %v7229
    %7231 = vdwg.mxu0
    %7232 = vmatprep.subr.bf16.mxu0 %v5572
    %7233 = vmatpush1.bf16.msra.mxu0 %v5571
    %7234 = vmatprep.subr.bf16.mxu0 %v5570
    %7235 = vmatpush1.bf16.msra.mxu0 %v5569
    %7236 = vmatprep.subr.bf16.mxu0 %v5568
    %7237 = vmatpush1.bf16.msra.mxu0 %v5567
    %7238 = vmatprep.subr.bf16.mxu0 %v5566
    %7239 = vmatpush1.bf16.msra.mxu0 %v5565
    %7240 = vmatprep.subr.bf16.mxu0 %v5564
    %7241 = vmatpush1.bf16.msra.mxu0 %v5563
    %7242 = vmatprep.subr.bf16.mxu0 %v5562
    %7243 = vmatpush1.bf16.msra.mxu0 %v5561
    %7244 = vmatprep.subr.bf16.mxu0 %v5560
    %7245 = vmatpush1.bf16.msra.mxu0 %v5559
    %7246 = vmatprep.subr.bf16.mxu0 %v5558
    %7247 = vmatpush1.bf16.msra.mxu0 %v5557
    %7248 = vmatprep.subr.bf16.mxu0 %v5588
    %7249 = vmatpush2.bf16.msra.mxu0 %v5587
    %7250 = vmatprep.subr.bf16.mxu0 %v5586
    %7251 = vmatpush2.bf16.msra.mxu0 %v5585
    %7252 = vmatprep.subr.bf16.mxu0 %v5584
    %7253 = vmatpush2.bf16.msra.mxu0 %v5583
    %7254 = vmatprep.subr.bf16.mxu0 %v5582
    %7255 = vmatpush2.bf16.msra.mxu0 %v5581
    %7256 = vmatprep.subr.bf16.mxu0 %v5580
    %7257 = vmatpush2.bf16.msra.mxu0 %v5579
    %7258 = vmatprep.subr.bf16.mxu0 %v5578
    %7259 = vmatpush2.bf16.msra.mxu0 %v5577
    %7260 = vmatprep.subr.bf16.mxu0 %v5576
    %7261 = vmatpush2.bf16.msra.mxu0 %v5575
    %7262 = vmatprep.subr.bf16.mxu0 %v5574
    %7263 = vmatpush2.bf16.msra.mxu0 %v5573
    %7264 = vmatprep.mubr.bf16.mxu0 %v2928
    %7265 = vmatmul.mubr.bf16.gmra.mxu0 %v2927
    %v7266 = vpop.f32.mrf.mxu0
    %v7267 = vadd.f32 %v7224, %v7266
    %v7268 = vpop.f32.mrf.mxu0
    %v7269 = vadd.f32 %v7226, %v7268
    %v7270 = vpop.f32.mrf.mxu0
    %v7271 = vadd.f32 %v7228, %v7270
    %v7272 = vpop.f32.mrf.mxu0
    %v7273 = vadd.f32 %v7230, %v7272
    %7274 = vdwg.mxu0
    %7275 = vmatprep.subr.bf16.mxu0 %v5604
    %7276 = vmatpush1.bf16.msra.mxu0 %v5603
    %7277 = vmatprep.subr.bf16.mxu0 %v5602
    %7278 = vmatpush1.bf16.msra.mxu0 %v5601
    %7279 = vmatprep.subr.bf16.mxu0 %v5600
    %7280 = vmatpush1.bf16.msra.mxu0 %v5599
    %7281 = vmatprep.subr.bf16.mxu0 %v5598
    %7282 = vmatpush1.bf16.msra.mxu0 %v5597
    %7283 = vmatprep.subr.bf16.mxu0 %v5596
    %7284 = vmatpush1.bf16.msra.mxu0 %v5595
    %7285 = vmatprep.subr.bf16.mxu0 %v5594
    %7286 = vmatpush1.bf16.msra.mxu0 %v5593
    %7287 = vmatprep.subr.bf16.mxu0 %v5592
    %7288 = vmatpush1.bf16.msra.mxu0 %v5591
    %7289 = vmatprep.subr.bf16.mxu0 %v5590
    %7290 = vmatpush1.bf16.msra.mxu0 %v5589
    %7291 = vmatprep.subr.bf16.mxu0 %v5620
    %7292 = vmatpush2.bf16.msra.mxu0 %v5619
    %7293 = vmatprep.subr.bf16.mxu0 %v5618
    %7294 = vmatpush2.bf16.msra.mxu0 %v5617
    %7295 = vmatprep.subr.bf16.mxu0 %v5616
    %7296 = vmatpush2.bf16.msra.mxu0 %v5615
    %7297 = vmatprep.subr.bf16.mxu0 %v5614
    %7298 = vmatpush2.bf16.msra.mxu0 %v5613
    %7299 = vmatprep.subr.bf16.mxu0 %v5612
    %7300 = vmatpush2.bf16.msra.mxu0 %v5611
    %7301 = vmatprep.subr.bf16.mxu0 %v5610
    %7302 = vmatpush2.bf16.msra.mxu0 %v5609
    %7303 = vmatprep.subr.bf16.mxu0 %v5608
    %7304 = vmatpush2.bf16.msra.mxu0 %v5607
    %7305 = vmatprep.subr.bf16.mxu0 %v5606
    %7306 = vmatpush2.bf16.msra.mxu0 %v5605
    %7307 = vmatprep.mubr.bf16.mxu0 %v2930
    %7308 = vmatmul.mubr.bf16.gmra.mxu0 %v2929
    %v7309 = vpop.f32.mrf.mxu0
    %v7310 = vadd.f32 %v7267, %v7309
    %v7311 = vpop.f32.mrf.mxu0
    %v7312 = vadd.f32 %v7269, %v7311
    %v7313 = vpop.f32.mrf.mxu0
    %v7314 = vadd.f32 %v7271, %v7313
    %v7315 = vpop.f32.mrf.mxu0
    %v7316 = vadd.f32 %v7273, %v7315
    %7317 = vdwg.mxu0
    %7318 = vmatprep.subr.bf16.mxu0 %v5636
    %7319 = vmatpush1.bf16.msra.mxu0 %v5635
    %7320 = vmatprep.subr.bf16.mxu0 %v5634
    %7321 = vmatpush1.bf16.msra.mxu0 %v5633
    %7322 = vmatprep.subr.bf16.mxu0 %v5632
    %7323 = vmatpush1.bf16.msra.mxu0 %v5631
    %7324 = vmatprep.subr.bf16.mxu0 %v5630
    %7325 = vmatpush1.bf16.msra.mxu0 %v5629
    %7326 = vmatprep.subr.bf16.mxu0 %v5628
    %7327 = vmatpush1.bf16.msra.mxu0 %v5627
    %7328 = vmatprep.subr.bf16.mxu0 %v5626
    %7329 = vmatpush1.bf16.msra.mxu0 %v5625
    %7330 = vmatprep.subr.bf16.mxu0 %v5624
    %7331 = vmatpush1.bf16.msra.mxu0 %v5623
    %7332 = vmatprep.subr.bf16.mxu0 %v5622
    %7333 = vmatpush1.bf16.msra.mxu0 %v5621
    %7334 = vmatprep.subr.bf16.mxu0 %v5652
    %7335 = vmatpush2.bf16.msra.mxu0 %v5651
    %7336 = vmatprep.subr.bf16.mxu0 %v5650
    %7337 = vmatpush2.bf16.msra.mxu0 %v5649
    %7338 = vmatprep.subr.bf16.mxu0 %v5648
    %7339 = vmatpush2.bf16.msra.mxu0 %v5647
    %7340 = vmatprep.subr.bf16.mxu0 %v5646
    %7341 = vmatpush2.bf16.msra.mxu0 %v5645
    %7342 = vmatprep.subr.bf16.mxu0 %v5644
    %7343 = vmatpush2.bf16.msra.mxu0 %v5643
    %7344 = vmatprep.subr.bf16.mxu0 %v5642
    %7345 = vmatpush2.bf16.msra.mxu0 %v5641
    %7346 = vmatprep.subr.bf16.mxu0 %v5640
    %7347 = vmatpush2.bf16.msra.mxu0 %v5639
    %7348 = vmatprep.subr.bf16.mxu0 %v5638
    %7349 = vmatpush2.bf16.msra.mxu0 %v5637
    %7350 = vmatprep.mubr.bf16.mxu0 %v2932
    %7351 = vmatmul.mubr.bf16.gmra.mxu0 %v2931
    %v7352 = vpop.f32.mrf.mxu0
    %v7353 = vadd.f32 %v7310, %v7352
    %v7354 = vpop.f32.mrf.mxu0
    %v7355 = vadd.f32 %v7312, %v7354
    %v7356 = vpop.f32.mrf.mxu0
    %v7357 = vadd.f32 %v7314, %v7356
    %v7358 = vpop.f32.mrf.mxu0
    %v7359 = vadd.f32 %v7316, %v7358
    %7360 = vdwg.mxu0
    %7361 = vmatprep.subr.bf16.mxu0 %v5668
    %7362 = vmatpush1.bf16.msra.mxu0 %v5667
    %7363 = vmatprep.subr.bf16.mxu0 %v5666
    %7364 = vmatpush1.bf16.msra.mxu0 %v5665
    %7365 = vmatprep.subr.bf16.mxu0 %v5664
    %7366 = vmatpush1.bf16.msra.mxu0 %v5663
    %7367 = vmatprep.subr.bf16.mxu0 %v5662
    %7368 = vmatpush1.bf16.msra.mxu0 %v5661
    %7369 = vmatprep.subr.bf16.mxu0 %v5660
    %7370 = vmatpush1.bf16.msra.mxu0 %v5659
    %7371 = vmatprep.subr.bf16.mxu0 %v5658
    %7372 = vmatpush1.bf16.msra.mxu0 %v5657
    %7373 = vmatprep.subr.bf16.mxu0 %v5656
    %7374 = vmatpush1.bf16.msra.mxu0 %v5655
    %7375 = vmatprep.subr.bf16.mxu0 %v5654
    %7376 = vmatpush1.bf16.msra.mxu0 %v5653
    %7377 = vmatprep.subr.bf16.mxu0 %v5684
    %7378 = vmatpush2.bf16.msra.mxu0 %v5683
    %7379 = vmatprep.subr.bf16.mxu0 %v5682
    %7380 = vmatpush2.bf16.msra.mxu0 %v5681
    %7381 = vmatprep.subr.bf16.mxu0 %v5680
    %7382 = vmatpush2.bf16.msra.mxu0 %v5679
    %7383 = vmatprep.subr.bf16.mxu0 %v5678
    %7384 = vmatpush2.bf16.msra.mxu0 %v5677
    %7385 = vmatprep.subr.bf16.mxu0 %v5676
    %7386 = vmatpush2.bf16.msra.mxu0 %v5675
    %7387 = vmatprep.subr.bf16.mxu0 %v5674
    %7388 = vmatpush2.bf16.msra.mxu0 %v5673
    %7389 = vmatprep.subr.bf16.mxu0 %v5672
    %7390 = vmatpush2.bf16.msra.mxu0 %v5671
    %7391 = vmatprep.subr.bf16.mxu0 %v5670
    %7392 = vmatpush2.bf16.msra.mxu0 %v5669
    %7393 = vmatprep.mubr.bf16.mxu0 %v2934
    %7394 = vmatmul.mubr.bf16.gmra.mxu0 %v2933
    %v7395 = vpop.f32.mrf.mxu0
    %v7396 = vadd.f32 %v7353, %v7395
    %v7397 = vpop.f32.mrf.mxu0
    %v7398 = vadd.f32 %v7355, %v7397
    %v7399 = vpop.f32.mrf.mxu0
    %v7400 = vadd.f32 %v7357, %v7399
    %v7401 = vpop.f32.mrf.mxu0
    %v7402 = vadd.f32 %v7359, %v7401
    %7403 = vdwg.mxu0
    %7404 = vmatprep.subr.bf16.mxu0 %v5700
    %7405 = vmatpush1.bf16.msra.mxu0 %v5699
    %7406 = vmatprep.subr.bf16.mxu0 %v5698
    %7407 = vmatpush1.bf16.msra.mxu0 %v5697
    %7408 = vmatprep.subr.bf16.mxu0 %v5696
    %7409 = vmatpush1.bf16.msra.mxu0 %v5695
    %7410 = vmatprep.subr.bf16.mxu0 %v5694
    %7411 = vmatpush1.bf16.msra.mxu0 %v5693
    %7412 = vmatprep.subr.bf16.mxu0 %v5692
    %7413 = vmatpush1.bf16.msra.mxu0 %v5691
    %7414 = vmatprep.subr.bf16.mxu0 %v5690
    %7415 = vmatpush1.bf16.msra.mxu0 %v5689
    %7416 = vmatprep.subr.bf16.mxu0 %v5688
    %7417 = vmatpush1.bf16.msra.mxu0 %v5687
    %7418 = vmatprep.subr.bf16.mxu0 %v5686
    %7419 = vmatpush1.bf16.msra.mxu0 %v5685
    %7420 = vmatprep.subr.bf16.mxu0 %v5716
    %7421 = vmatpush2.bf16.msra.mxu0 %v5715
    %7422 = vmatprep.subr.bf16.mxu0 %v5714
    %7423 = vmatpush2.bf16.msra.mxu0 %v5713
    %7424 = vmatprep.subr.bf16.mxu0 %v5712
    %7425 = vmatpush2.bf16.msra.mxu0 %v5711
    %7426 = vmatprep.subr.bf16.mxu0 %v5710
    %7427 = vmatpush2.bf16.msra.mxu0 %v5709
    %7428 = vmatprep.subr.bf16.mxu0 %v5708
    %7429 = vmatpush2.bf16.msra.mxu0 %v5707
    %7430 = vmatprep.subr.bf16.mxu0 %v5706
    %7431 = vmatpush2.bf16.msra.mxu0 %v5705
    %7432 = vmatprep.subr.bf16.mxu0 %v5704
    %7433 = vmatpush2.bf16.msra.mxu0 %v5703
    %7434 = vmatprep.subr.bf16.mxu0 %v5702
    %7435 = vmatpush2.bf16.msra.mxu0 %v5701
    %7436 = vmatprep.mubr.bf16.mxu0 %v2936
    %7437 = vmatmul.mubr.bf16.gmra.mxu0 %v2935
    %v7438 = vpop.f32.mrf.mxu0
    %v7439 = vadd.f32 %v7396, %v7438
    %v7440 = vpop.f32.mrf.mxu0
    %v7441 = vadd.f32 %v7398, %v7440
    %v7442 = vpop.f32.mrf.mxu0
    %v7443 = vadd.f32 %v7400, %v7442
    %v7444 = vpop.f32.mrf.mxu0
    %v7445 = vadd.f32 %v7402, %v7444
    %7446 = vdwg.mxu0
    %7447 = vmatprep.subr.bf16.mxu0 %v5732
    %7448 = vmatpush1.bf16.msra.mxu0 %v5731
    %7449 = vmatprep.subr.bf16.mxu0 %v5730
    %7450 = vmatpush1.bf16.msra.mxu0 %v5729
    %7451 = vmatprep.subr.bf16.mxu0 %v5728
    %7452 = vmatpush1.bf16.msra.mxu0 %v5727
    %7453 = vmatprep.subr.bf16.mxu0 %v5726
    %7454 = vmatpush1.bf16.msra.mxu0 %v5725
    %7455 = vmatprep.subr.bf16.mxu0 %v5724
    %7456 = vmatpush1.bf16.msra.mxu0 %v5723
    %7457 = vmatprep.subr.bf16.mxu0 %v5722
    %7458 = vmatpush1.bf16.msra.mxu0 %v5721
    %7459 = vmatprep.subr.bf16.mxu0 %v5720
    %7460 = vmatpush1.bf16.msra.mxu0 %v5719
    %7461 = vmatprep.subr.bf16.mxu0 %v5718
    %7462 = vmatpush1.bf16.msra.mxu0 %v5717
    %7463 = vmatprep.subr.bf16.mxu0 %v5748
    %7464 = vmatpush2.bf16.msra.mxu0 %v5747
    %7465 = vmatprep.subr.bf16.mxu0 %v5746
    %7466 = vmatpush2.bf16.msra.mxu0 %v5745
    %7467 = vmatprep.subr.bf16.mxu0 %v5744
    %7468 = vmatpush2.bf16.msra.mxu0 %v5743
    %7469 = vmatprep.subr.bf16.mxu0 %v5742
    %7470 = vmatpush2.bf16.msra.mxu0 %v5741
    %7471 = vmatprep.subr.bf16.mxu0 %v5740
    %7472 = vmatpush2.bf16.msra.mxu0 %v5739
    %7473 = vmatprep.subr.bf16.mxu0 %v5738
    %7474 = vmatpush2.bf16.msra.mxu0 %v5737
    %7475 = vmatprep.subr.bf16.mxu0 %v5736
    %7476 = vmatpush2.bf16.msra.mxu0 %v5735
    %7477 = vmatprep.subr.bf16.mxu0 %v5734
    %7478 = vmatpush2.bf16.msra.mxu0 %v5733
    %7479 = vmatprep.mubr.bf16.mxu0 %v2938
    %7480 = vmatmul.mubr.bf16.gmra.mxu0 %v2937
    %v7481 = vpop.f32.mrf.mxu0
    %v7482 = vadd.f32 %v7439, %v7481
    %v7483 = vpop.f32.mrf.mxu0
    %v7484 = vadd.f32 %v7441, %v7483
    %v7485 = vpop.f32.mrf.mxu0
    %v7486 = vadd.f32 %v7443, %v7485
    %v7487 = vpop.f32.mrf.mxu0
    %v7488 = vadd.f32 %v7445, %v7487
    %7489 = vdwg.mxu0
    %7490 = vmatprep.subr.bf16.mxu0 %v5764
    %7491 = vmatpush1.bf16.msra.mxu0 %v5763
    %7492 = vmatprep.subr.bf16.mxu0 %v5762
    %7493 = vmatpush1.bf16.msra.mxu0 %v5761
    %7494 = vmatprep.subr.bf16.mxu0 %v5760
    %7495 = vmatpush1.bf16.msra.mxu0 %v5759
    %7496 = vmatprep.subr.bf16.mxu0 %v5758
    %7497 = vmatpush1.bf16.msra.mxu0 %v5757
    %7498 = vmatprep.subr.bf16.mxu0 %v5756
    %7499 = vmatpush1.bf16.msra.mxu0 %v5755
    %7500 = vmatprep.subr.bf16.mxu0 %v5754
    %7501 = vmatpush1.bf16.msra.mxu0 %v5753
    %7502 = vmatprep.subr.bf16.mxu0 %v5752
    %7503 = vmatpush1.bf16.msra.mxu0 %v5751
    %7504 = vmatprep.subr.bf16.mxu0 %v5750
    %7505 = vmatpush1.bf16.msra.mxu0 %v5749
    %7506 = vmatprep.subr.bf16.mxu0 %v5780
    %7507 = vmatpush2.bf16.msra.mxu0 %v5779
    %7508 = vmatprep.subr.bf16.mxu0 %v5778
    %7509 = vmatpush2.bf16.msra.mxu0 %v5777
    %7510 = vmatprep.subr.bf16.mxu0 %v5776
    %7511 = vmatpush2.bf16.msra.mxu0 %v5775
    %7512 = vmatprep.subr.bf16.mxu0 %v5774
    %7513 = vmatpush2.bf16.msra.mxu0 %v5773
    %7514 = vmatprep.subr.bf16.mxu0 %v5772
    %7515 = vmatpush2.bf16.msra.mxu0 %v5771
    %7516 = vmatprep.subr.bf16.mxu0 %v5770
    %7517 = vmatpush2.bf16.msra.mxu0 %v5769
    %7518 = vmatprep.subr.bf16.mxu0 %v5768
    %7519 = vmatpush2.bf16.msra.mxu0 %v5767
    %7520 = vmatprep.subr.bf16.mxu0 %v5766
    %7521 = vmatpush2.bf16.msra.mxu0 %v5765
    %7522 = vmatprep.mubr.bf16.mxu0 %v2940
    %7523 = vmatmul.mubr.bf16.gmra.mxu0 %v2939
    %v7524 = vpop.f32.mrf.mxu0
    %v7525 = vadd.f32 %v7482, %v7524
    %v7526 = vpop.f32.mrf.mxu0
    %v7527 = vadd.f32 %v7484, %v7526
    %v7528 = vpop.f32.mrf.mxu0
    %v7529 = vadd.f32 %v7486, %v7528
    %v7530 = vpop.f32.mrf.mxu0
    %v7531 = vadd.f32 %v7488, %v7530
    %7532 = vdwg.mxu0
    %7533 = vmatprep.subr.bf16.mxu0 %v5796
    %7534 = vmatpush1.bf16.msra.mxu0 %v5795
    %7535 = vmatprep.subr.bf16.mxu0 %v5794
    %7536 = vmatpush1.bf16.msra.mxu0 %v5793
    %7537 = vmatprep.subr.bf16.mxu0 %v5792
    %7538 = vmatpush1.bf16.msra.mxu0 %v5791
    %7539 = vmatprep.subr.bf16.mxu0 %v5790
    %7540 = vmatpush1.bf16.msra.mxu0 %v5789
    %7541 = vmatprep.subr.bf16.mxu0 %v5788
    %7542 = vmatpush1.bf16.msra.mxu0 %v5787
    %7543 = vmatprep.subr.bf16.mxu0 %v5786
    %7544 = vmatpush1.bf16.msra.mxu0 %v5785
    %7545 = vmatprep.subr.bf16.mxu0 %v5784
    %7546 = vmatpush1.bf16.msra.mxu0 %v5783
    %7547 = vmatprep.subr.bf16.mxu0 %v5782
    %7548 = vmatpush1.bf16.msra.mxu0 %v5781
    %7549 = vmatprep.subr.bf16.mxu0 %v5812
    %7550 = vmatpush2.bf16.msra.mxu0 %v5811
    %7551 = vmatprep.subr.bf16.mxu0 %v5810
    %7552 = vmatpush2.bf16.msra.mxu0 %v5809
    %7553 = vmatprep.subr.bf16.mxu0 %v5808
    %7554 = vmatpush2.bf16.msra.mxu0 %v5807
    %7555 = vmatprep.subr.bf16.mxu0 %v5806
    %7556 = vmatpush2.bf16.msra.mxu0 %v5805
    %7557 = vmatprep.subr.bf16.mxu0 %v5804
    %7558 = vmatpush2.bf16.msra.mxu0 %v5803
    %7559 = vmatprep.subr.bf16.mxu0 %v5802
    %7560 = vmatpush2.bf16.msra.mxu0 %v5801
    %7561 = vmatprep.subr.bf16.mxu0 %v5800
    %7562 = vmatpush2.bf16.msra.mxu0 %v5799
    %7563 = vmatprep.subr.bf16.mxu0 %v5798
    %7564 = vmatpush2.bf16.msra.mxu0 %v5797
    %7565 = vmatprep.mubr.bf16.mxu0 %v2942
    %7566 = vmatmul.mubr.bf16.gmra.mxu0 %v2941
    %v7567 = vpop.f32.mrf.mxu0
    %v7568 = vadd.f32 %v7525, %v7567
    %v7569 = vpop.f32.mrf.mxu0
    %v7570 = vadd.f32 %v7527, %v7569
    %v7571 = vpop.f32.mrf.mxu0
    %v7572 = vadd.f32 %v7529, %v7571
    %v7573 = vpop.f32.mrf.mxu0
    %v7574 = vadd.f32 %v7531, %v7573
    %7575 = vdwg.mxu0
    %7576 = vmatprep.subr.bf16.mxu0 %v5828
    %7577 = vmatpush1.bf16.msra.mxu0 %v5827
    %7578 = vmatprep.subr.bf16.mxu0 %v5826
    %7579 = vmatpush1.bf16.msra.mxu0 %v5825
    %7580 = vmatprep.subr.bf16.mxu0 %v5824
    %7581 = vmatpush1.bf16.msra.mxu0 %v5823
    %7582 = vmatprep.subr.bf16.mxu0 %v5822
    %7583 = vmatpush1.bf16.msra.mxu0 %v5821
    %7584 = vmatprep.subr.bf16.mxu0 %v5820
    %7585 = vmatpush1.bf16.msra.mxu0 %v5819
    %7586 = vmatprep.subr.bf16.mxu0 %v5818
    %7587 = vmatpush1.bf16.msra.mxu0 %v5817
    %7588 = vmatprep.subr.bf16.mxu0 %v5816
    %7589 = vmatpush1.bf16.msra.mxu0 %v5815
    %7590 = vmatprep.subr.bf16.mxu0 %v5814
    %7591 = vmatpush1.bf16.msra.mxu0 %v5813
    %7592 = vmatprep.subr.bf16.mxu0 %v5844
    %7593 = vmatpush2.bf16.msra.mxu0 %v5843
    %7594 = vmatprep.subr.bf16.mxu0 %v5842
    %7595 = vmatpush2.bf16.msra.mxu0 %v5841
    %7596 = vmatprep.subr.bf16.mxu0 %v5840
    %7597 = vmatpush2.bf16.msra.mxu0 %v5839
    %7598 = vmatprep.subr.bf16.mxu0 %v5838
    %7599 = vmatpush2.bf16.msra.mxu0 %v5837
    %7600 = vmatprep.subr.bf16.mxu0 %v5836
    %7601 = vmatpush2.bf16.msra.mxu0 %v5835
    %7602 = vmatprep.subr.bf16.mxu0 %v5834
    %7603 = vmatpush2.bf16.msra.mxu0 %v5833
    %7604 = vmatprep.subr.bf16.mxu0 %v5832
    %7605 = vmatpush2.bf16.msra.mxu0 %v5831
    %7606 = vmatprep.subr.bf16.mxu0 %v5830
    %7607 = vmatpush2.bf16.msra.mxu0 %v5829
    %7608 = vmatprep.mubr.bf16.mxu0 %v2944
    %7609 = vmatmul.mubr.bf16.gmra.mxu0 %v2943
    %v7610 = vpop.f32.mrf.mxu0
    %v7611 = vadd.f32 %v7568, %v7610
    %v7612 = vpop.f32.mrf.mxu0
    %v7613 = vadd.f32 %v7570, %v7612
    %v7614 = vpop.f32.mrf.mxu0
    %v7615 = vadd.f32 %v7572, %v7614
    %v7616 = vpop.f32.mrf.mxu0
    %v7617 = vadd.f32 %v7574, %v7616
    %7618 = vdwg.mxu0
    %7619 = vmatprep.subr.bf16.mxu0 %v5860
    %7620 = vmatpush1.bf16.msra.mxu0 %v5859
    %7621 = vmatprep.subr.bf16.mxu0 %v5858
    %7622 = vmatpush1.bf16.msra.mxu0 %v5857
    %7623 = vmatprep.subr.bf16.mxu0 %v5856
    %7624 = vmatpush1.bf16.msra.mxu0 %v5855
    %7625 = vmatprep.subr.bf16.mxu0 %v5854
    %7626 = vmatpush1.bf16.msra.mxu0 %v5853
    %7627 = vmatprep.subr.bf16.mxu0 %v5852
    %7628 = vmatpush1.bf16.msra.mxu0 %v5851
    %7629 = vmatprep.subr.bf16.mxu0 %v5850
    %7630 = vmatpush1.bf16.msra.mxu0 %v5849
    %7631 = vmatprep.subr.bf16.mxu0 %v5848
    %7632 = vmatpush1.bf16.msra.mxu0 %v5847
    %7633 = vmatprep.subr.bf16.mxu0 %v5846
    %7634 = vmatpush1.bf16.msra.mxu0 %v5845
    %7635 = vmatprep.subr.bf16.mxu0 %v5876
    %7636 = vmatpush2.bf16.msra.mxu0 %v5875
    %7637 = vmatprep.subr.bf16.mxu0 %v5874
    %7638 = vmatpush2.bf16.msra.mxu0 %v5873
    %7639 = vmatprep.subr.bf16.mxu0 %v5872
    %7640 = vmatpush2.bf16.msra.mxu0 %v5871
    %7641 = vmatprep.subr.bf16.mxu0 %v5870
    %7642 = vmatpush2.bf16.msra.mxu0 %v5869
    %7643 = vmatprep.subr.bf16.mxu0 %v5868
    %7644 = vmatpush2.bf16.msra.mxu0 %v5867
    %7645 = vmatprep.subr.bf16.mxu0 %v5866
    %7646 = vmatpush2.bf16.msra.mxu0 %v5865
    %7647 = vmatprep.subr.bf16.mxu0 %v5864
    %7648 = vmatpush2.bf16.msra.mxu0 %v5863
    %7649 = vmatprep.subr.bf16.mxu0 %v5862
    %7650 = vmatpush2.bf16.msra.mxu0 %v5861
    %7651 = vmatprep.mubr.bf16.mxu0 %v2946
    %7652 = vmatmul.mubr.bf16.gmra.mxu0 %v2945
    %v7653 = vpop.f32.mrf.mxu0
    %v7654 = vadd.f32 %v7611, %v7653
    %v7655 = vpop.f32.mrf.mxu0
    %v7656 = vadd.f32 %v7613, %v7655
    %v7657 = vpop.f32.mrf.mxu0
    %v7658 = vadd.f32 %v7615, %v7657
    %v7659 = vpop.f32.mrf.mxu0
    %v7660 = vadd.f32 %v7617, %v7659
    %7661 = vdwg.mxu0
    %7662 = vmatprep.subr.bf16.mxu0 %v5892
    %7663 = vmatpush1.bf16.msra.mxu0 %v5891
    %7664 = vmatprep.subr.bf16.mxu0 %v5890
    %7665 = vmatpush1.bf16.msra.mxu0 %v5889
    %7666 = vmatprep.subr.bf16.mxu0 %v5888
    %7667 = vmatpush1.bf16.msra.mxu0 %v5887
    %7668 = vmatprep.subr.bf16.mxu0 %v5886
    %7669 = vmatpush1.bf16.msra.mxu0 %v5885
    %7670 = vmatprep.subr.bf16.mxu0 %v5884
    %7671 = vmatpush1.bf16.msra.mxu0 %v5883
    %7672 = vmatprep.subr.bf16.mxu0 %v5882
    %7673 = vmatpush1.bf16.msra.mxu0 %v5881
    %7674 = vmatprep.subr.bf16.mxu0 %v5880
    %7675 = vmatpush1.bf16.msra.mxu0 %v5879
    %7676 = vmatprep.subr.bf16.mxu0 %v5878
    %7677 = vmatpush1.bf16.msra.mxu0 %v5877
    %7678 = vmatprep.subr.bf16.mxu0 %v5908
    %7679 = vmatpush2.bf16.msra.mxu0 %v5907
    %7680 = vmatprep.subr.bf16.mxu0 %v5906
    %7681 = vmatpush2.bf16.msra.mxu0 %v5905
    %7682 = vmatprep.subr.bf16.mxu0 %v5904
    %7683 = vmatpush2.bf16.msra.mxu0 %v5903
    %7684 = vmatprep.subr.bf16.mxu0 %v5902
    %7685 = vmatpush2.bf16.msra.mxu0 %v5901
    %7686 = vmatprep.subr.bf16.mxu0 %v5900
    %7687 = vmatpush2.bf16.msra.mxu0 %v5899
    %7688 = vmatprep.subr.bf16.mxu0 %v5898
    %7689 = vmatpush2.bf16.msra.mxu0 %v5897
    %7690 = vmatprep.subr.bf16.mxu0 %v5896
    %7691 = vmatpush2.bf16.msra.mxu0 %v5895
    %7692 = vmatprep.subr.bf16.mxu0 %v5894
    %7693 = vmatpush2.bf16.msra.mxu0 %v5893
    %7694 = vmatprep.mubr.bf16.mxu0 %v2948
    %7695 = vmatmul.mubr.bf16.gmra.mxu0 %v2947
    %v7696 = vpop.f32.mrf.mxu0
    %v7697 = vadd.f32 %v7654, %v7696
    %v7698 = vpop.f32.mrf.mxu0
    %v7699 = vadd.f32 %v7656, %v7698
    %v7700 = vpop.f32.mrf.mxu0
    %v7701 = vadd.f32 %v7658, %v7700
    %v7702 = vpop.f32.mrf.mxu0
    %v7703 = vadd.f32 %v7660, %v7702
    %7704 = vdwg.mxu0
    %7705 = vmatprep.subr.bf16.mxu0 %v5924
    %7706 = vmatpush1.bf16.msra.mxu0 %v5923
    %7707 = vmatprep.subr.bf16.mxu0 %v5922
    %7708 = vmatpush1.bf16.msra.mxu0 %v5921
    %7709 = vmatprep.subr.bf16.mxu0 %v5920
    %7710 = vmatpush1.bf16.msra.mxu0 %v5919
    %7711 = vmatprep.subr.bf16.mxu0 %v5918
    %7712 = vmatpush1.bf16.msra.mxu0 %v5917
    %7713 = vmatprep.subr.bf16.mxu0 %v5916
    %7714 = vmatpush1.bf16.msra.mxu0 %v5915
    %7715 = vmatprep.subr.bf16.mxu0 %v5914
    %7716 = vmatpush1.bf16.msra.mxu0 %v5913
    %7717 = vmatprep.subr.bf16.mxu0 %v5912
    %7718 = vmatpush1.bf16.msra.mxu0 %v5911
    %7719 = vmatprep.subr.bf16.mxu0 %v5910
    %7720 = vmatpush1.bf16.msra.mxu0 %v5909
    %7721 = vmatprep.subr.bf16.mxu0 %v5940
    %7722 = vmatpush2.bf16.msra.mxu0 %v5939
    %7723 = vmatprep.subr.bf16.mxu0 %v5938
    %7724 = vmatpush2.bf16.msra.mxu0 %v5937
    %7725 = vmatprep.subr.bf16.mxu0 %v5936
    %7726 = vmatpush2.bf16.msra.mxu0 %v5935
    %7727 = vmatprep.subr.bf16.mxu0 %v5934
    %7728 = vmatpush2.bf16.msra.mxu0 %v5933
    %7729 = vmatprep.subr.bf16.mxu0 %v5932
    %7730 = vmatpush2.bf16.msra.mxu0 %v5931
    %7731 = vmatprep.subr.bf16.mxu0 %v5930
    %7732 = vmatpush2.bf16.msra.mxu0 %v5929
    %7733 = vmatprep.subr.bf16.mxu0 %v5928
    %7734 = vmatpush2.bf16.msra.mxu0 %v5927
    %7735 = vmatprep.subr.bf16.mxu0 %v5926
    %7736 = vmatpush2.bf16.msra.mxu0 %v5925
    %7737 = vmatprep.mubr.bf16.mxu0 %v2950
    %7738 = vmatmul.mubr.bf16.gmra.mxu0 %v2949
    %v7739 = vpop.f32.mrf.mxu0
    %v7740 = vadd.f32 %v7697, %v7739
    %v7741 = vpop.f32.mrf.mxu0
    %v7742 = vadd.f32 %v7699, %v7741
    %v7743 = vpop.f32.mrf.mxu0
    %v7744 = vadd.f32 %v7701, %v7743
    %v7745 = vpop.f32.mrf.mxu0
    %v7746 = vadd.f32 %v7703, %v7745
    %7747 = vdwg.mxu0
    %7748 = vmatprep.subr.bf16.mxu0 %v5956
    %7749 = vmatpush1.bf16.msra.mxu0 %v5955
    %7750 = vmatprep.subr.bf16.mxu0 %v5954
    %7751 = vmatpush1.bf16.msra.mxu0 %v5953
    %7752 = vmatprep.subr.bf16.mxu0 %v5952
    %7753 = vmatpush1.bf16.msra.mxu0 %v5951
    %7754 = vmatprep.subr.bf16.mxu0 %v5950
    %7755 = vmatpush1.bf16.msra.mxu0 %v5949
    %7756 = vmatprep.subr.bf16.mxu0 %v5948
    %7757 = vmatpush1.bf16.msra.mxu0 %v5947
    %7758 = vmatprep.subr.bf16.mxu0 %v5946
    %7759 = vmatpush1.bf16.msra.mxu0 %v5945
    %7760 = vmatprep.subr.bf16.mxu0 %v5944
    %7761 = vmatpush1.bf16.msra.mxu0 %v5943
    %7762 = vmatprep.subr.bf16.mxu0 %v5942
    %7763 = vmatpush1.bf16.msra.mxu0 %v5941
    %7764 = vmatprep.subr.bf16.mxu0 %v5972
    %7765 = vmatpush2.bf16.msra.mxu0 %v5971
    %7766 = vmatprep.subr.bf16.mxu0 %v5970
    %7767 = vmatpush2.bf16.msra.mxu0 %v5969
    %7768 = vmatprep.subr.bf16.mxu0 %v5968
    %7769 = vmatpush2.bf16.msra.mxu0 %v5967
    %7770 = vmatprep.subr.bf16.mxu0 %v5966
    %7771 = vmatpush2.bf16.msra.mxu0 %v5965
    %7772 = vmatprep.subr.bf16.mxu0 %v5964
    %7773 = vmatpush2.bf16.msra.mxu0 %v5963
    %7774 = vmatprep.subr.bf16.mxu0 %v5962
    %7775 = vmatpush2.bf16.msra.mxu0 %v5961
    %7776 = vmatprep.subr.bf16.mxu0 %v5960
    %7777 = vmatpush2.bf16.msra.mxu0 %v5959
    %7778 = vmatprep.subr.bf16.mxu0 %v5958
    %7779 = vmatpush2.bf16.msra.mxu0 %v5957
    %7780 = vmatprep.mubr.bf16.mxu0 %v2952
    %7781 = vmatmul.mubr.bf16.gmra.mxu0 %v2951
    %v7782 = vpop.f32.mrf.mxu0
    %v7783 = vadd.f32 %v7740, %v7782
    %v7784 = vpop.f32.mrf.mxu0
    %v7785 = vadd.f32 %v7742, %v7784
    %v7786 = vpop.f32.mrf.mxu0
    %v7787 = vadd.f32 %v7744, %v7786
    %v7788 = vpop.f32.mrf.mxu0
    %v7789 = vadd.f32 %v7746, %v7788
    %7790 = vdwg.mxu0
    %7791 = vmatprep.subr.bf16.mxu0 %v5988
    %7792 = vmatpush1.bf16.msra.mxu0 %v5987
    %7793 = vmatprep.subr.bf16.mxu0 %v5986
    %7794 = vmatpush1.bf16.msra.mxu0 %v5985
    %7795 = vmatprep.subr.bf16.mxu0 %v5984
    %7796 = vmatpush1.bf16.msra.mxu0 %v5983
    %7797 = vmatprep.subr.bf16.mxu0 %v5982
    %7798 = vmatpush1.bf16.msra.mxu0 %v5981
    %7799 = vmatprep.subr.bf16.mxu0 %v5980
    %7800 = vmatpush1.bf16.msra.mxu0 %v5979
    %7801 = vmatprep.subr.bf16.mxu0 %v5978
    %7802 = vmatpush1.bf16.msra.mxu0 %v5977
    %7803 = vmatprep.subr.bf16.mxu0 %v5976
    %7804 = vmatpush1.bf16.msra.mxu0 %v5975
    %7805 = vmatprep.subr.bf16.mxu0 %v5974
    %7806 = vmatpush1.bf16.msra.mxu0 %v5973
    %7807 = vmatprep.subr.bf16.mxu0 %v6004
    %7808 = vmatpush2.bf16.msra.mxu0 %v6003
    %7809 = vmatprep.subr.bf16.mxu0 %v6002
    %7810 = vmatpush2.bf16.msra.mxu0 %v6001
    %7811 = vmatprep.subr.bf16.mxu0 %v6000
    %7812 = vmatpush2.bf16.msra.mxu0 %v5999
    %7813 = vmatprep.subr.bf16.mxu0 %v5998
    %7814 = vmatpush2.bf16.msra.mxu0 %v5997
    %7815 = vmatprep.subr.bf16.mxu0 %v5996
    %7816 = vmatpush2.bf16.msra.mxu0 %v5995
    %7817 = vmatprep.subr.bf16.mxu0 %v5994
    %7818 = vmatpush2.bf16.msra.mxu0 %v5993
    %7819 = vmatprep.subr.bf16.mxu0 %v5992
    %7820 = vmatpush2.bf16.msra.mxu0 %v5991
    %7821 = vmatprep.subr.bf16.mxu0 %v5990
    %7822 = vmatpush2.bf16.msra.mxu0 %v5989
    %7823 = vmatprep.mubr.bf16.mxu0 %v2954
    %7824 = vmatmul.mubr.bf16.gmra.mxu0 %v2953
    %v7825 = vpop.f32.mrf.mxu0
    %v7826 = vadd.f32 %v7783, %v7825
    %v7827 = vpop.f32.mrf.mxu0
    %v7828 = vadd.f32 %v7785, %v7827
    %v7829 = vpop.f32.mrf.mxu0
    %v7830 = vadd.f32 %v7787, %v7829
    %v7831 = vpop.f32.mrf.mxu0
    %v7832 = vadd.f32 %v7789, %v7831
    %7833 = vdwg.mxu0
    %7834 = vmatprep.subr.bf16.mxu0 %v6020
    %7835 = vmatpush1.bf16.msra.mxu0 %v6019
    %7836 = vmatprep.subr.bf16.mxu0 %v6018
    %7837 = vmatpush1.bf16.msra.mxu0 %v6017
    %7838 = vmatprep.subr.bf16.mxu0 %v6016
    %7839 = vmatpush1.bf16.msra.mxu0 %v6015
    %7840 = vmatprep.subr.bf16.mxu0 %v6014
    %7841 = vmatpush1.bf16.msra.mxu0 %v6013
    %7842 = vmatprep.subr.bf16.mxu0 %v6012
    %7843 = vmatpush1.bf16.msra.mxu0 %v6011
    %7844 = vmatprep.subr.bf16.mxu0 %v6010
    %7845 = vmatpush1.bf16.msra.mxu0 %v6009
    %7846 = vmatprep.subr.bf16.mxu0 %v6008
    %7847 = vmatpush1.bf16.msra.mxu0 %v6007
    %7848 = vmatprep.subr.bf16.mxu0 %v6006
    %7849 = vmatpush1.bf16.msra.mxu0 %v6005
    %7850 = vmatprep.subr.bf16.mxu0 %v6036
    %7851 = vmatpush2.bf16.msra.mxu0 %v6035
    %7852 = vmatprep.subr.bf16.mxu0 %v6034
    %7853 = vmatpush2.bf16.msra.mxu0 %v6033
    %7854 = vmatprep.subr.bf16.mxu0 %v6032
    %7855 = vmatpush2.bf16.msra.mxu0 %v6031
    %7856 = vmatprep.subr.bf16.mxu0 %v6030
    %7857 = vmatpush2.bf16.msra.mxu0 %v6029
    %7858 = vmatprep.subr.bf16.mxu0 %v6028
    %7859 = vmatpush2.bf16.msra.mxu0 %v6027
    %7860 = vmatprep.subr.bf16.mxu0 %v6026
    %7861 = vmatpush2.bf16.msra.mxu0 %v6025
    %7862 = vmatprep.subr.bf16.mxu0 %v6024
    %7863 = vmatpush2.bf16.msra.mxu0 %v6023
    %7864 = vmatprep.subr.bf16.mxu0 %v6022
    %7865 = vmatpush2.bf16.msra.mxu0 %v6021
    %7866 = vmatprep.mubr.bf16.mxu0 %v2956
    %7867 = vmatmul.mubr.bf16.gmra.mxu0 %v2955
    %v7868 = vpop.f32.mrf.mxu0
    %v7869 = vadd.f32 %v7826, %v7868
    %v7870 = vpop.f32.mrf.mxu0
    %v7871 = vadd.f32 %v7828, %v7870
    %v7872 = vpop.f32.mrf.mxu0
    %v7873 = vadd.f32 %v7830, %v7872
    %v7874 = vpop.f32.mrf.mxu0
    %v7875 = vadd.f32 %v7832, %v7874
    %7876 = vdwg.mxu0
    %7877 = vmatprep.subr.bf16.mxu0 %v6052
    %7878 = vmatpush1.bf16.msra.mxu0 %v6051
    %7879 = vmatprep.subr.bf16.mxu0 %v6050
    %7880 = vmatpush1.bf16.msra.mxu0 %v6049
    %7881 = vmatprep.subr.bf16.mxu0 %v6048
    %7882 = vmatpush1.bf16.msra.mxu0 %v6047
    %7883 = vmatprep.subr.bf16.mxu0 %v6046
    %7884 = vmatpush1.bf16.msra.mxu0 %v6045
    %7885 = vmatprep.subr.bf16.mxu0 %v6044
    %7886 = vmatpush1.bf16.msra.mxu0 %v6043
    %7887 = vmatprep.subr.bf16.mxu0 %v6042
    %7888 = vmatpush1.bf16.msra.mxu0 %v6041
    %7889 = vmatprep.subr.bf16.mxu0 %v6040
    %7890 = vmatpush1.bf16.msra.mxu0 %v6039
    %7891 = vmatprep.subr.bf16.mxu0 %v6038
    %7892 = vmatpush1.bf16.msra.mxu0 %v6037
    %7893 = vmatprep.subr.bf16.mxu0 %v6068
    %7894 = vmatpush2.bf16.msra.mxu0 %v6067
    %7895 = vmatprep.subr.bf16.mxu0 %v6066
    %7896 = vmatpush2.bf16.msra.mxu0 %v6065
    %7897 = vmatprep.subr.bf16.mxu0 %v6064
    %7898 = vmatpush2.bf16.msra.mxu0 %v6063
    %7899 = vmatprep.subr.bf16.mxu0 %v6062
    %7900 = vmatpush2.bf16.msra.mxu0 %v6061
    %7901 = vmatprep.subr.bf16.mxu0 %v6060
    %7902 = vmatpush2.bf16.msra.mxu0 %v6059
    %7903 = vmatprep.subr.bf16.mxu0 %v6058
    %7904 = vmatpush2.bf16.msra.mxu0 %v6057
    %7905 = vmatprep.subr.bf16.mxu0 %v6056
    %7906 = vmatpush2.bf16.msra.mxu0 %v6055
    %7907 = vmatprep.subr.bf16.mxu0 %v6054
    %7908 = vmatpush2.bf16.msra.mxu0 %v6053
    %7909 = vmatprep.mubr.bf16.mxu0 %v2958
    %7910 = vmatmul.mubr.bf16.gmra.mxu0 %v2957
    %v7911 = vpop.f32.mrf.mxu0
    %v7912 = vadd.f32 %v7869, %v7911
    %v7913 = vpop.f32.mrf.mxu0
    %v7914 = vadd.f32 %v7871, %v7913
    %v7915 = vpop.f32.mrf.mxu0
    %v7916 = vadd.f32 %v7873, %v7915
    %v7917 = vpop.f32.mrf.mxu0
    %v7918 = vadd.f32 %v7875, %v7917
    %7919 = vdwg.mxu0
    %7920 = vmatprep.subr.bf16.mxu0 %v6084
    %7921 = vmatpush1.bf16.msra.mxu0 %v6083
    %7922 = vmatprep.subr.bf16.mxu0 %v6082
    %7923 = vmatpush1.bf16.msra.mxu0 %v6081
    %7924 = vmatprep.subr.bf16.mxu0 %v6080
    %7925 = vmatpush1.bf16.msra.mxu0 %v6079
    %7926 = vmatprep.subr.bf16.mxu0 %v6078
    %7927 = vmatpush1.bf16.msra.mxu0 %v6077
    %7928 = vmatprep.subr.bf16.mxu0 %v6076
    %7929 = vmatpush1.bf16.msra.mxu0 %v6075
    %7930 = vmatprep.subr.bf16.mxu0 %v6074
    %7931 = vmatpush1.bf16.msra.mxu0 %v6073
    %7932 = vmatprep.subr.bf16.mxu0 %v6072
    %7933 = vmatpush1.bf16.msra.mxu0 %v6071
    %7934 = vmatprep.subr.bf16.mxu0 %v6070
    %7935 = vmatpush1.bf16.msra.mxu0 %v6069
    %7936 = vmatprep.subr.bf16.mxu0 %v6100
    %7937 = vmatpush2.bf16.msra.mxu0 %v6099
    %7938 = vmatprep.subr.bf16.mxu0 %v6098
    %7939 = vmatpush2.bf16.msra.mxu0 %v6097
    %7940 = vmatprep.subr.bf16.mxu0 %v6096
    %7941 = vmatpush2.bf16.msra.mxu0 %v6095
    %7942 = vmatprep.subr.bf16.mxu0 %v6094
    %7943 = vmatpush2.bf16.msra.mxu0 %v6093
    %7944 = vmatprep.subr.bf16.mxu0 %v6092
    %7945 = vmatpush2.bf16.msra.mxu0 %v6091
    %7946 = vmatprep.subr.bf16.mxu0 %v6090
    %7947 = vmatpush2.bf16.msra.mxu0 %v6089
    %7948 = vmatprep.subr.bf16.mxu0 %v6088
    %7949 = vmatpush2.bf16.msra.mxu0 %v6087
    %7950 = vmatprep.subr.bf16.mxu0 %v6086
    %7951 = vmatpush2.bf16.msra.mxu0 %v6085
    %7952 = vmatprep.mubr.bf16.mxu0 %v2960
    %7953 = vmatmul.mubr.bf16.gmra.mxu0 %v2959
    %v7954 = vpop.f32.mrf.mxu0
    %v7955 = vadd.f32 %v7912, %v7954
    %v7956 = vpop.f32.mrf.mxu0
    %v7957 = vadd.f32 %v7914, %v7956
    %v7958 = vpop.f32.mrf.mxu0
    %v7959 = vadd.f32 %v7916, %v7958
    %v7960 = vpop.f32.mrf.mxu0
    %v7961 = vadd.f32 %v7918, %v7960
    %7962 = vdwg.mxu0
    %7963 = vmatprep.subr.bf16.mxu0 %v6116
    %7964 = vmatpush1.bf16.msra.mxu0 %v6115
    %7965 = vmatprep.subr.bf16.mxu0 %v6114
    %7966 = vmatpush1.bf16.msra.mxu0 %v6113
    %7967 = vmatprep.subr.bf16.mxu0 %v6112
    %7968 = vmatpush1.bf16.msra.mxu0 %v6111
    %7969 = vmatprep.subr.bf16.mxu0 %v6110
    %7970 = vmatpush1.bf16.msra.mxu0 %v6109
    %7971 = vmatprep.subr.bf16.mxu0 %v6108
    %7972 = vmatpush1.bf16.msra.mxu0 %v6107
    %7973 = vmatprep.subr.bf16.mxu0 %v6106
    %7974 = vmatpush1.bf16.msra.mxu0 %v6105
    %7975 = vmatprep.subr.bf16.mxu0 %v6104
    %7976 = vmatpush1.bf16.msra.mxu0 %v6103
    %7977 = vmatprep.subr.bf16.mxu0 %v6102
    %7978 = vmatpush1.bf16.msra.mxu0 %v6101
    %7979 = vmatprep.subr.bf16.mxu0 %v6132
    %7980 = vmatpush2.bf16.msra.mxu0 %v6131
    %7981 = vmatprep.subr.bf16.mxu0 %v6130
    %7982 = vmatpush2.bf16.msra.mxu0 %v6129
    %7983 = vmatprep.subr.bf16.mxu0 %v6128
    %7984 = vmatpush2.bf16.msra.mxu0 %v6127
    %7985 = vmatprep.subr.bf16.mxu0 %v6126
    %7986 = vmatpush2.bf16.msra.mxu0 %v6125
    %7987 = vmatprep.subr.bf16.mxu0 %v6124
    %7988 = vmatpush2.bf16.msra.mxu0 %v6123
    %7989 = vmatprep.subr.bf16.mxu0 %v6122
    %7990 = vmatpush2.bf16.msra.mxu0 %v6121
    %7991 = vmatprep.subr.bf16.mxu0 %v6120
    %7992 = vmatpush2.bf16.msra.mxu0 %v6119
    %7993 = vmatprep.subr.bf16.mxu0 %v6118
    %7994 = vmatpush2.bf16.msra.mxu0 %v6117
    %7995 = vmatprep.mubr.bf16.mxu0 %v2962
    %7996 = vmatmul.mubr.bf16.gmra.mxu0 %v2961
    %v7997 = vpop.f32.mrf.mxu0
    %v7998 = vadd.f32 %v7955, %v7997
    %v7999 = vpop.f32.mrf.mxu0
    %v8000 = vadd.f32 %v7957, %v7999
    %v8001 = vpop.f32.mrf.mxu0
    %v8002 = vadd.f32 %v7959, %v8001
    %v8003 = vpop.f32.mrf.mxu0
    %v8004 = vadd.f32 %v7961, %v8003
    %8005 = vdwg.mxu0
    %8006 = vmatprep.subr.bf16.mxu0 %v6148
    %8007 = vmatpush1.bf16.msra.mxu0 %v6147
    %8008 = vmatprep.subr.bf16.mxu0 %v6146
    %8009 = vmatpush1.bf16.msra.mxu0 %v6145
    %8010 = vmatprep.subr.bf16.mxu0 %v6144
    %8011 = vmatpush1.bf16.msra.mxu0 %v6143
    %8012 = vmatprep.subr.bf16.mxu0 %v6142
    %8013 = vmatpush1.bf16.msra.mxu0 %v6141
    %8014 = vmatprep.subr.bf16.mxu0 %v6140
    %8015 = vmatpush1.bf16.msra.mxu0 %v6139
    %8016 = vmatprep.subr.bf16.mxu0 %v6138
    %8017 = vmatpush1.bf16.msra.mxu0 %v6137
    %8018 = vmatprep.subr.bf16.mxu0 %v6136
    %8019 = vmatpush1.bf16.msra.mxu0 %v6135
    %8020 = vmatprep.subr.bf16.mxu0 %v6134
    %8021 = vmatpush1.bf16.msra.mxu0 %v6133
    %8022 = vmatprep.subr.bf16.mxu0 %v6164
    %8023 = vmatpush2.bf16.msra.mxu0 %v6163
    %8024 = vmatprep.subr.bf16.mxu0 %v6162
    %8025 = vmatpush2.bf16.msra.mxu0 %v6161
    %8026 = vmatprep.subr.bf16.mxu0 %v6160
    %8027 = vmatpush2.bf16.msra.mxu0 %v6159
    %8028 = vmatprep.subr.bf16.mxu0 %v6158
    %8029 = vmatpush2.bf16.msra.mxu0 %v6157
    %8030 = vmatprep.subr.bf16.mxu0 %v6156
    %8031 = vmatpush2.bf16.msra.mxu0 %v6155
    %8032 = vmatprep.subr.bf16.mxu0 %v6154
    %8033 = vmatpush2.bf16.msra.mxu0 %v6153
    %8034 = vmatprep.subr.bf16.mxu0 %v6152
    %8035 = vmatpush2.bf16.msra.mxu0 %v6151
    %8036 = vmatprep.subr.bf16.mxu0 %v6150
    %8037 = vmatpush2.bf16.msra.mxu0 %v6149
    %8038 = vmatprep.mubr.bf16.mxu0 %v2964
    %8039 = vmatmul.mubr.bf16.gmra.mxu0 %v2963
    %v8040 = vpop.f32.mrf.mxu0
    %v8041 = vadd.f32 %v7998, %v8040
    %v8042 = vpop.f32.mrf.mxu0
    %v8043 = vadd.f32 %v8000, %v8042
    %v8044 = vpop.f32.mrf.mxu0
    %v8045 = vadd.f32 %v8002, %v8044
    %v8046 = vpop.f32.mrf.mxu0
    %v8047 = vadd.f32 %v8004, %v8046
    %8048 = vdwg.mxu0
    %8049 = vmatprep.subr.bf16.mxu0 %v6180
    %8050 = vmatpush1.bf16.msra.mxu0 %v6179
    %8051 = vmatprep.subr.bf16.mxu0 %v6178
    %8052 = vmatpush1.bf16.msra.mxu0 %v6177
    %8053 = vmatprep.subr.bf16.mxu0 %v6176
    %8054 = vmatpush1.bf16.msra.mxu0 %v6175
    %8055 = vmatprep.subr.bf16.mxu0 %v6174
    %8056 = vmatpush1.bf16.msra.mxu0 %v6173
    %8057 = vmatprep.subr.bf16.mxu0 %v6172
    %8058 = vmatpush1.bf16.msra.mxu0 %v6171
    %8059 = vmatprep.subr.bf16.mxu0 %v6170
    %8060 = vmatpush1.bf16.msra.mxu0 %v6169
    %8061 = vmatprep.subr.bf16.mxu0 %v6168
    %8062 = vmatpush1.bf16.msra.mxu0 %v6167
    %8063 = vmatprep.subr.bf16.mxu0 %v6166
    %8064 = vmatpush1.bf16.msra.mxu0 %v6165
    %8065 = vmatprep.subr.bf16.mxu0 %v6196
    %8066 = vmatpush2.bf16.msra.mxu0 %v6195
    %8067 = vmatprep.subr.bf16.mxu0 %v6194
    %8068 = vmatpush2.bf16.msra.mxu0 %v6193
    %8069 = vmatprep.subr.bf16.mxu0 %v6192
    %8070 = vmatpush2.bf16.msra.mxu0 %v6191
    %8071 = vmatprep.subr.bf16.mxu0 %v6190
    %8072 = vmatpush2.bf16.msra.mxu0 %v6189
    %8073 = vmatprep.subr.bf16.mxu0 %v6188
    %8074 = vmatpush2.bf16.msra.mxu0 %v6187
    %8075 = vmatprep.subr.bf16.mxu0 %v6186
    %8076 = vmatpush2.bf16.msra.mxu0 %v6185
    %8077 = vmatprep.subr.bf16.mxu0 %v6184
    %8078 = vmatpush2.bf16.msra.mxu0 %v6183
    %8079 = vmatprep.subr.bf16.mxu0 %v6182
    %8080 = vmatpush2.bf16.msra.mxu0 %v6181
    %8081 = vmatprep.mubr.bf16.mxu0 %v2966
    %8082 = vmatmul.mubr.bf16.gmra.mxu0 %v2965
    %v8083 = vpop.f32.mrf.mxu0
    %v8084 = vadd.f32 %v8041, %v8083
    %v8085 = vpop.f32.mrf.mxu0
    %v8086 = vadd.f32 %v8043, %v8085
    %v8087 = vpop.f32.mrf.mxu0
    %v8088 = vadd.f32 %v8045, %v8087
    %v8089 = vpop.f32.mrf.mxu0
    %v8090 = vadd.f32 %v8047, %v8089
    %8091 = vdwg.mxu0
    %8092 = vmatprep.subr.bf16.mxu0 %v6212
    %8093 = vmatpush1.bf16.msra.mxu0 %v6211
    %8094 = vmatprep.subr.bf16.mxu0 %v6210
    %8095 = vmatpush1.bf16.msra.mxu0 %v6209
    %8096 = vmatprep.subr.bf16.mxu0 %v6208
    %8097 = vmatpush1.bf16.msra.mxu0 %v6207
    %8098 = vmatprep.subr.bf16.mxu0 %v6206
    %8099 = vmatpush1.bf16.msra.mxu0 %v6205
    %8100 = vmatprep.subr.bf16.mxu0 %v6204
    %8101 = vmatpush1.bf16.msra.mxu0 %v6203
    %8102 = vmatprep.subr.bf16.mxu0 %v6202
    %8103 = vmatpush1.bf16.msra.mxu0 %v6201
    %8104 = vmatprep.subr.bf16.mxu0 %v6200
    %8105 = vmatpush1.bf16.msra.mxu0 %v6199
    %8106 = vmatprep.subr.bf16.mxu0 %v6198
    %8107 = vmatpush1.bf16.msra.mxu0 %v6197
    %8108 = vmatprep.subr.bf16.mxu0 %v6228
    %8109 = vmatpush2.bf16.msra.mxu0 %v6227
    %8110 = vmatprep.subr.bf16.mxu0 %v6226
    %8111 = vmatpush2.bf16.msra.mxu0 %v6225
    %8112 = vmatprep.subr.bf16.mxu0 %v6224
    %8113 = vmatpush2.bf16.msra.mxu0 %v6223
    %8114 = vmatprep.subr.bf16.mxu0 %v6222
    %8115 = vmatpush2.bf16.msra.mxu0 %v6221
    %8116 = vmatprep.subr.bf16.mxu0 %v6220
    %8117 = vmatpush2.bf16.msra.mxu0 %v6219
    %8118 = vmatprep.subr.bf16.mxu0 %v6218
    %8119 = vmatpush2.bf16.msra.mxu0 %v6217
    %8120 = vmatprep.subr.bf16.mxu0 %v6216
    %8121 = vmatpush2.bf16.msra.mxu0 %v6215
    %8122 = vmatprep.subr.bf16.mxu0 %v6214
    %8123 = vmatpush2.bf16.msra.mxu0 %v6213
    %8124 = vmatprep.mubr.bf16.mxu0 %v2968
    %8125 = vmatmul.mubr.bf16.gmra.mxu0 %v2967
    %v8126 = vpop.f32.mrf.mxu0
    %v8127 = vadd.f32 %v8084, %v8126
    %v8128 = vpop.f32.mrf.mxu0
    %v8129 = vadd.f32 %v8086, %v8128
    %v8130 = vpop.f32.mrf.mxu0
    %v8131 = vadd.f32 %v8088, %v8130
    %v8132 = vpop.f32.mrf.mxu0
    %v8133 = vadd.f32 %v8090, %v8132
    %8134 = vdwg.mxu0
    %8135 = vmatprep.subr.bf16.mxu0 %v6244
    %8136 = vmatpush1.bf16.msra.mxu0 %v6243
    %8137 = vmatprep.subr.bf16.mxu0 %v6242
    %8138 = vmatpush1.bf16.msra.mxu0 %v6241
    %8139 = vmatprep.subr.bf16.mxu0 %v6240
    %8140 = vmatpush1.bf16.msra.mxu0 %v6239
    %8141 = vmatprep.subr.bf16.mxu0 %v6238
    %8142 = vmatpush1.bf16.msra.mxu0 %v6237
    %8143 = vmatprep.subr.bf16.mxu0 %v6236
    %8144 = vmatpush1.bf16.msra.mxu0 %v6235
    %8145 = vmatprep.subr.bf16.mxu0 %v6234
    %8146 = vmatpush1.bf16.msra.mxu0 %v6233
    %8147 = vmatprep.subr.bf16.mxu0 %v6232
    %8148 = vmatpush1.bf16.msra.mxu0 %v6231
    %8149 = vmatprep.subr.bf16.mxu0 %v6230
    %8150 = vmatpush1.bf16.msra.mxu0 %v6229
    %8151 = vmatprep.subr.bf16.mxu0 %v6260
    %8152 = vmatpush2.bf16.msra.mxu0 %v6259
    %8153 = vmatprep.subr.bf16.mxu0 %v6258
    %8154 = vmatpush2.bf16.msra.mxu0 %v6257
    %8155 = vmatprep.subr.bf16.mxu0 %v6256
    %8156 = vmatpush2.bf16.msra.mxu0 %v6255
    %8157 = vmatprep.subr.bf16.mxu0 %v6254
    %8158 = vmatpush2.bf16.msra.mxu0 %v6253
    %8159 = vmatprep.subr.bf16.mxu0 %v6252
    %8160 = vmatpush2.bf16.msra.mxu0 %v6251
    %8161 = vmatprep.subr.bf16.mxu0 %v6250
    %8162 = vmatpush2.bf16.msra.mxu0 %v6249
    %8163 = vmatprep.subr.bf16.mxu0 %v6248
    %8164 = vmatpush2.bf16.msra.mxu0 %v6247
    %8165 = vmatprep.subr.bf16.mxu0 %v6246
    %8166 = vmatpush2.bf16.msra.mxu0 %v6245
    %8167 = vmatprep.mubr.bf16.mxu0 %v2970
    %8168 = vmatmul.mubr.bf16.gmra.mxu0 %v2969
    %v8169 = vpop.f32.mrf.mxu0
    %v8170 = vadd.f32 %v8127, %v8169
    %v8171 = vpop.f32.mrf.mxu0
    %v8172 = vadd.f32 %v8129, %v8171
    %v8173 = vpop.f32.mrf.mxu0
    %v8174 = vadd.f32 %v8131, %v8173
    %v8175 = vpop.f32.mrf.mxu0
    %v8176 = vadd.f32 %v8133, %v8175
    %8177 = vdwg.mxu0
    %8178 = vmatprep.subr.bf16.mxu0 %v6276
    %8179 = vmatpush1.bf16.msra.mxu0 %v6275
    %8180 = vmatprep.subr.bf16.mxu0 %v6274
    %8181 = vmatpush1.bf16.msra.mxu0 %v6273
    %8182 = vmatprep.subr.bf16.mxu0 %v6272
    %8183 = vmatpush1.bf16.msra.mxu0 %v6271
    %8184 = vmatprep.subr.bf16.mxu0 %v6270
    %8185 = vmatpush1.bf16.msra.mxu0 %v6269
    %8186 = vmatprep.subr.bf16.mxu0 %v6268
    %8187 = vmatpush1.bf16.msra.mxu0 %v6267
    %8188 = vmatprep.subr.bf16.mxu0 %v6266
    %8189 = vmatpush1.bf16.msra.mxu0 %v6265
    %8190 = vmatprep.subr.bf16.mxu0 %v6264
    %8191 = vmatpush1.bf16.msra.mxu0 %v6263
    %8192 = vmatprep.subr.bf16.mxu0 %v6262
    %8193 = vmatpush1.bf16.msra.mxu0 %v6261
    %8194 = vmatprep.subr.bf16.mxu0 %v6292
    %8195 = vmatpush2.bf16.msra.mxu0 %v6291
    %8196 = vmatprep.subr.bf16.mxu0 %v6290
    %8197 = vmatpush2.bf16.msra.mxu0 %v6289
    %8198 = vmatprep.subr.bf16.mxu0 %v6288
    %8199 = vmatpush2.bf16.msra.mxu0 %v6287
    %8200 = vmatprep.subr.bf16.mxu0 %v6286
    %8201 = vmatpush2.bf16.msra.mxu0 %v6285
    %8202 = vmatprep.subr.bf16.mxu0 %v6284
    %8203 = vmatpush2.bf16.msra.mxu0 %v6283
    %8204 = vmatprep.subr.bf16.mxu0 %v6282
    %8205 = vmatpush2.bf16.msra.mxu0 %v6281
    %8206 = vmatprep.subr.bf16.mxu0 %v6280
    %8207 = vmatpush2.bf16.msra.mxu0 %v6279
    %8208 = vmatprep.subr.bf16.mxu0 %v6278
    %8209 = vmatpush2.bf16.msra.mxu0 %v6277
    %8210 = vmatprep.mubr.bf16.mxu0 %v2972
    %8211 = vmatmul.mubr.bf16.gmra.mxu0 %v2971
    %v8212 = vpop.f32.mrf.mxu0
    %v8213 = vadd.f32 %v8170, %v8212
    %v8214 = vpop.f32.mrf.mxu0
    %v8215 = vadd.f32 %v8172, %v8214
    %v8216 = vpop.f32.mrf.mxu0
    %v8217 = vadd.f32 %v8174, %v8216
    %v8218 = vpop.f32.mrf.mxu0
    %v8219 = vadd.f32 %v8176, %v8218
    %8220 = vdwg.mxu0
    %8221 = vmatprep.subr.bf16.mxu0 %v6308
    %8222 = vmatpush1.bf16.msra.mxu0 %v6307
    %8223 = vmatprep.subr.bf16.mxu0 %v6306
    %8224 = vmatpush1.bf16.msra.mxu0 %v6305
    %8225 = vmatprep.subr.bf16.mxu0 %v6304
    %8226 = vmatpush1.bf16.msra.mxu0 %v6303
    %8227 = vmatprep.subr.bf16.mxu0 %v6302
    %8228 = vmatpush1.bf16.msra.mxu0 %v6301
    %8229 = vmatprep.subr.bf16.mxu0 %v6300
    %8230 = vmatpush1.bf16.msra.mxu0 %v6299
    %8231 = vmatprep.subr.bf16.mxu0 %v6298
    %8232 = vmatpush1.bf16.msra.mxu0 %v6297
    %8233 = vmatprep.subr.bf16.mxu0 %v6296
    %8234 = vmatpush1.bf16.msra.mxu0 %v6295
    %8235 = vmatprep.subr.bf16.mxu0 %v6294
    %8236 = vmatpush1.bf16.msra.mxu0 %v6293
    %8237 = vmatprep.subr.bf16.mxu0 %v6324
    %8238 = vmatpush2.bf16.msra.mxu0 %v6323
    %8239 = vmatprep.subr.bf16.mxu0 %v6322
    %8240 = vmatpush2.bf16.msra.mxu0 %v6321
    %8241 = vmatprep.subr.bf16.mxu0 %v6320
    %8242 = vmatpush2.bf16.msra.mxu0 %v6319
    %8243 = vmatprep.subr.bf16.mxu0 %v6318
    %8244 = vmatpush2.bf16.msra.mxu0 %v6317
    %8245 = vmatprep.subr.bf16.mxu0 %v6316
    %8246 = vmatpush2.bf16.msra.mxu0 %v6315
    %8247 = vmatprep.subr.bf16.mxu0 %v6314
    %8248 = vmatpush2.bf16.msra.mxu0 %v6313
    %8249 = vmatprep.subr.bf16.mxu0 %v6312
    %8250 = vmatpush2.bf16.msra.mxu0 %v6311
    %8251 = vmatprep.subr.bf16.mxu0 %v6310
    %8252 = vmatpush2.bf16.msra.mxu0 %v6309
    %8253 = vmatprep.mubr.bf16.mxu0 %v2974
    %8254 = vmatmul.mubr.bf16.gmra.mxu0 %v2973
    %v8255 = vpop.f32.mrf.mxu0
    %v8256 = vadd.f32 %v8213, %v8255
    %v8257 = vpop.f32.mrf.mxu0
    %v8258 = vadd.f32 %v8215, %v8257
    %v8259 = vpop.f32.mrf.mxu0
    %v8260 = vadd.f32 %v8217, %v8259
    %v8261 = vpop.f32.mrf.mxu0
    %v8262 = vadd.f32 %v8219, %v8261
    %8263 = vdwg.mxu0
    %8264 = vmatprep.subr.bf16.mxu0 %v6340
    %8265 = vmatpush1.bf16.msra.mxu0 %v6339
    %8266 = vmatprep.subr.bf16.mxu0 %v6338
    %8267 = vmatpush1.bf16.msra.mxu0 %v6337
    %8268 = vmatprep.subr.bf16.mxu0 %v6336
    %8269 = vmatpush1.bf16.msra.mxu0 %v6335
    %8270 = vmatprep.subr.bf16.mxu0 %v6334
    %8271 = vmatpush1.bf16.msra.mxu0 %v6333
    %8272 = vmatprep.subr.bf16.mxu0 %v6332
    %8273 = vmatpush1.bf16.msra.mxu0 %v6331
    %8274 = vmatprep.subr.bf16.mxu0 %v6330
    %8275 = vmatpush1.bf16.msra.mxu0 %v6329
    %8276 = vmatprep.subr.bf16.mxu0 %v6328
    %8277 = vmatpush1.bf16.msra.mxu0 %v6327
    %8278 = vmatprep.subr.bf16.mxu0 %v6326
    %8279 = vmatpush1.bf16.msra.mxu0 %v6325
    %8280 = vmatprep.subr.bf16.mxu0 %v6356
    %8281 = vmatpush2.bf16.msra.mxu0 %v6355
    %8282 = vmatprep.subr.bf16.mxu0 %v6354
    %8283 = vmatpush2.bf16.msra.mxu0 %v6353
    %8284 = vmatprep.subr.bf16.mxu0 %v6352
    %8285 = vmatpush2.bf16.msra.mxu0 %v6351
    %8286 = vmatprep.subr.bf16.mxu0 %v6350
    %8287 = vmatpush2.bf16.msra.mxu0 %v6349
    %8288 = vmatprep.subr.bf16.mxu0 %v6348
    %8289 = vmatpush2.bf16.msra.mxu0 %v6347
    %8290 = vmatprep.subr.bf16.mxu0 %v6346
    %8291 = vmatpush2.bf16.msra.mxu0 %v6345
    %8292 = vmatprep.subr.bf16.mxu0 %v6344
    %8293 = vmatpush2.bf16.msra.mxu0 %v6343
    %8294 = vmatprep.subr.bf16.mxu0 %v6342
    %8295 = vmatpush2.bf16.msra.mxu0 %v6341
    %8296 = vmatprep.mubr.bf16.mxu0 %v2976
    %8297 = vmatmul.mubr.bf16.gmra.mxu0 %v2975
    %v8298 = vpop.f32.mrf.mxu0
    %v8299 = vadd.f32 %v8256, %v8298
    %v8300 = vpop.f32.mrf.mxu0
    %v8301 = vadd.f32 %v8258, %v8300
    %v8302 = vpop.f32.mrf.mxu0
    %v8303 = vadd.f32 %v8260, %v8302
    %v8304 = vpop.f32.mrf.mxu0
    %v8305 = vadd.f32 %v8262, %v8304
    %8306 = vdwg.mxu0
    %v8307 = vpack.c.bf16 %v8303, %v8299
    %v8308 = vpack.c.bf16 %v8305, %v8301
    %v8309 = vld [vmem:[#allocation10] sm:$0xf]
    %v8310 = vld [vmem:[#allocation10 + $0x4] sm:$0xf]
    %v8311 = vld [vmem:[#allocation10 + $0x8] sm:$0xf]
    %v8312 = vld [vmem:[#allocation10 + $0xc] sm:$0xf]
    %v8313 = vld [vmem:[#allocation10 + $0x10] sm:$0xf]
    %v8314 = vld [vmem:[#allocation10 + $0x14] sm:$0xf]
    %v8315 = vld [vmem:[#allocation10 + $0x18] sm:$0xf]
    %v8316 = vld [vmem:[#allocation10 + $0x1c] sm:$0xf]
    %v8317 = vld [vmem:[#allocation10 + $0x20] sm:$0xf]
    %v8318 = vld [vmem:[#allocation10 + $0x24] sm:$0xf]
    %v8319 = vld [vmem:[#allocation10 + $0x28] sm:$0xf]
    %v8320 = vld [vmem:[#allocation10 + $0x2c] sm:$0xf]
    %v8321 = vld [vmem:[#allocation10 + $0x30] sm:$0xf]
    %v8322 = vld [vmem:[#allocation10 + $0x34] sm:$0xf]
    %v8323 = vld [vmem:[#allocation10 + $0x38] sm:$0xf]
    %v8324 = vld [vmem:[#allocation10 + $0x3c] sm:$0xf]
    %v8325 = vld [vmem:[#allocation10 + $0x40] sm:$0xf]
    %v8326 = vld [vmem:[#allocation10 + $0x44] sm:$0xf]
    %v8327 = vld [vmem:[#allocation10 + $0x48] sm:$0xf]
    %v8328 = vld [vmem:[#allocation10 + $0x4c] sm:$0xf]
    %v8329 = vld [vmem:[#allocation10 + $0x50] sm:$0xf]
    %v8330 = vld [vmem:[#allocation10 + $0x54] sm:$0xf]
    %v8331 = vld [vmem:[#allocation10 + $0x58] sm:$0xf]
    %v8332 = vld [vmem:[#allocation10 + $0x5c] sm:$0xf]
    %v8333 = vld [vmem:[#allocation10 + $0x60] sm:$0xf]
    %v8334 = vld [vmem:[#allocation10 + $0x64] sm:$0xf]
    %v8335 = vld [vmem:[#allocation10 + $0x68] sm:$0xf]
    %v8336 = vld [vmem:[#allocation10 + $0x6c] sm:$0xf]
    %v8337 = vld [vmem:[#allocation10 + $0x70] sm:$0xf]
    %v8338 = vld [vmem:[#allocation10 + $0x74] sm:$0xf]
    %v8339 = vld [vmem:[#allocation10 + $0x78] sm:$0xf]
    %v8340 = vld [vmem:[#allocation10 + $0x7c] sm:$0xf]
    %v8341 = vld [vmem:[#allocation11] sm:$0x1]
    %v8343 = vlaneseq
    %v8344 = vshrl.u32 %v8343, 7
    %v8345 = vsub.s32 0, %v8344
    %v8346 = vrot.slane %v8341, %v8345
    %v8380 = vunpack.c.l.b16 %v8309
    %v8381 = vunpack.c.l.b16 %v8310
    %v8382 = vunpack.c.l.b16 %v8311
    %v8383 = vunpack.c.l.b16 %v8312
    %v8384 = vunpack.c.l.b16 %v8313
    %v8385 = vunpack.c.l.b16 %v8314
    %v8386 = vunpack.c.l.b16 %v8315
    %v8387 = vunpack.c.l.b16 %v8316
    %v8388 = vunpack.c.l.b16 %v8317
    %v8389 = vunpack.c.l.b16 %v8318
    %v8390 = vunpack.c.l.b16 %v8319
    %v8391 = vunpack.c.l.b16 %v8320
    %v8392 = vunpack.c.l.b16 %v8321
    %v8393 = vunpack.c.l.b16 %v8322
    %v8394 = vunpack.c.l.b16 %v8323
    %v8395 = vunpack.c.l.b16 %v8324
    %v8396 = vunpack.c.l.b16 %v8325
    %v8397 = vunpack.c.l.b16 %v8326
    %v8398 = vunpack.c.l.b16 %v8327
    %v8399 = vunpack.c.l.b16 %v8328
    %v8400 = vunpack.c.l.b16 %v8329
    %v8401 = vunpack.c.l.b16 %v8330
    %v8402 = vunpack.c.l.b16 %v8331
    %v8403 = vunpack.c.l.b16 %v8332
    %v8404 = vunpack.c.l.b16 %v8333
    %v8405 = vunpack.c.l.b16 %v8334
    %v8406 = vunpack.c.l.b16 %v8335
    %v8407 = vunpack.c.l.b16 %v8336
    %v8408 = vunpack.c.l.b16 %v8337
    %v8409 = vunpack.c.l.b16 %v8338
    %v8410 = vunpack.c.l.b16 %v8339
    %v8411 = vunpack.c.l.b16 %v8340
    %v8412 = vpack.c.b16 %v8381, %v8380
    %v8413 = vpack.c.b16 %v8383, %v8382
    %v8414 = vpack.c.b16 %v8385, %v8384
    %v8415 = vpack.c.b16 %v8387, %v8386
    %v8416 = vpack.c.b16 %v8389, %v8388
    %v8417 = vpack.c.b16 %v8391, %v8390
    %v8418 = vpack.c.b16 %v8393, %v8392
    %v8419 = vpack.c.b16 %v8395, %v8394
    %v8420 = vpack.c.b16 %v8397, %v8396
    %v8421 = vpack.c.b16 %v8399, %v8398
    %v8422 = vpack.c.b16 %v8401, %v8400
    %v8423 = vpack.c.b16 %v8403, %v8402
    %v8424 = vpack.c.b16 %v8405, %v8404
    %v8425 = vpack.c.b16 %v8407, %v8406
    %v8426 = vpack.c.b16 %v8409, %v8408
    %v8427 = vpack.c.b16 %v8411, %v8410
    %8444 = vmatprep.subr.bf16.mxu0 0
    %8445 = vmatpush1.bf16.msra.mxu0 %v8419
    %8446 = vmatprep.subr.bf16.mxu0 0
    %8447 = vmatpush1.bf16.msra.mxu0 %v8418
    %8448 = vmatprep.subr.bf16.mxu0 0
    %8449 = vmatpush1.bf16.msra.mxu0 %v8417
    %8450 = vmatprep.subr.bf16.mxu0 0
    %8451 = vmatpush1.bf16.msra.mxu0 %v8416
    %8452 = vmatprep.subr.bf16.mxu0 0
    %8453 = vmatpush1.bf16.msra.mxu0 %v8415
    %8454 = vmatprep.subr.bf16.mxu0 0
    %8455 = vmatpush1.bf16.msra.mxu0 %v8414
    %8456 = vmatprep.subr.bf16.mxu0 0
    %8457 = vmatpush1.bf16.msra.mxu0 %v8413
    %8458 = vmatprep.subr.bf16.mxu0 0
    %8459 = vmatpush1.bf16.msra.mxu0 %v8412
    %8460 = vmatprep.subr.bf16.mxu0 0
    %8461 = vmatpush2.bf16.msra.mxu0 %v8427
    %8462 = vmatprep.subr.bf16.mxu0 0
    %8463 = vmatpush2.bf16.msra.mxu0 %v8426
    %8464 = vmatprep.subr.bf16.mxu0 0
    %8465 = vmatpush2.bf16.msra.mxu0 %v8425
    %8466 = vmatprep.subr.bf16.mxu0 0
    %8467 = vmatpush2.bf16.msra.mxu0 %v8424
    %8468 = vmatprep.subr.bf16.mxu0 0
    %8469 = vmatpush2.bf16.msra.mxu0 %v8423
    %8470 = vmatprep.subr.bf16.mxu0 0
    %8471 = vmatpush2.bf16.msra.mxu0 %v8422
    %8472 = vmatprep.subr.bf16.mxu0 0
    %8473 = vmatpush2.bf16.msra.mxu0 %v8421
    %8474 = vmatprep.subr.bf16.mxu0 0
    %8475 = vmatpush2.bf16.msra.mxu0 %v8420
    %8476 = vmatprep.mubr.bf16.mxu0 %v8308
    %8477 = vmatmul.mubr.bf16.gmra.mxu0 %v8307
    %v8478 = vpop.f32.mrf.mxu0
    %v8479 = vadd.f32 %v8346, %v8478
    %v8480 = vpop.f32.mrf.mxu0
    %v8481 = vpop.f32.mrf.mxu0
    %v8482 = vadd.f32 %v8346, %v8481
    %v8483 = vpop.f32.mrf.mxu0
    %8484 = vdwg.mxu0
    %8485 = vst [vmem:[%s7] sm:$0xff] %v8479
    %8486 = vst [vmem:[%s7 + $0x8] sm:$0xff] %v8482
    // Predicated region
    $region54: #{critic_forward.1} parent=1 // pred_check
      _
    $region55: #{critic_forward.1} parent=1 // pred_check_branch
      %8488 = sbr.rel (0) target = $region57
    $region56: #{critic_forward.1} parent=1 // pred_region
      _
    $region57: #{critic_forward.1} parent=1 // pred_fallthru
      _
    // Predicated region
    $region58: #{critic_forward.1} parent=1 // pred_check
      _
    $region59: #{critic_forward.1} parent=1 // pred_check_branch
      %8490 = sbr.rel (0) target = $region61
    $region60: #{critic_forward.1} parent=1 // pred_region
      _
    $region61: #{critic_forward.1} parent=1 // pred_fallthru
      _
    %8491 = vsyncpa [#allocation4], 1
    %8492 = vsyncpa [#allocation6], 1
    %8493 = vsyncpa [#allocation9], 1
    %8494 = vsyncpa [#allocation12], 1

</llo_original>
